<compile_context>
chip_gen: v5e
topology: v5e:2x2
jax: 0.10.0
libtpu: 0.0.40
codegen_flags: <defaults>
</compile_context>

<pallas_src>
import math
import numpy as np
import jax
import jax.numpy as jnp
from jax.experimental import pallas as pl
from jax.experimental.pallas import tpu as pltpu

# ---------------- small synthetic configuration ----------------
N_ATOMS = 16            # total atoms (N_MOL molecules of equal size); power of 2
N_MOL   = 2
HIDDEN  = 32            # hidden_channels
FILTERS = 32            # num_filters (== HIDDEN, exploited by the weight packing)
GAUSS   = 16            # num_gaussians
N_INTER = 3             # num_interactions
CUTOFF  = 10.0
PI      = math.pi
LOG2    = math.log(2.0)
GAUSS_DELTA = CUTOFF / (GAUSS - 1)
COEFF   = -0.5 / (GAUSS_DELTA ** 2)      # GaussianSmearing coeff
H2      = HIDDEN // 2
E       = N_ATOMS * N_ATOMS              # dense (padded) edge count, e = i*N + j (i=target, j=source)
TF      = N_INTER * FILTERS              # stacked edge-filter rows
PER_T   = FILTERS + 2 * HIDDEN           # rows per interaction in the atom-weight slab
OW1_ROW = N_INTER * PER_T                # row offset of the readout weight in that slab
LOG2N   = N_ATOMS.bit_length() - 1       # log2(N_ATOMS) for the in-kernel selectors
assert N_ATOMS & (N_ATOMS - 1) == 0, "in-kernel selectors use shift/and; N_ATOMS must be a power of 2"
assert HIDDEN == FILTERS, "atom-weight slab packing assumes HIDDEN == FILTERS"

# column layout of the packed small-vector slab ([HIDDEN, N_VEC])
COL_CB2  = 0                      # cols [0, T)   : conv.lin2 bias (per t)
COL_IB   = N_INTER                # cols [T, 2T)  : interaction.lin bias, ssp folded (per t)
COL_OB1  = 2 * N_INTER            # readout lin1 bias
COL_OW2  = 2 * N_INTER + 1        # readout lin2 weight column
COL_OB2  = 2 * N_INTER + 2        # readout lin2 bias, ssp folded
COL_GOFF = 2 * N_INTER + 3        # gaussian offsets
N_VEC    = 2 * N_INTER + 4


def _softplus(x):
    # numerically stable softplus; the ShiftedSoftplus "-log 2" is folded into
    # the bias of the following Linear layer in the wrapper.
    return jnp.maximum(x, 0.0) + jnp.log1p(jnp.exp(-jnp.abs(x)))


# ---------------- Pallas kernel (single grid step) ----------------
def schnet_kernel(edge_ref, npack_ref, vecs_ref, w1p_ref, w2p_ref, aw_ref, out_ref):
    f32 = jnp.float32

    edges = edge_ref[...]                                  # [2, E]
    dist  = edges[0:1, :]                                  # [1, E] edge distances
    adj   = edges[1:2, :]                                  # [1, E] 1.0 = valid edge
    vecs  = vecs_ref[...]                                  # [H, N_VEC] packed bias/offset vectors
    npack = npack_ref[...]                                 # [H + M, N]
    hT    = npack[0:HIDDEN, :]                             # [H, N] atom features (transposed state)
    mol   = npack[HIDDEN:HIDDEN + N_MOL, :]                # [M, N] molecule one-hot

    # ---- h-independent edge phase, batched across ALL interactions (hoisted) ----
    goff = vecs[0:GAUSS, COL_GOFF:COL_GOFF + 1]            # [G, 1]
    d = dist - goff                                        # [G, E]
    edge_attr = jnp.exp(COEFF * d * d)                     # Gaussian smearing        [G, E]

    w1p = w1p_ref[...]                                     # [T*F, G+1]  (bias = last column)
    a1 = jnp.dot(w1p[:, 0:GAUSS], edge_attr,
                 preferred_element_type=f32) + w1p[:, GAUSS:GAUSS + 1]           # [T*F, E]
    w2p = w2p_ref[...]                                     # [T*F, T*F+1] block-diag (bias = last col)
    w_all = jnp.dot(w2p[:, 0:TF], _softplus(a1),
                    preferred_element_type=f32) + w2p[:, TF:TF + 1]              # [T*F, E]
    mask = (0.5 * (jnp.cos(dist * (PI / CUTOFF)) + 1.0)) * adj                   # cosine cutoff * adjacency
    w_all = w_all * mask                                   # filters for all blocks, lane-dense [T*F, E]

    # ---- 0/1 selectors built from iotas (constants, hoisted; e = i*N + j) ----
    e_s = jax.lax.broadcasted_iota(jnp.int32, (E, N_ATOMS), 0)
    i_s = jax.lax.broadcasted_iota(jnp.int32, (E, N_ATOMS), 1)
    sel = (jnp.right_shift(e_s, LOG2N) == i_s).astype(f32)         # [E, N]: e // N == i (scatter-add over j)
    j_g = jax.lax.broadcasted_iota(jnp.int32, (N_ATOMS, E), 0)
    e_g = jax.lax.broadcasted_iota(jnp.int32, (N_ATOMS, E), 1)
    gat = (jnp.bitwise_and(e_g, N_ATOMS - 1) == j_g).astype(f32)   # [N, E]: e %  N == j (source gather)

    # ---- interaction blocks: statically unrolled, only h-dependent work here ----
    for t in range(N_INTER):
        base = t * PER_T
        cw1T = aw_ref[pl.ds(base, FILTERS), :]                      # [F, H] conv.lin1ᵀ
        cw2T = aw_ref[pl.ds(base + FILTERS, HIDDEN), :]             # [H, F] conv.lin2ᵀ
        iwT  = aw_ref[pl.ds(base + FILTERS + HIDDEN, HIDDEN), :]    # [H, H] interaction.linᵀ
        w_t  = w_all[t * FILTERS:(t + 1) * FILTERS, :]              # [F, E]

        xT   = jnp.dot(cw1T, hT, preferred_element_type=f32)               # [F, N]  conv.lin1
        xTe  = jnp.dot(xT, gat, preferred_element_type=f32)                # [F, E]  gather x_j (lane-dense)
        aggT = jnp.dot(w_t * xTe, sel, preferred_element_type=f32)         # [F, N]  message + scatter-add
        xT   = jnp.dot(cw2T, aggT, preferred_element_type=f32) \
               + vecs[:, COL_CB2 + t:COL_CB2 + t + 1]                      # [H, N]  conv.lin2
        xT   = jnp.dot(iwT, _softplus(xT), preferred_element_type=f32) \
               + vecs[:, COL_IB + t:COL_IB + t + 1]                        # interaction tail (ssp folded)
        hT   = hT + xT                                                     # residual update

    # ---- readout MLP + per-molecule "add" pooling (VPU/XLU reductions, no N=1 matmuls) ----
    ow1T = aw_ref[pl.ds(OW1_ROW, H2), :]                                   # [H2, H]
    y = jnp.dot(ow1T, hT, preferred_element_type=f32) + vecs[0:H2, COL_OB1:COL_OB1 + 1]
    y = _softplus(y) * vecs[0:H2, COL_OW2:COL_OW2 + 1]                     # [H2, N]
    y = jnp.sum(y, axis=0, keepdims=True) + vecs[0:1, COL_OB2:COL_OB2 + 1]  # per-atom energy [1, N]
    out_ref[...] = jnp.sum(mol * y, axis=1, keepdims=True)                  # per-molecule sum [M, 1]


# ---------------- wrapper: parameter packing + pallas_call ----------------
def pack_params(params, goff):
    mw1, mb1, mw2, mb2, cw1, cw2, cb2, iw, ib, ow1, ob1, ow2, ob2 = params

    # edge-filter MLP layer 1, stacked across t, transposed, bias as last column
    w1p = jnp.concatenate(
        [jnp.transpose(mw1, (0, 2, 1)).reshape(TF, GAUSS),
         jnp.transpose(mb1, (0, 2, 1)).reshape(TF, 1)], axis=1)             # [T*F, G+1]

    # edge-filter MLP layer 2: block-diagonal across t; ShiftedSoftplus -log2 folded into bias
    mb2_f = mb2 - LOG2 * jnp.sum(mw2, axis=1, keepdims=True)                # [T, 1, F]
    w2_blk = jnp.zeros((TF, TF), jnp.float32)
    for t in range(N_INTER):
        w2_blk = w2_blk.at[t * FILTERS:(t + 1) * FILTERS,
                           t * FILTERS:(t + 1) * FILTERS].set(mw2[t].T)
    w2p = jnp.concatenate(
        [w2_blk, jnp.transpose(mb2_f, (0, 2, 1)).reshape(TF, 1)], axis=1)   # [T*F, T*F+1]

    # atom-phase weights, pre-transposed so the atom state flows as [H, N] (no in-kernel transposes)
    blocks = []
    for t in range(N_INTER):
        blocks += [cw1[t].T, cw2[t].T, iw[t].T]
    blocks.append(ow1.T)
    awpack = jnp.concatenate(blocks, axis=0)                                # [N_INTER*PER_T + H2, 32]

    # all small bias/offset vectors packed into one slab
    ib_f  = ib - LOG2 * jnp.sum(iw, axis=1, keepdims=True)                  # [T, 1, H]
    ob2_f = ob2 - LOG2 * jnp.sum(ow2, axis=0, keepdims=True)                # [1, 1]
    vecs = jnp.zeros((HIDDEN, N_VEC), jnp.float32)
    for t in range(N_INTER):
        vecs = vecs.at[:, COL_CB2 + t].set(cb2[t, 0])
        vecs = vecs.at[:, COL_IB + t].set(ib_f[t, 0])
    vecs = vecs.at[:H2, COL_OB1].set(ob1[0])
    vecs = vecs.at[:H2, COL_OW2].set(ow2[:, 0])
    vecs = vecs.at[0, COL_OB2].set(ob2_f[0, 0])
    vecs = vecs.at[:GAUSS, COL_GOFF].set(goff)
    return w1p, w2p, awpack, vecs


def schnet_pallas(edge_in, npack, vecs, w1p, w2p, awpack):
    fixed2 = lambda i: (0, 0)
    grid_spec = pltpu.PrefetchScalarGridSpec(
        num_scalar_prefetch=0,
        grid=(1,),   # single step: the interaction loop is unrolled inside the kernel
        in_specs=[
            pl.BlockSpec(edge_in.shape, fixed2),   # [2, E]  dist / adjacency (E on lanes)
            pl.BlockSpec(npack.shape, fixed2),     # [H+M, N] h0ᵀ + molecule one-hot
            pl.BlockSpec(vecs.shape, fixed2),      # [H, N_VEC] packed bias/offset vectors
            pl.BlockSpec(w1p.shape, fixed2),       # [T*F, G+1] edge MLP layer 1 (stacked)
            pl.BlockSpec(w2p.shape, fixed2),       # [T*F, T*F+1] edge MLP layer 2 (block-diag)
            pl.BlockSpec(awpack.shape, fixed2),    # atom-phase weight slab
        ],
        out_specs=pl.BlockSpec((N_MOL, 1), fixed2),
    )
    # TODO(synk): for large systems, tile E on a leading "parallel" grid axis (size the per-tile
    # edge working set against v7x's 64 MiB VMEM, 2 TCs) and cast the edge-MLP MXU operands to
    # bf16 while keeping the elementwise exp/cos/softplus math fp32 (v5e has no bf16 VPU/EUP).
    return pl.pallas_call(
        schnet_kernel,
        out_shape=jax.ShapeDtypeStruct((N_MOL, 1), jnp.float32),
        grid_spec=grid_spec,
        compiler_params=pltpu.CompilerParams(dimension_semantics=("arbitrary",)),
    )(edge_in, npack, vecs, w1p, w2p, awpack)


# ---------------- pure-JAX reference (edge-list / segment_sum semantics) ----------------
def schnet_ref(z, pos, batch, emb, goff, params):
    mw1, mb1, mw2, mb2, cw1, cw2, cb2, iw, ib, ow1, ob1, ow2, ob2 = params
    h = emb[z]
    diff = pos[:, None, :] - pos[None, :, :]
    dist_mat = jnp.sqrt(jnp.sum(diff * diff, -1))
    same = batch[:, None] == batch[None, :]
    eye = jnp.eye(N_ATOMS, dtype=bool)
    adj = np.array(same & (~eye) & (dist_mat < CUTOFF))
    ii, jj = np.nonzero(adj)                      # ii = target, jj = source
    ew = dist_mat[ii, jj]
    ea = jnp.exp(COEFF * (ew[:, None] - goff[None, :]) ** 2)

    def ssp(x):
        return jax.nn.softplus(x) - LOG2

    for t in range(N_INTER):
        c = 0.5 * (jnp.cos(ew * PI / CUTOFF) + 1.0)
        W = (ssp(ea @ mw1[t] + mb1[t, 0]) @ mw2[t] + mb2[t, 0]) * c[:, None]
        x = h @ cw1[t]
        msg = x[jj] * W
        agg = jax.ops.segment_sum(msg, ii, num_segments=N_ATOMS)
        x = agg @ cw2[t] + cb2[t, 0]
        x = ssp(x)
        x = x @ iw[t] + ib[t, 0]
        h = h + x
    y = ssp(h @ ow1 + ob1[0]) @ ow2 + ob2[0]
    return jax.ops.segment_sum(y, batch, num_segments=N_MOL)


# ---------------- parameter / input construction ----------------
def xavier(key, fan_in, fan_out):
    bound = math.sqrt(6.0 / (fan_in + fan_out))
    return jax.random.uniform(key, (fan_in, fan_out), jnp.float32, -bound, bound)


if __name__ == "__main__":
    # both the kernel and the reference should use full-fp32 matmuls for a tight comparison
    jax.config.update("jax_default_matmul_precision", "highest")

    key = jax.random.PRNGKey(0)
    kit = iter(jax.random.split(key, 64))

    # Embedding(100, hidden, padding_idx=0): N(0,1) init, row 0 zeroed.
    emb = jax.random.normal(next(kit), (100, HIDDEN), jnp.float32)
    emb = emb.at[0].set(0.0)

    mw1 = jnp.stack([xavier(next(kit), GAUSS, FILTERS) for _ in range(N_INTER)])
    mb1 = jnp.zeros((N_INTER, 1, FILTERS), jnp.float32)
    mw2 = jnp.stack([xavier(next(kit), FILTERS, FILTERS) for _ in range(N_INTER)])
    mb2 = jnp.zeros((N_INTER, 1, FILTERS), jnp.float32)
    cw1 = jnp.stack([xavier(next(kit), HIDDEN, FILTERS) for _ in range(N_INTER)])
    cw2 = jnp.stack([xavier(next(kit), FILTERS, HIDDEN) for _ in range(N_INTER)])
    cb2 = jnp.zeros((N_INTER, 1, HIDDEN), jnp.float32)
    iw  = jnp.stack([xavier(next(kit), HIDDEN, HIDDEN) for _ in range(N_INTER)])
    ib  = jnp.zeros((N_INTER, 1, HIDDEN), jnp.float32)
    ow1 = xavier(next(kit), HIDDEN, H2)
    ob1 = jnp.zeros((1, H2), jnp.float32)
    ow2 = xavier(next(kit), H2, 1)
    ob2 = jnp.zeros((1, 1), jnp.float32)
    params = (mw1, mb1, mw2, mb2, cw1, cw2, cb2, iw, ib, ow1, ob1, ow2, ob2)

    # Synthetic molecule batch: atomic numbers, positions, batch vector.
    z = jax.random.randint(next(kit), (N_ATOMS,), 1, 10)
    pos = jax.random.uniform(next(kit), (N_ATOMS, 3), jnp.float32, 0.0, 3.0)
    batch = jnp.repeat(jnp.arange(N_MOL), N_ATOMS // N_MOL)
    goff = jnp.linspace(0.0, CUTOFF, GAUSS, dtype=jnp.float32)

    # ---- glue: embedding lookup + dense RadiusInteractionGraph (dist + masked adjacency) ----
    h0 = emb[z]                                               # [N, H]
    diff = pos[:, None, :] - pos[None, :, :]
    dist_mat = jnp.sqrt(jnp.sum(diff * diff, -1))             # [N, N] dense edge_weight
    same = batch[:, None] == batch[None, :]
    eye = jnp.eye(N_ATOMS, dtype=bool)
    adj = (same & (~eye) & (dist_mat < CUTOFF)).astype(jnp.float32)
    # TODO(synk): radius_graph's max_num_neighbors=32 cap is not applied
    # (molecules here are smaller than the cap so it is a no-op).
    edge_in = jnp.stack([dist_mat.reshape(E), adj.reshape(E)], axis=0)          # [2, E]
    mol_onehot = (batch[None, :] == jnp.arange(N_MOL)[:, None]).astype(jnp.float32)
    npack = jnp.concatenate([h0.T, mol_onehot], axis=0)                         # [H+M, N]

    w1p, w2p, awpack, vecs = pack_params(params, goff)

    out = schnet_pallas(edge_in, npack, vecs, w1p, w2p, awpack)
    out = jax.block_until_ready(out)

    ref = jax.block_until_ready(schnet_ref(z, pos, batch, emb, goff, params))
    np.testing.assert_allclose(np.asarray(out), np.asarray(ref), rtol=1e-4, atol=1e-4)

    print("KERNEL_OK")
</pallas_src>

<mosaic_0001>
module attributes {stable_mosaic.version = 11 : i64} {
  func.func @schnet_kernel(%arg0: i32, %arg1: memref<2x256xf32, #tpu.memory_space<vmem>>, %arg2: memref<34x16xf32, #tpu.memory_space<vmem>>, %arg3: memref<32x10xf32, #tpu.memory_space<vmem>>, %arg4: memref<96x17xf32, #tpu.memory_space<vmem>>, %arg5: memref<96x97xf32, #tpu.memory_space<vmem>>, %arg6: memref<304x32xf32, #tpu.memory_space<vmem>>, %arg7: memref<2x1xf32, #tpu.memory_space<vmem>>) attributes {dimension_semantics = [#tpu.dimension_semantics<arbitrary>], iteration_bounds = array<i64: 1>, scalar_prefetch = 0 : i64, scratch_operands = 0 : i64, tpu.core_type = #tpu.core_type<tc>, window_params = [{pipeline_mode = #tpu.pipeline_mode<synchronous>, transform_indices = @transform_0, window_bounds = array<i64: 2, 256>}, {pipeline_mode = #tpu.pipeline_mode<synchronous>, transform_indices = @transform_1, window_bounds = array<i64: 34, 16>}, {pipeline_mode = #tpu.pipeline_mode<synchronous>, transform_indices = @transform_2, window_bounds = array<i64: 32, 10>}, {pipeline_mode = #tpu.pipeline_mode<synchronous>, transform_indices = @transform_3, window_bounds = array<i64: 96, 17>}, {pipeline_mode = #tpu.pipeline_mode<synchronous>, transform_indices = @transform_4, window_bounds = array<i64: 96, 97>}, {pipeline_mode = #tpu.pipeline_mode<synchronous>, transform_indices = @transform_5, window_bounds = array<i64: 304, 32>}, {pipeline_mode = #tpu.pipeline_mode<synchronous>, transform_indices = @transform_6, window_bounds = array<i64: 2, 1>}]} {
    %c0 = arith.constant 0 : index
    %c0_0 = arith.constant 0 : index
    %0 = vector.load %arg1[%c0, %c0_0] : memref<2x256xf32, #tpu.memory_space<vmem>>, vector<2x256xf32>
    %1 = vector.extract_strided_slice %0 {offsets = [0, 0], sizes = [1, 256], strides = [1, 1]} : vector<2x256xf32> to vector<1x256xf32>
    %2 = vector.extract_strided_slice %0 {offsets = [1, 0], sizes = [1, 256], strides = [1, 1]} : vector<2x256xf32> to vector<1x256xf32>
    %c0_1 = arith.constant 0 : index
    %c0_2 = arith.constant 0 : index
    %3 = vector.load %arg3[%c0_1, %c0_2] : memref<32x10xf32, #tpu.memory_space<vmem>>, vector<32x10xf32>
    %c0_3 = arith.constant 0 : index
    %c0_4 = arith.constant 0 : index
    %4 = vector.load %arg2[%c0_3, %c0_4] : memref<34x16xf32, #tpu.memory_space<vmem>>, vector<34x16xf32>
    %5 = vector.extract_strided_slice %4 {offsets = [0, 0], sizes = [32, 16], strides = [1, 1]} : vector<34x16xf32> to vector<32x16xf32>
    %6 = vector.extract_strided_slice %4 {offsets = [32, 0], sizes = [2, 16], strides = [1, 1]} : vector<34x16xf32> to vector<2x16xf32>
    %7 = vector.extract_strided_slice %3 {offsets = [0, 9], sizes = [16, 1], strides = [1, 1]} : vector<32x10xf32> to vector<16x1xf32>
    %8 = vector.broadcast %1 : vector<1x256xf32> to vector<16x256xf32>
    %9 = vector.broadcast %7 : vector<16x1xf32> to vector<16x256xf32>
    %10 = arith.subf %8, %9 : vector<16x256xf32>
    %cst = arith.constant -1.125000e+00 : f32
    %11 = vector.broadcast %cst : f32 to vector<16x256xf32>
    %12 = arith.mulf %11, %10 : vector<16x256xf32>
    %13 = arith.mulf %12, %10 : vector<16x256xf32>
    %14 = math.exp %13 : vector<16x256xf32>
    %c0_5 = arith.constant 0 : index
    %c0_6 = arith.constant 0 : index
    %15 = vector.load %arg4[%c0_5, %c0_6] : memref<96x17xf32, #tpu.memory_space<vmem>>, vector<96x17xf32>
    %16 = vector.extract_strided_slice %15 {offsets = [0, 0], sizes = [96, 16], strides = [1, 1]} : vector<96x17xf32> to vector<96x16xf32>
    %cst_7 = arith.constant dense<0.000000e+00> : vector<96x256xf32>
    %17 = tpu.matmul %16, %14, %cst_7 {dimension_numbers = #tpu.dot_dimension_numbers<[1], [0], [0], [1], [0, 0, 1, 1], [], []>, precision = #tpu.contract_precision<fp32>} : vector<96x16xf32>, vector<16x256xf32>, vector<96x256xf32> -> vector<96x256xf32>
    %18 = vector.extract_strided_slice %15 {offsets = [0, 16], sizes = [96, 1], strides = [1, 1]} : vector<96x17xf32> to vector<96x1xf32>
    %19 = vector.broadcast %18 : vector<96x1xf32> to vector<96x256xf32>
    %20 = arith.addf %17, %19 : vector<96x256xf32>
    %c0_8 = arith.constant 0 : index
    %c0_9 = arith.constant 0 : index
    %21 = vector.load %arg5[%c0_8, %c0_9] : memref<96x97xf32, #tpu.memory_space<vmem>>, vector<96x97xf32>
    %22 = vector.extract_strided_slice %21 {offsets = [0, 0], sizes = [96, 96], strides = [1, 1]} : vector<96x97xf32> to vector<96x96xf32>
    %cst_10 = arith.constant 0.000000e+00 : f32
    %23 = vector.broadcast %cst_10 : f32 to vector<96x256xf32>
    %24 = arith.maximumf %20, %23 : vector<96x256xf32>
    %25 = math.absf %20 : vector<96x256xf32>
    %cst_11 = arith.constant 0.000000e+00 : f32
    %26 = vector.broadcast %cst_11 : f32 to vector<96x256xf32>
    %27 = arith.subf %26, %25 : vector<96x256xf32>
    %28 = math.exp %27 : vector<96x256xf32>
    %29 = math.log1p %28 : vector<96x256xf32>
    %30 = arith.addf %24, %29 : vector<96x256xf32>
    %cst_12 = arith.constant dense<0.000000e+00> : vector<96x256xf32>
    %31 = tpu.matmul %22, %30, %cst_12 {dimension_numbers = #tpu.dot_dimension_numbers<[1], [0], [0], [1], [0, 0, 1, 1], [], []>, precision = #tpu.contract_precision<fp32>} : vector<96x96xf32>, vector<96x256xf32>, vector<96x256xf32> -> vector<96x256xf32>
    %32 = vector.extract_strided_slice %21 {offsets = [0, 96], sizes = [96, 1], strides = [1, 1]} : vector<96x97xf32> to vector<96x1xf32>
    %33 = vector.broadcast %32 : vector<96x1xf32> to vector<96x256xf32>
    %34 = arith.addf %31, %33 : vector<96x256xf32>
    %cst_13 = arith.constant 0.314159274 : f32
    %35 = vector.broadcast %cst_13 : f32 to vector<1x256xf32>
    %36 = arith.mulf %1, %35 : vector<1x256xf32>
    %37 = math.cos %36 : vector<1x256xf32>
    %cst_14 = arith.constant 1.000000e+00 : f32
    %38 = vector.broadcast %cst_14 : f32 to vector<1x256xf32>
    %39 = arith.addf %37, %38 : vector<1x256xf32>
    %cst_15 = arith.constant 5.000000e-01 : f32
    %40 = vector.broadcast %cst_15 : f32 to vector<1x256xf32>
    %41 = arith.mulf %40, %39 : vector<1x256xf32>
    %42 = arith.mulf %41, %2 : vector<1x256xf32>
    %43 = vector.broadcast %42 : vector<1x256xf32> to vector<96x256xf32>
    %44 = arith.mulf %34, %43 : vector<96x256xf32>
    %45 = tpu.iota {dimensions = array<i32: 0>} : vector<256x16xi32>
    %46 = tpu.iota {dimensions = array<i32: 1>} : vector<256x16xi32>
    %c4_i32 = arith.constant 4 : i32
    %47 = vector.broadcast %c4_i32 : i32 to vector<256x16xi32>
    %48 = arith.shrsi %45, %47 : vector<256x16xi32>
    %49 = arith.cmpi eq, %48, %46 : vector<256x16xi32>
    %50 = arith.extui %49 : vector<256x16xi1> to vector<256x16xi32>
    %51 = arith.sitofp %50 : vector<256x16xi32> to vector<256x16xf32>
    %52 = tpu.iota {dimensions = array<i32: 0>} : vector<16x256xi32>
    %53 = tpu.iota {dimensions = array<i32: 1>} : vector<16x256xi32>
    %c15_i32 = arith.constant 15 : i32
    %54 = vector.broadcast %c15_i32 : i32 to vector<16x256xi32>
    %55 = arith.andi %53, %54 : vector<16x256xi32>
    %56 = arith.cmpi eq, %55, %52 : vector<16x256xi32>
    %57 = arith.extui %56 : vector<16x256xi1> to vector<16x256xi32>
    %58 = arith.sitofp %57 : vector<16x256xi32> to vector<16x256xf32>
    %c0_16 = arith.constant 0 : index
    %c0_17 = arith.constant 0 : index
    %59 = vector.load %arg6[%c0_16, %c0_17] : memref<304x32xf32, #tpu.memory_space<vmem>>, vector<32x32xf32>
    %c32 = arith.constant 32 : index
    %c0_18 = arith.constant 0 : index
    %60 = vector.load %arg6[%c32, %c0_18] : memref<304x32xf32, #tpu.memory_space<vmem>>, vector<32x32xf32>
    %c64 = arith.constant 64 : index
    %c0_19 = arith.constant 0 : index
    %61 = vector.load %arg6[%c64, %c0_19] : memref<304x32xf32, #tpu.memory_space<vmem>>, vector<32x32xf32>
    %62 = vector.extract_strided_slice %44 {offsets = [0, 0], sizes = [32, 256], strides = [1, 1]} : vector<96x256xf32> to vector<32x256xf32>
    %cst_20 = arith.constant dense<0.000000e+00> : vector<32x16xf32>
    %63 = tpu.matmul %59, %5, %cst_20 {dimension_numbers = #tpu.dot_dimension_numbers<[1], [0], [0], [1], [0, 0, 1, 1], [], []>, precision = #tpu.contract_precision<fp32>} : vector<32x32xf32>, vector<32x16xf32>, vector<32x16xf32> -> vector<32x16xf32>
    %cst_21 = arith.constant dense<0.000000e+00> : vector<32x256xf32>
    %64 = tpu.matmul %63, %58, %cst_21 {dimension_numbers = #tpu.dot_dimension_numbers<[1], [0], [0], [1], [0, 0, 1, 1], [], []>, precision = #tpu.contract_precision<fp32>} : vector<32x16xf32>, vector<16x256xf32>, vector<32x256xf32> -> vector<32x256xf32>
    %65 = arith.mulf %62, %64 : vector<32x256xf32>
    %cst_22 = arith.constant dense<0.000000e+00> : vector<32x16xf32>
    %66 = tpu.matmul %65, %51, %cst_22 {dimension_numbers = #tpu.dot_dimension_numbers<[1], [0], [0], [1], [0, 0, 1, 1], [], []>, precision = #tpu.contract_precision<fp32>} : vector<32x256xf32>, vector<256x16xf32>, vector<32x16xf32> -> vector<32x16xf32>
    %cst_23 = arith.constant dense<0.000000e+00> : vector<32x16xf32>
    %67 = tpu.matmul %60, %66, %cst_23 {dimension_numbers = #tpu.dot_dimension_numbers<[1], [0], [0], [1], [0, 0, 1, 1], [], []>, precision = #tpu.contract_precision<fp32>} : vector<32x32xf32>, vector<32x16xf32>, vector<32x16xf32> -> vector<32x16xf32>
    %68 = vector.extract_strided_slice %3 {offsets = [0, 0], sizes = [32, 1], strides = [1, 1]} : vector<32x10xf32> to vector<32x1xf32>
    %69 = vector.broadcast %68 : vector<32x1xf32> to vector<32x16xf32>
    %70 = arith.addf %67, %69 : vector<32x16xf32>
    %cst_24 = arith.constant 0.000000e+00 : f32
    %71 = vector.broadcast %cst_24 : f32 to vector<32x16xf32>
    %72 = arith.maximumf %70, %71 : vector<32x16xf32>
    %73 = math.absf %70 : vector<32x16xf32>
    %cst_25 = arith.constant 0.000000e+00 : f32
    %74 = vector.broadcast %cst_25 : f32 to vector<32x16xf32>
    %75 = arith.subf %74, %73 : vector<32x16xf32>
    %76 = math.exp %75 : vector<32x16xf32>
    %77 = math.log1p %76 : vector<32x16xf32>
    %78 = arith.addf %72, %77 : vector<32x16xf32>
    %cst_26 = arith.constant dense<0.000000e+00> : vector<32x16xf32>
    %79 = tpu.matmul %61, %78, %cst_26 {dimension_numbers = #tpu.dot_dimension_numbers<[1], [0], [0], [1], [0, 0, 1, 1], [], []>, precision = #tpu.contract_precision<fp32>} : vector<32x32xf32>, vector<32x16xf32>, vector<32x16xf32> -> vector<32x16xf32>
    %80 = vector.extract_strided_slice %3 {offsets = [0, 3], sizes = [32, 1], strides = [1, 1]} : vector<32x10xf32> to vector<32x1xf32>
    %81 = vector.broadcast %80 : vector<32x1xf32> to vector<32x16xf32>
    %82 = arith.addf %79, %81 : vector<32x16xf32>
    %83 = arith.addf %5, %82 : vector<32x16xf32>
    %c96 = arith.constant 96 : index
    %c0_27 = arith.constant 0 : index
    %84 = vector.load %arg6[%c96, %c0_27] : memref<304x32xf32, #tpu.memory_space<vmem>>, vector<32x32xf32>
    %c128 = arith.constant 128 : index
    %c0_28 = arith.constant 0 : index
    %85 = vector.load %arg6[%c128, %c0_28] : memref<304x32xf32, #tpu.memory_space<vmem>>, vector<32x32xf32>
    %c160 = arith.constant 160 : index
    %c0_29 = arith.constant 0 : index
    %86 = vector.load %arg6[%c160, %c0_29] : memref<304x32xf32, #tpu.memory_space<vmem>>, vector<32x32xf32>
    %87 = vector.extract_strided_slice %44 {offsets = [32, 0], sizes = [32, 256], strides = [1, 1]} : vector<96x256xf32> to vector<32x256xf32>
    %cst_30 = arith.constant dense<0.000000e+00> : vector<32x16xf32>
    %88 = tpu.matmul %84, %83, %cst_30 {dimension_numbers = #tpu.dot_dimension_numbers<[1], [0], [0], [1], [0, 0, 1, 1], [], []>, precision = #tpu.contract_precision<fp32>} : vector<32x32xf32>, vector<32x16xf32>, vector<32x16xf32> -> vector<32x16xf32>
    %cst_31 = arith.constant dense<0.000000e+00> : vector<32x256xf32>
    %89 = tpu.matmul %88, %58, %cst_31 {dimension_numbers = #tpu.dot_dimension_numbers<[1], [0], [0], [1], [0, 0, 1, 1], [], []>, precision = #tpu.contract_precision<fp32>} : vector<32x16xf32>, vector<16x256xf32>, vector<32x256xf32> -> vector<32x256xf32>
    %90 = arith.mulf %87, %89 : vector<32x256xf32>
    %cst_32 = arith.constant dense<0.000000e+00> : vector<32x16xf32>
    %91 = tpu.matmul %90, %51, %cst_32 {dimension_numbers = #tpu.dot_dimension_numbers<[1], [0], [0], [1], [0, 0, 1, 1], [], []>, precision = #tpu.contract_precision<fp32>} : vector<32x256xf32>, vector<256x16xf32>, vector<32x16xf32> -> vector<32x16xf32>
    %cst_33 = arith.constant dense<0.000000e+00> : vector<32x16xf32>
    %92 = tpu.matmul %85, %91, %cst_33 {dimension_numbers = #tpu.dot_dimension_numbers<[1], [0], [0], [1], [0, 0, 1, 1], [], []>, precision = #tpu.contract_precision<fp32>} : vector<32x32xf32>, vector<32x16xf32>, vector<32x16xf32> -> vector<32x16xf32>
    %93 = vector.extract_strided_slice %3 {offsets = [0, 1], sizes = [32, 1], strides = [1, 1]} : vector<32x10xf32> to vector<32x1xf32>
    %94 = vector.broadcast %93 : vector<32x1xf32> to vector<32x16xf32>
    %95 = arith.addf %92, %94 : vector<32x16xf32>
    %cst_34 = arith.constant 0.000000e+00 : f32
    %96 = vector.broadcast %cst_34 : f32 to vector<32x16xf32>
    %97 = arith.maximumf %95, %96 : vector<32x16xf32>
    %98 = math.absf %95 : vector<32x16xf32>
    %cst_35 = arith.constant 0.000000e+00 : f32
    %99 = vector.broadcast %cst_35 : f32 to vector<32x16xf32>
    %100 = arith.subf %99, %98 : vector<32x16xf32>
    %101 = math.exp %100 : vector<32x16xf32>
    %102 = math.log1p %101 : vector<32x16xf32>
    %103 = arith.addf %97, %102 : vector<32x16xf32>
    %cst_36 = arith.constant dense<0.000000e+00> : vector<32x16xf32>
    %104 = tpu.matmul %86, %103, %cst_36 {dimension_numbers = #tpu.dot_dimension_numbers<[1], [0], [0], [1], [0, 0, 1, 1], [], []>, precision = #tpu.contract_precision<fp32>} : vector<32x32xf32>, vector<32x16xf32>, vector<32x16xf32> -> vector<32x16xf32>
    %105 = vector.extract_strided_slice %3 {offsets = [0, 4], sizes = [32, 1], strides = [1, 1]} : vector<32x10xf32> to vector<32x1xf32>
    %106 = vector.broadcast %105 : vector<32x1xf32> to vector<32x16xf32>
    %107 = arith.addf %104, %106 : vector<32x16xf32>
    %108 = arith.addf %83, %107 : vector<32x16xf32>
    %c192 = arith.constant 192 : index
    %c0_37 = arith.constant 0 : index
    %109 = vector.load %arg6[%c192, %c0_37] : memref<304x32xf32, #tpu.memory_space<vmem>>, vector<32x32xf32>
    %c224 = arith.constant 224 : index
    %c0_38 = arith.constant 0 : index
    %110 = vector.load %arg6[%c224, %c0_38] : memref<304x32xf32, #tpu.memory_space<vmem>>, vector<32x32xf32>
    %c256 = arith.constant 256 : index
    %c0_39 = arith.constant 0 : index
    %111 = vector.load %arg6[%c256, %c0_39] : memref<304x32xf32, #tpu.memory_space<vmem>>, vector<32x32xf32>
    %112 = vector.extract_strided_slice %44 {offsets = [64, 0], sizes = [32, 256], strides = [1, 1]} : vector<96x256xf32> to vector<32x256xf32>
    %cst_40 = arith.constant dense<0.000000e+00> : vector<32x16xf32>
    %113 = tpu.matmul %109, %108, %cst_40 {dimension_numbers = #tpu.dot_dimension_numbers<[1], [0], [0], [1], [0, 0, 1, 1], [], []>, precision = #tpu.contract_precision<fp32>} : vector<32x32xf32>, vector<32x16xf32>, vector<32x16xf32> -> vector<32x16xf32>
    %cst_41 = arith.constant dense<0.000000e+00> : vector<32x256xf32>
    %114 = tpu.matmul %113, %58, %cst_41 {dimension_numbers = #tpu.dot_dimension_numbers<[1], [0], [0], [1], [0, 0, 1, 1], [], []>, precision = #tpu.contract_precision<fp32>} : vector<32x16xf32>, vector<16x256xf32>, vector<32x256xf32> -> vector<32x256xf32>
    %115 = arith.mulf %112, %114 : vector<32x256xf32>
    %cst_42 = arith.constant dense<0.000000e+00> : vector<32x16xf32>
    %116 = tpu.matmul %115, %51, %cst_42 {dimension_numbers = #tpu.dot_dimension_numbers<[1], [0], [0], [1], [0, 0, 1, 1], [], []>, precision = #tpu.contract_precision<fp32>} : vector<32x256xf32>, vector<256x16xf32>, vector<32x16xf32> -> vector<32x16xf32>
    %cst_43 = arith.constant dense<0.000000e+00> : vector<32x16xf32>
    %117 = tpu.matmul %110, %116, %cst_43 {dimension_numbers = #tpu.dot_dimension_numbers<[1], [0], [0], [1], [0, 0, 1, 1], [], []>, precision = #tpu.contract_precision<fp32>} : vector<32x32xf32>, vector<32x16xf32>, vector<32x16xf32> -> vector<32x16xf32>
    %118 = vector.extract_strided_slice %3 {offsets = [0, 2], sizes = [32, 1], strides = [1, 1]} : vector<32x10xf32> to vector<32x1xf32>
    %119 = vector.broadcast %118 : vector<32x1xf32> to vector<32x16xf32>
    %120 = arith.addf %117, %119 : vector<32x16xf32>
    %cst_44 = arith.constant 0.000000e+00 : f32
    %121 = vector.broadcast %cst_44 : f32 to vector<32x16xf32>
    %122 = arith.maximumf %120, %121 : vector<32x16xf32>
    %123 = math.absf %120 : vector<32x16xf32>
    %cst_45 = arith.constant 0.000000e+00 : f32
    %124 = vector.broadcast %cst_45 : f32 to vector<32x16xf32>
    %125 = arith.subf %124, %123 : vector<32x16xf32>
    %126 = math.exp %125 : vector<32x16xf32>
    %127 = math.log1p %126 : vector<32x16xf32>
    %128 = arith.addf %122, %127 : vector<32x16xf32>
    %cst_46 = arith.constant dense<0.000000e+00> : vector<32x16xf32>
    %129 = tpu.matmul %111, %128, %cst_46 {dimension_numbers = #tpu.dot_dimension_numbers<[1], [0], [0], [1], [0, 0, 1, 1], [], []>, precision = #tpu.contract_precision<fp32>} : vector<32x32xf32>, vector<32x16xf32>, vector<32x16xf32> -> vector<32x16xf32>
    %130 = vector.extract_strided_slice %3 {offsets = [0, 5], sizes = [32, 1], strides = [1, 1]} : vector<32x10xf32> to vector<32x1xf32>
    %131 = vector.broadcast %130 : vector<32x1xf32> to vector<32x16xf32>
    %132 = arith.addf %129, %131 : vector<32x16xf32>
    %133 = arith.addf %108, %132 : vector<32x16xf32>
    %c288 = arith.constant 288 : index
    %c0_47 = arith.constant 0 : index
    %134 = vector.load %arg6[%c288, %c0_47] : memref<304x32xf32, #tpu.memory_space<vmem>>, vector<16x32xf32>
    %cst_48 = arith.constant dense<0.000000e+00> : vector<16x16xf32>
    %135 = tpu.matmul %134, %133, %cst_48 {dimension_numbers = #tpu.dot_dimension_numbers<[1], [0], [0], [1], [0, 0, 1, 1], [], []>, precision = #tpu.contract_precision<fp32>} : vector<16x32xf32>, vector<32x16xf32>, vector<16x16xf32> -> vector<16x16xf32>
    %136 = vector.extract_strided_slice %3 {offsets = [0, 6], sizes = [16, 1], strides = [1, 1]} : vector<32x10xf32> to vector<16x1xf32>
    %137 = vector.broadcast %136 : vector<16x1xf32> to vector<16x16xf32>
    %138 = arith.addf %135, %137 : vector<16x16xf32>
    %cst_49 = arith.constant 0.000000e+00 : f32
    %139 = vector.broadcast %cst_49 : f32 to vector<16x16xf32>
    %140 = arith.maximumf %138, %139 : vector<16x16xf32>
    %141 = math.absf %138 : vector<16x16xf32>
    %cst_50 = arith.constant 0.000000e+00 : f32
    %142 = vector.broadcast %cst_50 : f32 to vector<16x16xf32>
    %143 = arith.subf %142, %141 : vector<16x16xf32>
    %144 = math.exp %143 : vector<16x16xf32>
    %145 = math.log1p %144 : vector<16x16xf32>
    %146 = arith.addf %140, %145 : vector<16x16xf32>
    %147 = vector.extract_strided_slice %3 {offsets = [0, 7], sizes = [16, 1], strides = [1, 1]} : vector<32x10xf32> to vector<16x1xf32>
    %148 = vector.broadcast %147 : vector<16x1xf32> to vector<16x16xf32>
    %149 = arith.mulf %146, %148 : vector<16x16xf32>
    %cst_51 = arith.constant dense<0.000000e+00> : vector<16xf32>
    %150 = vector.multi_reduction <add>, %149, %cst_51 [0] : vector<16x16xf32> to vector<16xf32>
    %151 = vector.shape_cast %150 : vector<16xf32> to vector<1x16xf32>
    %152 = vector.extract_strided_slice %3 {offsets = [0, 8], sizes = [1, 1], strides = [1, 1]} : vector<32x10xf32> to vector<1x1xf32>
    %153 = vector.broadcast %152 : vector<1x1xf32> to vector<1x16xf32>
    %154 = arith.addf %151, %153 : vector<1x16xf32>
    %155 = vector.broadcast %154 : vector<1x16xf32> to vector<2x16xf32>
    %156 = arith.mulf %6, %155 : vector<2x16xf32>
    %cst_52 = arith.constant dense<0.000000e+00> : vector<2xf32>
    %157 = vector.multi_reduction <add>, %156, %cst_52 [1] : vector<2x16xf32> to vector<2xf32>
    %158 = vector.shape_cast %157 : vector<2xf32> to vector<2x1xf32>
    %c0_53 = arith.constant 0 : index
    %c0_54 = arith.constant 0 : index
    %159 = vector.load %arg7[%c0_53, %c0_54] : memref<2x1xf32, #tpu.memory_space<vmem>>, vector<2x1xf32>
    tpu.vector_store %arg7[%c0_53, %c0_54], %158 {strides = array<i32>} : memref<2x1xf32, #tpu.memory_space<vmem>>, vector<2x1xf32>,
    return
  }
  func.func @transform_0(%arg0: i32) -> (i32, i32) {
    %c0_i32 = arith.constant 0 : i32
    %c0_i32_0 = arith.constant 0 : i32
    %c0_i32_1 = arith.constant 0 : i32
    return %c0_i32, %c0_i32_0 : i32, i32
  }
  func.func @transform_1(%arg0: i32) -> (i32, i32) {
    %c0_i32 = arith.constant 0 : i32
    %c0_i32_0 = arith.constant 0 : i32
    %c0_i32_1 = arith.constant 0 : i32
    return %c0_i32, %c0_i32_0 : i32, i32
  }
  func.func @transform_2(%arg0: i32) -> (i32, i32) {
    %c0_i32 = arith.constant 0 : i32
    %c0_i32_0 = arith.constant 0 : i32
    %c0_i32_1 = arith.constant 0 : i32
    return %c0_i32, %c0_i32_0 : i32, i32
  }
  func.func @transform_3(%arg0: i32) -> (i32, i32) {
    %c0_i32 = arith.constant 0 : i32
    %c0_i32_0 = arith.constant 0 : i32
    %c0_i32_1 = arith.constant 0 : i32
    return %c0_i32, %c0_i32_0 : i32, i32
  }
  func.func @transform_4(%arg0: i32) -> (i32, i32) {
    %c0_i32 = arith.constant 0 : i32
    %c0_i32_0 = arith.constant 0 : i32
    %c0_i32_1 = arith.constant 0 : i32
    return %c0_i32, %c0_i32_0 : i32, i32
  }
  func.func @transform_5(%arg0: i32) -> (i32, i32) {
    %c0_i32 = arith.constant 0 : i32
    %c0_i32_0 = arith.constant 0 : i32
    %c0_i32_1 = arith.constant 0 : i32
    return %c0_i32, %c0_i32_0 : i32, i32
  }
  func.func @transform_6(%arg0: i32) -> (i32, i32) {
    %c0_i32 = arith.constant 0 : i32
    %c0_i32_0 = arith.constant 0 : i32
    %c0_i32_1 = arith.constant 0 : i32
    return %c0_i32, %c0_i32_0 : i32, i32
  }
}

</mosaic_0001>

<llo_original>
// kernel: tpu_custom_call.1
$region0: #{tpu_custom_call.1}
  #allocation0 [shape = 'u32[]', space=smem, size = 0x4, offset = 0x4, fixed_abs, tag = 'smem constant byte address 0x4 - core index']
  #allocation1 [shape = 'u32[72,128]{1,0:T(1,128)}', space=vmem, size = 0x9000, scoped, tag = 'internal scratch']
  %s0 = inlined_call_operand.vmem [shape: f32[2,256], index: 0, kind: input, shape index: {}]
  %s1 = inlined_call_operand.vmem [shape: f32[34,16], index: 1, kind: input, shape index: {}]
  %s2 = inlined_call_operand.vmem [shape: f32[32,10], index: 2, kind: input, shape index: {}]
  %s3 = inlined_call_operand.vmem [shape: f32[96,17], index: 3, kind: input, shape index: {}]
  %s4 = inlined_call_operand.vmem [shape: f32[96,97], index: 4, kind: input, shape index: {}]
  %s5 = inlined_call_operand.vmem [shape: f32[304,32], index: 5, kind: input, shape index: {}]
  %s6 = inlined_call_operand.vmem [shape: f32[2,1], index: 6, kind: output, shape index: {}]
  %s7 = sld [smem:[#allocation0]]
  $region34: #{tpu_custom_call.1} parent=0
    _
  %s9 = ssub.s32 1, %s7
  %s10 = scalar_select 0, %s9, %s7
  // Predicated region
  $region2: #{tpu_custom_call.1} parent=0 // pred_check
    _
  $region3: #{tpu_custom_call.1} parent=0 // pred_check_branch
    %12 = sbr.rel (0) target = $region5
  $region4: #{tpu_custom_call.1} parent=0 // pred_region
    _
  $region5: #{tpu_custom_call.1} parent=0 // pred_fallthru
    _
  // Predicated region
  $region6: #{tpu_custom_call.1} parent=0 // pred_check
    _
  $region7: #{tpu_custom_call.1} parent=0 // pred_check_branch
    %14 = sbr.rel (0) target = $region9
  $region8: #{tpu_custom_call.1} parent=0 // pred_region
    _
  $region9: #{tpu_custom_call.1} parent=0 // pred_fallthru
    _
  // Predicated region
  $region10: #{tpu_custom_call.1} parent=0 // pred_check
    _
  $region11: #{tpu_custom_call.1} parent=0 // pred_check_branch
    %16 = sbr.rel (0) target = $region13
  $region12: #{tpu_custom_call.1} parent=0 // pred_region
    _
  $region13: #{tpu_custom_call.1} parent=0 // pred_fallthru
    _
  // Predicated region
  $region14: #{tpu_custom_call.1} parent=0 // pred_check
    _
  $region15: #{tpu_custom_call.1} parent=0 // pred_check_branch
    %18 = sbr.rel (0) target = $region17
  $region16: #{tpu_custom_call.1} parent=0 // pred_region
    _
  $region17: #{tpu_custom_call.1} parent=0 // pred_fallthru
    _
  // Predicated region
  $region18: #{tpu_custom_call.1} parent=0 // pred_check
    _
  $region19: #{tpu_custom_call.1} parent=0 // pred_check_branch
    %20 = sbr.rel (0) target = $region21
  $region20: #{tpu_custom_call.1} parent=0 // pred_region
    _
  $region21: #{tpu_custom_call.1} parent=0 // pred_fallthru
    _
  // Predicated region
  $region22: #{tpu_custom_call.1} parent=0 // pred_check
    _
  $region23: #{tpu_custom_call.1} parent=0 // pred_check_branch
    %22 = sbr.rel (0) target = $region25
  $region24: #{tpu_custom_call.1} parent=0 // pred_region
    _
  $region25: #{tpu_custom_call.1} parent=0 // pred_fallthru
    _
  %v23 = vld [vmem:[%s0] sm:$0xf]
  %v24 = vld [vmem:[%s2] sm:$0xff]
  %v25 = vld [vmem:[%s2 + $0x8] sm:$0xff]
  %v26 = vld [vmem:[%s2 + $0x10] sm:$0xff]
  %v27 = vld [vmem:[%s2 + $0x18] sm:$0xff]
  %v28 = vld [vmem:[%s1] sm:$0xff]
  %v29 = vld [vmem:[%s1 + $0x8] sm:$0xff]
  %v30 = vld [vmem:[%s1 + $0x10] sm:$0xff]
  %v31 = vld [vmem:[%s1 + $0x18] sm:$0xff]
  %v32 = vld [vmem:[%s1 + $0x20] sm:$0x3]
  %v34 = vperm.slane %v23, 0
  %v35 = vperm.slane %v23, 2
  %v38 = vperm.slane %v34, 0
  %v39 = vperm.slane %v35, 0
  %41 = vset.pattern.permute.xlu0 9
  %42 = vperm.xlu0 %41, %v24
  %v43 = vpop.permute.xlu0 %42
  %46 = vset.pattern.permute.xlu0 9
  %47 = vperm.xlu0 %46, %v25
  %v48 = vpop.permute.xlu0 %47
  %v50 = vsub.f32 %v38, %v43
  %v51 = vsub.f32 %v39, %v43
  %v52 = vsub.f32 %v38, %v48
  %v53 = vsub.f32 %v39, %v48
  %v54 = vmul.f32 %v50, -1.125
  %v55 = vmul.f32 %v51, -1.125
  %v56 = vmul.f32 %v52, -1.125
  %v57 = vmul.f32 %v53, -1.125
  %v58 = vmul.f32 %v54, %v50
  %v59 = vmul.f32 %v55, %v51
  %v60 = vmul.f32 %v56, %v52
  %v61 = vmul.f32 %v57, %v53
  %v62 = vmul.f32 %v58, 1.442695
  %v63 = vpow.pop %v62
  %v64 = vmul.f32 %v59, 1.442695
  %v65 = vpow.pop %v64
  %v66 = vmul.f32 %v60, 1.442695
  %v67 = vpow.pop %v66
  %v68 = vmul.f32 %v61, 1.442695
  %v69 = vpow.pop %v68
  %v70 = vld [vmem:[%s3] sm:$0xff]
  %v71 = vld [vmem:[%s3 + $0x8] sm:$0xff]
  %v72 = vld [vmem:[%s3 + $0x10] sm:$0xff]
  %v73 = vld [vmem:[%s3 + $0x18] sm:$0xff]
  %v74 = vld [vmem:[%s3 + $0x20] sm:$0xff]
  %v75 = vld [vmem:[%s3 + $0x28] sm:$0xff]
  %v76 = vld [vmem:[%s3 + $0x30] sm:$0xff]
  %v77 = vld [vmem:[%s3 + $0x38] sm:$0xff]
  %v78 = vld [vmem:[%s3 + $0x40] sm:$0xff]
  %v79 = vld [vmem:[%s3 + $0x48] sm:$0xff]
  %v80 = vld [vmem:[%s3 + $0x50] sm:$0xff]
  %v81 = vld [vmem:[%s3 + $0x58] sm:$0xff]
  %83 = vset.pattern.permute.xlu0 16
  %84 = vperm.xlu0 %83, %v70
  %v85 = vpop.permute.xlu0 %84
  %88 = vset.pattern.permute.xlu0 16
  %89 = vperm.xlu0 %88, %v71
  %v90 = vpop.permute.xlu0 %89
  %93 = vset.pattern.permute.xlu0 16
  %94 = vperm.xlu0 %93, %v72
  %v95 = vpop.permute.xlu0 %94
  %98 = vset.pattern.permute.xlu0 16
  %99 = vperm.xlu0 %98, %v73
  %v100 = vpop.permute.xlu0 %99
  %103 = vset.pattern.permute.xlu0 16
  %104 = vperm.xlu0 %103, %v74
  %v105 = vpop.permute.xlu0 %104
  %108 = vset.pattern.permute.xlu0 16
  %109 = vperm.xlu0 %108, %v75
  %v110 = vpop.permute.xlu0 %109
  %113 = vset.pattern.permute.xlu0 16
  %114 = vperm.xlu0 %113, %v76
  %v115 = vpop.permute.xlu0 %114
  %118 = vset.pattern.permute.xlu0 16
  %119 = vperm.xlu0 %118, %v77
  %v120 = vpop.permute.xlu0 %119
  %123 = vset.pattern.permute.xlu0 16
  %124 = vperm.xlu0 %123, %v78
  %v125 = vpop.permute.xlu0 %124
  %128 = vset.pattern.permute.xlu0 16
  %129 = vperm.xlu0 %128, %v79
  %v130 = vpop.permute.xlu0 %129
  %133 = vset.pattern.permute.xlu0 16
  %134 = vperm.xlu0 %133, %v80
  %v135 = vpop.permute.xlu0 %134
  %138 = vset.pattern.permute.xlu0 16
  %139 = vperm.xlu0 %138, %v81
  %v140 = vpop.permute.xlu0 %139
  %vm142 = vcmask 130048
  %v143 = vsel %vm142, %v70, 0
  %v145 = vsel %vm142, %v71, 0
  %v147 = vsel %vm142, %v72, 0
  %v149 = vsel %vm142, %v73, 0
  %v151 = vsel %vm142, %v74, 0
  %v153 = vsel %vm142, %v75, 0
  %v155 = vsel %vm142, %v76, 0
  %v157 = vsel %vm142, %v77, 0
  %v159 = vsel %vm142, %v78, 0
  %v161 = vsel %vm142, %v79, 0
  %v163 = vsel %vm142, %v80, 0
  %v165 = vsel %vm142, %v81, 0
  %167 = vmatpush.msra.mxu0 0.0
  %168 = vmatpush.msra.mxu0 0.0
  %169 = vmatpush.msra.mxu0 0.0
  %170 = vmatpush.msra.mxu0 0.0
  %171 = vmatpush.msra.mxu0 0.0
  %172 = vmatpush.msra.mxu0 0.0
  %173 = vmatpush.msra.mxu0 0.0
  %174 = vmatpush.msra.mxu0 0.0
  %175 = vmatpush.msra.mxu0 0.0
  %176 = vmatpush.msra.mxu0 0.0
  %177 = vmatpush.msra.mxu0 0.0
  %178 = vmatpush.msra.mxu0 0.0
  %179 = vmatpush.msra.mxu0 0.0
  %180 = vmatpush.msra.mxu0 0.0
  %v181 = vand.u32 %v67, 4294901760
  %182 = vmatpush.msra.mxu0 %v181
  %v183 = vand.u32 %v63, 4294901760
  %184 = vmatpush.msra.mxu0 %v183
  %v185 = vand.u32 %v143, 4294901760
  %v186 = vsub.f32 %v143, %v185
  %v187 = vand.u32 %v186, 4294901760
  %v188 = vsub.f32 %v186, %v187
  %v189 = vand.u32 %v188, 4294901760
  %190 = vmatmul.f32.gmra.mxu0 %v189
  %v191 = vpop.f32.mrf.mxu0
  %v192 = vadd.f32 %v85, %v191
  %v193 = vand.u32 %v145, 4294901760
  %v194 = vsub.f32 %v145, %v193
  %v195 = vand.u32 %v194, 4294901760
  %v196 = vsub.f32 %v194, %v195
  %v197 = vand.u32 %v196, 4294901760
  %198 = vmatmul.f32.gmra.mxu0 %v197
  %v199 = vpop.f32.mrf.mxu0
  %v200 = vadd.f32 %v90, %v199
  %v201 = vand.u32 %v147, 4294901760
  %v202 = vsub.f32 %v147, %v201
  %v203 = vand.u32 %v202, 4294901760
  %v204 = vsub.f32 %v202, %v203
  %v205 = vand.u32 %v204, 4294901760
  %206 = vmatmul.f32.gmra.mxu0 %v205
  %v207 = vpop.f32.mrf.mxu0
  %v208 = vadd.f32 %v95, %v207
  %v209 = vand.u32 %v149, 4294901760
  %v210 = vsub.f32 %v149, %v209
  %v211 = vand.u32 %v210, 4294901760
  %v212 = vsub.f32 %v210, %v211
  %v213 = vand.u32 %v212, 4294901760
  %214 = vmatmul.f32.gmra.mxu0 %v213
  %v215 = vpop.f32.mrf.mxu0
  %v216 = vadd.f32 %v100, %v215
  %v217 = vand.u32 %v151, 4294901760
  %v218 = vsub.f32 %v151, %v217
  %v219 = vand.u32 %v218, 4294901760
  %v220 = vsub.f32 %v218, %v219
  %v221 = vand.u32 %v220, 4294901760
  %222 = vmatmul.f32.gmra.mxu0 %v221
  %v223 = vpop.f32.mrf.mxu0
  %v224 = vadd.f32 %v105, %v223
  %v225 = vand.u32 %v153, 4294901760
  %v226 = vsub.f32 %v153, %v225
  %v227 = vand.u32 %v226, 4294901760
  %v228 = vsub.f32 %v226, %v227
  %v229 = vand.u32 %v228, 4294901760
  %230 = vmatmul.f32.gmra.mxu0 %v229
  %v231 = vpop.f32.mrf.mxu0
  %v232 = vadd.f32 %v110, %v231
  %v233 = vand.u32 %v155, 4294901760
  %v234 = vsub.f32 %v155, %v233
  %v235 = vand.u32 %v234, 4294901760
  %v236 = vsub.f32 %v234, %v235
  %v237 = vand.u32 %v236, 4294901760
  %238 = vmatmul.f32.gmra.mxu0 %v237
  %v239 = vpop.f32.mrf.mxu0
  %v240 = vadd.f32 %v115, %v239
  %v241 = vand.u32 %v157, 4294901760
  %v242 = vsub.f32 %v157, %v241
  %v243 = vand.u32 %v242, 4294901760
  %v244 = vsub.f32 %v242, %v243
  %v245 = vand.u32 %v244, 4294901760
  %246 = vmatmul.f32.gmra.mxu0 %v245
  %v247 = vpop.f32.mrf.mxu0
  %v248 = vadd.f32 %v120, %v247
  %v249 = vand.u32 %v159, 4294901760
  %v250 = vsub.f32 %v159, %v249
  %v251 = vand.u32 %v250, 4294901760
  %v252 = vsub.f32 %v250, %v251
  %v253 = vand.u32 %v252, 4294901760
  %254 = vmatmul.f32.gmra.mxu0 %v253
  %v255 = vpop.f32.mrf.mxu0
  %v256 = vadd.f32 %v125, %v255
  %v257 = vand.u32 %v161, 4294901760
  %v258 = vsub.f32 %v161, %v257
  %v259 = vand.u32 %v258, 4294901760
  %v260 = vsub.f32 %v258, %v259
  %v261 = vand.u32 %v260, 4294901760
  %262 = vmatmul.f32.gmra.mxu0 %v261
  %v263 = vpop.f32.mrf.mxu0
  %v264 = vadd.f32 %v130, %v263
  %v265 = vand.u32 %v163, 4294901760
  %v266 = vsub.f32 %v163, %v265
  %v267 = vand.u32 %v266, 4294901760
  %v268 = vsub.f32 %v266, %v267
  %v269 = vand.u32 %v268, 4294901760
  %270 = vmatmul.f32.gmra.mxu0 %v269
  %v271 = vpop.f32.mrf.mxu0
  %v272 = vadd.f32 %v135, %v271
  %v273 = vand.u32 %v165, 4294901760
  %v274 = vsub.f32 %v165, %v273
  %v275 = vand.u32 %v274, 4294901760
  %v276 = vsub.f32 %v274, %v275
  %v277 = vand.u32 %v276, 4294901760
  %278 = vmatmul.f32.gmra.mxu0 %v277
  %v279 = vpop.f32.mrf.mxu0
  %v280 = vadd.f32 %v140, %v279
  %281 = vdwg.mxu0
  %282 = vmatpush.msra.mxu0 0.0
  %283 = vmatpush.msra.mxu0 0.0
  %284 = vmatpush.msra.mxu0 0.0
  %285 = vmatpush.msra.mxu0 0.0
  %286 = vmatpush.msra.mxu0 0.0
  %287 = vmatpush.msra.mxu0 0.0
  %288 = vmatpush.msra.mxu0 0.0
  %289 = vmatpush.msra.mxu0 0.0
  %290 = vmatpush.msra.mxu0 0.0
  %291 = vmatpush.msra.mxu0 0.0
  %292 = vmatpush.msra.mxu0 0.0
  %293 = vmatpush.msra.mxu0 0.0
  %294 = vmatpush.msra.mxu0 0.0
  %295 = vmatpush.msra.mxu0 0.0
  %v296 = vand.u32 %v67, 4294901760
  %v297 = vsub.f32 %v67, %v296
  %v298 = vand.u32 %v297, 4294901760
  %v299 = vsub.f32 %v297, %v298
  %v300 = vand.u32 %v299, 4294901760
  %301 = vmatpush.msra.mxu0 %v300
  %v302 = vand.u32 %v63, 4294901760
  %v303 = vsub.f32 %v63, %v302
  %v304 = vand.u32 %v303, 4294901760
  %v305 = vsub.f32 %v303, %v304
  %v306 = vand.u32 %v305, 4294901760
  %307 = vmatpush.msra.mxu0 %v306
  %v308 = vand.u32 %v143, 4294901760
  %309 = vmatmul.f32.gmra.mxu0 %v308
  %v310 = vpop.f32.mrf.mxu0
  %v311 = vadd.f32 %v192, %v310
  %v312 = vand.u32 %v145, 4294901760
  %313 = vmatmul.f32.gmra.mxu0 %v312
  %v314 = vpop.f32.mrf.mxu0
  %v315 = vadd.f32 %v200, %v314
  %v316 = vand.u32 %v147, 4294901760
  %317 = vmatmul.f32.gmra.mxu0 %v316
  %v318 = vpop.f32.mrf.mxu0
  %v319 = vadd.f32 %v208, %v318
  %v320 = vand.u32 %v149, 4294901760
  %321 = vmatmul.f32.gmra.mxu0 %v320
  %v322 = vpop.f32.mrf.mxu0
  %v323 = vadd.f32 %v216, %v322
  %v324 = vand.u32 %v151, 4294901760
  %325 = vmatmul.f32.gmra.mxu0 %v324
  %v326 = vpop.f32.mrf.mxu0
  %v327 = vadd.f32 %v224, %v326
  %v328 = vand.u32 %v153, 4294901760
  %329 = vmatmul.f32.gmra.mxu0 %v328
  %v330 = vpop.f32.mrf.mxu0
  %v331 = vadd.f32 %v232, %v330
  %v332 = vand.u32 %v155, 4294901760
  %333 = vmatmul.f32.gmra.mxu0 %v332
  %v334 = vpop.f32.mrf.mxu0
  %v335 = vadd.f32 %v240, %v334
  %v336 = vand.u32 %v157, 4294901760
  %337 = vmatmul.f32.gmra.mxu0 %v336
  %v338 = vpop.f32.mrf.mxu0
  %v339 = vadd.f32 %v248, %v338
  %v340 = vand.u32 %v159, 4294901760
  %341 = vmatmul.f32.gmra.mxu0 %v340
  %v342 = vpop.f32.mrf.mxu0
  %v343 = vadd.f32 %v256, %v342
  %v344 = vand.u32 %v161, 4294901760
  %345 = vmatmul.f32.gmra.mxu0 %v344
  %v346 = vpop.f32.mrf.mxu0
  %v347 = vadd.f32 %v264, %v346
  %v348 = vand.u32 %v163, 4294901760
  %349 = vmatmul.f32.gmra.mxu0 %v348
  %v350 = vpop.f32.mrf.mxu0
  %v351 = vadd.f32 %v272, %v350
  %v352 = vand.u32 %v165, 4294901760
  %353 = vmatmul.f32.gmra.mxu0 %v352
  %v354 = vpop.f32.mrf.mxu0
  %v355 = vadd.f32 %v280, %v354
  %356 = vdwg.mxu0
  %357 = vmatpush.msra.mxu0 0.0
  %358 = vmatpush.msra.mxu0 0.0
  %359 = vmatpush.msra.mxu0 0.0
  %360 = vmatpush.msra.mxu0 0.0
  %361 = vmatpush.msra.mxu0 0.0
  %362 = vmatpush.msra.mxu0 0.0
  %363 = vmatpush.msra.mxu0 0.0
  %364 = vmatpush.msra.mxu0 0.0
  %365 = vmatpush.msra.mxu0 0.0
  %366 = vmatpush.msra.mxu0 0.0
  %367 = vmatpush.msra.mxu0 0.0
  %368 = vmatpush.msra.mxu0 0.0
  %369 = vmatpush.msra.mxu0 0.0
  %370 = vmatpush.msra.mxu0 0.0
  %v371 = vand.u32 %v67, 4294901760
  %v372 = vsub.f32 %v67, %v371
  %373 = vmatpush.msra.mxu0 %v372
  %v374 = vand.u32 %v63, 4294901760
  %v375 = vsub.f32 %v63, %v374
  %376 = vmatpush.msra.mxu0 %v375
  %v377 = vand.u32 %v143, 4294901760
  %v378 = vsub.f32 %v143, %v377
  %379 = vmatmul.f32.gmra.mxu0 %v378
  %v380 = vpop.f32.mrf.mxu0
  %v381 = vadd.f32 %v311, %v380
  %v382 = vand.u32 %v145, 4294901760
  %v383 = vsub.f32 %v145, %v382
  %384 = vmatmul.f32.gmra.mxu0 %v383
  %v385 = vpop.f32.mrf.mxu0
  %v386 = vadd.f32 %v315, %v385
  %v387 = vand.u32 %v147, 4294901760
  %v388 = vsub.f32 %v147, %v387
  %389 = vmatmul.f32.gmra.mxu0 %v388
  %v390 = vpop.f32.mrf.mxu0
  %v391 = vadd.f32 %v319, %v390
  %v392 = vand.u32 %v149, 4294901760
  %v393 = vsub.f32 %v149, %v392
  %394 = vmatmul.f32.gmra.mxu0 %v393
  %v395 = vpop.f32.mrf.mxu0
  %v396 = vadd.f32 %v323, %v395
  %v397 = vand.u32 %v151, 4294901760
  %v398 = vsub.f32 %v151, %v397
  %399 = vmatmul.f32.gmra.mxu0 %v398
  %v400 = vpop.f32.mrf.mxu0
  %v401 = vadd.f32 %v327, %v400
  %v402 = vand.u32 %v153, 4294901760
  %v403 = vsub.f32 %v153, %v402
  %404 = vmatmul.f32.gmra.mxu0 %v403
  %v405 = vpop.f32.mrf.mxu0
  %v406 = vadd.f32 %v331, %v405
  %v407 = vand.u32 %v155, 4294901760
  %v408 = vsub.f32 %v155, %v407
  %409 = vmatmul.f32.gmra.mxu0 %v408
  %v410 = vpop.f32.mrf.mxu0
  %v411 = vadd.f32 %v335, %v410
  %v412 = vand.u32 %v157, 4294901760
  %v413 = vsub.f32 %v157, %v412
  %414 = vmatmul.f32.gmra.mxu0 %v413
  %v415 = vpop.f32.mrf.mxu0
  %v416 = vadd.f32 %v339, %v415
  %v417 = vand.u32 %v159, 4294901760
  %v418 = vsub.f32 %v159, %v417
  %419 = vmatmul.f32.gmra.mxu0 %v418
  %v420 = vpop.f32.mrf.mxu0
  %v421 = vadd.f32 %v343, %v420
  %v422 = vand.u32 %v161, 4294901760
  %v423 = vsub.f32 %v161, %v422
  %424 = vmatmul.f32.gmra.mxu0 %v423
  %v425 = vpop.f32.mrf.mxu0
  %v426 = vadd.f32 %v347, %v425
  %v427 = vand.u32 %v163, 4294901760
  %v428 = vsub.f32 %v163, %v427
  %429 = vmatmul.f32.gmra.mxu0 %v428
  %v430 = vpop.f32.mrf.mxu0
  %v431 = vadd.f32 %v351, %v430
  %v432 = vand.u32 %v165, 4294901760
  %v433 = vsub.f32 %v165, %v432
  %434 = vmatmul.f32.gmra.mxu0 %v433
  %v435 = vpop.f32.mrf.mxu0
  %v436 = vadd.f32 %v355, %v435
  %437 = vdwg.mxu0
  %438 = vmatpush.msra.mxu0 0.0
  %439 = vmatpush.msra.mxu0 0.0
  %440 = vmatpush.msra.mxu0 0.0
  %441 = vmatpush.msra.mxu0 0.0
  %442 = vmatpush.msra.mxu0 0.0
  %443 = vmatpush.msra.mxu0 0.0
  %444 = vmatpush.msra.mxu0 0.0
  %445 = vmatpush.msra.mxu0 0.0
  %446 = vmatpush.msra.mxu0 0.0
  %447 = vmatpush.msra.mxu0 0.0
  %448 = vmatpush.msra.mxu0 0.0
  %449 = vmatpush.msra.mxu0 0.0
  %450 = vmatpush.msra.mxu0 0.0
  %451 = vmatpush.msra.mxu0 0.0
  %v452 = vand.u32 %v67, 4294901760
  %453 = vmatpush.msra.mxu0 %v452
  %v454 = vand.u32 %v63, 4294901760
  %455 = vmatpush.msra.mxu0 %v454
  %v456 = vand.u32 %v143, 4294901760
  %v457 = vsub.f32 %v143, %v456
  %v458 = vand.u32 %v457, 4294901760
  %459 = vmatmul.f32.gmra.mxu0 %v458
  %v460 = vpop.f32.mrf.mxu0
  %v461 = vadd.f32 %v381, %v460
  %v462 = vand.u32 %v145, 4294901760
  %v463 = vsub.f32 %v145, %v462
  %v464 = vand.u32 %v463, 4294901760
  %465 = vmatmul.f32.gmra.mxu0 %v464
  %v466 = vpop.f32.mrf.mxu0
  %v467 = vadd.f32 %v386, %v466
  %v468 = vand.u32 %v147, 4294901760
  %v469 = vsub.f32 %v147, %v468
  %v470 = vand.u32 %v469, 4294901760
  %471 = vmatmul.f32.gmra.mxu0 %v470
  %v472 = vpop.f32.mrf.mxu0
  %v473 = vadd.f32 %v391, %v472
  %v474 = vand.u32 %v149, 4294901760
  %v475 = vsub.f32 %v149, %v474
  %v476 = vand.u32 %v475, 4294901760
  %477 = vmatmul.f32.gmra.mxu0 %v476
  %v478 = vpop.f32.mrf.mxu0
  %v479 = vadd.f32 %v396, %v478
  %v480 = vand.u32 %v151, 4294901760
  %v481 = vsub.f32 %v151, %v480
  %v482 = vand.u32 %v481, 4294901760
  %483 = vmatmul.f32.gmra.mxu0 %v482
  %v484 = vpop.f32.mrf.mxu0
  %v485 = vadd.f32 %v401, %v484
  %v486 = vand.u32 %v153, 4294901760
  %v487 = vsub.f32 %v153, %v486
  %v488 = vand.u32 %v487, 4294901760
  %489 = vmatmul.f32.gmra.mxu0 %v488
  %v490 = vpop.f32.mrf.mxu0
  %v491 = vadd.f32 %v406, %v490
  %v492 = vand.u32 %v155, 4294901760
  %v493 = vsub.f32 %v155, %v492
  %v494 = vand.u32 %v493, 4294901760
  %495 = vmatmul.f32.gmra.mxu0 %v494
  %v496 = vpop.f32.mrf.mxu0
  %v497 = vadd.f32 %v411, %v496
  %v498 = vand.u32 %v157, 4294901760
  %v499 = vsub.f32 %v157, %v498
  %v500 = vand.u32 %v499, 4294901760
  %501 = vmatmul.f32.gmra.mxu0 %v500
  %v502 = vpop.f32.mrf.mxu0
  %v503 = vadd.f32 %v416, %v502
  %v504 = vand.u32 %v159, 4294901760
  %v505 = vsub.f32 %v159, %v504
  %v506 = vand.u32 %v505, 4294901760
  %507 = vmatmul.f32.gmra.mxu0 %v506
  %v508 = vpop.f32.mrf.mxu0
  %v509 = vadd.f32 %v421, %v508
  %v510 = vand.u32 %v161, 4294901760
  %v511 = vsub.f32 %v161, %v510
  %v512 = vand.u32 %v511, 4294901760
  %513 = vmatmul.f32.gmra.mxu0 %v512
  %v514 = vpop.f32.mrf.mxu0
  %v515 = vadd.f32 %v426, %v514
  %v516 = vand.u32 %v163, 4294901760
  %v517 = vsub.f32 %v163, %v516
  %v518 = vand.u32 %v517, 4294901760
  %519 = vmatmul.f32.gmra.mxu0 %v518
  %v520 = vpop.f32.mrf.mxu0
  %v521 = vadd.f32 %v431, %v520
  %v522 = vand.u32 %v165, 4294901760
  %v523 = vsub.f32 %v165, %v522
  %v524 = vand.u32 %v523, 4294901760
  %525 = vmatmul.f32.gmra.mxu0 %v524
  %v526 = vpop.f32.mrf.mxu0
  %v527 = vadd.f32 %v436, %v526
  %528 = vdwg.mxu0
  %529 = vmatpush.msra.mxu0 0.0
  %530 = vmatpush.msra.mxu0 0.0
  %531 = vmatpush.msra.mxu0 0.0
  %532 = vmatpush.msra.mxu0 0.0
  %533 = vmatpush.msra.mxu0 0.0
  %534 = vmatpush.msra.mxu0 0.0
  %535 = vmatpush.msra.mxu0 0.0
  %536 = vmatpush.msra.mxu0 0.0
  %537 = vmatpush.msra.mxu0 0.0
  %538 = vmatpush.msra.mxu0 0.0
  %539 = vmatpush.msra.mxu0 0.0
  %540 = vmatpush.msra.mxu0 0.0
  %541 = vmatpush.msra.mxu0 0.0
  %542 = vmatpush.msra.mxu0 0.0
  %v543 = vand.u32 %v67, 4294901760
  %v544 = vsub.f32 %v67, %v543
  %v545 = vand.u32 %v544, 4294901760
  %546 = vmatpush.msra.mxu0 %v545
  %v547 = vand.u32 %v63, 4294901760
  %v548 = vsub.f32 %v63, %v547
  %v549 = vand.u32 %v548, 4294901760
  %550 = vmatpush.msra.mxu0 %v549
  %v551 = vand.u32 %v143, 4294901760
  %552 = vmatmul.f32.gmra.mxu0 %v551
  %v553 = vpop.f32.mrf.mxu0
  %v554 = vadd.f32 %v461, %v553
  %v555 = vand.u32 %v145, 4294901760
  %556 = vmatmul.f32.gmra.mxu0 %v555
  %v557 = vpop.f32.mrf.mxu0
  %v558 = vadd.f32 %v467, %v557
  %v559 = vand.u32 %v147, 4294901760
  %560 = vmatmul.f32.gmra.mxu0 %v559
  %v561 = vpop.f32.mrf.mxu0
  %v562 = vadd.f32 %v473, %v561
  %v563 = vand.u32 %v149, 4294901760
  %564 = vmatmul.f32.gmra.mxu0 %v563
  %v565 = vpop.f32.mrf.mxu0
  %v566 = vadd.f32 %v479, %v565
  %v567 = vand.u32 %v151, 4294901760
  %568 = vmatmul.f32.gmra.mxu0 %v567
  %v569 = vpop.f32.mrf.mxu0
  %v570 = vadd.f32 %v485, %v569
  %v571 = vand.u32 %v153, 4294901760
  %572 = vmatmul.f32.gmra.mxu0 %v571
  %v573 = vpop.f32.mrf.mxu0
  %v574 = vadd.f32 %v491, %v573
  %v575 = vand.u32 %v155, 4294901760
  %576 = vmatmul.f32.gmra.mxu0 %v575
  %v577 = vpop.f32.mrf.mxu0
  %v578 = vadd.f32 %v497, %v577
  %v579 = vand.u32 %v157, 4294901760
  %580 = vmatmul.f32.gmra.mxu0 %v579
  %v581 = vpop.f32.mrf.mxu0
  %v582 = vadd.f32 %v503, %v581
  %v583 = vand.u32 %v159, 4294901760
  %584 = vmatmul.f32.gmra.mxu0 %v583
  %v585 = vpop.f32.mrf.mxu0
  %v586 = vadd.f32 %v509, %v585
  %v587 = vand.u32 %v161, 4294901760
  %588 = vmatmul.f32.gmra.mxu0 %v587
  %v589 = vpop.f32.mrf.mxu0
  %v590 = vadd.f32 %v515, %v589
  %v591 = vand.u32 %v163, 4294901760
  %592 = vmatmul.f32.gmra.mxu0 %v591
  %v593 = vpop.f32.mrf.mxu0
  %v594 = vadd.f32 %v521, %v593
  %v595 = vand.u32 %v165, 4294901760
  %596 = vmatmul.f32.gmra.mxu0 %v595
  %v597 = vpop.f32.mrf.mxu0
  %v598 = vadd.f32 %v527, %v597
  %599 = vdwg.mxu0
  %600 = vmatpush.msra.mxu0 0.0
  %601 = vmatpush.msra.mxu0 0.0
  %602 = vmatpush.msra.mxu0 0.0
  %603 = vmatpush.msra.mxu0 0.0
  %604 = vmatpush.msra.mxu0 0.0
  %605 = vmatpush.msra.mxu0 0.0
  %606 = vmatpush.msra.mxu0 0.0
  %607 = vmatpush.msra.mxu0 0.0
  %608 = vmatpush.msra.mxu0 0.0
  %609 = vmatpush.msra.mxu0 0.0
  %610 = vmatpush.msra.mxu0 0.0
  %611 = vmatpush.msra.mxu0 0.0
  %612 = vmatpush.msra.mxu0 0.0
  %613 = vmatpush.msra.mxu0 0.0
  %v614 = vand.u32 %v67, 4294901760
  %615 = vmatpush.msra.mxu0 %v614
  %v616 = vand.u32 %v63, 4294901760
  %617 = vmatpush.msra.mxu0 %v616
  %v618 = vand.u32 %v143, 4294901760
  %619 = vmatmul.f32.gmra.mxu0 %v618
  %v620 = vpop.f32.mrf.mxu0
  %v621 = vadd.f32 %v554, %v620
  %v622 = vand.u32 %v145, 4294901760
  %623 = vmatmul.f32.gmra.mxu0 %v622
  %v624 = vpop.f32.mrf.mxu0
  %v625 = vadd.f32 %v558, %v624
  %v626 = vand.u32 %v147, 4294901760
  %627 = vmatmul.f32.gmra.mxu0 %v626
  %v628 = vpop.f32.mrf.mxu0
  %v629 = vadd.f32 %v562, %v628
  %v630 = vand.u32 %v149, 4294901760
  %631 = vmatmul.f32.gmra.mxu0 %v630
  %v632 = vpop.f32.mrf.mxu0
  %v633 = vadd.f32 %v566, %v632
  %v634 = vand.u32 %v151, 4294901760
  %635 = vmatmul.f32.gmra.mxu0 %v634
  %v636 = vpop.f32.mrf.mxu0
  %v637 = vadd.f32 %v570, %v636
  %v638 = vand.u32 %v153, 4294901760
  %639 = vmatmul.f32.gmra.mxu0 %v638
  %v640 = vpop.f32.mrf.mxu0
  %v641 = vadd.f32 %v574, %v640
  %v642 = vand.u32 %v155, 4294901760
  %643 = vmatmul.f32.gmra.mxu0 %v642
  %v644 = vpop.f32.mrf.mxu0
  %v645 = vadd.f32 %v578, %v644
  %v646 = vand.u32 %v157, 4294901760
  %647 = vmatmul.f32.gmra.mxu0 %v646
  %v648 = vpop.f32.mrf.mxu0
  %v649 = vadd.f32 %v582, %v648
  %v650 = vand.u32 %v159, 4294901760
  %651 = vmatmul.f32.gmra.mxu0 %v650
  %v652 = vpop.f32.mrf.mxu0
  %v653 = vadd.f32 %v586, %v652
  %v654 = vand.u32 %v161, 4294901760
  %655 = vmatmul.f32.gmra.mxu0 %v654
  %v656 = vpop.f32.mrf.mxu0
  %v657 = vadd.f32 %v590, %v656
  %v658 = vand.u32 %v163, 4294901760
  %659 = vmatmul.f32.gmra.mxu0 %v658
  %v660 = vpop.f32.mrf.mxu0
  %v661 = vadd.f32 %v594, %v660
  %v662 = vand.u32 %v165, 4294901760
  %663 = vmatmul.f32.gmra.mxu0 %v662
  %v664 = vpop.f32.mrf.mxu0
  %v665 = vadd.f32 %v598, %v664
  %666 = vdwg.mxu0
  %667 = vmatpush.msra.mxu0 0.0
  %668 = vmatpush.msra.mxu0 0.0
  %669 = vmatpush.msra.mxu0 0.0
  %670 = vmatpush.msra.mxu0 0.0
  %671 = vmatpush.msra.mxu0 0.0
  %672 = vmatpush.msra.mxu0 0.0
  %673 = vmatpush.msra.mxu0 0.0
  %674 = vmatpush.msra.mxu0 0.0
  %675 = vmatpush.msra.mxu0 0.0
  %676 = vmatpush.msra.mxu0 0.0
  %677 = vmatpush.msra.mxu0 0.0
  %678 = vmatpush.msra.mxu0 0.0
  %679 = vmatpush.msra.mxu0 0.0
  %680 = vmatpush.msra.mxu0 0.0
  %v681 = vand.u32 %v69, 4294901760
  %682 = vmatpush.msra.mxu0 %v681
  %v683 = vand.u32 %v65, 4294901760
  %684 = vmatpush.msra.mxu0 %v683
  %v685 = vand.u32 %v143, 4294901760
  %v686 = vsub.f32 %v143, %v685
  %v687 = vand.u32 %v686, 4294901760
  %v688 = vsub.f32 %v686, %v687
  %v689 = vand.u32 %v688, 4294901760
  %690 = vmatmul.f32.gmra.mxu0 %v689
  %v691 = vpop.f32.mrf.mxu0
  %v692 = vadd.f32 %v85, %v691
  %v693 = vand.u32 %v145, 4294901760
  %v694 = vsub.f32 %v145, %v693
  %v695 = vand.u32 %v694, 4294901760
  %v696 = vsub.f32 %v694, %v695
  %v697 = vand.u32 %v696, 4294901760
  %698 = vmatmul.f32.gmra.mxu0 %v697
  %v699 = vpop.f32.mrf.mxu0
  %v700 = vadd.f32 %v90, %v699
  %v701 = vand.u32 %v147, 4294901760
  %v702 = vsub.f32 %v147, %v701
  %v703 = vand.u32 %v702, 4294901760
  %v704 = vsub.f32 %v702, %v703
  %v705 = vand.u32 %v704, 4294901760
  %706 = vmatmul.f32.gmra.mxu0 %v705
  %v707 = vpop.f32.mrf.mxu0
  %v708 = vadd.f32 %v95, %v707
  %v709 = vand.u32 %v149, 4294901760
  %v710 = vsub.f32 %v149, %v709
  %v711 = vand.u32 %v710, 4294901760
  %v712 = vsub.f32 %v710, %v711
  %v713 = vand.u32 %v712, 4294901760
  %714 = vmatmul.f32.gmra.mxu0 %v713
  %v715 = vpop.f32.mrf.mxu0
  %v716 = vadd.f32 %v100, %v715
  %v717 = vand.u32 %v151, 4294901760
  %v718 = vsub.f32 %v151, %v717
  %v719 = vand.u32 %v718, 4294901760
  %v720 = vsub.f32 %v718, %v719
  %v721 = vand.u32 %v720, 4294901760
  %722 = vmatmul.f32.gmra.mxu0 %v721
  %v723 = vpop.f32.mrf.mxu0
  %v724 = vadd.f32 %v105, %v723
  %v725 = vand.u32 %v153, 4294901760
  %v726 = vsub.f32 %v153, %v725
  %v727 = vand.u32 %v726, 4294901760
  %v728 = vsub.f32 %v726, %v727
  %v729 = vand.u32 %v728, 4294901760
  %730 = vmatmul.f32.gmra.mxu0 %v729
  %v731 = vpop.f32.mrf.mxu0
  %v732 = vadd.f32 %v110, %v731
  %v733 = vand.u32 %v155, 4294901760
  %v734 = vsub.f32 %v155, %v733
  %v735 = vand.u32 %v734, 4294901760
  %v736 = vsub.f32 %v734, %v735
  %v737 = vand.u32 %v736, 4294901760
  %738 = vmatmul.f32.gmra.mxu0 %v737
  %v739 = vpop.f32.mrf.mxu0
  %v740 = vadd.f32 %v115, %v739
  %v741 = vand.u32 %v157, 4294901760
  %v742 = vsub.f32 %v157, %v741
  %v743 = vand.u32 %v742, 4294901760
  %v744 = vsub.f32 %v742, %v743
  %v745 = vand.u32 %v744, 4294901760
  %746 = vmatmul.f32.gmra.mxu0 %v745
  %v747 = vpop.f32.mrf.mxu0
  %v748 = vadd.f32 %v120, %v747
  %v749 = vand.u32 %v159, 4294901760
  %v750 = vsub.f32 %v159, %v749
  %v751 = vand.u32 %v750, 4294901760
  %v752 = vsub.f32 %v750, %v751
  %v753 = vand.u32 %v752, 4294901760
  %754 = vmatmul.f32.gmra.mxu0 %v753
  %v755 = vpop.f32.mrf.mxu0
  %v756 = vadd.f32 %v125, %v755
  %v757 = vand.u32 %v161, 4294901760
  %v758 = vsub.f32 %v161, %v757
  %v759 = vand.u32 %v758, 4294901760
  %v760 = vsub.f32 %v758, %v759
  %v761 = vand.u32 %v760, 4294901760
  %762 = vmatmul.f32.gmra.mxu0 %v761
  %v763 = vpop.f32.mrf.mxu0
  %v764 = vadd.f32 %v130, %v763
  %v765 = vand.u32 %v163, 4294901760
  %v766 = vsub.f32 %v163, %v765
  %v767 = vand.u32 %v766, 4294901760
  %v768 = vsub.f32 %v766, %v767
  %v769 = vand.u32 %v768, 4294901760
  %770 = vmatmul.f32.gmra.mxu0 %v769
  %v771 = vpop.f32.mrf.mxu0
  %v772 = vadd.f32 %v135, %v771
  %v773 = vand.u32 %v165, 4294901760
  %v774 = vsub.f32 %v165, %v773
  %v775 = vand.u32 %v774, 4294901760
  %v776 = vsub.f32 %v774, %v775
  %v777 = vand.u32 %v776, 4294901760
  %778 = vmatmul.f32.gmra.mxu0 %v777
  %v779 = vpop.f32.mrf.mxu0
  %v780 = vadd.f32 %v140, %v779
  %781 = vdwg.mxu0
  %782 = vmatpush.msra.mxu0 0.0
  %783 = vmatpush.msra.mxu0 0.0
  %784 = vmatpush.msra.mxu0 0.0
  %785 = vmatpush.msra.mxu0 0.0
  %786 = vmatpush.msra.mxu0 0.0
  %787 = vmatpush.msra.mxu0 0.0
  %788 = vmatpush.msra.mxu0 0.0
  %789 = vmatpush.msra.mxu0 0.0
  %790 = vmatpush.msra.mxu0 0.0
  %791 = vmatpush.msra.mxu0 0.0
  %792 = vmatpush.msra.mxu0 0.0
  %793 = vmatpush.msra.mxu0 0.0
  %794 = vmatpush.msra.mxu0 0.0
  %795 = vmatpush.msra.mxu0 0.0
  %v796 = vand.u32 %v69, 4294901760
  %v797 = vsub.f32 %v69, %v796
  %v798 = vand.u32 %v797, 4294901760
  %v799 = vsub.f32 %v797, %v798
  %v800 = vand.u32 %v799, 4294901760
  %801 = vmatpush.msra.mxu0 %v800
  %v802 = vand.u32 %v65, 4294901760
  %v803 = vsub.f32 %v65, %v802
  %v804 = vand.u32 %v803, 4294901760
  %v805 = vsub.f32 %v803, %v804
  %v806 = vand.u32 %v805, 4294901760
  %807 = vmatpush.msra.mxu0 %v806
  %v808 = vand.u32 %v143, 4294901760
  %809 = vmatmul.f32.gmra.mxu0 %v808
  %v810 = vpop.f32.mrf.mxu0
  %v811 = vadd.f32 %v692, %v810
  %v812 = vand.u32 %v145, 4294901760
  %813 = vmatmul.f32.gmra.mxu0 %v812
  %v814 = vpop.f32.mrf.mxu0
  %v815 = vadd.f32 %v700, %v814
  %v816 = vand.u32 %v147, 4294901760
  %817 = vmatmul.f32.gmra.mxu0 %v816
  %v818 = vpop.f32.mrf.mxu0
  %v819 = vadd.f32 %v708, %v818
  %v820 = vand.u32 %v149, 4294901760
  %821 = vmatmul.f32.gmra.mxu0 %v820
  %v822 = vpop.f32.mrf.mxu0
  %v823 = vadd.f32 %v716, %v822
  %v824 = vand.u32 %v151, 4294901760
  %825 = vmatmul.f32.gmra.mxu0 %v824
  %v826 = vpop.f32.mrf.mxu0
  %v827 = vadd.f32 %v724, %v826
  %v828 = vand.u32 %v153, 4294901760
  %829 = vmatmul.f32.gmra.mxu0 %v828
  %v830 = vpop.f32.mrf.mxu0
  %v831 = vadd.f32 %v732, %v830
  %v832 = vand.u32 %v155, 4294901760
  %833 = vmatmul.f32.gmra.mxu0 %v832
  %v834 = vpop.f32.mrf.mxu0
  %v835 = vadd.f32 %v740, %v834
  %v836 = vand.u32 %v157, 4294901760
  %837 = vmatmul.f32.gmra.mxu0 %v836
  %v838 = vpop.f32.mrf.mxu0
  %v839 = vadd.f32 %v748, %v838
  %v840 = vand.u32 %v159, 4294901760
  %841 = vmatmul.f32.gmra.mxu0 %v840
  %v842 = vpop.f32.mrf.mxu0
  %v843 = vadd.f32 %v756, %v842
  %v844 = vand.u32 %v161, 4294901760
  %845 = vmatmul.f32.gmra.mxu0 %v844
  %v846 = vpop.f32.mrf.mxu0
  %v847 = vadd.f32 %v764, %v846
  %v848 = vand.u32 %v163, 4294901760
  %849 = vmatmul.f32.gmra.mxu0 %v848
  %v850 = vpop.f32.mrf.mxu0
  %v851 = vadd.f32 %v772, %v850
  %v852 = vand.u32 %v165, 4294901760
  %853 = vmatmul.f32.gmra.mxu0 %v852
  %v854 = vpop.f32.mrf.mxu0
  %v855 = vadd.f32 %v780, %v854
  %856 = vdwg.mxu0
  %857 = vmatpush.msra.mxu0 0.0
  %858 = vmatpush.msra.mxu0 0.0
  %859 = vmatpush.msra.mxu0 0.0
  %860 = vmatpush.msra.mxu0 0.0
  %861 = vmatpush.msra.mxu0 0.0
  %862 = vmatpush.msra.mxu0 0.0
  %863 = vmatpush.msra.mxu0 0.0
  %864 = vmatpush.msra.mxu0 0.0
  %865 = vmatpush.msra.mxu0 0.0
  %866 = vmatpush.msra.mxu0 0.0
  %867 = vmatpush.msra.mxu0 0.0
  %868 = vmatpush.msra.mxu0 0.0
  %869 = vmatpush.msra.mxu0 0.0
  %870 = vmatpush.msra.mxu0 0.0
  %v871 = vand.u32 %v69, 4294901760
  %v872 = vsub.f32 %v69, %v871
  %873 = vmatpush.msra.mxu0 %v872
  %v874 = vand.u32 %v65, 4294901760
  %v875 = vsub.f32 %v65, %v874
  %876 = vmatpush.msra.mxu0 %v875
  %v877 = vand.u32 %v143, 4294901760
  %v878 = vsub.f32 %v143, %v877
  %879 = vmatmul.f32.gmra.mxu0 %v878
  %v880 = vpop.f32.mrf.mxu0
  %v881 = vadd.f32 %v811, %v880
  %v882 = vand.u32 %v145, 4294901760
  %v883 = vsub.f32 %v145, %v882
  %884 = vmatmul.f32.gmra.mxu0 %v883
  %v885 = vpop.f32.mrf.mxu0
  %v886 = vadd.f32 %v815, %v885
  %v887 = vand.u32 %v147, 4294901760
  %v888 = vsub.f32 %v147, %v887
  %889 = vmatmul.f32.gmra.mxu0 %v888
  %v890 = vpop.f32.mrf.mxu0
  %v891 = vadd.f32 %v819, %v890
  %v892 = vand.u32 %v149, 4294901760
  %v893 = vsub.f32 %v149, %v892
  %894 = vmatmul.f32.gmra.mxu0 %v893
  %v895 = vpop.f32.mrf.mxu0
  %v896 = vadd.f32 %v823, %v895
  %v897 = vand.u32 %v151, 4294901760
  %v898 = vsub.f32 %v151, %v897
  %899 = vmatmul.f32.gmra.mxu0 %v898
  %v900 = vpop.f32.mrf.mxu0
  %v901 = vadd.f32 %v827, %v900
  %v902 = vand.u32 %v153, 4294901760
  %v903 = vsub.f32 %v153, %v902
  %904 = vmatmul.f32.gmra.mxu0 %v903
  %v905 = vpop.f32.mrf.mxu0
  %v906 = vadd.f32 %v831, %v905
  %v907 = vand.u32 %v155, 4294901760
  %v908 = vsub.f32 %v155, %v907
  %909 = vmatmul.f32.gmra.mxu0 %v908
  %v910 = vpop.f32.mrf.mxu0
  %v911 = vadd.f32 %v835, %v910
  %v912 = vand.u32 %v157, 4294901760
  %v913 = vsub.f32 %v157, %v912
  %914 = vmatmul.f32.gmra.mxu0 %v913
  %v915 = vpop.f32.mrf.mxu0
  %v916 = vadd.f32 %v839, %v915
  %v917 = vand.u32 %v159, 4294901760
  %v918 = vsub.f32 %v159, %v917
  %919 = vmatmul.f32.gmra.mxu0 %v918
  %v920 = vpop.f32.mrf.mxu0
  %v921 = vadd.f32 %v843, %v920
  %v922 = vand.u32 %v161, 4294901760
  %v923 = vsub.f32 %v161, %v922
  %924 = vmatmul.f32.gmra.mxu0 %v923
  %v925 = vpop.f32.mrf.mxu0
  %v926 = vadd.f32 %v847, %v925
  %v927 = vand.u32 %v163, 4294901760
  %v928 = vsub.f32 %v163, %v927
  %929 = vmatmul.f32.gmra.mxu0 %v928
  %v930 = vpop.f32.mrf.mxu0
  %v931 = vadd.f32 %v851, %v930
  %v932 = vand.u32 %v165, 4294901760
  %v933 = vsub.f32 %v165, %v932
  %934 = vmatmul.f32.gmra.mxu0 %v933
  %v935 = vpop.f32.mrf.mxu0
  %v936 = vadd.f32 %v855, %v935
  %937 = vdwg.mxu0
  %938 = vmatpush.msra.mxu0 0.0
  %939 = vmatpush.msra.mxu0 0.0
  %940 = vmatpush.msra.mxu0 0.0
  %941 = vmatpush.msra.mxu0 0.0
  %942 = vmatpush.msra.mxu0 0.0
  %943 = vmatpush.msra.mxu0 0.0
  %944 = vmatpush.msra.mxu0 0.0
  %945 = vmatpush.msra.mxu0 0.0
  %946 = vmatpush.msra.mxu0 0.0
  %947 = vmatpush.msra.mxu0 0.0
  %948 = vmatpush.msra.mxu0 0.0
  %949 = vmatpush.msra.mxu0 0.0
  %950 = vmatpush.msra.mxu0 0.0
  %951 = vmatpush.msra.mxu0 0.0
  %v952 = vand.u32 %v69, 4294901760
  %953 = vmatpush.msra.mxu0 %v952
  %v954 = vand.u32 %v65, 4294901760
  %955 = vmatpush.msra.mxu0 %v954
  %v956 = vand.u32 %v143, 4294901760
  %v957 = vsub.f32 %v143, %v956
  %v958 = vand.u32 %v957, 4294901760
  %959 = vmatmul.f32.gmra.mxu0 %v958
  %v960 = vpop.f32.mrf.mxu0
  %v961 = vadd.f32 %v881, %v960
  %v962 = vand.u32 %v145, 4294901760
  %v963 = vsub.f32 %v145, %v962
  %v964 = vand.u32 %v963, 4294901760
  %965 = vmatmul.f32.gmra.mxu0 %v964
  %v966 = vpop.f32.mrf.mxu0
  %v967 = vadd.f32 %v886, %v966
  %v968 = vand.u32 %v147, 4294901760
  %v969 = vsub.f32 %v147, %v968
  %v970 = vand.u32 %v969, 4294901760
  %971 = vmatmul.f32.gmra.mxu0 %v970
  %v972 = vpop.f32.mrf.mxu0
  %v973 = vadd.f32 %v891, %v972
  %v974 = vand.u32 %v149, 4294901760
  %v975 = vsub.f32 %v149, %v974
  %v976 = vand.u32 %v975, 4294901760
  %977 = vmatmul.f32.gmra.mxu0 %v976
  %v978 = vpop.f32.mrf.mxu0
  %v979 = vadd.f32 %v896, %v978
  %v980 = vand.u32 %v151, 4294901760
  %v981 = vsub.f32 %v151, %v980
  %v982 = vand.u32 %v981, 4294901760
  %983 = vmatmul.f32.gmra.mxu0 %v982
  %v984 = vpop.f32.mrf.mxu0
  %v985 = vadd.f32 %v901, %v984
  %v986 = vand.u32 %v153, 4294901760
  %v987 = vsub.f32 %v153, %v986
  %v988 = vand.u32 %v987, 4294901760
  %989 = vmatmul.f32.gmra.mxu0 %v988
  %v990 = vpop.f32.mrf.mxu0
  %v991 = vadd.f32 %v906, %v990
  %v992 = vand.u32 %v155, 4294901760
  %v993 = vsub.f32 %v155, %v992
  %v994 = vand.u32 %v993, 4294901760
  %995 = vmatmul.f32.gmra.mxu0 %v994
  %v996 = vpop.f32.mrf.mxu0
  %v997 = vadd.f32 %v911, %v996
  %v998 = vand.u32 %v157, 4294901760
  %v999 = vsub.f32 %v157, %v998
  %v1000 = vand.u32 %v999, 4294901760
  %1001 = vmatmul.f32.gmra.mxu0 %v1000
  %v1002 = vpop.f32.mrf.mxu0
  %v1003 = vadd.f32 %v916, %v1002
  %v1004 = vand.u32 %v159, 4294901760
  %v1005 = vsub.f32 %v159, %v1004
  %v1006 = vand.u32 %v1005, 4294901760
  %1007 = vmatmul.f32.gmra.mxu0 %v1006
  %v1008 = vpop.f32.mrf.mxu0
  %v1009 = vadd.f32 %v921, %v1008
  %v1010 = vand.u32 %v161, 4294901760
  %v1011 = vsub.f32 %v161, %v1010
  %v1012 = vand.u32 %v1011, 4294901760
  %1013 = vmatmul.f32.gmra.mxu0 %v1012
  %v1014 = vpop.f32.mrf.mxu0
  %v1015 = vadd.f32 %v926, %v1014
  %v1016 = vand.u32 %v163, 4294901760
  %v1017 = vsub.f32 %v163, %v1016
  %v1018 = vand.u32 %v1017, 4294901760
  %1019 = vmatmul.f32.gmra.mxu0 %v1018
  %v1020 = vpop.f32.mrf.mxu0
  %v1021 = vadd.f32 %v931, %v1020
  %v1022 = vand.u32 %v165, 4294901760
  %v1023 = vsub.f32 %v165, %v1022
  %v1024 = vand.u32 %v1023, 4294901760
  %1025 = vmatmul.f32.gmra.mxu0 %v1024
  %v1026 = vpop.f32.mrf.mxu0
  %v1027 = vadd.f32 %v936, %v1026
  %1028 = vdwg.mxu0
  %1029 = vmatpush.msra.mxu0 0.0
  %1030 = vmatpush.msra.mxu0 0.0
  %1031 = vmatpush.msra.mxu0 0.0
  %1032 = vmatpush.msra.mxu0 0.0
  %1033 = vmatpush.msra.mxu0 0.0
  %1034 = vmatpush.msra.mxu0 0.0
  %1035 = vmatpush.msra.mxu0 0.0
  %1036 = vmatpush.msra.mxu0 0.0
  %1037 = vmatpush.msra.mxu0 0.0
  %1038 = vmatpush.msra.mxu0 0.0
  %1039 = vmatpush.msra.mxu0 0.0
  %1040 = vmatpush.msra.mxu0 0.0
  %1041 = vmatpush.msra.mxu0 0.0
  %1042 = vmatpush.msra.mxu0 0.0
  %v1043 = vand.u32 %v69, 4294901760
  %v1044 = vsub.f32 %v69, %v1043
  %v1045 = vand.u32 %v1044, 4294901760
  %1046 = vmatpush.msra.mxu0 %v1045
  %v1047 = vand.u32 %v65, 4294901760
  %v1048 = vsub.f32 %v65, %v1047
  %v1049 = vand.u32 %v1048, 4294901760
  %1050 = vmatpush.msra.mxu0 %v1049
  %v1051 = vand.u32 %v143, 4294901760
  %1052 = vmatmul.f32.gmra.mxu0 %v1051
  %v1053 = vpop.f32.mrf.mxu0
  %v1054 = vadd.f32 %v961, %v1053
  %v1055 = vand.u32 %v145, 4294901760
  %1056 = vmatmul.f32.gmra.mxu0 %v1055
  %v1057 = vpop.f32.mrf.mxu0
  %v1058 = vadd.f32 %v967, %v1057
  %v1059 = vand.u32 %v147, 4294901760
  %1060 = vmatmul.f32.gmra.mxu0 %v1059
  %v1061 = vpop.f32.mrf.mxu0
  %v1062 = vadd.f32 %v973, %v1061
  %v1063 = vand.u32 %v149, 4294901760
  %1064 = vmatmul.f32.gmra.mxu0 %v1063
  %v1065 = vpop.f32.mrf.mxu0
  %v1066 = vadd.f32 %v979, %v1065
  %v1067 = vand.u32 %v151, 4294901760
  %1068 = vmatmul.f32.gmra.mxu0 %v1067
  %v1069 = vpop.f32.mrf.mxu0
  %v1070 = vadd.f32 %v985, %v1069
  %v1071 = vand.u32 %v153, 4294901760
  %1072 = vmatmul.f32.gmra.mxu0 %v1071
  %v1073 = vpop.f32.mrf.mxu0
  %v1074 = vadd.f32 %v991, %v1073
  %v1075 = vand.u32 %v155, 4294901760
  %1076 = vmatmul.f32.gmra.mxu0 %v1075
  %v1077 = vpop.f32.mrf.mxu0
  %v1078 = vadd.f32 %v997, %v1077
  %v1079 = vand.u32 %v157, 4294901760
  %1080 = vmatmul.f32.gmra.mxu0 %v1079
  %v1081 = vpop.f32.mrf.mxu0
  %v1082 = vadd.f32 %v1003, %v1081
  %v1083 = vand.u32 %v159, 4294901760
  %1084 = vmatmul.f32.gmra.mxu0 %v1083
  %v1085 = vpop.f32.mrf.mxu0
  %v1086 = vadd.f32 %v1009, %v1085
  %v1087 = vand.u32 %v161, 4294901760
  %1088 = vmatmul.f32.gmra.mxu0 %v1087
  %v1089 = vpop.f32.mrf.mxu0
  %v1090 = vadd.f32 %v1015, %v1089
  %v1091 = vand.u32 %v163, 4294901760
  %1092 = vmatmul.f32.gmra.mxu0 %v1091
  %v1093 = vpop.f32.mrf.mxu0
  %v1094 = vadd.f32 %v1021, %v1093
  %v1095 = vand.u32 %v165, 4294901760
  %1096 = vmatmul.f32.gmra.mxu0 %v1095
  %v1097 = vpop.f32.mrf.mxu0
  %v1098 = vadd.f32 %v1027, %v1097
  %1099 = vdwg.mxu0
  %1100 = vmatpush.msra.mxu0 0.0
  %1101 = vmatpush.msra.mxu0 0.0
  %1102 = vmatpush.msra.mxu0 0.0
  %1103 = vmatpush.msra.mxu0 0.0
  %1104 = vmatpush.msra.mxu0 0.0
  %1105 = vmatpush.msra.mxu0 0.0
  %1106 = vmatpush.msra.mxu0 0.0
  %1107 = vmatpush.msra.mxu0 0.0
  %1108 = vmatpush.msra.mxu0 0.0
  %1109 = vmatpush.msra.mxu0 0.0
  %1110 = vmatpush.msra.mxu0 0.0
  %1111 = vmatpush.msra.mxu0 0.0
  %1112 = vmatpush.msra.mxu0 0.0
  %1113 = vmatpush.msra.mxu0 0.0
  %v1114 = vand.u32 %v69, 4294901760
  %1115 = vmatpush.msra.mxu0 %v1114
  %v1116 = vand.u32 %v65, 4294901760
  %1117 = vmatpush.msra.mxu0 %v1116
  %v1118 = vand.u32 %v143, 4294901760
  %1119 = vmatmul.f32.gmra.mxu0 %v1118
  %v1120 = vpop.f32.mrf.mxu0
  %v1121 = vadd.f32 %v1054, %v1120
  %v1122 = vand.u32 %v145, 4294901760
  %1123 = vmatmul.f32.gmra.mxu0 %v1122
  %v1124 = vpop.f32.mrf.mxu0
  %v1125 = vadd.f32 %v1058, %v1124
  %v1126 = vand.u32 %v147, 4294901760
  %1127 = vmatmul.f32.gmra.mxu0 %v1126
  %v1128 = vpop.f32.mrf.mxu0
  %v1129 = vadd.f32 %v1062, %v1128
  %v1130 = vand.u32 %v149, 4294901760
  %1131 = vmatmul.f32.gmra.mxu0 %v1130
  %v1132 = vpop.f32.mrf.mxu0
  %v1133 = vadd.f32 %v1066, %v1132
  %v1134 = vand.u32 %v151, 4294901760
  %1135 = vmatmul.f32.gmra.mxu0 %v1134
  %v1136 = vpop.f32.mrf.mxu0
  %v1137 = vadd.f32 %v1070, %v1136
  %v1138 = vand.u32 %v153, 4294901760
  %1139 = vmatmul.f32.gmra.mxu0 %v1138
  %v1140 = vpop.f32.mrf.mxu0
  %v1141 = vadd.f32 %v1074, %v1140
  %v1142 = vand.u32 %v155, 4294901760
  %1143 = vmatmul.f32.gmra.mxu0 %v1142
  %v1144 = vpop.f32.mrf.mxu0
  %v1145 = vadd.f32 %v1078, %v1144
  %v1146 = vand.u32 %v157, 4294901760
  %1147 = vmatmul.f32.gmra.mxu0 %v1146
  %v1148 = vpop.f32.mrf.mxu0
  %v1149 = vadd.f32 %v1082, %v1148
  %v1150 = vand.u32 %v159, 4294901760
  %1151 = vmatmul.f32.gmra.mxu0 %v1150
  %v1152 = vpop.f32.mrf.mxu0
  %v1153 = vadd.f32 %v1086, %v1152
  %v1154 = vand.u32 %v161, 4294901760
  %1155 = vmatmul.f32.gmra.mxu0 %v1154
  %v1156 = vpop.f32.mrf.mxu0
  %v1157 = vadd.f32 %v1090, %v1156
  %v1158 = vand.u32 %v163, 4294901760
  %1159 = vmatmul.f32.gmra.mxu0 %v1158
  %v1160 = vpop.f32.mrf.mxu0
  %v1161 = vadd.f32 %v1094, %v1160
  %v1162 = vand.u32 %v165, 4294901760
  %1163 = vmatmul.f32.gmra.mxu0 %v1162
  %v1164 = vpop.f32.mrf.mxu0
  %v1165 = vadd.f32 %v1098, %v1164
  %1166 = vdwg.mxu0
  %v1167 = vld [vmem:[%s4] sm:$0xff]
  %v1168 = vld [vmem:[%s4 + $0x8] sm:$0xff]
  %v1169 = vld [vmem:[%s4 + $0x10] sm:$0xff]
  %v1170 = vld [vmem:[%s4 + $0x18] sm:$0xff]
  %v1171 = vld [vmem:[%s4 + $0x20] sm:$0xff]
  %v1172 = vld [vmem:[%s4 + $0x28] sm:$0xff]
  %v1173 = vld [vmem:[%s4 + $0x30] sm:$0xff]
  %v1174 = vld [vmem:[%s4 + $0x38] sm:$0xff]
  %v1175 = vld [vmem:[%s4 + $0x40] sm:$0xff]
  %v1176 = vld [vmem:[%s4 + $0x48] sm:$0xff]
  %v1177 = vld [vmem:[%s4 + $0x50] sm:$0xff]
  %v1178 = vld [vmem:[%s4 + $0x58] sm:$0xff]
  %v1179 = vmax.f32 %v621, 0.0
  %v1180 = vmax.f32 %v1121, 0.0
  %v1181 = vmax.f32 %v625, 0.0
  %v1182 = vmax.f32 %v1125, 0.0
  %v1183 = vmax.f32 %v629, 0.0
  %v1184 = vmax.f32 %v1129, 0.0
  %v1185 = vmax.f32 %v633, 0.0
  %v1186 = vmax.f32 %v1133, 0.0
  %v1187 = vmax.f32 %v637, 0.0
  %v1188 = vmax.f32 %v1137, 0.0
  %v1189 = vmax.f32 %v641, 0.0
  %v1190 = vmax.f32 %v1141, 0.0
  %v1191 = vmax.f32 %v645, 0.0
  %v1192 = vmax.f32 %v1145, 0.0
  %v1193 = vmax.f32 %v649, 0.0
  %v1194 = vmax.f32 %v1149, 0.0
  %v1195 = vmax.f32 %v653, 0.0
  %v1196 = vmax.f32 %v1153, 0.0
  %v1197 = vmax.f32 %v657, 0.0
  %v1198 = vmax.f32 %v1157, 0.0
  %v1199 = vmax.f32 %v661, 0.0
  %v1200 = vmax.f32 %v1161, 0.0
  %v1201 = vmax.f32 %v665, 0.0
  %v1202 = vmax.f32 %v1165, 0.0
  %v1203 = vand.u32 2147483647, %v621
  %v1204 = vand.u32 2147483647, %v1121
  %v1205 = vand.u32 2147483647, %v625
  %v1206 = vand.u32 2147483647, %v1125
  %v1207 = vand.u32 2147483647, %v629
  %v1208 = vand.u32 2147483647, %v1129
  %v1209 = vand.u32 2147483647, %v633
  %v1210 = vand.u32 2147483647, %v1133
  %v1211 = vand.u32 2147483647, %v637
  %v1212 = vand.u32 2147483647, %v1137
  %v1213 = vand.u32 2147483647, %v641
  %v1214 = vand.u32 2147483647, %v1141
  %v1215 = vand.u32 2147483647, %v645
  %v1216 = vand.u32 2147483647, %v1145
  %v1217 = vand.u32 2147483647, %v649
  %v1218 = vand.u32 2147483647, %v1149
  %v1219 = vand.u32 2147483647, %v653
  %v1220 = vand.u32 2147483647, %v1153
  %v1221 = vand.u32 2147483647, %v657
  %v1222 = vand.u32 2147483647, %v1157
  %v1223 = vand.u32 2147483647, %v661
  %v1224 = vand.u32 2147483647, %v1161
  %v1225 = vand.u32 2147483647, %v665
  %v1226 = vand.u32 2147483647, %v1165
  %v1227 = vsub.f32 0.0, %v1203
  %v1228 = vsub.f32 0.0, %v1204
  %v1229 = vsub.f32 0.0, %v1205
  %v1230 = vsub.f32 0.0, %v1206
  %v1231 = vsub.f32 0.0, %v1207
  %v1232 = vsub.f32 0.0, %v1208
  %v1233 = vsub.f32 0.0, %v1209
  %v1234 = vsub.f32 0.0, %v1210
  %v1235 = vsub.f32 0.0, %v1211
  %v1236 = vsub.f32 0.0, %v1212
  %v1237 = vsub.f32 0.0, %v1213
  %v1238 = vsub.f32 0.0, %v1214
  %v1239 = vsub.f32 0.0, %v1215
  %v1240 = vsub.f32 0.0, %v1216
  %v1241 = vsub.f32 0.0, %v1217
  %v1242 = vsub.f32 0.0, %v1218
  %v1243 = vsub.f32 0.0, %v1219
  %v1244 = vsub.f32 0.0, %v1220
  %v1245 = vsub.f32 0.0, %v1221
  %v1246 = vsub.f32 0.0, %v1222
  %v1247 = vsub.f32 0.0, %v1223
  %v1248 = vsub.f32 0.0, %v1224
  %v1249 = vsub.f32 0.0, %v1225
  %v1250 = vsub.f32 0.0, %v1226
  %v1251 = vmul.f32 %v1227, 1.442695
  %v1252 = vpow.pop %v1251
  %v1253 = vmul.f32 %v1228, 1.442695
  %v1254 = vpow.pop %v1253
  %v1255 = vmul.f32 %v1229, 1.442695
  %v1256 = vpow.pop %v1255
  %v1257 = vmul.f32 %v1230, 1.442695
  %v1258 = vpow.pop %v1257
  %v1259 = vmul.f32 %v1231, 1.442695
  %v1260 = vpow.pop %v1259
  %v1261 = vmul.f32 %v1232, 1.442695
  %v1262 = vpow.pop %v1261
  %v1263 = vmul.f32 %v1233, 1.442695
  %v1264 = vpow.pop %v1263
  %v1265 = vmul.f32 %v1234, 1.442695
  %v1266 = vpow.pop %v1265
  %v1267 = vmul.f32 %v1235, 1.442695
  %v1268 = vpow.pop %v1267
  %v1269 = vmul.f32 %v1236, 1.442695
  %v1270 = vpow.pop %v1269
  %v1271 = vmul.f32 %v1237, 1.442695
  %v1272 = vpow.pop %v1271
  %v1273 = vmul.f32 %v1238, 1.442695
  %v1274 = vpow.pop %v1273
  %v1275 = vmul.f32 %v1239, 1.442695
  %v1276 = vpow.pop %v1275
  %v1277 = vmul.f32 %v1240, 1.442695
  %v1278 = vpow.pop %v1277
  %v1279 = vmul.f32 %v1241, 1.442695
  %v1280 = vpow.pop %v1279
  %v1281 = vmul.f32 %v1242, 1.442695
  %v1282 = vpow.pop %v1281
  %v1283 = vmul.f32 %v1243, 1.442695
  %v1284 = vpow.pop %v1283
  %v1285 = vmul.f32 %v1244, 1.442695
  %v1286 = vpow.pop %v1285
  %v1287 = vmul.f32 %v1245, 1.442695
  %v1288 = vpow.pop %v1287
  %v1289 = vmul.f32 %v1246, 1.442695
  %v1290 = vpow.pop %v1289
  %v1291 = vmul.f32 %v1247, 1.442695
  %v1292 = vpow.pop %v1291
  %v1293 = vmul.f32 %v1248, 1.442695
  %v1294 = vpow.pop %v1293
  %v1295 = vmul.f32 %v1249, 1.442695
  %v1296 = vpow.pop %v1295
  %v1297 = vmul.f32 %v1250, 1.442695
  %v1298 = vpow.pop %v1297
  %v1299 = vadd.f32 %v1252, 1.0
  %v1300 = vlog2.pop %v1299
  %v1301 = vmul.f32 %v1300, 0.6931472
  %v1302 = vmul.f32 -0.5, %v1252
  %v1303 = vadd.f32 %v1302, 1.0
  %v1304 = vmul.f32 %v1303, %v1252
  %v1305 = vand.u32 2147483647, %v1252
  %vm1306 = vcmp.lt.f32.partialorder %v1305, 0.0004427343
  %v1307 = vsel %vm1306, %v1304, %v1301
  %v1308 = vadd.f32 %v1254, 1.0
  %v1309 = vlog2.pop %v1308
  %v1310 = vmul.f32 %v1309, 0.6931472
  %v1311 = vmul.f32 -0.5, %v1254
  %v1312 = vadd.f32 %v1311, 1.0
  %v1313 = vmul.f32 %v1312, %v1254
  %v1314 = vand.u32 2147483647, %v1254
  %vm1315 = vcmp.lt.f32.partialorder %v1314, 0.0004427343
  %v1316 = vsel %vm1315, %v1313, %v1310
  %v1317 = vadd.f32 %v1256, 1.0
  %v1318 = vlog2.pop %v1317
  %v1319 = vmul.f32 %v1318, 0.6931472
  %v1320 = vmul.f32 -0.5, %v1256
  %v1321 = vadd.f32 %v1320, 1.0
  %v1322 = vmul.f32 %v1321, %v1256
  %v1323 = vand.u32 2147483647, %v1256
  %vm1324 = vcmp.lt.f32.partialorder %v1323, 0.0004427343
  %v1325 = vsel %vm1324, %v1322, %v1319
  %v1326 = vadd.f32 %v1258, 1.0
  %v1327 = vlog2.pop %v1326
  %v1328 = vmul.f32 %v1327, 0.6931472
  %v1329 = vmul.f32 -0.5, %v1258
  %v1330 = vadd.f32 %v1329, 1.0
  %v1331 = vmul.f32 %v1330, %v1258
  %v1332 = vand.u32 2147483647, %v1258
  %vm1333 = vcmp.lt.f32.partialorder %v1332, 0.0004427343
  %v1334 = vsel %vm1333, %v1331, %v1328
  %v1335 = vadd.f32 %v1260, 1.0
  %v1336 = vlog2.pop %v1335
  %v1337 = vmul.f32 %v1336, 0.6931472
  %v1338 = vmul.f32 -0.5, %v1260
  %v1339 = vadd.f32 %v1338, 1.0
  %v1340 = vmul.f32 %v1339, %v1260
  %v1341 = vand.u32 2147483647, %v1260
  %vm1342 = vcmp.lt.f32.partialorder %v1341, 0.0004427343
  %v1343 = vsel %vm1342, %v1340, %v1337
  %v1344 = vadd.f32 %v1262, 1.0
  %v1345 = vlog2.pop %v1344
  %v1346 = vmul.f32 %v1345, 0.6931472
  %v1347 = vmul.f32 -0.5, %v1262
  %v1348 = vadd.f32 %v1347, 1.0
  %v1349 = vmul.f32 %v1348, %v1262
  %v1350 = vand.u32 2147483647, %v1262
  %vm1351 = vcmp.lt.f32.partialorder %v1350, 0.0004427343
  %v1352 = vsel %vm1351, %v1349, %v1346
  %v1353 = vadd.f32 %v1264, 1.0
  %v1354 = vlog2.pop %v1353
  %v1355 = vmul.f32 %v1354, 0.6931472
  %v1356 = vmul.f32 -0.5, %v1264
  %v1357 = vadd.f32 %v1356, 1.0
  %v1358 = vmul.f32 %v1357, %v1264
  %v1359 = vand.u32 2147483647, %v1264
  %vm1360 = vcmp.lt.f32.partialorder %v1359, 0.0004427343
  %v1361 = vsel %vm1360, %v1358, %v1355
  %v1362 = vadd.f32 %v1266, 1.0
  %v1363 = vlog2.pop %v1362
  %v1364 = vmul.f32 %v1363, 0.6931472
  %v1365 = vmul.f32 -0.5, %v1266
  %v1366 = vadd.f32 %v1365, 1.0
  %v1367 = vmul.f32 %v1366, %v1266
  %v1368 = vand.u32 2147483647, %v1266
  %vm1369 = vcmp.lt.f32.partialorder %v1368, 0.0004427343
  %v1370 = vsel %vm1369, %v1367, %v1364
  %v1371 = vadd.f32 %v1268, 1.0
  %v1372 = vlog2.pop %v1371
  %v1373 = vmul.f32 %v1372, 0.6931472
  %v1374 = vmul.f32 -0.5, %v1268
  %v1375 = vadd.f32 %v1374, 1.0
  %v1376 = vmul.f32 %v1375, %v1268
  %v1377 = vand.u32 2147483647, %v1268
  %vm1378 = vcmp.lt.f32.partialorder %v1377, 0.0004427343
  %v1379 = vsel %vm1378, %v1376, %v1373
  %v1380 = vadd.f32 %v1270, 1.0
  %v1381 = vlog2.pop %v1380
  %v1382 = vmul.f32 %v1381, 0.6931472
  %v1383 = vmul.f32 -0.5, %v1270
  %v1384 = vadd.f32 %v1383, 1.0
  %v1385 = vmul.f32 %v1384, %v1270
  %v1386 = vand.u32 2147483647, %v1270
  %vm1387 = vcmp.lt.f32.partialorder %v1386, 0.0004427343
  %v1388 = vsel %vm1387, %v1385, %v1382
  %v1389 = vadd.f32 %v1272, 1.0
  %v1390 = vlog2.pop %v1389
  %v1391 = vmul.f32 %v1390, 0.6931472
  %v1392 = vmul.f32 -0.5, %v1272
  %v1393 = vadd.f32 %v1392, 1.0
  %v1394 = vmul.f32 %v1393, %v1272
  %v1395 = vand.u32 2147483647, %v1272
  %vm1396 = vcmp.lt.f32.partialorder %v1395, 0.0004427343
  %v1397 = vsel %vm1396, %v1394, %v1391
  %v1398 = vadd.f32 %v1274, 1.0
  %v1399 = vlog2.pop %v1398
  %v1400 = vmul.f32 %v1399, 0.6931472
  %v1401 = vmul.f32 -0.5, %v1274
  %v1402 = vadd.f32 %v1401, 1.0
  %v1403 = vmul.f32 %v1402, %v1274
  %v1404 = vand.u32 2147483647, %v1274
  %vm1405 = vcmp.lt.f32.partialorder %v1404, 0.0004427343
  %v1406 = vsel %vm1405, %v1403, %v1400
  %v1407 = vadd.f32 %v1276, 1.0
  %v1408 = vlog2.pop %v1407
  %v1409 = vmul.f32 %v1408, 0.6931472
  %v1410 = vmul.f32 -0.5, %v1276
  %v1411 = vadd.f32 %v1410, 1.0
  %v1412 = vmul.f32 %v1411, %v1276
  %v1413 = vand.u32 2147483647, %v1276
  %vm1414 = vcmp.lt.f32.partialorder %v1413, 0.0004427343
  %v1415 = vsel %vm1414, %v1412, %v1409
  %v1416 = vadd.f32 %v1278, 1.0
  %v1417 = vlog2.pop %v1416
  %v1418 = vmul.f32 %v1417, 0.6931472
  %v1419 = vmul.f32 -0.5, %v1278
  %v1420 = vadd.f32 %v1419, 1.0
  %v1421 = vmul.f32 %v1420, %v1278
  %v1422 = vand.u32 2147483647, %v1278
  %vm1423 = vcmp.lt.f32.partialorder %v1422, 0.0004427343
  %v1424 = vsel %vm1423, %v1421, %v1418
  %v1425 = vadd.f32 %v1280, 1.0
  %v1426 = vlog2.pop %v1425
  %v1427 = vmul.f32 %v1426, 0.6931472
  %v1428 = vmul.f32 -0.5, %v1280
  %v1429 = vadd.f32 %v1428, 1.0
  %v1430 = vmul.f32 %v1429, %v1280
  %v1431 = vand.u32 2147483647, %v1280
  %vm1432 = vcmp.lt.f32.partialorder %v1431, 0.0004427343
  %v1433 = vsel %vm1432, %v1430, %v1427
  %v1434 = vadd.f32 %v1282, 1.0
  %v1435 = vlog2.pop %v1434
  %v1436 = vmul.f32 %v1435, 0.6931472
  %v1437 = vmul.f32 -0.5, %v1282
  %v1438 = vadd.f32 %v1437, 1.0
  %v1439 = vmul.f32 %v1438, %v1282
  %v1440 = vand.u32 2147483647, %v1282
  %vm1441 = vcmp.lt.f32.partialorder %v1440, 0.0004427343
  %v1442 = vsel %vm1441, %v1439, %v1436
  %v1443 = vadd.f32 %v1284, 1.0
  %v1444 = vlog2.pop %v1443
  %v1445 = vmul.f32 %v1444, 0.6931472
  %v1446 = vmul.f32 -0.5, %v1284
  %v1447 = vadd.f32 %v1446, 1.0
  %v1448 = vmul.f32 %v1447, %v1284
  %v1449 = vand.u32 2147483647, %v1284
  %vm1450 = vcmp.lt.f32.partialorder %v1449, 0.0004427343
  %v1451 = vsel %vm1450, %v1448, %v1445
  %v1452 = vadd.f32 %v1286, 1.0
  %v1453 = vlog2.pop %v1452
  %v1454 = vmul.f32 %v1453, 0.6931472
  %v1455 = vmul.f32 -0.5, %v1286
  %v1456 = vadd.f32 %v1455, 1.0
  %v1457 = vmul.f32 %v1456, %v1286
  %v1458 = vand.u32 2147483647, %v1286
  %vm1459 = vcmp.lt.f32.partialorder %v1458, 0.0004427343
  %v1460 = vsel %vm1459, %v1457, %v1454
  %v1461 = vadd.f32 %v1288, 1.0
  %v1462 = vlog2.pop %v1461
  %v1463 = vmul.f32 %v1462, 0.6931472
  %v1464 = vmul.f32 -0.5, %v1288
  %v1465 = vadd.f32 %v1464, 1.0
  %v1466 = vmul.f32 %v1465, %v1288
  %v1467 = vand.u32 2147483647, %v1288
  %vm1468 = vcmp.lt.f32.partialorder %v1467, 0.0004427343
  %v1469 = vsel %vm1468, %v1466, %v1463
  %v1470 = vadd.f32 %v1290, 1.0
  %v1471 = vlog2.pop %v1470
  %v1472 = vmul.f32 %v1471, 0.6931472
  %v1473 = vmul.f32 -0.5, %v1290
  %v1474 = vadd.f32 %v1473, 1.0
  %v1475 = vmul.f32 %v1474, %v1290
  %v1476 = vand.u32 2147483647, %v1290
  %vm1477 = vcmp.lt.f32.partialorder %v1476, 0.0004427343
  %v1478 = vsel %vm1477, %v1475, %v1472
  %v1479 = vadd.f32 %v1292, 1.0
  %v1480 = vlog2.pop %v1479
  %v1481 = vmul.f32 %v1480, 0.6931472
  %v1482 = vmul.f32 -0.5, %v1292
  %v1483 = vadd.f32 %v1482, 1.0
  %v1484 = vmul.f32 %v1483, %v1292
  %v1485 = vand.u32 2147483647, %v1292
  %vm1486 = vcmp.lt.f32.partialorder %v1485, 0.0004427343
  %v1487 = vsel %vm1486, %v1484, %v1481
  %v1488 = vadd.f32 %v1294, 1.0
  %v1489 = vlog2.pop %v1488
  %v1490 = vmul.f32 %v1489, 0.6931472
  %v1491 = vmul.f32 -0.5, %v1294
  %v1492 = vadd.f32 %v1491, 1.0
  %v1493 = vmul.f32 %v1492, %v1294
  %v1494 = vand.u32 2147483647, %v1294
  %vm1495 = vcmp.lt.f32.partialorder %v1494, 0.0004427343
  %v1496 = vsel %vm1495, %v1493, %v1490
  %v1497 = vadd.f32 %v1296, 1.0
  %v1498 = vlog2.pop %v1497
  %v1499 = vmul.f32 %v1498, 0.6931472
  %v1500 = vmul.f32 -0.5, %v1296
  %v1501 = vadd.f32 %v1500, 1.0
  %v1502 = vmul.f32 %v1501, %v1296
  %v1503 = vand.u32 2147483647, %v1296
  %vm1504 = vcmp.lt.f32.partialorder %v1503, 0.0004427343
  %v1505 = vsel %vm1504, %v1502, %v1499
  %v1506 = vadd.f32 %v1298, 1.0
  %v1507 = vlog2.pop %v1506
  %v1508 = vmul.f32 %v1507, 0.6931472
  %v1509 = vmul.f32 -0.5, %v1298
  %v1510 = vadd.f32 %v1509, 1.0
  %v1511 = vmul.f32 %v1510, %v1298
  %v1512 = vand.u32 2147483647, %v1298
  %vm1513 = vcmp.lt.f32.partialorder %v1512, 0.0004427343
  %v1514 = vsel %vm1513, %v1511, %v1508
  %v1515 = vadd.f32 %v1179, %v1307
  %v1516 = vadd.f32 %v1180, %v1316
  %v1517 = vadd.f32 %v1181, %v1325
  %v1518 = vadd.f32 %v1182, %v1334
  %v1519 = vadd.f32 %v1183, %v1343
  %v1520 = vadd.f32 %v1184, %v1352
  %v1521 = vadd.f32 %v1185, %v1361
  %v1522 = vadd.f32 %v1186, %v1370
  %v1523 = vadd.f32 %v1187, %v1379
  %v1524 = vadd.f32 %v1188, %v1388
  %v1525 = vadd.f32 %v1189, %v1397
  %v1526 = vadd.f32 %v1190, %v1406
  %v1527 = vadd.f32 %v1191, %v1415
  %v1528 = vadd.f32 %v1192, %v1424
  %v1529 = vadd.f32 %v1193, %v1433
  %v1530 = vadd.f32 %v1194, %v1442
  %v1531 = vadd.f32 %v1195, %v1451
  %v1532 = vadd.f32 %v1196, %v1460
  %v1533 = vadd.f32 %v1197, %v1469
  %v1534 = vadd.f32 %v1198, %v1478
  %v1535 = vadd.f32 %v1199, %v1487
  %v1536 = vadd.f32 %v1200, %v1496
  %v1537 = vadd.f32 %v1201, %v1505
  %v1538 = vadd.f32 %v1202, %v1514
  %1540 = vset.pattern.permute.xlu0 96
  %1541 = vperm.xlu0 %1540, %v1167
  %v1542 = vpop.permute.xlu0 %1541
  %1545 = vset.pattern.permute.xlu0 96
  %1546 = vperm.xlu0 %1545, %v1168
  %v1547 = vpop.permute.xlu0 %1546
  %1550 = vset.pattern.permute.xlu0 96
  %1551 = vperm.xlu0 %1550, %v1169
  %v1552 = vpop.permute.xlu0 %1551
  %1555 = vset.pattern.permute.xlu0 96
  %1556 = vperm.xlu0 %1555, %v1170
  %v1557 = vpop.permute.xlu0 %1556
  %1560 = vset.pattern.permute.xlu0 96
  %1561 = vperm.xlu0 %1560, %v1171
  %v1562 = vpop.permute.xlu0 %1561
  %1565 = vset.pattern.permute.xlu0 96
  %1566 = vperm.xlu0 %1565, %v1172
  %v1567 = vpop.permute.xlu0 %1566
  %1570 = vset.pattern.permute.xlu0 96
  %1571 = vperm.xlu0 %1570, %v1173
  %v1572 = vpop.permute.xlu0 %1571
  %1575 = vset.pattern.permute.xlu0 96
  %1576 = vperm.xlu0 %1575, %v1174
  %v1577 = vpop.permute.xlu0 %1576
  %1580 = vset.pattern.permute.xlu0 96
  %1581 = vperm.xlu0 %1580, %v1175
  %v1582 = vpop.permute.xlu0 %1581
  %1585 = vset.pattern.permute.xlu0 96
  %1586 = vperm.xlu0 %1585, %v1176
  %v1587 = vpop.permute.xlu0 %1586
  %1590 = vset.pattern.permute.xlu0 96
  %1591 = vperm.xlu0 %1590, %v1177
  %v1592 = vpop.permute.xlu0 %1591
  %1595 = vset.pattern.permute.xlu0 96
  %1596 = vperm.xlu0 %1595, %v1178
  %v1597 = vpop.permute.xlu0 %1596
  %vm1599 = vcmask 785408
  %v1600 = vsel %vm1599, %v1167, 0
  %v1602 = vsel %vm1599, %v1168, 0
  %v1604 = vsel %vm1599, %v1169, 0
  %v1606 = vsel %vm1599, %v1170, 0
  %v1608 = vsel %vm1599, %v1171, 0
  %v1610 = vsel %vm1599, %v1172, 0
  %v1612 = vsel %vm1599, %v1173, 0
  %v1614 = vsel %vm1599, %v1174, 0
  %v1616 = vsel %vm1599, %v1175, 0
  %v1618 = vsel %vm1599, %v1176, 0
  %v1620 = vsel %vm1599, %v1177, 0
  %v1622 = vsel %vm1599, %v1178, 0
  %1624 = vmatpush.msra.mxu0 0.0
  %1625 = vmatpush.msra.mxu0 0.0
  %1626 = vmatpush.msra.mxu0 0.0
  %1627 = vmatpush.msra.mxu0 0.0
  %v1628 = vand.u32 %v1537, 4294901760
  %1629 = vmatpush.msra.mxu0 %v1628
  %v1630 = vand.u32 %v1535, 4294901760
  %1631 = vmatpush.msra.mxu0 %v1630
  %v1632 = vand.u32 %v1533, 4294901760
  %1633 = vmatpush.msra.mxu0 %v1632
  %v1634 = vand.u32 %v1531, 4294901760
  %1635 = vmatpush.msra.mxu0 %v1634
  %v1636 = vand.u32 %v1529, 4294901760
  %1637 = vmatpush.msra.mxu0 %v1636
  %v1638 = vand.u32 %v1527, 4294901760
  %1639 = vmatpush.msra.mxu0 %v1638
  %v1640 = vand.u32 %v1525, 4294901760
  %1641 = vmatpush.msra.mxu0 %v1640
  %v1642 = vand.u32 %v1523, 4294901760
  %1643 = vmatpush.msra.mxu0 %v1642
  %v1644 = vand.u32 %v1521, 4294901760
  %1645 = vmatpush.msra.mxu0 %v1644
  %v1646 = vand.u32 %v1519, 4294901760
  %1647 = vmatpush.msra.mxu0 %v1646
  %v1648 = vand.u32 %v1517, 4294901760
  %1649 = vmatpush.msra.mxu0 %v1648
  %v1650 = vand.u32 %v1515, 4294901760
  %1651 = vmatpush.msra.mxu0 %v1650
  %v1652 = vand.u32 %v1600, 4294901760
  %v1653 = vsub.f32 %v1600, %v1652
  %v1654 = vand.u32 %v1653, 4294901760
  %v1655 = vsub.f32 %v1653, %v1654
  %v1656 = vand.u32 %v1655, 4294901760
  %1657 = vmatmul.f32.gmra.mxu0 %v1656
  %v1658 = vpop.f32.mrf.mxu0
  %v1659 = vadd.f32 %v1542, %v1658
  %v1660 = vand.u32 %v1602, 4294901760
  %v1661 = vsub.f32 %v1602, %v1660
  %v1662 = vand.u32 %v1661, 4294901760
  %v1663 = vsub.f32 %v1661, %v1662
  %v1664 = vand.u32 %v1663, 4294901760
  %1665 = vmatmul.f32.gmra.mxu0 %v1664
  %v1666 = vpop.f32.mrf.mxu0
  %v1667 = vadd.f32 %v1547, %v1666
  %v1668 = vand.u32 %v1604, 4294901760
  %v1669 = vsub.f32 %v1604, %v1668
  %v1670 = vand.u32 %v1669, 4294901760
  %v1671 = vsub.f32 %v1669, %v1670
  %v1672 = vand.u32 %v1671, 4294901760
  %1673 = vmatmul.f32.gmra.mxu0 %v1672
  %v1674 = vpop.f32.mrf.mxu0
  %v1675 = vadd.f32 %v1552, %v1674
  %v1676 = vand.u32 %v1606, 4294901760
  %v1677 = vsub.f32 %v1606, %v1676
  %v1678 = vand.u32 %v1677, 4294901760
  %v1679 = vsub.f32 %v1677, %v1678
  %v1680 = vand.u32 %v1679, 4294901760
  %1681 = vmatmul.f32.gmra.mxu0 %v1680
  %v1682 = vpop.f32.mrf.mxu0
  %v1683 = vadd.f32 %v1557, %v1682
  %v1684 = vand.u32 %v1608, 4294901760
  %v1685 = vsub.f32 %v1608, %v1684
  %v1686 = vand.u32 %v1685, 4294901760
  %v1687 = vsub.f32 %v1685, %v1686
  %v1688 = vand.u32 %v1687, 4294901760
  %1689 = vmatmul.f32.gmra.mxu0 %v1688
  %v1690 = vpop.f32.mrf.mxu0
  %v1691 = vadd.f32 %v1562, %v1690
  %v1692 = vand.u32 %v1610, 4294901760
  %v1693 = vsub.f32 %v1610, %v1692
  %v1694 = vand.u32 %v1693, 4294901760
  %v1695 = vsub.f32 %v1693, %v1694
  %v1696 = vand.u32 %v1695, 4294901760
  %1697 = vmatmul.f32.gmra.mxu0 %v1696
  %v1698 = vpop.f32.mrf.mxu0
  %v1699 = vadd.f32 %v1567, %v1698
  %v1700 = vand.u32 %v1612, 4294901760
  %v1701 = vsub.f32 %v1612, %v1700
  %v1702 = vand.u32 %v1701, 4294901760
  %v1703 = vsub.f32 %v1701, %v1702
  %v1704 = vand.u32 %v1703, 4294901760
  %1705 = vmatmul.f32.gmra.mxu0 %v1704
  %v1706 = vpop.f32.mrf.mxu0
  %v1707 = vadd.f32 %v1572, %v1706
  %v1708 = vand.u32 %v1614, 4294901760
  %v1709 = vsub.f32 %v1614, %v1708
  %v1710 = vand.u32 %v1709, 4294901760
  %v1711 = vsub.f32 %v1709, %v1710
  %v1712 = vand.u32 %v1711, 4294901760
  %1713 = vmatmul.f32.gmra.mxu0 %v1712
  %v1714 = vpop.f32.mrf.mxu0
  %v1715 = vadd.f32 %v1577, %v1714
  %v1716 = vand.u32 %v1616, 4294901760
  %v1717 = vsub.f32 %v1616, %v1716
  %v1718 = vand.u32 %v1717, 4294901760
  %v1719 = vsub.f32 %v1717, %v1718
  %v1720 = vand.u32 %v1719, 4294901760
  %1721 = vmatmul.f32.gmra.mxu0 %v1720
  %v1722 = vpop.f32.mrf.mxu0
  %v1723 = vadd.f32 %v1582, %v1722
  %v1724 = vand.u32 %v1618, 4294901760
  %v1725 = vsub.f32 %v1618, %v1724
  %v1726 = vand.u32 %v1725, 4294901760
  %v1727 = vsub.f32 %v1725, %v1726
  %v1728 = vand.u32 %v1727, 4294901760
  %1729 = vmatmul.f32.gmra.mxu0 %v1728
  %v1730 = vpop.f32.mrf.mxu0
  %v1731 = vadd.f32 %v1587, %v1730
  %v1732 = vand.u32 %v1620, 4294901760
  %v1733 = vsub.f32 %v1620, %v1732
  %v1734 = vand.u32 %v1733, 4294901760
  %v1735 = vsub.f32 %v1733, %v1734
  %v1736 = vand.u32 %v1735, 4294901760
  %1737 = vmatmul.f32.gmra.mxu0 %v1736
  %v1738 = vpop.f32.mrf.mxu0
  %v1739 = vadd.f32 %v1592, %v1738
  %v1740 = vand.u32 %v1622, 4294901760
  %v1741 = vsub.f32 %v1622, %v1740
  %v1742 = vand.u32 %v1741, 4294901760
  %v1743 = vsub.f32 %v1741, %v1742
  %v1744 = vand.u32 %v1743, 4294901760
  %1745 = vmatmul.f32.gmra.mxu0 %v1744
  %v1746 = vpop.f32.mrf.mxu0
  %v1747 = vadd.f32 %v1597, %v1746
  %1748 = vdwg.mxu0
  %1749 = vmatpush.msra.mxu0 0.0
  %1750 = vmatpush.msra.mxu0 0.0
  %1751 = vmatpush.msra.mxu0 0.0
  %1752 = vmatpush.msra.mxu0 0.0
  %v1753 = vand.u32 %v1537, 4294901760
  %v1754 = vsub.f32 %v1537, %v1753
  %v1755 = vand.u32 %v1754, 4294901760
  %v1756 = vsub.f32 %v1754, %v1755
  %v1757 = vand.u32 %v1756, 4294901760
  %1758 = vmatpush.msra.mxu0 %v1757
  %v1759 = vand.u32 %v1535, 4294901760
  %v1760 = vsub.f32 %v1535, %v1759
  %v1761 = vand.u32 %v1760, 4294901760
  %v1762 = vsub.f32 %v1760, %v1761
  %v1763 = vand.u32 %v1762, 4294901760
  %1764 = vmatpush.msra.mxu0 %v1763
  %v1765 = vand.u32 %v1533, 4294901760
  %v1766 = vsub.f32 %v1533, %v1765
  %v1767 = vand.u32 %v1766, 4294901760
  %v1768 = vsub.f32 %v1766, %v1767
  %v1769 = vand.u32 %v1768, 4294901760
  %1770 = vmatpush.msra.mxu0 %v1769
  %v1771 = vand.u32 %v1531, 4294901760
  %v1772 = vsub.f32 %v1531, %v1771
  %v1773 = vand.u32 %v1772, 4294901760
  %v1774 = vsub.f32 %v1772, %v1773
  %v1775 = vand.u32 %v1774, 4294901760
  %1776 = vmatpush.msra.mxu0 %v1775
  %v1777 = vand.u32 %v1529, 4294901760
  %v1778 = vsub.f32 %v1529, %v1777
  %v1779 = vand.u32 %v1778, 4294901760
  %v1780 = vsub.f32 %v1778, %v1779
  %v1781 = vand.u32 %v1780, 4294901760
  %1782 = vmatpush.msra.mxu0 %v1781
  %v1783 = vand.u32 %v1527, 4294901760
  %v1784 = vsub.f32 %v1527, %v1783
  %v1785 = vand.u32 %v1784, 4294901760
  %v1786 = vsub.f32 %v1784, %v1785
  %v1787 = vand.u32 %v1786, 4294901760
  %1788 = vmatpush.msra.mxu0 %v1787
  %v1789 = vand.u32 %v1525, 4294901760
  %v1790 = vsub.f32 %v1525, %v1789
  %v1791 = vand.u32 %v1790, 4294901760
  %v1792 = vsub.f32 %v1790, %v1791
  %v1793 = vand.u32 %v1792, 4294901760
  %1794 = vmatpush.msra.mxu0 %v1793
  %v1795 = vand.u32 %v1523, 4294901760
  %v1796 = vsub.f32 %v1523, %v1795
  %v1797 = vand.u32 %v1796, 4294901760
  %v1798 = vsub.f32 %v1796, %v1797
  %v1799 = vand.u32 %v1798, 4294901760
  %1800 = vmatpush.msra.mxu0 %v1799
  %v1801 = vand.u32 %v1521, 4294901760
  %v1802 = vsub.f32 %v1521, %v1801
  %v1803 = vand.u32 %v1802, 4294901760
  %v1804 = vsub.f32 %v1802, %v1803
  %v1805 = vand.u32 %v1804, 4294901760
  %1806 = vmatpush.msra.mxu0 %v1805
  %v1807 = vand.u32 %v1519, 4294901760
  %v1808 = vsub.f32 %v1519, %v1807
  %v1809 = vand.u32 %v1808, 4294901760
  %v1810 = vsub.f32 %v1808, %v1809
  %v1811 = vand.u32 %v1810, 4294901760
  %1812 = vmatpush.msra.mxu0 %v1811
  %v1813 = vand.u32 %v1517, 4294901760
  %v1814 = vsub.f32 %v1517, %v1813
  %v1815 = vand.u32 %v1814, 4294901760
  %v1816 = vsub.f32 %v1814, %v1815
  %v1817 = vand.u32 %v1816, 4294901760
  %1818 = vmatpush.msra.mxu0 %v1817
  %v1819 = vand.u32 %v1515, 4294901760
  %v1820 = vsub.f32 %v1515, %v1819
  %v1821 = vand.u32 %v1820, 4294901760
  %v1822 = vsub.f32 %v1820, %v1821
  %v1823 = vand.u32 %v1822, 4294901760
  %1824 = vmatpush.msra.mxu0 %v1823
  %v1825 = vand.u32 %v1600, 4294901760
  %1826 = vmatmul.f32.gmra.mxu0 %v1825
  %v1827 = vpop.f32.mrf.mxu0
  %v1828 = vadd.f32 %v1659, %v1827
  %v1829 = vand.u32 %v1602, 4294901760
  %1830 = vmatmul.f32.gmra.mxu0 %v1829
  %v1831 = vpop.f32.mrf.mxu0
  %v1832 = vadd.f32 %v1667, %v1831
  %v1833 = vand.u32 %v1604, 4294901760
  %1834 = vmatmul.f32.gmra.mxu0 %v1833
  %v1835 = vpop.f32.mrf.mxu0
  %v1836 = vadd.f32 %v1675, %v1835
  %v1837 = vand.u32 %v1606, 4294901760
  %1838 = vmatmul.f32.gmra.mxu0 %v1837
  %v1839 = vpop.f32.mrf.mxu0
  %v1840 = vadd.f32 %v1683, %v1839
  %v1841 = vand.u32 %v1608, 4294901760
  %1842 = vmatmul.f32.gmra.mxu0 %v1841
  %v1843 = vpop.f32.mrf.mxu0
  %v1844 = vadd.f32 %v1691, %v1843
  %v1845 = vand.u32 %v1610, 4294901760
  %1846 = vmatmul.f32.gmra.mxu0 %v1845
  %v1847 = vpop.f32.mrf.mxu0
  %v1848 = vadd.f32 %v1699, %v1847
  %v1849 = vand.u32 %v1612, 4294901760
  %1850 = vmatmul.f32.gmra.mxu0 %v1849
  %v1851 = vpop.f32.mrf.mxu0
  %v1852 = vadd.f32 %v1707, %v1851
  %v1853 = vand.u32 %v1614, 4294901760
  %1854 = vmatmul.f32.gmra.mxu0 %v1853
  %v1855 = vpop.f32.mrf.mxu0
  %v1856 = vadd.f32 %v1715, %v1855
  %v1857 = vand.u32 %v1616, 4294901760
  %1858 = vmatmul.f32.gmra.mxu0 %v1857
  %v1859 = vpop.f32.mrf.mxu0
  %v1860 = vadd.f32 %v1723, %v1859
  %v1861 = vand.u32 %v1618, 4294901760
  %1862 = vmatmul.f32.gmra.mxu0 %v1861
  %v1863 = vpop.f32.mrf.mxu0
  %v1864 = vadd.f32 %v1731, %v1863
  %v1865 = vand.u32 %v1620, 4294901760
  %1866 = vmatmul.f32.gmra.mxu0 %v1865
  %v1867 = vpop.f32.mrf.mxu0
  %v1868 = vadd.f32 %v1739, %v1867
  %v1869 = vand.u32 %v1622, 4294901760
  %1870 = vmatmul.f32.gmra.mxu0 %v1869
  %v1871 = vpop.f32.mrf.mxu0
  %v1872 = vadd.f32 %v1747, %v1871
  %1873 = vdwg.mxu0
  %1874 = vmatpush.msra.mxu0 0.0
  %1875 = vmatpush.msra.mxu0 0.0
  %1876 = vmatpush.msra.mxu0 0.0
  %1877 = vmatpush.msra.mxu0 0.0
  %v1878 = vand.u32 %v1537, 4294901760
  %v1879 = vsub.f32 %v1537, %v1878
  %1880 = vmatpush.msra.mxu0 %v1879
  %v1881 = vand.u32 %v1535, 4294901760
  %v1882 = vsub.f32 %v1535, %v1881
  %1883 = vmatpush.msra.mxu0 %v1882
  %v1884 = vand.u32 %v1533, 4294901760
  %v1885 = vsub.f32 %v1533, %v1884
  %1886 = vmatpush.msra.mxu0 %v1885
  %v1887 = vand.u32 %v1531, 4294901760
  %v1888 = vsub.f32 %v1531, %v1887
  %1889 = vmatpush.msra.mxu0 %v1888
  %v1890 = vand.u32 %v1529, 4294901760
  %v1891 = vsub.f32 %v1529, %v1890
  %1892 = vmatpush.msra.mxu0 %v1891
  %v1893 = vand.u32 %v1527, 4294901760
  %v1894 = vsub.f32 %v1527, %v1893
  %1895 = vmatpush.msra.mxu0 %v1894
  %v1896 = vand.u32 %v1525, 4294901760
  %v1897 = vsub.f32 %v1525, %v1896
  %1898 = vmatpush.msra.mxu0 %v1897
  %v1899 = vand.u32 %v1523, 4294901760
  %v1900 = vsub.f32 %v1523, %v1899
  %1901 = vmatpush.msra.mxu0 %v1900
  %v1902 = vand.u32 %v1521, 4294901760
  %v1903 = vsub.f32 %v1521, %v1902
  %1904 = vmatpush.msra.mxu0 %v1903
  %v1905 = vand.u32 %v1519, 4294901760
  %v1906 = vsub.f32 %v1519, %v1905
  %1907 = vmatpush.msra.mxu0 %v1906
  %v1908 = vand.u32 %v1517, 4294901760
  %v1909 = vsub.f32 %v1517, %v1908
  %1910 = vmatpush.msra.mxu0 %v1909
  %v1911 = vand.u32 %v1515, 4294901760
  %v1912 = vsub.f32 %v1515, %v1911
  %1913 = vmatpush.msra.mxu0 %v1912
  %v1914 = vand.u32 %v1600, 4294901760
  %v1915 = vsub.f32 %v1600, %v1914
  %1916 = vmatmul.f32.gmra.mxu0 %v1915
  %v1917 = vpop.f32.mrf.mxu0
  %v1918 = vadd.f32 %v1828, %v1917
  %v1919 = vand.u32 %v1602, 4294901760
  %v1920 = vsub.f32 %v1602, %v1919
  %1921 = vmatmul.f32.gmra.mxu0 %v1920
  %v1922 = vpop.f32.mrf.mxu0
  %v1923 = vadd.f32 %v1832, %v1922
  %v1924 = vand.u32 %v1604, 4294901760
  %v1925 = vsub.f32 %v1604, %v1924
  %1926 = vmatmul.f32.gmra.mxu0 %v1925
  %v1927 = vpop.f32.mrf.mxu0
  %v1928 = vadd.f32 %v1836, %v1927
  %v1929 = vand.u32 %v1606, 4294901760
  %v1930 = vsub.f32 %v1606, %v1929
  %1931 = vmatmul.f32.gmra.mxu0 %v1930
  %v1932 = vpop.f32.mrf.mxu0
  %v1933 = vadd.f32 %v1840, %v1932
  %v1934 = vand.u32 %v1608, 4294901760
  %v1935 = vsub.f32 %v1608, %v1934
  %1936 = vmatmul.f32.gmra.mxu0 %v1935
  %v1937 = vpop.f32.mrf.mxu0
  %v1938 = vadd.f32 %v1844, %v1937
  %v1939 = vand.u32 %v1610, 4294901760
  %v1940 = vsub.f32 %v1610, %v1939
  %1941 = vmatmul.f32.gmra.mxu0 %v1940
  %v1942 = vpop.f32.mrf.mxu0
  %v1943 = vadd.f32 %v1848, %v1942
  %v1944 = vand.u32 %v1612, 4294901760
  %v1945 = vsub.f32 %v1612, %v1944
  %1946 = vmatmul.f32.gmra.mxu0 %v1945
  %v1947 = vpop.f32.mrf.mxu0
  %v1948 = vadd.f32 %v1852, %v1947
  %v1949 = vand.u32 %v1614, 4294901760
  %v1950 = vsub.f32 %v1614, %v1949
  %1951 = vmatmul.f32.gmra.mxu0 %v1950
  %v1952 = vpop.f32.mrf.mxu0
  %v1953 = vadd.f32 %v1856, %v1952
  %v1954 = vand.u32 %v1616, 4294901760
  %v1955 = vsub.f32 %v1616, %v1954
  %1956 = vmatmul.f32.gmra.mxu0 %v1955
  %v1957 = vpop.f32.mrf.mxu0
  %v1958 = vadd.f32 %v1860, %v1957
  %v1959 = vand.u32 %v1618, 4294901760
  %v1960 = vsub.f32 %v1618, %v1959
  %1961 = vmatmul.f32.gmra.mxu0 %v1960
  %v1962 = vpop.f32.mrf.mxu0
  %v1963 = vadd.f32 %v1864, %v1962
  %v1964 = vand.u32 %v1620, 4294901760
  %v1965 = vsub.f32 %v1620, %v1964
  %1966 = vmatmul.f32.gmra.mxu0 %v1965
  %v1967 = vpop.f32.mrf.mxu0
  %v1968 = vadd.f32 %v1868, %v1967
  %v1969 = vand.u32 %v1622, 4294901760
  %v1970 = vsub.f32 %v1622, %v1969
  %1971 = vmatmul.f32.gmra.mxu0 %v1970
  %v1972 = vpop.f32.mrf.mxu0
  %v1973 = vadd.f32 %v1872, %v1972
  %1974 = vdwg.mxu0
  %1975 = vmatpush.msra.mxu0 0.0
  %1976 = vmatpush.msra.mxu0 0.0
  %1977 = vmatpush.msra.mxu0 0.0
  %1978 = vmatpush.msra.mxu0 0.0
  %v1979 = vand.u32 %v1537, 4294901760
  %1980 = vmatpush.msra.mxu0 %v1979
  %v1981 = vand.u32 %v1535, 4294901760
  %1982 = vmatpush.msra.mxu0 %v1981
  %v1983 = vand.u32 %v1533, 4294901760
  %1984 = vmatpush.msra.mxu0 %v1983
  %v1985 = vand.u32 %v1531, 4294901760
  %1986 = vmatpush.msra.mxu0 %v1985
  %v1987 = vand.u32 %v1529, 4294901760
  %1988 = vmatpush.msra.mxu0 %v1987
  %v1989 = vand.u32 %v1527, 4294901760
  %1990 = vmatpush.msra.mxu0 %v1989
  %v1991 = vand.u32 %v1525, 4294901760
  %1992 = vmatpush.msra.mxu0 %v1991
  %v1993 = vand.u32 %v1523, 4294901760
  %1994 = vmatpush.msra.mxu0 %v1993
  %v1995 = vand.u32 %v1521, 4294901760
  %1996 = vmatpush.msra.mxu0 %v1995
  %v1997 = vand.u32 %v1519, 4294901760
  %1998 = vmatpush.msra.mxu0 %v1997
  %v1999 = vand.u32 %v1517, 4294901760
  %2000 = vmatpush.msra.mxu0 %v1999
  %v2001 = vand.u32 %v1515, 4294901760
  %2002 = vmatpush.msra.mxu0 %v2001
  %v2003 = vand.u32 %v1600, 4294901760
  %v2004 = vsub.f32 %v1600, %v2003
  %v2005 = vand.u32 %v2004, 4294901760
  %2006 = vmatmul.f32.gmra.mxu0 %v2005
  %v2007 = vpop.f32.mrf.mxu0
  %v2008 = vadd.f32 %v1918, %v2007
  %v2009 = vand.u32 %v1602, 4294901760
  %v2010 = vsub.f32 %v1602, %v2009
  %v2011 = vand.u32 %v2010, 4294901760
  %2012 = vmatmul.f32.gmra.mxu0 %v2011
  %v2013 = vpop.f32.mrf.mxu0
  %v2014 = vadd.f32 %v1923, %v2013
  %v2015 = vand.u32 %v1604, 4294901760
  %v2016 = vsub.f32 %v1604, %v2015
  %v2017 = vand.u32 %v2016, 4294901760
  %2018 = vmatmul.f32.gmra.mxu0 %v2017
  %v2019 = vpop.f32.mrf.mxu0
  %v2020 = vadd.f32 %v1928, %v2019
  %v2021 = vand.u32 %v1606, 4294901760
  %v2022 = vsub.f32 %v1606, %v2021
  %v2023 = vand.u32 %v2022, 4294901760
  %2024 = vmatmul.f32.gmra.mxu0 %v2023
  %v2025 = vpop.f32.mrf.mxu0
  %v2026 = vadd.f32 %v1933, %v2025
  %v2027 = vand.u32 %v1608, 4294901760
  %v2028 = vsub.f32 %v1608, %v2027
  %v2029 = vand.u32 %v2028, 4294901760
  %2030 = vmatmul.f32.gmra.mxu0 %v2029
  %v2031 = vpop.f32.mrf.mxu0
  %v2032 = vadd.f32 %v1938, %v2031
  %v2033 = vand.u32 %v1610, 4294901760
  %v2034 = vsub.f32 %v1610, %v2033
  %v2035 = vand.u32 %v2034, 4294901760
  %2036 = vmatmul.f32.gmra.mxu0 %v2035
  %v2037 = vpop.f32.mrf.mxu0
  %v2038 = vadd.f32 %v1943, %v2037
  %v2039 = vand.u32 %v1612, 4294901760
  %v2040 = vsub.f32 %v1612, %v2039
  %v2041 = vand.u32 %v2040, 4294901760
  %2042 = vmatmul.f32.gmra.mxu0 %v2041
  %v2043 = vpop.f32.mrf.mxu0
  %v2044 = vadd.f32 %v1948, %v2043
  %v2045 = vand.u32 %v1614, 4294901760
  %v2046 = vsub.f32 %v1614, %v2045
  %v2047 = vand.u32 %v2046, 4294901760
  %2048 = vmatmul.f32.gmra.mxu0 %v2047
  %v2049 = vpop.f32.mrf.mxu0
  %v2050 = vadd.f32 %v1953, %v2049
  %v2051 = vand.u32 %v1616, 4294901760
  %v2052 = vsub.f32 %v1616, %v2051
  %v2053 = vand.u32 %v2052, 4294901760
  %2054 = vmatmul.f32.gmra.mxu0 %v2053
  %v2055 = vpop.f32.mrf.mxu0
  %v2056 = vadd.f32 %v1958, %v2055
  %v2057 = vand.u32 %v1618, 4294901760
  %v2058 = vsub.f32 %v1618, %v2057
  %v2059 = vand.u32 %v2058, 4294901760
  %2060 = vmatmul.f32.gmra.mxu0 %v2059
  %v2061 = vpop.f32.mrf.mxu0
  %v2062 = vadd.f32 %v1963, %v2061
  %v2063 = vand.u32 %v1620, 4294901760
  %v2064 = vsub.f32 %v1620, %v2063
  %v2065 = vand.u32 %v2064, 4294901760
  %2066 = vmatmul.f32.gmra.mxu0 %v2065
  %v2067 = vpop.f32.mrf.mxu0
  %v2068 = vadd.f32 %v1968, %v2067
  %v2069 = vand.u32 %v1622, 4294901760
  %v2070 = vsub.f32 %v1622, %v2069
  %v2071 = vand.u32 %v2070, 4294901760
  %2072 = vmatmul.f32.gmra.mxu0 %v2071
  %v2073 = vpop.f32.mrf.mxu0
  %v2074 = vadd.f32 %v1973, %v2073
  %2075 = vdwg.mxu0
  %2076 = vmatpush.msra.mxu0 0.0
  %2077 = vmatpush.msra.mxu0 0.0
  %2078 = vmatpush.msra.mxu0 0.0
  %2079 = vmatpush.msra.mxu0 0.0
  %v2080 = vand.u32 %v1537, 4294901760
  %v2081 = vsub.f32 %v1537, %v2080
  %v2082 = vand.u32 %v2081, 4294901760
  %2083 = vmatpush.msra.mxu0 %v2082
  %v2084 = vand.u32 %v1535, 4294901760
  %v2085 = vsub.f32 %v1535, %v2084
  %v2086 = vand.u32 %v2085, 4294901760
  %2087 = vmatpush.msra.mxu0 %v2086
  %v2088 = vand.u32 %v1533, 4294901760
  %v2089 = vsub.f32 %v1533, %v2088
  %v2090 = vand.u32 %v2089, 4294901760
  %2091 = vmatpush.msra.mxu0 %v2090
  %v2092 = vand.u32 %v1531, 4294901760
  %v2093 = vsub.f32 %v1531, %v2092
  %v2094 = vand.u32 %v2093, 4294901760
  %2095 = vmatpush.msra.mxu0 %v2094
  %v2096 = vand.u32 %v1529, 4294901760
  %v2097 = vsub.f32 %v1529, %v2096
  %v2098 = vand.u32 %v2097, 4294901760
  %2099 = vmatpush.msra.mxu0 %v2098
  %v2100 = vand.u32 %v1527, 4294901760
  %v2101 = vsub.f32 %v1527, %v2100
  %v2102 = vand.u32 %v2101, 4294901760
  %2103 = vmatpush.msra.mxu0 %v2102
  %v2104 = vand.u32 %v1525, 4294901760
  %v2105 = vsub.f32 %v1525, %v2104
  %v2106 = vand.u32 %v2105, 4294901760
  %2107 = vmatpush.msra.mxu0 %v2106
  %v2108 = vand.u32 %v1523, 4294901760
  %v2109 = vsub.f32 %v1523, %v2108
  %v2110 = vand.u32 %v2109, 4294901760
  %2111 = vmatpush.msra.mxu0 %v2110
  %v2112 = vand.u32 %v1521, 4294901760
  %v2113 = vsub.f32 %v1521, %v2112
  %v2114 = vand.u32 %v2113, 4294901760
  %2115 = vmatpush.msra.mxu0 %v2114
  %v2116 = vand.u32 %v1519, 4294901760
  %v2117 = vsub.f32 %v1519, %v2116
  %v2118 = vand.u32 %v2117, 4294901760
  %2119 = vmatpush.msra.mxu0 %v2118
  %v2120 = vand.u32 %v1517, 4294901760
  %v2121 = vsub.f32 %v1517, %v2120
  %v2122 = vand.u32 %v2121, 4294901760
  %2123 = vmatpush.msra.mxu0 %v2122
  %v2124 = vand.u32 %v1515, 4294901760
  %v2125 = vsub.f32 %v1515, %v2124
  %v2126 = vand.u32 %v2125, 4294901760
  %2127 = vmatpush.msra.mxu0 %v2126
  %v2128 = vand.u32 %v1600, 4294901760
  %2129 = vmatmul.f32.gmra.mxu0 %v2128
  %v2130 = vpop.f32.mrf.mxu0
  %v2131 = vadd.f32 %v2008, %v2130
  %v2132 = vand.u32 %v1602, 4294901760
  %2133 = vmatmul.f32.gmra.mxu0 %v2132
  %v2134 = vpop.f32.mrf.mxu0
  %v2135 = vadd.f32 %v2014, %v2134
  %v2136 = vand.u32 %v1604, 4294901760
  %2137 = vmatmul.f32.gmra.mxu0 %v2136
  %v2138 = vpop.f32.mrf.mxu0
  %v2139 = vadd.f32 %v2020, %v2138
  %v2140 = vand.u32 %v1606, 4294901760
  %2141 = vmatmul.f32.gmra.mxu0 %v2140
  %v2142 = vpop.f32.mrf.mxu0
  %v2143 = vadd.f32 %v2026, %v2142
  %v2144 = vand.u32 %v1608, 4294901760
  %2145 = vmatmul.f32.gmra.mxu0 %v2144
  %v2146 = vpop.f32.mrf.mxu0
  %v2147 = vadd.f32 %v2032, %v2146
  %v2148 = vand.u32 %v1610, 4294901760
  %2149 = vmatmul.f32.gmra.mxu0 %v2148
  %v2150 = vpop.f32.mrf.mxu0
  %v2151 = vadd.f32 %v2038, %v2150
  %v2152 = vand.u32 %v1612, 4294901760
  %2153 = vmatmul.f32.gmra.mxu0 %v2152
  %v2154 = vpop.f32.mrf.mxu0
  %v2155 = vadd.f32 %v2044, %v2154
  %v2156 = vand.u32 %v1614, 4294901760
  %2157 = vmatmul.f32.gmra.mxu0 %v2156
  %v2158 = vpop.f32.mrf.mxu0
  %v2159 = vadd.f32 %v2050, %v2158
  %v2160 = vand.u32 %v1616, 4294901760
  %2161 = vmatmul.f32.gmra.mxu0 %v2160
  %v2162 = vpop.f32.mrf.mxu0
  %v2163 = vadd.f32 %v2056, %v2162
  %v2164 = vand.u32 %v1618, 4294901760
  %2165 = vmatmul.f32.gmra.mxu0 %v2164
  %v2166 = vpop.f32.mrf.mxu0
  %v2167 = vadd.f32 %v2062, %v2166
  %v2168 = vand.u32 %v1620, 4294901760
  %2169 = vmatmul.f32.gmra.mxu0 %v2168
  %v2170 = vpop.f32.mrf.mxu0
  %v2171 = vadd.f32 %v2068, %v2170
  %v2172 = vand.u32 %v1622, 4294901760
  %2173 = vmatmul.f32.gmra.mxu0 %v2172
  %v2174 = vpop.f32.mrf.mxu0
  %v2175 = vadd.f32 %v2074, %v2174
  %2176 = vdwg.mxu0
  %2177 = vmatpush.msra.mxu0 0.0
  %2178 = vmatpush.msra.mxu0 0.0
  %2179 = vmatpush.msra.mxu0 0.0
  %2180 = vmatpush.msra.mxu0 0.0
  %v2181 = vand.u32 %v1537, 4294901760
  %2182 = vmatpush.msra.mxu0 %v2181
  %v2183 = vand.u32 %v1535, 4294901760
  %2184 = vmatpush.msra.mxu0 %v2183
  %v2185 = vand.u32 %v1533, 4294901760
  %2186 = vmatpush.msra.mxu0 %v2185
  %v2187 = vand.u32 %v1531, 4294901760
  %2188 = vmatpush.msra.mxu0 %v2187
  %v2189 = vand.u32 %v1529, 4294901760
  %2190 = vmatpush.msra.mxu0 %v2189
  %v2191 = vand.u32 %v1527, 4294901760
  %2192 = vmatpush.msra.mxu0 %v2191
  %v2193 = vand.u32 %v1525, 4294901760
  %2194 = vmatpush.msra.mxu0 %v2193
  %v2195 = vand.u32 %v1523, 4294901760
  %2196 = vmatpush.msra.mxu0 %v2195
  %v2197 = vand.u32 %v1521, 4294901760
  %2198 = vmatpush.msra.mxu0 %v2197
  %v2199 = vand.u32 %v1519, 4294901760
  %2200 = vmatpush.msra.mxu0 %v2199
  %v2201 = vand.u32 %v1517, 4294901760
  %2202 = vmatpush.msra.mxu0 %v2201
  %v2203 = vand.u32 %v1515, 4294901760
  %2204 = vmatpush.msra.mxu0 %v2203
  %v2205 = vand.u32 %v1600, 4294901760
  %2206 = vmatmul.f32.gmra.mxu0 %v2205
  %v2207 = vpop.f32.mrf.mxu0
  %v2208 = vadd.f32 %v2131, %v2207
  %v2209 = vand.u32 %v1602, 4294901760
  %2210 = vmatmul.f32.gmra.mxu0 %v2209
  %v2211 = vpop.f32.mrf.mxu0
  %v2212 = vadd.f32 %v2135, %v2211
  %v2213 = vand.u32 %v1604, 4294901760
  %2214 = vmatmul.f32.gmra.mxu0 %v2213
  %v2215 = vpop.f32.mrf.mxu0
  %v2216 = vadd.f32 %v2139, %v2215
  %v2217 = vand.u32 %v1606, 4294901760
  %2218 = vmatmul.f32.gmra.mxu0 %v2217
  %v2219 = vpop.f32.mrf.mxu0
  %v2220 = vadd.f32 %v2143, %v2219
  %v2221 = vand.u32 %v1608, 4294901760
  %2222 = vmatmul.f32.gmra.mxu0 %v2221
  %v2223 = vpop.f32.mrf.mxu0
  %v2224 = vadd.f32 %v2147, %v2223
  %v2225 = vand.u32 %v1610, 4294901760
  %2226 = vmatmul.f32.gmra.mxu0 %v2225
  %v2227 = vpop.f32.mrf.mxu0
  %v2228 = vadd.f32 %v2151, %v2227
  %v2229 = vand.u32 %v1612, 4294901760
  %2230 = vmatmul.f32.gmra.mxu0 %v2229
  %v2231 = vpop.f32.mrf.mxu0
  %v2232 = vadd.f32 %v2155, %v2231
  %v2233 = vand.u32 %v1614, 4294901760
  %2234 = vmatmul.f32.gmra.mxu0 %v2233
  %v2235 = vpop.f32.mrf.mxu0
  %v2236 = vadd.f32 %v2159, %v2235
  %v2237 = vand.u32 %v1616, 4294901760
  %2238 = vmatmul.f32.gmra.mxu0 %v2237
  %v2239 = vpop.f32.mrf.mxu0
  %v2240 = vadd.f32 %v2163, %v2239
  %v2241 = vand.u32 %v1618, 4294901760
  %2242 = vmatmul.f32.gmra.mxu0 %v2241
  %v2243 = vpop.f32.mrf.mxu0
  %v2244 = vadd.f32 %v2167, %v2243
  %v2245 = vand.u32 %v1620, 4294901760
  %2246 = vmatmul.f32.gmra.mxu0 %v2245
  %v2247 = vpop.f32.mrf.mxu0
  %v2248 = vadd.f32 %v2171, %v2247
  %v2249 = vand.u32 %v1622, 4294901760
  %2250 = vmatmul.f32.gmra.mxu0 %v2249
  %v2251 = vpop.f32.mrf.mxu0
  %v2252 = vadd.f32 %v2175, %v2251
  %2253 = vdwg.mxu0
  %2254 = vmatpush.msra.mxu0 0.0
  %2255 = vmatpush.msra.mxu0 0.0
  %2256 = vmatpush.msra.mxu0 0.0
  %2257 = vmatpush.msra.mxu0 0.0
  %v2258 = vand.u32 %v1538, 4294901760
  %2259 = vmatpush.msra.mxu0 %v2258
  %v2260 = vand.u32 %v1536, 4294901760
  %2261 = vmatpush.msra.mxu0 %v2260
  %v2262 = vand.u32 %v1534, 4294901760
  %2263 = vmatpush.msra.mxu0 %v2262
  %v2264 = vand.u32 %v1532, 4294901760
  %2265 = vmatpush.msra.mxu0 %v2264
  %v2266 = vand.u32 %v1530, 4294901760
  %2267 = vmatpush.msra.mxu0 %v2266
  %v2268 = vand.u32 %v1528, 4294901760
  %2269 = vmatpush.msra.mxu0 %v2268
  %v2270 = vand.u32 %v1526, 4294901760
  %2271 = vmatpush.msra.mxu0 %v2270
  %v2272 = vand.u32 %v1524, 4294901760
  %2273 = vmatpush.msra.mxu0 %v2272
  %v2274 = vand.u32 %v1522, 4294901760
  %2275 = vmatpush.msra.mxu0 %v2274
  %v2276 = vand.u32 %v1520, 4294901760
  %2277 = vmatpush.msra.mxu0 %v2276
  %v2278 = vand.u32 %v1518, 4294901760
  %2279 = vmatpush.msra.mxu0 %v2278
  %v2280 = vand.u32 %v1516, 4294901760
  %2281 = vmatpush.msra.mxu0 %v2280
  %v2282 = vand.u32 %v1600, 4294901760
  %v2283 = vsub.f32 %v1600, %v2282
  %v2284 = vand.u32 %v2283, 4294901760
  %v2285 = vsub.f32 %v2283, %v2284
  %v2286 = vand.u32 %v2285, 4294901760
  %2287 = vmatmul.f32.gmra.mxu0 %v2286
  %v2288 = vpop.f32.mrf.mxu0
  %v2289 = vadd.f32 %v1542, %v2288
  %v2290 = vand.u32 %v1602, 4294901760
  %v2291 = vsub.f32 %v1602, %v2290
  %v2292 = vand.u32 %v2291, 4294901760
  %v2293 = vsub.f32 %v2291, %v2292
  %v2294 = vand.u32 %v2293, 4294901760
  %2295 = vmatmul.f32.gmra.mxu0 %v2294
  %v2296 = vpop.f32.mrf.mxu0
  %v2297 = vadd.f32 %v1547, %v2296
  %v2298 = vand.u32 %v1604, 4294901760
  %v2299 = vsub.f32 %v1604, %v2298
  %v2300 = vand.u32 %v2299, 4294901760
  %v2301 = vsub.f32 %v2299, %v2300
  %v2302 = vand.u32 %v2301, 4294901760
  %2303 = vmatmul.f32.gmra.mxu0 %v2302
  %v2304 = vpop.f32.mrf.mxu0
  %v2305 = vadd.f32 %v1552, %v2304
  %v2306 = vand.u32 %v1606, 4294901760
  %v2307 = vsub.f32 %v1606, %v2306
  %v2308 = vand.u32 %v2307, 4294901760
  %v2309 = vsub.f32 %v2307, %v2308
  %v2310 = vand.u32 %v2309, 4294901760
  %2311 = vmatmul.f32.gmra.mxu0 %v2310
  %v2312 = vpop.f32.mrf.mxu0
  %v2313 = vadd.f32 %v1557, %v2312
  %v2314 = vand.u32 %v1608, 4294901760
  %v2315 = vsub.f32 %v1608, %v2314
  %v2316 = vand.u32 %v2315, 4294901760
  %v2317 = vsub.f32 %v2315, %v2316
  %v2318 = vand.u32 %v2317, 4294901760
  %2319 = vmatmul.f32.gmra.mxu0 %v2318
  %v2320 = vpop.f32.mrf.mxu0
  %v2321 = vadd.f32 %v1562, %v2320
  %v2322 = vand.u32 %v1610, 4294901760
  %v2323 = vsub.f32 %v1610, %v2322
  %v2324 = vand.u32 %v2323, 4294901760
  %v2325 = vsub.f32 %v2323, %v2324
  %v2326 = vand.u32 %v2325, 4294901760
  %2327 = vmatmul.f32.gmra.mxu0 %v2326
  %v2328 = vpop.f32.mrf.mxu0
  %v2329 = vadd.f32 %v1567, %v2328
  %v2330 = vand.u32 %v1612, 4294901760
  %v2331 = vsub.f32 %v1612, %v2330
  %v2332 = vand.u32 %v2331, 4294901760
  %v2333 = vsub.f32 %v2331, %v2332
  %v2334 = vand.u32 %v2333, 4294901760
  %2335 = vmatmul.f32.gmra.mxu0 %v2334
  %v2336 = vpop.f32.mrf.mxu0
  %v2337 = vadd.f32 %v1572, %v2336
  %v2338 = vand.u32 %v1614, 4294901760
  %v2339 = vsub.f32 %v1614, %v2338
  %v2340 = vand.u32 %v2339, 4294901760
  %v2341 = vsub.f32 %v2339, %v2340
  %v2342 = vand.u32 %v2341, 4294901760
  %2343 = vmatmul.f32.gmra.mxu0 %v2342
  %v2344 = vpop.f32.mrf.mxu0
  %v2345 = vadd.f32 %v1577, %v2344
  %v2346 = vand.u32 %v1616, 4294901760
  %v2347 = vsub.f32 %v1616, %v2346
  %v2348 = vand.u32 %v2347, 4294901760
  %v2349 = vsub.f32 %v2347, %v2348
  %v2350 = vand.u32 %v2349, 4294901760
  %2351 = vmatmul.f32.gmra.mxu0 %v2350
  %v2352 = vpop.f32.mrf.mxu0
  %v2353 = vadd.f32 %v1582, %v2352
  %v2354 = vand.u32 %v1618, 4294901760
  %v2355 = vsub.f32 %v1618, %v2354
  %v2356 = vand.u32 %v2355, 4294901760
  %v2357 = vsub.f32 %v2355, %v2356
  %v2358 = vand.u32 %v2357, 4294901760
  %2359 = vmatmul.f32.gmra.mxu0 %v2358
  %v2360 = vpop.f32.mrf.mxu0
  %v2361 = vadd.f32 %v1587, %v2360
  %v2362 = vand.u32 %v1620, 4294901760
  %v2363 = vsub.f32 %v1620, %v2362
  %v2364 = vand.u32 %v2363, 4294901760
  %v2365 = vsub.f32 %v2363, %v2364
  %v2366 = vand.u32 %v2365, 4294901760
  %2367 = vmatmul.f32.gmra.mxu0 %v2366
  %v2368 = vpop.f32.mrf.mxu0
  %v2369 = vadd.f32 %v1592, %v2368
  %v2370 = vand.u32 %v1622, 4294901760
  %v2371 = vsub.f32 %v1622, %v2370
  %v2372 = vand.u32 %v2371, 4294901760
  %v2373 = vsub.f32 %v2371, %v2372
  %v2374 = vand.u32 %v2373, 4294901760
  %2375 = vmatmul.f32.gmra.mxu0 %v2374
  %v2376 = vpop.f32.mrf.mxu0
  %v2377 = vadd.f32 %v1597, %v2376
  %2378 = vdwg.mxu0
  %2379 = vmatpush.msra.mxu0 0.0
  %2380 = vmatpush.msra.mxu0 0.0
  %2381 = vmatpush.msra.mxu0 0.0
  %2382 = vmatpush.msra.mxu0 0.0
  %v2383 = vand.u32 %v1538, 4294901760
  %v2384 = vsub.f32 %v1538, %v2383
  %v2385 = vand.u32 %v2384, 4294901760
  %v2386 = vsub.f32 %v2384, %v2385
  %v2387 = vand.u32 %v2386, 4294901760
  %2388 = vmatpush.msra.mxu0 %v2387
  %v2389 = vand.u32 %v1536, 4294901760
  %v2390 = vsub.f32 %v1536, %v2389
  %v2391 = vand.u32 %v2390, 4294901760
  %v2392 = vsub.f32 %v2390, %v2391
  %v2393 = vand.u32 %v2392, 4294901760
  %2394 = vmatpush.msra.mxu0 %v2393
  %v2395 = vand.u32 %v1534, 4294901760
  %v2396 = vsub.f32 %v1534, %v2395
  %v2397 = vand.u32 %v2396, 4294901760
  %v2398 = vsub.f32 %v2396, %v2397
  %v2399 = vand.u32 %v2398, 4294901760
  %2400 = vmatpush.msra.mxu0 %v2399
  %v2401 = vand.u32 %v1532, 4294901760
  %v2402 = vsub.f32 %v1532, %v2401
  %v2403 = vand.u32 %v2402, 4294901760
  %v2404 = vsub.f32 %v2402, %v2403
  %v2405 = vand.u32 %v2404, 4294901760
  %2406 = vmatpush.msra.mxu0 %v2405
  %v2407 = vand.u32 %v1530, 4294901760
  %v2408 = vsub.f32 %v1530, %v2407
  %v2409 = vand.u32 %v2408, 4294901760
  %v2410 = vsub.f32 %v2408, %v2409
  %v2411 = vand.u32 %v2410, 4294901760
  %2412 = vmatpush.msra.mxu0 %v2411
  %v2413 = vand.u32 %v1528, 4294901760
  %v2414 = vsub.f32 %v1528, %v2413
  %v2415 = vand.u32 %v2414, 4294901760
  %v2416 = vsub.f32 %v2414, %v2415
  %v2417 = vand.u32 %v2416, 4294901760
  %2418 = vmatpush.msra.mxu0 %v2417
  %v2419 = vand.u32 %v1526, 4294901760
  %v2420 = vsub.f32 %v1526, %v2419
  %v2421 = vand.u32 %v2420, 4294901760
  %v2422 = vsub.f32 %v2420, %v2421
  %v2423 = vand.u32 %v2422, 4294901760
  %2424 = vmatpush.msra.mxu0 %v2423
  %v2425 = vand.u32 %v1524, 4294901760
  %v2426 = vsub.f32 %v1524, %v2425
  %v2427 = vand.u32 %v2426, 4294901760
  %v2428 = vsub.f32 %v2426, %v2427
  %v2429 = vand.u32 %v2428, 4294901760
  %2430 = vmatpush.msra.mxu0 %v2429
  %v2431 = vand.u32 %v1522, 4294901760
  %v2432 = vsub.f32 %v1522, %v2431
  %v2433 = vand.u32 %v2432, 4294901760
  %v2434 = vsub.f32 %v2432, %v2433
  %v2435 = vand.u32 %v2434, 4294901760
  %2436 = vmatpush.msra.mxu0 %v2435
  %v2437 = vand.u32 %v1520, 4294901760
  %v2438 = vsub.f32 %v1520, %v2437
  %v2439 = vand.u32 %v2438, 4294901760
  %v2440 = vsub.f32 %v2438, %v2439
  %v2441 = vand.u32 %v2440, 4294901760
  %2442 = vmatpush.msra.mxu0 %v2441
  %v2443 = vand.u32 %v1518, 4294901760
  %v2444 = vsub.f32 %v1518, %v2443
  %v2445 = vand.u32 %v2444, 4294901760
  %v2446 = vsub.f32 %v2444, %v2445
  %v2447 = vand.u32 %v2446, 4294901760
  %2448 = vmatpush.msra.mxu0 %v2447
  %v2449 = vand.u32 %v1516, 4294901760
  %v2450 = vsub.f32 %v1516, %v2449
  %v2451 = vand.u32 %v2450, 4294901760
  %v2452 = vsub.f32 %v2450, %v2451
  %v2453 = vand.u32 %v2452, 4294901760
  %2454 = vmatpush.msra.mxu0 %v2453
  %v2455 = vand.u32 %v1600, 4294901760
  %2456 = vmatmul.f32.gmra.mxu0 %v2455
  %v2457 = vpop.f32.mrf.mxu0
  %v2458 = vadd.f32 %v2289, %v2457
  %v2459 = vand.u32 %v1602, 4294901760
  %2460 = vmatmul.f32.gmra.mxu0 %v2459
  %v2461 = vpop.f32.mrf.mxu0
  %v2462 = vadd.f32 %v2297, %v2461
  %v2463 = vand.u32 %v1604, 4294901760
  %2464 = vmatmul.f32.gmra.mxu0 %v2463
  %v2465 = vpop.f32.mrf.mxu0
  %v2466 = vadd.f32 %v2305, %v2465
  %v2467 = vand.u32 %v1606, 4294901760
  %2468 = vmatmul.f32.gmra.mxu0 %v2467
  %v2469 = vpop.f32.mrf.mxu0
  %v2470 = vadd.f32 %v2313, %v2469
  %v2471 = vand.u32 %v1608, 4294901760
  %2472 = vmatmul.f32.gmra.mxu0 %v2471
  %v2473 = vpop.f32.mrf.mxu0
  %v2474 = vadd.f32 %v2321, %v2473
  %v2475 = vand.u32 %v1610, 4294901760
  %2476 = vmatmul.f32.gmra.mxu0 %v2475
  %v2477 = vpop.f32.mrf.mxu0
  %v2478 = vadd.f32 %v2329, %v2477
  %v2479 = vand.u32 %v1612, 4294901760
  %2480 = vmatmul.f32.gmra.mxu0 %v2479
  %v2481 = vpop.f32.mrf.mxu0
  %v2482 = vadd.f32 %v2337, %v2481
  %v2483 = vand.u32 %v1614, 4294901760
  %2484 = vmatmul.f32.gmra.mxu0 %v2483
  %v2485 = vpop.f32.mrf.mxu0
  %v2486 = vadd.f32 %v2345, %v2485
  %v2487 = vand.u32 %v1616, 4294901760
  %2488 = vmatmul.f32.gmra.mxu0 %v2487
  %v2489 = vpop.f32.mrf.mxu0
  %v2490 = vadd.f32 %v2353, %v2489
  %v2491 = vand.u32 %v1618, 4294901760
  %2492 = vmatmul.f32.gmra.mxu0 %v2491
  %v2493 = vpop.f32.mrf.mxu0
  %v2494 = vadd.f32 %v2361, %v2493
  %v2495 = vand.u32 %v1620, 4294901760
  %2496 = vmatmul.f32.gmra.mxu0 %v2495
  %v2497 = vpop.f32.mrf.mxu0
  %v2498 = vadd.f32 %v2369, %v2497
  %v2499 = vand.u32 %v1622, 4294901760
  %2500 = vmatmul.f32.gmra.mxu0 %v2499
  %v2501 = vpop.f32.mrf.mxu0
  %v2502 = vadd.f32 %v2377, %v2501
  %2503 = vdwg.mxu0
  %2504 = vmatpush.msra.mxu0 0.0
  %2505 = vmatpush.msra.mxu0 0.0
  %2506 = vmatpush.msra.mxu0 0.0
  %2507 = vmatpush.msra.mxu0 0.0
  %v2508 = vand.u32 %v1538, 4294901760
  %v2509 = vsub.f32 %v1538, %v2508
  %2510 = vmatpush.msra.mxu0 %v2509
  %v2511 = vand.u32 %v1536, 4294901760
  %v2512 = vsub.f32 %v1536, %v2511
  %2513 = vmatpush.msra.mxu0 %v2512
  %v2514 = vand.u32 %v1534, 4294901760
  %v2515 = vsub.f32 %v1534, %v2514
  %2516 = vmatpush.msra.mxu0 %v2515
  %v2517 = vand.u32 %v1532, 4294901760
  %v2518 = vsub.f32 %v1532, %v2517
  %2519 = vmatpush.msra.mxu0 %v2518
  %v2520 = vand.u32 %v1530, 4294901760
  %v2521 = vsub.f32 %v1530, %v2520
  %2522 = vmatpush.msra.mxu0 %v2521
  %v2523 = vand.u32 %v1528, 4294901760
  %v2524 = vsub.f32 %v1528, %v2523
  %2525 = vmatpush.msra.mxu0 %v2524
  %v2526 = vand.u32 %v1526, 4294901760
  %v2527 = vsub.f32 %v1526, %v2526
  %2528 = vmatpush.msra.mxu0 %v2527
  %v2529 = vand.u32 %v1524, 4294901760
  %v2530 = vsub.f32 %v1524, %v2529
  %2531 = vmatpush.msra.mxu0 %v2530
  %v2532 = vand.u32 %v1522, 4294901760
  %v2533 = vsub.f32 %v1522, %v2532
  %2534 = vmatpush.msra.mxu0 %v2533
  %v2535 = vand.u32 %v1520, 4294901760
  %v2536 = vsub.f32 %v1520, %v2535
  %2537 = vmatpush.msra.mxu0 %v2536
  %v2538 = vand.u32 %v1518, 4294901760
  %v2539 = vsub.f32 %v1518, %v2538
  %2540 = vmatpush.msra.mxu0 %v2539
  %v2541 = vand.u32 %v1516, 4294901760
  %v2542 = vsub.f32 %v1516, %v2541
  %2543 = vmatpush.msra.mxu0 %v2542
  %v2544 = vand.u32 %v1600, 4294901760
  %v2545 = vsub.f32 %v1600, %v2544
  %2546 = vmatmul.f32.gmra.mxu0 %v2545
  %v2547 = vpop.f32.mrf.mxu0
  %v2548 = vadd.f32 %v2458, %v2547
  %v2549 = vand.u32 %v1602, 4294901760
  %v2550 = vsub.f32 %v1602, %v2549
  %2551 = vmatmul.f32.gmra.mxu0 %v2550
  %v2552 = vpop.f32.mrf.mxu0
  %v2553 = vadd.f32 %v2462, %v2552
  %v2554 = vand.u32 %v1604, 4294901760
  %v2555 = vsub.f32 %v1604, %v2554
  %2556 = vmatmul.f32.gmra.mxu0 %v2555
  %v2557 = vpop.f32.mrf.mxu0
  %v2558 = vadd.f32 %v2466, %v2557
  %v2559 = vand.u32 %v1606, 4294901760
  %v2560 = vsub.f32 %v1606, %v2559
  %2561 = vmatmul.f32.gmra.mxu0 %v2560
  %v2562 = vpop.f32.mrf.mxu0
  %v2563 = vadd.f32 %v2470, %v2562
  %v2564 = vand.u32 %v1608, 4294901760
  %v2565 = vsub.f32 %v1608, %v2564
  %2566 = vmatmul.f32.gmra.mxu0 %v2565
  %v2567 = vpop.f32.mrf.mxu0
  %v2568 = vadd.f32 %v2474, %v2567
  %v2569 = vand.u32 %v1610, 4294901760
  %v2570 = vsub.f32 %v1610, %v2569
  %2571 = vmatmul.f32.gmra.mxu0 %v2570
  %v2572 = vpop.f32.mrf.mxu0
  %v2573 = vadd.f32 %v2478, %v2572
  %v2574 = vand.u32 %v1612, 4294901760
  %v2575 = vsub.f32 %v1612, %v2574
  %2576 = vmatmul.f32.gmra.mxu0 %v2575
  %v2577 = vpop.f32.mrf.mxu0
  %v2578 = vadd.f32 %v2482, %v2577
  %v2579 = vand.u32 %v1614, 4294901760
  %v2580 = vsub.f32 %v1614, %v2579
  %2581 = vmatmul.f32.gmra.mxu0 %v2580
  %v2582 = vpop.f32.mrf.mxu0
  %v2583 = vadd.f32 %v2486, %v2582
  %v2584 = vand.u32 %v1616, 4294901760
  %v2585 = vsub.f32 %v1616, %v2584
  %2586 = vmatmul.f32.gmra.mxu0 %v2585
  %v2587 = vpop.f32.mrf.mxu0
  %v2588 = vadd.f32 %v2490, %v2587
  %v2589 = vand.u32 %v1618, 4294901760
  %v2590 = vsub.f32 %v1618, %v2589
  %2591 = vmatmul.f32.gmra.mxu0 %v2590
  %v2592 = vpop.f32.mrf.mxu0
  %v2593 = vadd.f32 %v2494, %v2592
  %v2594 = vand.u32 %v1620, 4294901760
  %v2595 = vsub.f32 %v1620, %v2594
  %2596 = vmatmul.f32.gmra.mxu0 %v2595
  %v2597 = vpop.f32.mrf.mxu0
  %v2598 = vadd.f32 %v2498, %v2597
  %v2599 = vand.u32 %v1622, 4294901760
  %v2600 = vsub.f32 %v1622, %v2599
  %2601 = vmatmul.f32.gmra.mxu0 %v2600
  %v2602 = vpop.f32.mrf.mxu0
  %v2603 = vadd.f32 %v2502, %v2602
  %2604 = vdwg.mxu0
  %2605 = vmatpush.msra.mxu0 0.0
  %2606 = vmatpush.msra.mxu0 0.0
  %2607 = vmatpush.msra.mxu0 0.0
  %2608 = vmatpush.msra.mxu0 0.0
  %v2609 = vand.u32 %v1538, 4294901760
  %2610 = vmatpush.msra.mxu0 %v2609
  %v2611 = vand.u32 %v1536, 4294901760
  %2612 = vmatpush.msra.mxu0 %v2611
  %v2613 = vand.u32 %v1534, 4294901760
  %2614 = vmatpush.msra.mxu0 %v2613
  %v2615 = vand.u32 %v1532, 4294901760
  %2616 = vmatpush.msra.mxu0 %v2615
  %v2617 = vand.u32 %v1530, 4294901760
  %2618 = vmatpush.msra.mxu0 %v2617
  %v2619 = vand.u32 %v1528, 4294901760
  %2620 = vmatpush.msra.mxu0 %v2619
  %v2621 = vand.u32 %v1526, 4294901760
  %2622 = vmatpush.msra.mxu0 %v2621
  %v2623 = vand.u32 %v1524, 4294901760
  %2624 = vmatpush.msra.mxu0 %v2623
  %v2625 = vand.u32 %v1522, 4294901760
  %2626 = vmatpush.msra.mxu0 %v2625
  %v2627 = vand.u32 %v1520, 4294901760
  %2628 = vmatpush.msra.mxu0 %v2627
  %v2629 = vand.u32 %v1518, 4294901760
  %2630 = vmatpush.msra.mxu0 %v2629
  %v2631 = vand.u32 %v1516, 4294901760
  %2632 = vmatpush.msra.mxu0 %v2631
  %v2633 = vand.u32 %v1600, 4294901760
  %v2634 = vsub.f32 %v1600, %v2633
  %v2635 = vand.u32 %v2634, 4294901760
  %2636 = vmatmul.f32.gmra.mxu0 %v2635
  %v2637 = vpop.f32.mrf.mxu0
  %v2638 = vadd.f32 %v2548, %v2637
  %v2639 = vand.u32 %v1602, 4294901760
  %v2640 = vsub.f32 %v1602, %v2639
  %v2641 = vand.u32 %v2640, 4294901760
  %2642 = vmatmul.f32.gmra.mxu0 %v2641
  %v2643 = vpop.f32.mrf.mxu0
  %v2644 = vadd.f32 %v2553, %v2643
  %v2645 = vand.u32 %v1604, 4294901760
  %v2646 = vsub.f32 %v1604, %v2645
  %v2647 = vand.u32 %v2646, 4294901760
  %2648 = vmatmul.f32.gmra.mxu0 %v2647
  %v2649 = vpop.f32.mrf.mxu0
  %v2650 = vadd.f32 %v2558, %v2649
  %v2651 = vand.u32 %v1606, 4294901760
  %v2652 = vsub.f32 %v1606, %v2651
  %v2653 = vand.u32 %v2652, 4294901760
  %2654 = vmatmul.f32.gmra.mxu0 %v2653
  %v2655 = vpop.f32.mrf.mxu0
  %v2656 = vadd.f32 %v2563, %v2655
  %v2657 = vand.u32 %v1608, 4294901760
  %v2658 = vsub.f32 %v1608, %v2657
  %v2659 = vand.u32 %v2658, 4294901760
  %2660 = vmatmul.f32.gmra.mxu0 %v2659
  %v2661 = vpop.f32.mrf.mxu0
  %v2662 = vadd.f32 %v2568, %v2661
  %v2663 = vand.u32 %v1610, 4294901760
  %v2664 = vsub.f32 %v1610, %v2663
  %v2665 = vand.u32 %v2664, 4294901760
  %2666 = vmatmul.f32.gmra.mxu0 %v2665
  %v2667 = vpop.f32.mrf.mxu0
  %v2668 = vadd.f32 %v2573, %v2667
  %v2669 = vand.u32 %v1612, 4294901760
  %v2670 = vsub.f32 %v1612, %v2669
  %v2671 = vand.u32 %v2670, 4294901760
  %2672 = vmatmul.f32.gmra.mxu0 %v2671
  %v2673 = vpop.f32.mrf.mxu0
  %v2674 = vadd.f32 %v2578, %v2673
  %v2675 = vand.u32 %v1614, 4294901760
  %v2676 = vsub.f32 %v1614, %v2675
  %v2677 = vand.u32 %v2676, 4294901760
  %2678 = vmatmul.f32.gmra.mxu0 %v2677
  %v2679 = vpop.f32.mrf.mxu0
  %v2680 = vadd.f32 %v2583, %v2679
  %v2681 = vand.u32 %v1616, 4294901760
  %v2682 = vsub.f32 %v1616, %v2681
  %v2683 = vand.u32 %v2682, 4294901760
  %2684 = vmatmul.f32.gmra.mxu0 %v2683
  %v2685 = vpop.f32.mrf.mxu0
  %v2686 = vadd.f32 %v2588, %v2685
  %v2687 = vand.u32 %v1618, 4294901760
  %v2688 = vsub.f32 %v1618, %v2687
  %v2689 = vand.u32 %v2688, 4294901760
  %2690 = vmatmul.f32.gmra.mxu0 %v2689
  %v2691 = vpop.f32.mrf.mxu0
  %v2692 = vadd.f32 %v2593, %v2691
  %v2693 = vand.u32 %v1620, 4294901760
  %v2694 = vsub.f32 %v1620, %v2693
  %v2695 = vand.u32 %v2694, 4294901760
  %2696 = vmatmul.f32.gmra.mxu0 %v2695
  %v2697 = vpop.f32.mrf.mxu0
  %v2698 = vadd.f32 %v2598, %v2697
  %v2699 = vand.u32 %v1622, 4294901760
  %v2700 = vsub.f32 %v1622, %v2699
  %v2701 = vand.u32 %v2700, 4294901760
  %2702 = vmatmul.f32.gmra.mxu0 %v2701
  %v2703 = vpop.f32.mrf.mxu0
  %v2704 = vadd.f32 %v2603, %v2703
  %2705 = vdwg.mxu0
  %2706 = vmatpush.msra.mxu0 0.0
  %2707 = vmatpush.msra.mxu0 0.0
  %2708 = vmatpush.msra.mxu0 0.0
  %2709 = vmatpush.msra.mxu0 0.0
  %v2710 = vand.u32 %v1538, 4294901760
  %v2711 = vsub.f32 %v1538, %v2710
  %v2712 = vand.u32 %v2711, 4294901760
  %2713 = vmatpush.msra.mxu0 %v2712
  %v2714 = vand.u32 %v1536, 4294901760
  %v2715 = vsub.f32 %v1536, %v2714
  %v2716 = vand.u32 %v2715, 4294901760
  %2717 = vmatpush.msra.mxu0 %v2716
  %v2718 = vand.u32 %v1534, 4294901760
  %v2719 = vsub.f32 %v1534, %v2718
  %v2720 = vand.u32 %v2719, 4294901760
  %2721 = vmatpush.msra.mxu0 %v2720
  %v2722 = vand.u32 %v1532, 4294901760
  %v2723 = vsub.f32 %v1532, %v2722
  %v2724 = vand.u32 %v2723, 4294901760
  %2725 = vmatpush.msra.mxu0 %v2724
  %v2726 = vand.u32 %v1530, 4294901760
  %v2727 = vsub.f32 %v1530, %v2726
  %v2728 = vand.u32 %v2727, 4294901760
  %2729 = vmatpush.msra.mxu0 %v2728
  %v2730 = vand.u32 %v1528, 4294901760
  %v2731 = vsub.f32 %v1528, %v2730
  %v2732 = vand.u32 %v2731, 4294901760
  %2733 = vmatpush.msra.mxu0 %v2732
  %v2734 = vand.u32 %v1526, 4294901760
  %v2735 = vsub.f32 %v1526, %v2734
  %v2736 = vand.u32 %v2735, 4294901760
  %2737 = vmatpush.msra.mxu0 %v2736
  %v2738 = vand.u32 %v1524, 4294901760
  %v2739 = vsub.f32 %v1524, %v2738
  %v2740 = vand.u32 %v2739, 4294901760
  %2741 = vmatpush.msra.mxu0 %v2740
  %v2742 = vand.u32 %v1522, 4294901760
  %v2743 = vsub.f32 %v1522, %v2742
  %v2744 = vand.u32 %v2743, 4294901760
  %2745 = vmatpush.msra.mxu0 %v2744
  %v2746 = vand.u32 %v1520, 4294901760
  %v2747 = vsub.f32 %v1520, %v2746
  %v2748 = vand.u32 %v2747, 4294901760
  %2749 = vmatpush.msra.mxu0 %v2748
  %v2750 = vand.u32 %v1518, 4294901760
  %v2751 = vsub.f32 %v1518, %v2750
  %v2752 = vand.u32 %v2751, 4294901760
  %2753 = vmatpush.msra.mxu0 %v2752
  %v2754 = vand.u32 %v1516, 4294901760
  %v2755 = vsub.f32 %v1516, %v2754
  %v2756 = vand.u32 %v2755, 4294901760
  %2757 = vmatpush.msra.mxu0 %v2756
  %v2758 = vand.u32 %v1600, 4294901760
  %2759 = vmatmul.f32.gmra.mxu0 %v2758
  %v2760 = vpop.f32.mrf.mxu0
  %v2761 = vadd.f32 %v2638, %v2760
  %v2762 = vand.u32 %v1602, 4294901760
  %2763 = vmatmul.f32.gmra.mxu0 %v2762
  %v2764 = vpop.f32.mrf.mxu0
  %v2765 = vadd.f32 %v2644, %v2764
  %v2766 = vand.u32 %v1604, 4294901760
  %2767 = vmatmul.f32.gmra.mxu0 %v2766
  %v2768 = vpop.f32.mrf.mxu0
  %v2769 = vadd.f32 %v2650, %v2768
  %v2770 = vand.u32 %v1606, 4294901760
  %2771 = vmatmul.f32.gmra.mxu0 %v2770
  %v2772 = vpop.f32.mrf.mxu0
  %v2773 = vadd.f32 %v2656, %v2772
  %v2774 = vand.u32 %v1608, 4294901760
  %2775 = vmatmul.f32.gmra.mxu0 %v2774
  %v2776 = vpop.f32.mrf.mxu0
  %v2777 = vadd.f32 %v2662, %v2776
  %v2778 = vand.u32 %v1610, 4294901760
  %2779 = vmatmul.f32.gmra.mxu0 %v2778
  %v2780 = vpop.f32.mrf.mxu0
  %v2781 = vadd.f32 %v2668, %v2780
  %v2782 = vand.u32 %v1612, 4294901760
  %2783 = vmatmul.f32.gmra.mxu0 %v2782
  %v2784 = vpop.f32.mrf.mxu0
  %v2785 = vadd.f32 %v2674, %v2784
  %v2786 = vand.u32 %v1614, 4294901760
  %2787 = vmatmul.f32.gmra.mxu0 %v2786
  %v2788 = vpop.f32.mrf.mxu0
  %v2789 = vadd.f32 %v2680, %v2788
  %v2790 = vand.u32 %v1616, 4294901760
  %2791 = vmatmul.f32.gmra.mxu0 %v2790
  %v2792 = vpop.f32.mrf.mxu0
  %v2793 = vadd.f32 %v2686, %v2792
  %v2794 = vand.u32 %v1618, 4294901760
  %2795 = vmatmul.f32.gmra.mxu0 %v2794
  %v2796 = vpop.f32.mrf.mxu0
  %v2797 = vadd.f32 %v2692, %v2796
  %v2798 = vand.u32 %v1620, 4294901760
  %2799 = vmatmul.f32.gmra.mxu0 %v2798
  %v2800 = vpop.f32.mrf.mxu0
  %v2801 = vadd.f32 %v2698, %v2800
  %v2802 = vand.u32 %v1622, 4294901760
  %2803 = vmatmul.f32.gmra.mxu0 %v2802
  %v2804 = vpop.f32.mrf.mxu0
  %v2805 = vadd.f32 %v2704, %v2804
  %2806 = vdwg.mxu0
  %2807 = vmatpush.msra.mxu0 0.0
  %2808 = vmatpush.msra.mxu0 0.0
  %2809 = vmatpush.msra.mxu0 0.0
  %2810 = vmatpush.msra.mxu0 0.0
  %v2811 = vand.u32 %v1538, 4294901760
  %2812 = vmatpush.msra.mxu0 %v2811
  %v2813 = vand.u32 %v1536, 4294901760
  %2814 = vmatpush.msra.mxu0 %v2813
  %v2815 = vand.u32 %v1534, 4294901760
  %2816 = vmatpush.msra.mxu0 %v2815
  %v2817 = vand.u32 %v1532, 4294901760
  %2818 = vmatpush.msra.mxu0 %v2817
  %v2819 = vand.u32 %v1530, 4294901760
  %2820 = vmatpush.msra.mxu0 %v2819
  %v2821 = vand.u32 %v1528, 4294901760
  %2822 = vmatpush.msra.mxu0 %v2821
  %v2823 = vand.u32 %v1526, 4294901760
  %2824 = vmatpush.msra.mxu0 %v2823
  %v2825 = vand.u32 %v1524, 4294901760
  %2826 = vmatpush.msra.mxu0 %v2825
  %v2827 = vand.u32 %v1522, 4294901760
  %2828 = vmatpush.msra.mxu0 %v2827
  %v2829 = vand.u32 %v1520, 4294901760
  %2830 = vmatpush.msra.mxu0 %v2829
  %v2831 = vand.u32 %v1518, 4294901760
  %2832 = vmatpush.msra.mxu0 %v2831
  %v2833 = vand.u32 %v1516, 4294901760
  %2834 = vmatpush.msra.mxu0 %v2833
  %v2835 = vand.u32 %v1600, 4294901760
  %2836 = vmatmul.f32.gmra.mxu0 %v2835
  %v2837 = vpop.f32.mrf.mxu0
  %v2838 = vadd.f32 %v2761, %v2837
  %v2839 = vand.u32 %v1602, 4294901760
  %2840 = vmatmul.f32.gmra.mxu0 %v2839
  %v2841 = vpop.f32.mrf.mxu0
  %v2842 = vadd.f32 %v2765, %v2841
  %v2843 = vand.u32 %v1604, 4294901760
  %2844 = vmatmul.f32.gmra.mxu0 %v2843
  %v2845 = vpop.f32.mrf.mxu0
  %v2846 = vadd.f32 %v2769, %v2845
  %v2847 = vand.u32 %v1606, 4294901760
  %2848 = vmatmul.f32.gmra.mxu0 %v2847
  %v2849 = vpop.f32.mrf.mxu0
  %v2850 = vadd.f32 %v2773, %v2849
  %v2851 = vand.u32 %v1608, 4294901760
  %2852 = vmatmul.f32.gmra.mxu0 %v2851
  %v2853 = vpop.f32.mrf.mxu0
  %v2854 = vadd.f32 %v2777, %v2853
  %v2855 = vand.u32 %v1610, 4294901760
  %2856 = vmatmul.f32.gmra.mxu0 %v2855
  %v2857 = vpop.f32.mrf.mxu0
  %v2858 = vadd.f32 %v2781, %v2857
  %v2859 = vand.u32 %v1612, 4294901760
  %2860 = vmatmul.f32.gmra.mxu0 %v2859
  %v2861 = vpop.f32.mrf.mxu0
  %v2862 = vadd.f32 %v2785, %v2861
  %v2863 = vand.u32 %v1614, 4294901760
  %2864 = vmatmul.f32.gmra.mxu0 %v2863
  %v2865 = vpop.f32.mrf.mxu0
  %v2866 = vadd.f32 %v2789, %v2865
  %v2867 = vand.u32 %v1616, 4294901760
  %2868 = vmatmul.f32.gmra.mxu0 %v2867
  %v2869 = vpop.f32.mrf.mxu0
  %v2870 = vadd.f32 %v2793, %v2869
  %v2871 = vand.u32 %v1618, 4294901760
  %2872 = vmatmul.f32.gmra.mxu0 %v2871
  %v2873 = vpop.f32.mrf.mxu0
  %v2874 = vadd.f32 %v2797, %v2873
  %v2875 = vand.u32 %v1620, 4294901760
  %2876 = vmatmul.f32.gmra.mxu0 %v2875
  %v2877 = vpop.f32.mrf.mxu0
  %v2878 = vadd.f32 %v2801, %v2877
  %v2879 = vand.u32 %v1622, 4294901760
  %2880 = vmatmul.f32.gmra.mxu0 %v2879
  %v2881 = vpop.f32.mrf.mxu0
  %v2882 = vadd.f32 %v2805, %v2881
  %2883 = vdwg.mxu0
  %v2884 = vmul.f32 %v23, 0.31415927
  %v2885 = vand.u32 2147483647, %v2884
  %vm2886 = vcmp.le.f32.partialorder %v2885, 0.7853982
  %vm2887 = vcmp.lt.s32.totalorder %v2884, 0
  %v2888 = vand.u32 %v2884, 2139095040
  %v2889 = vshrl.u32 %v2888, 23
  %v2890 = vsub.s32 %v2889, 127
  %v2891 = vand.u32 2147483647, %v2884
  %v2892 = vand.u32 %v2891, 8388607
  %v2893 = vor.u32 %v2892, 8388608
  %v2894 = vsub.s32 0, %v2893
  %v2895 = vadd.s32 %v2890, 1
  %vm2896 = vcmp.gt.s32.totalorder %v2895, 0
  %v2897 = vsel %vm2896, %v2895, 0
  %v2898 = vshrl.u32 %v2897, 5
  %v2899 = vand.u32 %v2897, 31
  %v2900 = vsub.s32 32, %v2899
  %v2901 = vshrl.u32 683565275, %v2900
  %v2902 = vshll.u32 683565275, %v2899
  %v2903 = vshrl.u32 2475754826, %v2900
  %v2904 = vor.u32 %v2902, %v2903
  %v2905 = vshll.u32 2475754826, %v2899
  %v2906 = vshrl.u32 2131351028, %v2900
  %v2907 = vor.u32 %v2905, %v2906
  %v2908 = vshll.u32 2131351028, %v2899
  %v2909 = vshrl.u32 2102212464, %v2900
  %v2910 = vor.u32 %v2908, %v2909
  %v2911 = vshll.u32 2102212464, %v2899
  %v2912 = vshrl.u32 920167782, %v2900
  %v2913 = vor.u32 %v2911, %v2912
  %v2914 = vshll.u32 920167782, %v2899
  %v2915 = vshrl.u32 1326507024, %v2900
  %v2916 = vor.u32 %v2914, %v2915
  %vm2917 = vcmp.lt.s32.totalorder %v2898, 1
  %vm2918 = vcmp.lt.s32.totalorder %v2898, 2
  %vm2919 = vcmp.lt.s32.totalorder %v2898, 3
  %vm2920 = vcmp.lt.s32.totalorder %v2898, 4
  %v2921 = vsel %vm2917, %v2901, %v2904
  %v2922 = vsel %vm2920, %v2910, 2102212464
  %v2923 = vsel %vm2919, %v2907, %v2922
  %v2924 = vsel %vm2918, %v2921, %v2923
  %v2925 = vsel %vm2917, %v2904, %v2907
  %v2926 = vsel %vm2920, %v2913, 920167782
  %v2927 = vsel %vm2919, %v2910, %v2926
  %v2928 = vsel %vm2918, %v2925, %v2927
  %v2929 = vsel %vm2917, %v2907, %v2910
  %v2930 = vsel %vm2920, %v2916, 1326507024
  %v2931 = vsel %vm2919, %v2913, %v2930
  %v2932 = vsel %vm2918, %v2929, %v2931
  %v2933 = vshll.u32 %v2893, 8
  %v2934 = vand.u32 %v2933, 65535
  %v2935 = vshrl.u32 %v2933, 16
  %v2936 = vand.u32 %v2932, 65535
  %v2937 = vshrl.u32 %v2932, 16
  %v2938 = vmul.u32 %v2934, %v2936
  %v2939 = vmul.u32 %v2934, %v2937
  %v2940 = vmul.u32 %v2935, %v2936
  %v2941 = vmul.u32 %v2935, %v2937
  %v2942 = vshll.u32 %v2939, 16
  %v2943 = vshrl.u32 %v2939, 16
  %v2944 = vshll.u32 %v2940, 16
  %v2945 = vshrl.u32 %v2940, 16
  %vm2946 = vc.u32 %v2938, %v2942
  %v2947 = vsel %vm2946, 1, 0
  %v2948 = vadd.s32 %v2938, %v2942
  %v2949 = vadd.s32 %v2941, %v2947
  %vm2950 = vc.u32 %v2948, %v2944
  %v2951 = vsel %vm2950, 1, 0
  %v2952 = vadd.s32 %v2948, %v2944
  %v2953 = vadd.s32 %v2949, %v2951
  %v2954 = vadd.s32 %v2953, %v2943
  %v2955 = vadd.s32 %v2954, %v2945
  %v2956 = vand.u32 %v2933, 65535
  %v2957 = vshrl.u32 %v2933, 16
  %v2958 = vand.u32 %v2928, 65535
  %v2959 = vshrl.u32 %v2928, 16
  %v2960 = vmul.u32 %v2956, %v2958
  %v2961 = vmul.u32 %v2956, %v2959
  %v2962 = vmul.u32 %v2957, %v2958
  %v2963 = vmul.u32 %v2957, %v2959
  %v2964 = vshll.u32 %v2961, 16
  %v2965 = vshrl.u32 %v2961, 16
  %v2966 = vshll.u32 %v2962, 16
  %v2967 = vshrl.u32 %v2962, 16
  %vm2968 = vc.u32 %v2960, %v2964
  %v2969 = vsel %vm2968, 1, 0
  %v2970 = vadd.s32 %v2960, %v2964
  %v2971 = vadd.s32 %v2963, %v2969
  %vm2972 = vc.u32 %v2970, %v2966
  %v2973 = vsel %vm2972, 1, 0
  %v2974 = vadd.s32 %v2970, %v2966
  %v2975 = vadd.s32 %v2971, %v2973
  %v2976 = vadd.s32 %v2975, %v2965
  %v2977 = vadd.s32 %v2976, %v2967
  %v2978 = vmul.u32 %v2933, %v2924
  %v2979 = vadd.s32 %v2955, %v2974
  %vm2980 = vc.u32 %v2955, %v2974
  %v2981 = vadd.s32 %v2977, 1
  %v2982 = vsel %vm2980, %v2981, %v2977
  %v2983 = vadd.s32 %v2978, %v2982
  %v2984 = vadd.s32 %v2983, 536870912
  %v2985 = vshrl.u32 %v2984, 30
  %v2986 = vshll.u32 %v2985, 30
  %v2987 = vsub.s32 %v2983, %v2986
  %vm2988 = vcmp.lt.s32.totalorder %v2987, 0
  %v2989 = vsub.s32 0, %v2987
  %v2990 = vsel %vm2988, %v2989, %v2987
  %v2991 = vclz %v2990
  %v2992 = vsub.s32 %v2991, 2
  %vm2993 = vcmp.gt.s32.totalorder 0, %v2992
  %v2994 = vsel %vm2993, 0, %v2992
  %v2995 = vsub.s32 32, %v2994
  %v2996 = vshll.u32 %v2987, %v2994
  %v2997 = vshrl.u32 %v2979, %v2995
  %v2998 = vor.u32 %v2996, %v2997
  %v2999 = vsub.s32 4294967266, %v2994
  %v3000 = vadd.s32 %v2999, 127
  %v3001 = vshll.u32 %v3000, 23
  %v3002 = vor.u32 4788187, %v3001
  %v3003 = vand.u32 2147483647, %v3002
  %v3005 = vcvt.s32.f32 %v2998
  %v3006 = vmul.f32 %v3005, %v3003
  %v3007 = vxor.u32 %v3006, 2147483648
  %v3008 = vsel %vm2887, %v3007, %v3006
  %v3009 = vsub.s32 4, %v2985
  %v3010 = vsel %vm2887, %v3009, %v2985
  %v3011 = vsel %vm2886, %v2884, %v3008
  %v3012 = vsel %vm2886, 0, %v3010
  %v3013 = vmul.f32 %v3011, %v3011
  %v3014 = vmul.f32 %v3013, -0.001358992
  %v3015 = vadd.f32 %v3014, 0.041655596
  %v3016 = vmul.f32 %v3013, %v3015
  %v3017 = vadd.f32 %v3016, -0.4999988
  %v3018 = vmul.f32 %v3013, %v3017
  %v3019 = vadd.f32 1.0, %v3018
  %v3020 = vmul.f32 %v3011, %v3011
  %v3021 = vmul.f32 %v3020, -0.00019511016
  %v3022 = vadd.f32 %v3021, 0.008332121
  %v3023 = vmul.f32 %v3020, %v3022
  %v3024 = vadd.f32 %v3023, -0.16666654
  %v3025 = vmul.f32 %v3020, %v3024
  %v3026 = vadd.f32 %v3025, 1.0
  %v3027 = vmul.f32 %v3026, %v3011
  %vm3028 = vweird.f32 %v2884
  %v3029 = vand.u32 %v3012, 3
  %vm3030 = vcmp.lt.s32.totalorder %v3029, 2
  %vm3031 = vcmp.eq.s32.totalorder %v3029, 0
  %v3032 = vxor.u32 %v3027, 2147483648
  %v3033 = vsel %vm3031, %v3019, %v3032
  %vm3034 = vcmp.eq.s32.totalorder %v3029, 2
  %v3035 = vxor.u32 %v3019, 2147483648
  %v3036 = vsel %vm3034, %v3035, %v3027
  %v3037 = vsel %vm3030, %v3033, %v3036
  %v3038 = vsel %vm3028, nan, %v3037
  %v3039 = vadd.f32 %v3038, 1.0
  %v3040 = vmul.f32 %v3039, 0.5
  %v3041 = vrot.slane %v23, 7
  %v3042 = vrot.slane %v3041, 2
  %v3044 = vmul.f32 %v3040, %v3042
  %v3046 = vperm.slane %v3044, 0
  %v3047 = vperm.slane %v3044, 2
  %v3050 = vperm.slane %v3046, 0
  %v3051 = vperm.slane %v3047, 0
  %v3052 = vmul.f32 %v2208, %v3050
  %v3053 = vmul.f32 %v2838, %v3051
  %v3054 = vmul.f32 %v2212, %v3050
  %v3055 = vmul.f32 %v2842, %v3051
  %v3056 = vmul.f32 %v2216, %v3050
  %v3057 = vmul.f32 %v2846, %v3051
  %v3058 = vmul.f32 %v2220, %v3050
  %v3059 = vmul.f32 %v2850, %v3051
  %v3060 = vmul.f32 %v2224, %v3050
  %v3061 = vmul.f32 %v2854, %v3051
  %v3062 = vmul.f32 %v2228, %v3050
  %v3063 = vmul.f32 %v2858, %v3051
  %v3064 = vmul.f32 %v2232, %v3050
  %v3065 = vmul.f32 %v2862, %v3051
  %v3066 = vmul.f32 %v2236, %v3050
  %v3067 = vmul.f32 %v2866, %v3051
  %v3068 = vmul.f32 %v2240, %v3050
  %v3069 = vmul.f32 %v2870, %v3051
  %v3070 = vmul.f32 %v2244, %v3050
  %v3071 = vmul.f32 %v2874, %v3051
  %v3072 = vmul.f32 %v2248, %v3050
  %v3073 = vmul.f32 %v2878, %v3051
  %v3074 = vmul.f32 %v2252, %v3050
  %v3075 = vmul.f32 %v2882, %v3051
  %v3076 = vlaneseq
  %v3077 = vshrl.u32 %v3076, 7
  %v3078 = vadd.s32 %v3077, 8
  %v3079 = vadd.s32 %v3077, 16
  %v3080 = vadd.s32 %v3077, 24
  %v3081 = vadd.s32 %v3077, 32
  %v3082 = vadd.s32 %v3077, 40
  %v3083 = vadd.s32 %v3077, 48
  %v3084 = vadd.s32 %v3077, 56
  %v3085 = vadd.s32 %v3077, 64
  %v3086 = vadd.s32 %v3077, 72
  %v3087 = vadd.s32 %v3077, 80
  %v3088 = vadd.s32 %v3077, 88
  %v3089 = vadd.s32 %v3077, 96
  %v3090 = vadd.s32 %v3077, 104
  %v3091 = vadd.s32 %v3077, 112
  %v3092 = vadd.s32 %v3077, 120
  %v3093 = vadd.s32 %v3077, 128
  %v3094 = vadd.s32 %v3077, 136
  %v3095 = vadd.s32 %v3077, 144
  %v3096 = vadd.s32 %v3077, 152
  %v3097 = vadd.s32 %v3077, 160
  %v3098 = vadd.s32 %v3077, 168
  %v3099 = vadd.s32 %v3077, 176
  %v3100 = vadd.s32 %v3077, 184
  %v3101 = vadd.s32 %v3077, 192
  %v3102 = vadd.s32 %v3077, 200
  %v3103 = vadd.s32 %v3077, 208
  %v3104 = vadd.s32 %v3077, 216
  %v3105 = vadd.s32 %v3077, 224
  %v3106 = vadd.s32 %v3077, 232
  %v3107 = vadd.s32 %v3077, 240
  %v3108 = vadd.s32 %v3077, 248
  %v3109 = vlaneseq
  %v3110 = vand.u32 %v3109, 127
  %v3111 = vshra.s32 %v3077, 4
  %v3112 = vshra.s32 %v3078, 4
  %v3113 = vshra.s32 %v3079, 4
  %v3114 = vshra.s32 %v3080, 4
  %v3115 = vshra.s32 %v3081, 4
  %v3116 = vshra.s32 %v3082, 4
  %v3117 = vshra.s32 %v3083, 4
  %v3118 = vshra.s32 %v3084, 4
  %v3119 = vshra.s32 %v3085, 4
  %v3120 = vshra.s32 %v3086, 4
  %v3121 = vshra.s32 %v3087, 4
  %v3122 = vshra.s32 %v3088, 4
  %v3123 = vshra.s32 %v3089, 4
  %v3124 = vshra.s32 %v3090, 4
  %v3125 = vshra.s32 %v3091, 4
  %v3126 = vshra.s32 %v3092, 4
  %v3127 = vshra.s32 %v3093, 4
  %v3128 = vshra.s32 %v3094, 4
  %v3129 = vshra.s32 %v3095, 4
  %v3130 = vshra.s32 %v3096, 4
  %v3131 = vshra.s32 %v3097, 4
  %v3132 = vshra.s32 %v3098, 4
  %v3133 = vshra.s32 %v3099, 4
  %v3134 = vshra.s32 %v3100, 4
  %v3135 = vshra.s32 %v3101, 4
  %v3136 = vshra.s32 %v3102, 4
  %v3137 = vshra.s32 %v3103, 4
  %v3138 = vshra.s32 %v3104, 4
  %v3139 = vshra.s32 %v3105, 4
  %v3140 = vshra.s32 %v3106, 4
  %v3141 = vshra.s32 %v3107, 4
  %v3142 = vshra.s32 %v3108, 4
  %vm3143 = vcmp.eq.s32.totalorder %v3111, %v3110
  %vm3144 = vcmp.eq.s32.totalorder %v3112, %v3110
  %vm3145 = vcmp.eq.s32.totalorder %v3113, %v3110
  %vm3146 = vcmp.eq.s32.totalorder %v3114, %v3110
  %vm3147 = vcmp.eq.s32.totalorder %v3115, %v3110
  %vm3148 = vcmp.eq.s32.totalorder %v3116, %v3110
  %vm3149 = vcmp.eq.s32.totalorder %v3117, %v3110
  %vm3150 = vcmp.eq.s32.totalorder %v3118, %v3110
  %vm3151 = vcmp.eq.s32.totalorder %v3119, %v3110
  %vm3152 = vcmp.eq.s32.totalorder %v3120, %v3110
  %vm3153 = vcmp.eq.s32.totalorder %v3121, %v3110
  %vm3154 = vcmp.eq.s32.totalorder %v3122, %v3110
  %vm3155 = vcmp.eq.s32.totalorder %v3123, %v3110
  %vm3156 = vcmp.eq.s32.totalorder %v3124, %v3110
  %vm3157 = vcmp.eq.s32.totalorder %v3125, %v3110
  %vm3158 = vcmp.eq.s32.totalorder %v3126, %v3110
  %vm3159 = vcmp.eq.s32.totalorder %v3127, %v3110
  %vm3160 = vcmp.eq.s32.totalorder %v3128, %v3110
  %vm3161 = vcmp.eq.s32.totalorder %v3129, %v3110
  %vm3162 = vcmp.eq.s32.totalorder %v3130, %v3110
  %vm3163 = vcmp.eq.s32.totalorder %v3131, %v3110
  %vm3164 = vcmp.eq.s32.totalorder %v3132, %v3110
  %vm3165 = vcmp.eq.s32.totalorder %v3133, %v3110
  %vm3166 = vcmp.eq.s32.totalorder %v3134, %v3110
  %vm3167 = vcmp.eq.s32.totalorder %v3135, %v3110
  %vm3168 = vcmp.eq.s32.totalorder %v3136, %v3110
  %vm3169 = vcmp.eq.s32.totalorder %v3137, %v3110
  %vm3170 = vcmp.eq.s32.totalorder %v3138, %v3110
  %vm3171 = vcmp.eq.s32.totalorder %v3139, %v3110
  %vm3172 = vcmp.eq.s32.totalorder %v3140, %v3110
  %vm3173 = vcmp.eq.s32.totalorder %v3141, %v3110
  %vm3174 = vcmp.eq.s32.totalorder %v3142, %v3110
  %v3175 = vsel %vm3143, 1, 0
  %v3176 = vsel %vm3144, 1, 0
  %v3177 = vsel %vm3145, 1, 0
  %v3178 = vsel %vm3146, 1, 0
  %v3179 = vsel %vm3147, 1, 0
  %v3180 = vsel %vm3148, 1, 0
  %v3181 = vsel %vm3149, 1, 0
  %v3182 = vsel %vm3150, 1, 0
  %v3183 = vsel %vm3151, 1, 0
  %v3184 = vsel %vm3152, 1, 0
  %v3185 = vsel %vm3153, 1, 0
  %v3186 = vsel %vm3154, 1, 0
  %v3187 = vsel %vm3155, 1, 0
  %v3188 = vsel %vm3156, 1, 0
  %v3189 = vsel %vm3157, 1, 0
  %v3190 = vsel %vm3158, 1, 0
  %v3191 = vsel %vm3159, 1, 0
  %v3192 = vsel %vm3160, 1, 0
  %v3193 = vsel %vm3161, 1, 0
  %v3194 = vsel %vm3162, 1, 0
  %v3195 = vsel %vm3163, 1, 0
  %v3196 = vsel %vm3164, 1, 0
  %v3197 = vsel %vm3165, 1, 0
  %v3198 = vsel %vm3166, 1, 0
  %v3199 = vsel %vm3167, 1, 0
  %v3200 = vsel %vm3168, 1, 0
  %v3201 = vsel %vm3169, 1, 0
  %v3202 = vsel %vm3170, 1, 0
  %v3203 = vsel %vm3171, 1, 0
  %v3204 = vsel %vm3172, 1, 0
  %v3205 = vsel %vm3173, 1, 0
  %v3206 = vsel %vm3174, 1, 0
  %v3207 = vcvt.s32.f32 %v3175
  %v3208 = vcvt.s32.f32 %v3176
  %v3209 = vcvt.s32.f32 %v3177
  %v3210 = vcvt.s32.f32 %v3178
  %v3211 = vcvt.s32.f32 %v3179
  %v3212 = vcvt.s32.f32 %v3180
  %v3213 = vcvt.s32.f32 %v3181
  %v3214 = vcvt.s32.f32 %v3182
  %v3215 = vcvt.s32.f32 %v3183
  %v3216 = vcvt.s32.f32 %v3184
  %v3217 = vcvt.s32.f32 %v3185
  %v3218 = vcvt.s32.f32 %v3186
  %v3219 = vcvt.s32.f32 %v3187
  %v3220 = vcvt.s32.f32 %v3188
  %v3221 = vcvt.s32.f32 %v3189
  %v3222 = vcvt.s32.f32 %v3190
  %v3223 = vcvt.s32.f32 %v3191
  %v3224 = vcvt.s32.f32 %v3192
  %v3225 = vcvt.s32.f32 %v3193
  %v3226 = vcvt.s32.f32 %v3194
  %v3227 = vcvt.s32.f32 %v3195
  %v3228 = vcvt.s32.f32 %v3196
  %v3229 = vcvt.s32.f32 %v3197
  %v3230 = vcvt.s32.f32 %v3198
  %v3231 = vcvt.s32.f32 %v3199
  %v3232 = vcvt.s32.f32 %v3200
  %v3233 = vcvt.s32.f32 %v3201
  %v3234 = vcvt.s32.f32 %v3202
  %v3235 = vcvt.s32.f32 %v3203
  %v3236 = vcvt.s32.f32 %v3204
  %v3237 = vcvt.s32.f32 %v3205
  %v3238 = vcvt.s32.f32 %v3206
  %v3239 = vadd.s32 %v3110, 128
  %v3240 = vand.u32 %v3110, 15
  %v3241 = vand.u32 %v3239, 15
  %vm3242 = vcmp.eq.s32.totalorder %v3240, %v3077
  %vm3243 = vcmp.eq.s32.totalorder %v3241, %v3077
  %vm3244 = vcmp.eq.s32.totalorder %v3240, %v3078
  %vm3245 = vcmp.eq.s32.totalorder %v3241, %v3078
  %v3246 = vsel %vm3242, 1, 0
  %v3247 = vsel %vm3243, 1, 0
  %v3248 = vsel %vm3244, 1, 0
  %v3249 = vsel %vm3245, 1, 0
  %v3250 = vcvt.s32.f32 %v3246
  %v3251 = vcvt.s32.f32 %v3247
  %v3252 = vcvt.s32.f32 %v3248
  %v3253 = vcvt.s32.f32 %v3249
  %v3254 = vld [vmem:[%s5] sm:$0xff]
  %v3255 = vld [vmem:[%s5 + $0x8] sm:$0xff]
  %v3256 = vld [vmem:[%s5 + $0x10] sm:$0xff]
  %v3257 = vld [vmem:[%s5 + $0x18] sm:$0xff]
  %v3258 = vld [vmem:[%s5 + $0x20] sm:$0xff]
  %v3259 = vld [vmem:[%s5 + $0x28] sm:$0xff]
  %v3260 = vld [vmem:[%s5 + $0x30] sm:$0xff]
  %v3261 = vld [vmem:[%s5 + $0x38] sm:$0xff]
  %v3262 = vld [vmem:[%s5 + $0x40] sm:$0xff]
  %v3263 = vld [vmem:[%s5 + $0x48] sm:$0xff]
  %v3264 = vld [vmem:[%s5 + $0x50] sm:$0xff]
  %v3265 = vld [vmem:[%s5 + $0x58] sm:$0xff]
  %vm3266 = vcmask 261120
  %v3268 = vsel %vm3266, %v3254, 0
  %v3271 = vsel %vm3266, %v3255, 0
  %v3274 = vsel %vm3266, %v3256, 0
  %v3277 = vsel %vm3266, %v3257, 0
  %3279 = vmatpush.msra.mxu0 0.0
  %3280 = vmatpush.msra.mxu0 0.0
  %3281 = vmatpush.msra.mxu0 0.0
  %3282 = vmatpush.msra.mxu0 0.0
  %3283 = vmatpush.msra.mxu0 0.0
  %3284 = vmatpush.msra.mxu0 0.0
  %3285 = vmatpush.msra.mxu0 0.0
  %3286 = vmatpush.msra.mxu0 0.0
  %3287 = vmatpush.msra.mxu0 0.0
  %3288 = vmatpush.msra.mxu0 0.0
  %3289 = vmatpush.msra.mxu0 0.0
  %3290 = vmatpush.msra.mxu0 0.0
  %v3291 = vand.u32 %v31, 4294901760
  %3292 = vmatpush.msra.mxu0 %v3291
  %v3293 = vand.u32 %v30, 4294901760
  %3294 = vmatpush.msra.mxu0 %v3293
  %v3295 = vand.u32 %v29, 4294901760
  %3296 = vmatpush.msra.mxu0 %v3295
  %v3297 = vand.u32 %v28, 4294901760
  %3298 = vmatpush.msra.mxu0 %v3297
  %v3299 = vand.u32 %v3268, 4294901760
  %v3300 = vsub.f32 %v3268, %v3299
  %v3301 = vand.u32 %v3300, 4294901760
  %v3302 = vsub.f32 %v3300, %v3301
  %v3303 = vand.u32 %v3302, 4294901760
  %3304 = vmatmul.f32.gmra.mxu0 %v3303
  %v3305 = vpop.f32.mrf.mxu0
  %v3306 = vadd.f32 0.0, %v3305
  %v3307 = vand.u32 %v3271, 4294901760
  %v3308 = vsub.f32 %v3271, %v3307
  %v3309 = vand.u32 %v3308, 4294901760
  %v3310 = vsub.f32 %v3308, %v3309
  %v3311 = vand.u32 %v3310, 4294901760
  %3312 = vmatmul.f32.gmra.mxu0 %v3311
  %v3313 = vpop.f32.mrf.mxu0
  %v3314 = vadd.f32 0.0, %v3313
  %v3315 = vand.u32 %v3274, 4294901760
  %v3316 = vsub.f32 %v3274, %v3315
  %v3317 = vand.u32 %v3316, 4294901760
  %v3318 = vsub.f32 %v3316, %v3317
  %v3319 = vand.u32 %v3318, 4294901760
  %3320 = vmatmul.f32.gmra.mxu0 %v3319
  %v3321 = vpop.f32.mrf.mxu0
  %v3322 = vadd.f32 0.0, %v3321
  %v3323 = vand.u32 %v3277, 4294901760
  %v3324 = vsub.f32 %v3277, %v3323
  %v3325 = vand.u32 %v3324, 4294901760
  %v3326 = vsub.f32 %v3324, %v3325
  %v3327 = vand.u32 %v3326, 4294901760
  %3328 = vmatmul.f32.gmra.mxu0 %v3327
  %v3329 = vpop.f32.mrf.mxu0
  %v3330 = vadd.f32 0.0, %v3329
  %3331 = vdwg.mxu0
  %3332 = vmatpush.msra.mxu0 0.0
  %3333 = vmatpush.msra.mxu0 0.0
  %3334 = vmatpush.msra.mxu0 0.0
  %3335 = vmatpush.msra.mxu0 0.0
  %3336 = vmatpush.msra.mxu0 0.0
  %3337 = vmatpush.msra.mxu0 0.0
  %3338 = vmatpush.msra.mxu0 0.0
  %3339 = vmatpush.msra.mxu0 0.0
  %3340 = vmatpush.msra.mxu0 0.0
  %3341 = vmatpush.msra.mxu0 0.0
  %3342 = vmatpush.msra.mxu0 0.0
  %3343 = vmatpush.msra.mxu0 0.0
  %v3344 = vand.u32 %v31, 4294901760
  %v3345 = vsub.f32 %v31, %v3344
  %v3346 = vand.u32 %v3345, 4294901760
  %v3347 = vsub.f32 %v3345, %v3346
  %v3348 = vand.u32 %v3347, 4294901760
  %3349 = vmatpush.msra.mxu0 %v3348
  %v3350 = vand.u32 %v30, 4294901760
  %v3351 = vsub.f32 %v30, %v3350
  %v3352 = vand.u32 %v3351, 4294901760
  %v3353 = vsub.f32 %v3351, %v3352
  %v3354 = vand.u32 %v3353, 4294901760
  %3355 = vmatpush.msra.mxu0 %v3354
  %v3356 = vand.u32 %v29, 4294901760
  %v3357 = vsub.f32 %v29, %v3356
  %v3358 = vand.u32 %v3357, 4294901760
  %v3359 = vsub.f32 %v3357, %v3358
  %v3360 = vand.u32 %v3359, 4294901760
  %3361 = vmatpush.msra.mxu0 %v3360
  %v3362 = vand.u32 %v28, 4294901760
  %v3363 = vsub.f32 %v28, %v3362
  %v3364 = vand.u32 %v3363, 4294901760
  %v3365 = vsub.f32 %v3363, %v3364
  %v3366 = vand.u32 %v3365, 4294901760
  %3367 = vmatpush.msra.mxu0 %v3366
  %v3368 = vand.u32 %v3268, 4294901760
  %3369 = vmatmul.f32.gmra.mxu0 %v3368
  %v3370 = vpop.f32.mrf.mxu0
  %v3371 = vadd.f32 %v3306, %v3370
  %v3372 = vand.u32 %v3271, 4294901760
  %3373 = vmatmul.f32.gmra.mxu0 %v3372
  %v3374 = vpop.f32.mrf.mxu0
  %v3375 = vadd.f32 %v3314, %v3374
  %v3376 = vand.u32 %v3274, 4294901760
  %3377 = vmatmul.f32.gmra.mxu0 %v3376
  %v3378 = vpop.f32.mrf.mxu0
  %v3379 = vadd.f32 %v3322, %v3378
  %v3380 = vand.u32 %v3277, 4294901760
  %3381 = vmatmul.f32.gmra.mxu0 %v3380
  %v3382 = vpop.f32.mrf.mxu0
  %v3383 = vadd.f32 %v3330, %v3382
  %3384 = vdwg.mxu0
  %3385 = vmatpush.msra.mxu0 0.0
  %3386 = vmatpush.msra.mxu0 0.0
  %3387 = vmatpush.msra.mxu0 0.0
  %3388 = vmatpush.msra.mxu0 0.0
  %3389 = vmatpush.msra.mxu0 0.0
  %3390 = vmatpush.msra.mxu0 0.0
  %3391 = vmatpush.msra.mxu0 0.0
  %3392 = vmatpush.msra.mxu0 0.0
  %3393 = vmatpush.msra.mxu0 0.0
  %3394 = vmatpush.msra.mxu0 0.0
  %3395 = vmatpush.msra.mxu0 0.0
  %3396 = vmatpush.msra.mxu0 0.0
  %v3397 = vand.u32 %v31, 4294901760
  %v3398 = vsub.f32 %v31, %v3397
  %3399 = vmatpush.msra.mxu0 %v3398
  %v3400 = vand.u32 %v30, 4294901760
  %v3401 = vsub.f32 %v30, %v3400
  %3402 = vmatpush.msra.mxu0 %v3401
  %v3403 = vand.u32 %v29, 4294901760
  %v3404 = vsub.f32 %v29, %v3403
  %3405 = vmatpush.msra.mxu0 %v3404
  %v3406 = vand.u32 %v28, 4294901760
  %v3407 = vsub.f32 %v28, %v3406
  %3408 = vmatpush.msra.mxu0 %v3407
  %v3409 = vand.u32 %v3268, 4294901760
  %v3410 = vsub.f32 %v3268, %v3409
  %3411 = vmatmul.f32.gmra.mxu0 %v3410
  %v3412 = vpop.f32.mrf.mxu0
  %v3413 = vadd.f32 %v3371, %v3412
  %v3414 = vand.u32 %v3271, 4294901760
  %v3415 = vsub.f32 %v3271, %v3414
  %3416 = vmatmul.f32.gmra.mxu0 %v3415
  %v3417 = vpop.f32.mrf.mxu0
  %v3418 = vadd.f32 %v3375, %v3417
  %v3419 = vand.u32 %v3274, 4294901760
  %v3420 = vsub.f32 %v3274, %v3419
  %3421 = vmatmul.f32.gmra.mxu0 %v3420
  %v3422 = vpop.f32.mrf.mxu0
  %v3423 = vadd.f32 %v3379, %v3422
  %v3424 = vand.u32 %v3277, 4294901760
  %v3425 = vsub.f32 %v3277, %v3424
  %3426 = vmatmul.f32.gmra.mxu0 %v3425
  %v3427 = vpop.f32.mrf.mxu0
  %v3428 = vadd.f32 %v3383, %v3427
  %3429 = vdwg.mxu0
  %3430 = vmatpush.msra.mxu0 0.0
  %3431 = vmatpush.msra.mxu0 0.0
  %3432 = vmatpush.msra.mxu0 0.0
  %3433 = vmatpush.msra.mxu0 0.0
  %3434 = vmatpush.msra.mxu0 0.0
  %3435 = vmatpush.msra.mxu0 0.0
  %3436 = vmatpush.msra.mxu0 0.0
  %3437 = vmatpush.msra.mxu0 0.0
  %3438 = vmatpush.msra.mxu0 0.0
  %3439 = vmatpush.msra.mxu0 0.0
  %3440 = vmatpush.msra.mxu0 0.0
  %3441 = vmatpush.msra.mxu0 0.0
  %v3442 = vand.u32 %v31, 4294901760
  %3443 = vmatpush.msra.mxu0 %v3442
  %v3444 = vand.u32 %v30, 4294901760
  %3445 = vmatpush.msra.mxu0 %v3444
  %v3446 = vand.u32 %v29, 4294901760
  %3447 = vmatpush.msra.mxu0 %v3446
  %v3448 = vand.u32 %v28, 4294901760
  %3449 = vmatpush.msra.mxu0 %v3448
  %v3450 = vand.u32 %v3268, 4294901760
  %v3451 = vsub.f32 %v3268, %v3450
  %v3452 = vand.u32 %v3451, 4294901760
  %3453 = vmatmul.f32.gmra.mxu0 %v3452
  %v3454 = vpop.f32.mrf.mxu0
  %v3455 = vadd.f32 %v3413, %v3454
  %v3456 = vand.u32 %v3271, 4294901760
  %v3457 = vsub.f32 %v3271, %v3456
  %v3458 = vand.u32 %v3457, 4294901760
  %3459 = vmatmul.f32.gmra.mxu0 %v3458
  %v3460 = vpop.f32.mrf.mxu0
  %v3461 = vadd.f32 %v3418, %v3460
  %v3462 = vand.u32 %v3274, 4294901760
  %v3463 = vsub.f32 %v3274, %v3462
  %v3464 = vand.u32 %v3463, 4294901760
  %3465 = vmatmul.f32.gmra.mxu0 %v3464
  %v3466 = vpop.f32.mrf.mxu0
  %v3467 = vadd.f32 %v3423, %v3466
  %v3468 = vand.u32 %v3277, 4294901760
  %v3469 = vsub.f32 %v3277, %v3468
  %v3470 = vand.u32 %v3469, 4294901760
  %3471 = vmatmul.f32.gmra.mxu0 %v3470
  %v3472 = vpop.f32.mrf.mxu0
  %v3473 = vadd.f32 %v3428, %v3472
  %3474 = vdwg.mxu0
  %3475 = vmatpush.msra.mxu0 0.0
  %3476 = vmatpush.msra.mxu0 0.0
  %3477 = vmatpush.msra.mxu0 0.0
  %3478 = vmatpush.msra.mxu0 0.0
  %3479 = vmatpush.msra.mxu0 0.0
  %3480 = vmatpush.msra.mxu0 0.0
  %3481 = vmatpush.msra.mxu0 0.0
  %3482 = vmatpush.msra.mxu0 0.0
  %3483 = vmatpush.msra.mxu0 0.0
  %3484 = vmatpush.msra.mxu0 0.0
  %3485 = vmatpush.msra.mxu0 0.0
  %3486 = vmatpush.msra.mxu0 0.0
  %v3487 = vand.u32 %v31, 4294901760
  %v3488 = vsub.f32 %v31, %v3487
  %v3489 = vand.u32 %v3488, 4294901760
  %3490 = vmatpush.msra.mxu0 %v3489
  %v3491 = vand.u32 %v30, 4294901760
  %v3492 = vsub.f32 %v30, %v3491
  %v3493 = vand.u32 %v3492, 4294901760
  %3494 = vmatpush.msra.mxu0 %v3493
  %v3495 = vand.u32 %v29, 4294901760
  %v3496 = vsub.f32 %v29, %v3495
  %v3497 = vand.u32 %v3496, 4294901760
  %3498 = vmatpush.msra.mxu0 %v3497
  %v3499 = vand.u32 %v28, 4294901760
  %v3500 = vsub.f32 %v28, %v3499
  %v3501 = vand.u32 %v3500, 4294901760
  %3502 = vmatpush.msra.mxu0 %v3501
  %v3503 = vand.u32 %v3268, 4294901760
  %3504 = vmatmul.f32.gmra.mxu0 %v3503
  %v3505 = vpop.f32.mrf.mxu0
  %v3506 = vadd.f32 %v3455, %v3505
  %v3507 = vand.u32 %v3271, 4294901760
  %3508 = vmatmul.f32.gmra.mxu0 %v3507
  %v3509 = vpop.f32.mrf.mxu0
  %v3510 = vadd.f32 %v3461, %v3509
  %v3511 = vand.u32 %v3274, 4294901760
  %3512 = vmatmul.f32.gmra.mxu0 %v3511
  %v3513 = vpop.f32.mrf.mxu0
  %v3514 = vadd.f32 %v3467, %v3513
  %v3515 = vand.u32 %v3277, 4294901760
  %3516 = vmatmul.f32.gmra.mxu0 %v3515
  %v3517 = vpop.f32.mrf.mxu0
  %v3518 = vadd.f32 %v3473, %v3517
  %3519 = vdwg.mxu0
  %3520 = vmatpush.msra.mxu0 0.0
  %3521 = vmatpush.msra.mxu0 0.0
  %3522 = vmatpush.msra.mxu0 0.0
  %3523 = vmatpush.msra.mxu0 0.0
  %3524 = vmatpush.msra.mxu0 0.0
  %3525 = vmatpush.msra.mxu0 0.0
  %3526 = vmatpush.msra.mxu0 0.0
  %3527 = vmatpush.msra.mxu0 0.0
  %3528 = vmatpush.msra.mxu0 0.0
  %3529 = vmatpush.msra.mxu0 0.0
  %3530 = vmatpush.msra.mxu0 0.0
  %3531 = vmatpush.msra.mxu0 0.0
  %v3532 = vand.u32 %v31, 4294901760
  %3533 = vmatpush.msra.mxu0 %v3532
  %v3534 = vand.u32 %v30, 4294901760
  %3535 = vmatpush.msra.mxu0 %v3534
  %v3536 = vand.u32 %v29, 4294901760
  %3537 = vmatpush.msra.mxu0 %v3536
  %v3538 = vand.u32 %v28, 4294901760
  %3539 = vmatpush.msra.mxu0 %v3538
  %v3540 = vand.u32 %v3268, 4294901760
  %3541 = vmatmul.f32.gmra.mxu0 %v3540
  %v3542 = vpop.f32.mrf.mxu0
  %v3543 = vadd.f32 %v3506, %v3542
  %v3544 = vand.u32 %v3271, 4294901760
  %3545 = vmatmul.f32.gmra.mxu0 %v3544
  %v3546 = vpop.f32.mrf.mxu0
  %v3547 = vadd.f32 %v3510, %v3546
  %v3548 = vand.u32 %v3274, 4294901760
  %3549 = vmatmul.f32.gmra.mxu0 %v3548
  %v3550 = vpop.f32.mrf.mxu0
  %v3551 = vadd.f32 %v3514, %v3550
  %v3552 = vand.u32 %v3277, 4294901760
  %3553 = vmatmul.f32.gmra.mxu0 %v3552
  %v3554 = vpop.f32.mrf.mxu0
  %v3555 = vadd.f32 %v3518, %v3554
  %3556 = vdwg.mxu0
  %v3558 = vsel %vm142, %v3543, 0
  %v3561 = vsel %vm142, %v3547, 0
  %v3564 = vsel %vm142, %v3551, 0
  %v3567 = vsel %vm142, %v3555, 0
  %3569 = vmatpush.msra.mxu0 0.0
  %3570 = vmatpush.msra.mxu0 0.0
  %3571 = vmatpush.msra.mxu0 0.0
  %3572 = vmatpush.msra.mxu0 0.0
  %3573 = vmatpush.msra.mxu0 0.0
  %3574 = vmatpush.msra.mxu0 0.0
  %3575 = vmatpush.msra.mxu0 0.0
  %3576 = vmatpush.msra.mxu0 0.0
  %3577 = vmatpush.msra.mxu0 0.0
  %3578 = vmatpush.msra.mxu0 0.0
  %3579 = vmatpush.msra.mxu0 0.0
  %3580 = vmatpush.msra.mxu0 0.0
  %3581 = vmatpush.msra.mxu0 0.0
  %3582 = vmatpush.msra.mxu0 0.0
  %v3583 = vand.u32 %v3252, 4294901760
  %3584 = vmatpush.msra.mxu0 %v3583
  %v3585 = vand.u32 %v3250, 4294901760
  %3586 = vmatpush.msra.mxu0 %v3585
  %v3587 = vand.u32 %v3558, 4294901760
  %v3588 = vsub.f32 %v3558, %v3587
  %v3589 = vand.u32 %v3588, 4294901760
  %v3590 = vsub.f32 %v3588, %v3589
  %v3591 = vand.u32 %v3590, 4294901760
  %3592 = vmatmul.f32.gmra.mxu0 %v3591
  %v3593 = vpop.f32.mrf.mxu0
  %v3594 = vadd.f32 0.0, %v3593
  %v3595 = vand.u32 %v3561, 4294901760
  %v3596 = vsub.f32 %v3561, %v3595
  %v3597 = vand.u32 %v3596, 4294901760
  %v3598 = vsub.f32 %v3596, %v3597
  %v3599 = vand.u32 %v3598, 4294901760
  %3600 = vmatmul.f32.gmra.mxu0 %v3599
  %v3601 = vpop.f32.mrf.mxu0
  %v3602 = vadd.f32 0.0, %v3601
  %v3603 = vand.u32 %v3564, 4294901760
  %v3604 = vsub.f32 %v3564, %v3603
  %v3605 = vand.u32 %v3604, 4294901760
  %v3606 = vsub.f32 %v3604, %v3605
  %v3607 = vand.u32 %v3606, 4294901760
  %3608 = vmatmul.f32.gmra.mxu0 %v3607
  %v3609 = vpop.f32.mrf.mxu0
  %v3610 = vadd.f32 0.0, %v3609
  %v3611 = vand.u32 %v3567, 4294901760
  %v3612 = vsub.f32 %v3567, %v3611
  %v3613 = vand.u32 %v3612, 4294901760
  %v3614 = vsub.f32 %v3612, %v3613
  %v3615 = vand.u32 %v3614, 4294901760
  %3616 = vmatmul.f32.gmra.mxu0 %v3615
  %v3617 = vpop.f32.mrf.mxu0
  %v3618 = vadd.f32 0.0, %v3617
  %3619 = vdwg.mxu0
  %3620 = vmatpush.msra.mxu0 0.0
  %3621 = vmatpush.msra.mxu0 0.0
  %3622 = vmatpush.msra.mxu0 0.0
  %3623 = vmatpush.msra.mxu0 0.0
  %3624 = vmatpush.msra.mxu0 0.0
  %3625 = vmatpush.msra.mxu0 0.0
  %3626 = vmatpush.msra.mxu0 0.0
  %3627 = vmatpush.msra.mxu0 0.0
  %3628 = vmatpush.msra.mxu0 0.0
  %3629 = vmatpush.msra.mxu0 0.0
  %3630 = vmatpush.msra.mxu0 0.0
  %3631 = vmatpush.msra.mxu0 0.0
  %3632 = vmatpush.msra.mxu0 0.0
  %3633 = vmatpush.msra.mxu0 0.0
  %v3634 = vand.u32 %v3252, 4294901760
  %v3635 = vsub.f32 %v3252, %v3634
  %v3636 = vand.u32 %v3635, 4294901760
  %v3637 = vsub.f32 %v3635, %v3636
  %v3638 = vand.u32 %v3637, 4294901760
  %3639 = vmatpush.msra.mxu0 %v3638
  %v3640 = vand.u32 %v3250, 4294901760
  %v3641 = vsub.f32 %v3250, %v3640
  %v3642 = vand.u32 %v3641, 4294901760
  %v3643 = vsub.f32 %v3641, %v3642
  %v3644 = vand.u32 %v3643, 4294901760
  %3645 = vmatpush.msra.mxu0 %v3644
  %v3646 = vand.u32 %v3558, 4294901760
  %3647 = vmatmul.f32.gmra.mxu0 %v3646
  %v3648 = vpop.f32.mrf.mxu0
  %v3649 = vadd.f32 %v3594, %v3648
  %v3650 = vand.u32 %v3561, 4294901760
  %3651 = vmatmul.f32.gmra.mxu0 %v3650
  %v3652 = vpop.f32.mrf.mxu0
  %v3653 = vadd.f32 %v3602, %v3652
  %v3654 = vand.u32 %v3564, 4294901760
  %3655 = vmatmul.f32.gmra.mxu0 %v3654
  %v3656 = vpop.f32.mrf.mxu0
  %v3657 = vadd.f32 %v3610, %v3656
  %v3658 = vand.u32 %v3567, 4294901760
  %3659 = vmatmul.f32.gmra.mxu0 %v3658
  %v3660 = vpop.f32.mrf.mxu0
  %v3661 = vadd.f32 %v3618, %v3660
  %3662 = vdwg.mxu0
  %3663 = vmatpush.msra.mxu0 0.0
  %3664 = vmatpush.msra.mxu0 0.0
  %3665 = vmatpush.msra.mxu0 0.0
  %3666 = vmatpush.msra.mxu0 0.0
  %3667 = vmatpush.msra.mxu0 0.0
  %3668 = vmatpush.msra.mxu0 0.0
  %3669 = vmatpush.msra.mxu0 0.0
  %3670 = vmatpush.msra.mxu0 0.0
  %3671 = vmatpush.msra.mxu0 0.0
  %3672 = vmatpush.msra.mxu0 0.0
  %3673 = vmatpush.msra.mxu0 0.0
  %3674 = vmatpush.msra.mxu0 0.0
  %3675 = vmatpush.msra.mxu0 0.0
  %3676 = vmatpush.msra.mxu0 0.0
  %v3677 = vand.u32 %v3252, 4294901760
  %v3678 = vsub.f32 %v3252, %v3677
  %3679 = vmatpush.msra.mxu0 %v3678
  %v3680 = vand.u32 %v3250, 4294901760
  %v3681 = vsub.f32 %v3250, %v3680
  %3682 = vmatpush.msra.mxu0 %v3681
  %v3683 = vand.u32 %v3558, 4294901760
  %v3684 = vsub.f32 %v3558, %v3683
  %3685 = vmatmul.f32.gmra.mxu0 %v3684
  %v3686 = vpop.f32.mrf.mxu0
  %v3687 = vadd.f32 %v3649, %v3686
  %v3688 = vand.u32 %v3561, 4294901760
  %v3689 = vsub.f32 %v3561, %v3688
  %3690 = vmatmul.f32.gmra.mxu0 %v3689
  %v3691 = vpop.f32.mrf.mxu0
  %v3692 = vadd.f32 %v3653, %v3691
  %v3693 = vand.u32 %v3564, 4294901760
  %v3694 = vsub.f32 %v3564, %v3693
  %3695 = vmatmul.f32.gmra.mxu0 %v3694
  %v3696 = vpop.f32.mrf.mxu0
  %v3697 = vadd.f32 %v3657, %v3696
  %v3698 = vand.u32 %v3567, 4294901760
  %v3699 = vsub.f32 %v3567, %v3698
  %3700 = vmatmul.f32.gmra.mxu0 %v3699
  %v3701 = vpop.f32.mrf.mxu0
  %v3702 = vadd.f32 %v3661, %v3701
  %3703 = vdwg.mxu0
  %3704 = vmatpush.msra.mxu0 0.0
  %3705 = vmatpush.msra.mxu0 0.0
  %3706 = vmatpush.msra.mxu0 0.0
  %3707 = vmatpush.msra.mxu0 0.0
  %3708 = vmatpush.msra.mxu0 0.0
  %3709 = vmatpush.msra.mxu0 0.0
  %3710 = vmatpush.msra.mxu0 0.0
  %3711 = vmatpush.msra.mxu0 0.0
  %3712 = vmatpush.msra.mxu0 0.0
  %3713 = vmatpush.msra.mxu0 0.0
  %3714 = vmatpush.msra.mxu0 0.0
  %3715 = vmatpush.msra.mxu0 0.0
  %3716 = vmatpush.msra.mxu0 0.0
  %3717 = vmatpush.msra.mxu0 0.0
  %v3718 = vand.u32 %v3252, 4294901760
  %3719 = vmatpush.msra.mxu0 %v3718
  %v3720 = vand.u32 %v3250, 4294901760
  %3721 = vmatpush.msra.mxu0 %v3720
  %v3722 = vand.u32 %v3558, 4294901760
  %v3723 = vsub.f32 %v3558, %v3722
  %v3724 = vand.u32 %v3723, 4294901760
  %3725 = vmatmul.f32.gmra.mxu0 %v3724
  %v3726 = vpop.f32.mrf.mxu0
  %v3727 = vadd.f32 %v3687, %v3726
  %v3728 = vand.u32 %v3561, 4294901760
  %v3729 = vsub.f32 %v3561, %v3728
  %v3730 = vand.u32 %v3729, 4294901760
  %3731 = vmatmul.f32.gmra.mxu0 %v3730
  %v3732 = vpop.f32.mrf.mxu0
  %v3733 = vadd.f32 %v3692, %v3732
  %v3734 = vand.u32 %v3564, 4294901760
  %v3735 = vsub.f32 %v3564, %v3734
  %v3736 = vand.u32 %v3735, 4294901760
  %3737 = vmatmul.f32.gmra.mxu0 %v3736
  %v3738 = vpop.f32.mrf.mxu0
  %v3739 = vadd.f32 %v3697, %v3738
  %v3740 = vand.u32 %v3567, 4294901760
  %v3741 = vsub.f32 %v3567, %v3740
  %v3742 = vand.u32 %v3741, 4294901760
  %3743 = vmatmul.f32.gmra.mxu0 %v3742
  %v3744 = vpop.f32.mrf.mxu0
  %v3745 = vadd.f32 %v3702, %v3744
  %3746 = vdwg.mxu0
  %3747 = vmatpush.msra.mxu0 0.0
  %3748 = vmatpush.msra.mxu0 0.0
  %3749 = vmatpush.msra.mxu0 0.0
  %3750 = vmatpush.msra.mxu0 0.0
  %3751 = vmatpush.msra.mxu0 0.0
  %3752 = vmatpush.msra.mxu0 0.0
  %3753 = vmatpush.msra.mxu0 0.0
  %3754 = vmatpush.msra.mxu0 0.0
  %3755 = vmatpush.msra.mxu0 0.0
  %3756 = vmatpush.msra.mxu0 0.0
  %3757 = vmatpush.msra.mxu0 0.0
  %3758 = vmatpush.msra.mxu0 0.0
  %3759 = vmatpush.msra.mxu0 0.0
  %3760 = vmatpush.msra.mxu0 0.0
  %v3761 = vand.u32 %v3252, 4294901760
  %v3762 = vsub.f32 %v3252, %v3761
  %v3763 = vand.u32 %v3762, 4294901760
  %3764 = vmatpush.msra.mxu0 %v3763
  %v3765 = vand.u32 %v3250, 4294901760
  %v3766 = vsub.f32 %v3250, %v3765
  %v3767 = vand.u32 %v3766, 4294901760
  %3768 = vmatpush.msra.mxu0 %v3767
  %v3769 = vand.u32 %v3558, 4294901760
  %3770 = vmatmul.f32.gmra.mxu0 %v3769
  %v3771 = vpop.f32.mrf.mxu0
  %v3772 = vadd.f32 %v3727, %v3771
  %v3773 = vand.u32 %v3561, 4294901760
  %3774 = vmatmul.f32.gmra.mxu0 %v3773
  %v3775 = vpop.f32.mrf.mxu0
  %v3776 = vadd.f32 %v3733, %v3775
  %v3777 = vand.u32 %v3564, 4294901760
  %3778 = vmatmul.f32.gmra.mxu0 %v3777
  %v3779 = vpop.f32.mrf.mxu0
  %v3780 = vadd.f32 %v3739, %v3779
  %v3781 = vand.u32 %v3567, 4294901760
  %3782 = vmatmul.f32.gmra.mxu0 %v3781
  %v3783 = vpop.f32.mrf.mxu0
  %v3784 = vadd.f32 %v3745, %v3783
  %3785 = vdwg.mxu0
  %3786 = vmatpush.msra.mxu0 0.0
  %3787 = vmatpush.msra.mxu0 0.0
  %3788 = vmatpush.msra.mxu0 0.0
  %3789 = vmatpush.msra.mxu0 0.0
  %3790 = vmatpush.msra.mxu0 0.0
  %3791 = vmatpush.msra.mxu0 0.0
  %3792 = vmatpush.msra.mxu0 0.0
  %3793 = vmatpush.msra.mxu0 0.0
  %3794 = vmatpush.msra.mxu0 0.0
  %3795 = vmatpush.msra.mxu0 0.0
  %3796 = vmatpush.msra.mxu0 0.0
  %3797 = vmatpush.msra.mxu0 0.0
  %3798 = vmatpush.msra.mxu0 0.0
  %3799 = vmatpush.msra.mxu0 0.0
  %v3800 = vand.u32 %v3252, 4294901760
  %3801 = vmatpush.msra.mxu0 %v3800
  %v3802 = vand.u32 %v3250, 4294901760
  %3803 = vmatpush.msra.mxu0 %v3802
  %v3804 = vand.u32 %v3558, 4294901760
  %3805 = vmatmul.f32.gmra.mxu0 %v3804
  %v3806 = vpop.f32.mrf.mxu0
  %v3807 = vadd.f32 %v3772, %v3806
  %v3808 = vand.u32 %v3561, 4294901760
  %3809 = vmatmul.f32.gmra.mxu0 %v3808
  %v3810 = vpop.f32.mrf.mxu0
  %v3811 = vadd.f32 %v3776, %v3810
  %v3812 = vand.u32 %v3564, 4294901760
  %3813 = vmatmul.f32.gmra.mxu0 %v3812
  %v3814 = vpop.f32.mrf.mxu0
  %v3815 = vadd.f32 %v3780, %v3814
  %v3816 = vand.u32 %v3567, 4294901760
  %3817 = vmatmul.f32.gmra.mxu0 %v3816
  %v3818 = vpop.f32.mrf.mxu0
  %v3819 = vadd.f32 %v3784, %v3818
  %3820 = vdwg.mxu0
  %3821 = vmatpush.msra.mxu0 0.0
  %3822 = vmatpush.msra.mxu0 0.0
  %3823 = vmatpush.msra.mxu0 0.0
  %3824 = vmatpush.msra.mxu0 0.0
  %3825 = vmatpush.msra.mxu0 0.0
  %3826 = vmatpush.msra.mxu0 0.0
  %3827 = vmatpush.msra.mxu0 0.0
  %3828 = vmatpush.msra.mxu0 0.0
  %3829 = vmatpush.msra.mxu0 0.0
  %3830 = vmatpush.msra.mxu0 0.0
  %3831 = vmatpush.msra.mxu0 0.0
  %3832 = vmatpush.msra.mxu0 0.0
  %3833 = vmatpush.msra.mxu0 0.0
  %3834 = vmatpush.msra.mxu0 0.0
  %v3835 = vand.u32 %v3253, 4294901760
  %3836 = vmatpush.msra.mxu0 %v3835
  %v3837 = vand.u32 %v3251, 4294901760
  %3838 = vmatpush.msra.mxu0 %v3837
  %v3839 = vand.u32 %v3558, 4294901760
  %v3840 = vsub.f32 %v3558, %v3839
  %v3841 = vand.u32 %v3840, 4294901760
  %v3842 = vsub.f32 %v3840, %v3841
  %v3843 = vand.u32 %v3842, 4294901760
  %3844 = vmatmul.f32.gmra.mxu0 %v3843
  %v3845 = vpop.f32.mrf.mxu0
  %v3846 = vadd.f32 0.0, %v3845
  %v3847 = vand.u32 %v3561, 4294901760
  %v3848 = vsub.f32 %v3561, %v3847
  %v3849 = vand.u32 %v3848, 4294901760
  %v3850 = vsub.f32 %v3848, %v3849
  %v3851 = vand.u32 %v3850, 4294901760
  %3852 = vmatmul.f32.gmra.mxu0 %v3851
  %v3853 = vpop.f32.mrf.mxu0
  %v3854 = vadd.f32 0.0, %v3853
  %v3855 = vand.u32 %v3564, 4294901760
  %v3856 = vsub.f32 %v3564, %v3855
  %v3857 = vand.u32 %v3856, 4294901760
  %v3858 = vsub.f32 %v3856, %v3857
  %v3859 = vand.u32 %v3858, 4294901760
  %3860 = vmatmul.f32.gmra.mxu0 %v3859
  %v3861 = vpop.f32.mrf.mxu0
  %v3862 = vadd.f32 0.0, %v3861
  %v3863 = vand.u32 %v3567, 4294901760
  %v3864 = vsub.f32 %v3567, %v3863
  %v3865 = vand.u32 %v3864, 4294901760
  %v3866 = vsub.f32 %v3864, %v3865
  %v3867 = vand.u32 %v3866, 4294901760
  %3868 = vmatmul.f32.gmra.mxu0 %v3867
  %v3869 = vpop.f32.mrf.mxu0
  %v3870 = vadd.f32 0.0, %v3869
  %3871 = vdwg.mxu0
  %3872 = vmatpush.msra.mxu0 0.0
  %3873 = vmatpush.msra.mxu0 0.0
  %3874 = vmatpush.msra.mxu0 0.0
  %3875 = vmatpush.msra.mxu0 0.0
  %3876 = vmatpush.msra.mxu0 0.0
  %3877 = vmatpush.msra.mxu0 0.0
  %3878 = vmatpush.msra.mxu0 0.0
  %3879 = vmatpush.msra.mxu0 0.0
  %3880 = vmatpush.msra.mxu0 0.0
  %3881 = vmatpush.msra.mxu0 0.0
  %3882 = vmatpush.msra.mxu0 0.0
  %3883 = vmatpush.msra.mxu0 0.0
  %3884 = vmatpush.msra.mxu0 0.0
  %3885 = vmatpush.msra.mxu0 0.0
  %v3886 = vand.u32 %v3253, 4294901760
  %v3887 = vsub.f32 %v3253, %v3886
  %v3888 = vand.u32 %v3887, 4294901760
  %v3889 = vsub.f32 %v3887, %v3888
  %v3890 = vand.u32 %v3889, 4294901760
  %3891 = vmatpush.msra.mxu0 %v3890
  %v3892 = vand.u32 %v3251, 4294901760
  %v3893 = vsub.f32 %v3251, %v3892
  %v3894 = vand.u32 %v3893, 4294901760
  %v3895 = vsub.f32 %v3893, %v3894
  %v3896 = vand.u32 %v3895, 4294901760
  %3897 = vmatpush.msra.mxu0 %v3896
  %v3898 = vand.u32 %v3558, 4294901760
  %3899 = vmatmul.f32.gmra.mxu0 %v3898
  %v3900 = vpop.f32.mrf.mxu0
  %v3901 = vadd.f32 %v3846, %v3900
  %v3902 = vand.u32 %v3561, 4294901760
  %3903 = vmatmul.f32.gmra.mxu0 %v3902
  %v3904 = vpop.f32.mrf.mxu0
  %v3905 = vadd.f32 %v3854, %v3904
  %v3906 = vand.u32 %v3564, 4294901760
  %3907 = vmatmul.f32.gmra.mxu0 %v3906
  %v3908 = vpop.f32.mrf.mxu0
  %v3909 = vadd.f32 %v3862, %v3908
  %v3910 = vand.u32 %v3567, 4294901760
  %3911 = vmatmul.f32.gmra.mxu0 %v3910
  %v3912 = vpop.f32.mrf.mxu0
  %v3913 = vadd.f32 %v3870, %v3912
  %3914 = vdwg.mxu0
  %3915 = vmatpush.msra.mxu0 0.0
  %3916 = vmatpush.msra.mxu0 0.0
  %3917 = vmatpush.msra.mxu0 0.0
  %3918 = vmatpush.msra.mxu0 0.0
  %3919 = vmatpush.msra.mxu0 0.0
  %3920 = vmatpush.msra.mxu0 0.0
  %3921 = vmatpush.msra.mxu0 0.0
  %3922 = vmatpush.msra.mxu0 0.0
  %3923 = vmatpush.msra.mxu0 0.0
  %3924 = vmatpush.msra.mxu0 0.0
  %3925 = vmatpush.msra.mxu0 0.0
  %3926 = vmatpush.msra.mxu0 0.0
  %3927 = vmatpush.msra.mxu0 0.0
  %3928 = vmatpush.msra.mxu0 0.0
  %v3929 = vand.u32 %v3253, 4294901760
  %v3930 = vsub.f32 %v3253, %v3929
  %3931 = vmatpush.msra.mxu0 %v3930
  %v3932 = vand.u32 %v3251, 4294901760
  %v3933 = vsub.f32 %v3251, %v3932
  %3934 = vmatpush.msra.mxu0 %v3933
  %v3935 = vand.u32 %v3558, 4294901760
  %v3936 = vsub.f32 %v3558, %v3935
  %3937 = vmatmul.f32.gmra.mxu0 %v3936
  %v3938 = vpop.f32.mrf.mxu0
  %v3939 = vadd.f32 %v3901, %v3938
  %v3940 = vand.u32 %v3561, 4294901760
  %v3941 = vsub.f32 %v3561, %v3940
  %3942 = vmatmul.f32.gmra.mxu0 %v3941
  %v3943 = vpop.f32.mrf.mxu0
  %v3944 = vadd.f32 %v3905, %v3943
  %v3945 = vand.u32 %v3564, 4294901760
  %v3946 = vsub.f32 %v3564, %v3945
  %3947 = vmatmul.f32.gmra.mxu0 %v3946
  %v3948 = vpop.f32.mrf.mxu0
  %v3949 = vadd.f32 %v3909, %v3948
  %v3950 = vand.u32 %v3567, 4294901760
  %v3951 = vsub.f32 %v3567, %v3950
  %3952 = vmatmul.f32.gmra.mxu0 %v3951
  %v3953 = vpop.f32.mrf.mxu0
  %v3954 = vadd.f32 %v3913, %v3953
  %3955 = vdwg.mxu0
  %3956 = vmatpush.msra.mxu0 0.0
  %3957 = vmatpush.msra.mxu0 0.0
  %3958 = vmatpush.msra.mxu0 0.0
  %3959 = vmatpush.msra.mxu0 0.0
  %3960 = vmatpush.msra.mxu0 0.0
  %3961 = vmatpush.msra.mxu0 0.0
  %3962 = vmatpush.msra.mxu0 0.0
  %3963 = vmatpush.msra.mxu0 0.0
  %3964 = vmatpush.msra.mxu0 0.0
  %3965 = vmatpush.msra.mxu0 0.0
  %3966 = vmatpush.msra.mxu0 0.0
  %3967 = vmatpush.msra.mxu0 0.0
  %3968 = vmatpush.msra.mxu0 0.0
  %3969 = vmatpush.msra.mxu0 0.0
  %v3970 = vand.u32 %v3253, 4294901760
  %3971 = vmatpush.msra.mxu0 %v3970
  %v3972 = vand.u32 %v3251, 4294901760
  %3973 = vmatpush.msra.mxu0 %v3972
  %v3974 = vand.u32 %v3558, 4294901760
  %v3975 = vsub.f32 %v3558, %v3974
  %v3976 = vand.u32 %v3975, 4294901760
  %3977 = vmatmul.f32.gmra.mxu0 %v3976
  %v3978 = vpop.f32.mrf.mxu0
  %v3979 = vadd.f32 %v3939, %v3978
  %v3980 = vand.u32 %v3561, 4294901760
  %v3981 = vsub.f32 %v3561, %v3980
  %v3982 = vand.u32 %v3981, 4294901760
  %3983 = vmatmul.f32.gmra.mxu0 %v3982
  %v3984 = vpop.f32.mrf.mxu0
  %v3985 = vadd.f32 %v3944, %v3984
  %v3986 = vand.u32 %v3564, 4294901760
  %v3987 = vsub.f32 %v3564, %v3986
  %v3988 = vand.u32 %v3987, 4294901760
  %3989 = vmatmul.f32.gmra.mxu0 %v3988
  %v3990 = vpop.f32.mrf.mxu0
  %v3991 = vadd.f32 %v3949, %v3990
  %v3992 = vand.u32 %v3567, 4294901760
  %v3993 = vsub.f32 %v3567, %v3992
  %v3994 = vand.u32 %v3993, 4294901760
  %3995 = vmatmul.f32.gmra.mxu0 %v3994
  %v3996 = vpop.f32.mrf.mxu0
  %v3997 = vadd.f32 %v3954, %v3996
  %3998 = vdwg.mxu0
  %3999 = vmatpush.msra.mxu0 0.0
  %4000 = vmatpush.msra.mxu0 0.0
  %4001 = vmatpush.msra.mxu0 0.0
  %4002 = vmatpush.msra.mxu0 0.0
  %4003 = vmatpush.msra.mxu0 0.0
  %4004 = vmatpush.msra.mxu0 0.0
  %4005 = vmatpush.msra.mxu0 0.0
  %4006 = vmatpush.msra.mxu0 0.0
  %4007 = vmatpush.msra.mxu0 0.0
  %4008 = vmatpush.msra.mxu0 0.0
  %4009 = vmatpush.msra.mxu0 0.0
  %4010 = vmatpush.msra.mxu0 0.0
  %4011 = vmatpush.msra.mxu0 0.0
  %4012 = vmatpush.msra.mxu0 0.0
  %v4013 = vand.u32 %v3253, 4294901760
  %v4014 = vsub.f32 %v3253, %v4013
  %v4015 = vand.u32 %v4014, 4294901760
  %4016 = vmatpush.msra.mxu0 %v4015
  %v4017 = vand.u32 %v3251, 4294901760
  %v4018 = vsub.f32 %v3251, %v4017
  %v4019 = vand.u32 %v4018, 4294901760
  %4020 = vmatpush.msra.mxu0 %v4019
  %v4021 = vand.u32 %v3558, 4294901760
  %4022 = vmatmul.f32.gmra.mxu0 %v4021
  %v4023 = vpop.f32.mrf.mxu0
  %v4024 = vadd.f32 %v3979, %v4023
  %v4025 = vand.u32 %v3561, 4294901760
  %4026 = vmatmul.f32.gmra.mxu0 %v4025
  %v4027 = vpop.f32.mrf.mxu0
  %v4028 = vadd.f32 %v3985, %v4027
  %v4029 = vand.u32 %v3564, 4294901760
  %4030 = vmatmul.f32.gmra.mxu0 %v4029
  %v4031 = vpop.f32.mrf.mxu0
  %v4032 = vadd.f32 %v3991, %v4031
  %v4033 = vand.u32 %v3567, 4294901760
  %4034 = vmatmul.f32.gmra.mxu0 %v4033
  %v4035 = vpop.f32.mrf.mxu0
  %v4036 = vadd.f32 %v3997, %v4035
  %4037 = vdwg.mxu0
  %4038 = vmatpush.msra.mxu0 0.0
  %4039 = vmatpush.msra.mxu0 0.0
  %4040 = vmatpush.msra.mxu0 0.0
  %4041 = vmatpush.msra.mxu0 0.0
  %4042 = vmatpush.msra.mxu0 0.0
  %4043 = vmatpush.msra.mxu0 0.0
  %4044 = vmatpush.msra.mxu0 0.0
  %4045 = vmatpush.msra.mxu0 0.0
  %4046 = vmatpush.msra.mxu0 0.0
  %4047 = vmatpush.msra.mxu0 0.0
  %4048 = vmatpush.msra.mxu0 0.0
  %4049 = vmatpush.msra.mxu0 0.0
  %4050 = vmatpush.msra.mxu0 0.0
  %4051 = vmatpush.msra.mxu0 0.0
  %v4052 = vand.u32 %v3253, 4294901760
  %4053 = vmatpush.msra.mxu0 %v4052
  %v4054 = vand.u32 %v3251, 4294901760
  %4055 = vmatpush.msra.mxu0 %v4054
  %v4056 = vand.u32 %v3558, 4294901760
  %4057 = vmatmul.f32.gmra.mxu0 %v4056
  %v4058 = vpop.f32.mrf.mxu0
  %v4059 = vadd.f32 %v4024, %v4058
  %v4060 = vand.u32 %v3561, 4294901760
  %4061 = vmatmul.f32.gmra.mxu0 %v4060
  %v4062 = vpop.f32.mrf.mxu0
  %v4063 = vadd.f32 %v4028, %v4062
  %v4064 = vand.u32 %v3564, 4294901760
  %4065 = vmatmul.f32.gmra.mxu0 %v4064
  %v4066 = vpop.f32.mrf.mxu0
  %v4067 = vadd.f32 %v4032, %v4066
  %v4068 = vand.u32 %v3567, 4294901760
  %4069 = vmatmul.f32.gmra.mxu0 %v4068
  %v4070 = vpop.f32.mrf.mxu0
  %v4071 = vadd.f32 %v4036, %v4070
  %4072 = vdwg.mxu0
  %v4073 = vmul.f32 %v3052, %v3807
  %v4074 = vmul.f32 %v3053, %v4059
  %v4075 = vmul.f32 %v3054, %v3811
  %v4076 = vmul.f32 %v3055, %v4063
  %v4077 = vmul.f32 %v3056, %v3815
  %v4078 = vmul.f32 %v3057, %v4067
  %v4079 = vmul.f32 %v3058, %v3819
  %v4080 = vmul.f32 %v3059, %v4071
  %v4081 = vand.u32 %v3222, 4294901760
  %4082 = vmatpush.msra.mxu0 %v4081
  %v4083 = vand.u32 %v3221, 4294901760
  %4084 = vmatpush.msra.mxu0 %v4083
  %v4085 = vand.u32 %v3220, 4294901760
  %4086 = vmatpush.msra.mxu0 %v4085
  %v4087 = vand.u32 %v3219, 4294901760
  %4088 = vmatpush.msra.mxu0 %v4087
  %v4089 = vand.u32 %v3218, 4294901760
  %4090 = vmatpush.msra.mxu0 %v4089
  %v4091 = vand.u32 %v3217, 4294901760
  %4092 = vmatpush.msra.mxu0 %v4091
  %v4093 = vand.u32 %v3216, 4294901760
  %4094 = vmatpush.msra.mxu0 %v4093
  %v4095 = vand.u32 %v3215, 4294901760
  %4096 = vmatpush.msra.mxu0 %v4095
  %v4097 = vand.u32 %v3214, 4294901760
  %4098 = vmatpush.msra.mxu0 %v4097
  %v4099 = vand.u32 %v3213, 4294901760
  %4100 = vmatpush.msra.mxu0 %v4099
  %v4101 = vand.u32 %v3212, 4294901760
  %4102 = vmatpush.msra.mxu0 %v4101
  %v4103 = vand.u32 %v3211, 4294901760
  %4104 = vmatpush.msra.mxu0 %v4103
  %v4105 = vand.u32 %v3210, 4294901760
  %4106 = vmatpush.msra.mxu0 %v4105
  %v4107 = vand.u32 %v3209, 4294901760
  %4108 = vmatpush.msra.mxu0 %v4107
  %v4109 = vand.u32 %v3208, 4294901760
  %4110 = vmatpush.msra.mxu0 %v4109
  %v4111 = vand.u32 %v3207, 4294901760
  %4112 = vmatpush.msra.mxu0 %v4111
  %v4113 = vand.u32 %v4073, 4294901760
  %v4114 = vsub.f32 %v4073, %v4113
  %v4115 = vand.u32 %v4114, 4294901760
  %v4116 = vsub.f32 %v4114, %v4115
  %v4117 = vand.u32 %v4116, 4294901760
  %4118 = vmatmul.f32.gmra.mxu0 %v4117
  %v4119 = vpop.f32.mrf.mxu0
  %v4120 = vadd.f32 0.0, %v4119
  %v4121 = vand.u32 %v4075, 4294901760
  %v4122 = vsub.f32 %v4075, %v4121
  %v4123 = vand.u32 %v4122, 4294901760
  %v4124 = vsub.f32 %v4122, %v4123
  %v4125 = vand.u32 %v4124, 4294901760
  %4126 = vmatmul.f32.gmra.mxu0 %v4125
  %v4127 = vpop.f32.mrf.mxu0
  %v4128 = vadd.f32 0.0, %v4127
  %v4129 = vand.u32 %v4077, 4294901760
  %v4130 = vsub.f32 %v4077, %v4129
  %v4131 = vand.u32 %v4130, 4294901760
  %v4132 = vsub.f32 %v4130, %v4131
  %v4133 = vand.u32 %v4132, 4294901760
  %4134 = vmatmul.f32.gmra.mxu0 %v4133
  %v4135 = vpop.f32.mrf.mxu0
  %v4136 = vadd.f32 0.0, %v4135
  %v4137 = vand.u32 %v4079, 4294901760
  %v4138 = vsub.f32 %v4079, %v4137
  %v4139 = vand.u32 %v4138, 4294901760
  %v4140 = vsub.f32 %v4138, %v4139
  %v4141 = vand.u32 %v4140, 4294901760
  %4142 = vmatmul.f32.gmra.mxu0 %v4141
  %v4143 = vpop.f32.mrf.mxu0
  %v4144 = vadd.f32 0.0, %v4143
  %4145 = vdwg.mxu0
  %v4146 = vand.u32 %v3222, 4294901760
  %v4147 = vsub.f32 %v3222, %v4146
  %v4148 = vand.u32 %v4147, 4294901760
  %v4149 = vsub.f32 %v4147, %v4148
  %v4150 = vand.u32 %v4149, 4294901760
  %4151 = vmatpush.msra.mxu0 %v4150
  %v4152 = vand.u32 %v3221, 4294901760
  %v4153 = vsub.f32 %v3221, %v4152
  %v4154 = vand.u32 %v4153, 4294901760
  %v4155 = vsub.f32 %v4153, %v4154
  %v4156 = vand.u32 %v4155, 4294901760
  %4157 = vmatpush.msra.mxu0 %v4156
  %v4158 = vand.u32 %v3220, 4294901760
  %v4159 = vsub.f32 %v3220, %v4158
  %v4160 = vand.u32 %v4159, 4294901760
  %v4161 = vsub.f32 %v4159, %v4160
  %v4162 = vand.u32 %v4161, 4294901760
  %4163 = vmatpush.msra.mxu0 %v4162
  %v4164 = vand.u32 %v3219, 4294901760
  %v4165 = vsub.f32 %v3219, %v4164
  %v4166 = vand.u32 %v4165, 4294901760
  %v4167 = vsub.f32 %v4165, %v4166
  %v4168 = vand.u32 %v4167, 4294901760
  %4169 = vmatpush.msra.mxu0 %v4168
  %v4170 = vand.u32 %v3218, 4294901760
  %v4171 = vsub.f32 %v3218, %v4170
  %v4172 = vand.u32 %v4171, 4294901760
  %v4173 = vsub.f32 %v4171, %v4172
  %v4174 = vand.u32 %v4173, 4294901760
  %4175 = vmatpush.msra.mxu0 %v4174
  %v4176 = vand.u32 %v3217, 4294901760
  %v4177 = vsub.f32 %v3217, %v4176
  %v4178 = vand.u32 %v4177, 4294901760
  %v4179 = vsub.f32 %v4177, %v4178
  %v4180 = vand.u32 %v4179, 4294901760
  %4181 = vmatpush.msra.mxu0 %v4180
  %v4182 = vand.u32 %v3216, 4294901760
  %v4183 = vsub.f32 %v3216, %v4182
  %v4184 = vand.u32 %v4183, 4294901760
  %v4185 = vsub.f32 %v4183, %v4184
  %v4186 = vand.u32 %v4185, 4294901760
  %4187 = vmatpush.msra.mxu0 %v4186
  %v4188 = vand.u32 %v3215, 4294901760
  %v4189 = vsub.f32 %v3215, %v4188
  %v4190 = vand.u32 %v4189, 4294901760
  %v4191 = vsub.f32 %v4189, %v4190
  %v4192 = vand.u32 %v4191, 4294901760
  %4193 = vmatpush.msra.mxu0 %v4192
  %v4194 = vand.u32 %v3214, 4294901760
  %v4195 = vsub.f32 %v3214, %v4194
  %v4196 = vand.u32 %v4195, 4294901760
  %v4197 = vsub.f32 %v4195, %v4196
  %v4198 = vand.u32 %v4197, 4294901760
  %4199 = vmatpush.msra.mxu0 %v4198
  %v4200 = vand.u32 %v3213, 4294901760
  %v4201 = vsub.f32 %v3213, %v4200
  %v4202 = vand.u32 %v4201, 4294901760
  %v4203 = vsub.f32 %v4201, %v4202
  %v4204 = vand.u32 %v4203, 4294901760
  %4205 = vmatpush.msra.mxu0 %v4204
  %v4206 = vand.u32 %v3212, 4294901760
  %v4207 = vsub.f32 %v3212, %v4206
  %v4208 = vand.u32 %v4207, 4294901760
  %v4209 = vsub.f32 %v4207, %v4208
  %v4210 = vand.u32 %v4209, 4294901760
  %4211 = vmatpush.msra.mxu0 %v4210
  %v4212 = vand.u32 %v3211, 4294901760
  %v4213 = vsub.f32 %v3211, %v4212
  %v4214 = vand.u32 %v4213, 4294901760
  %v4215 = vsub.f32 %v4213, %v4214
  %v4216 = vand.u32 %v4215, 4294901760
  %4217 = vmatpush.msra.mxu0 %v4216
  %v4218 = vand.u32 %v3210, 4294901760
  %v4219 = vsub.f32 %v3210, %v4218
  %v4220 = vand.u32 %v4219, 4294901760
  %v4221 = vsub.f32 %v4219, %v4220
  %v4222 = vand.u32 %v4221, 4294901760
  %4223 = vmatpush.msra.mxu0 %v4222
  %v4224 = vand.u32 %v3209, 4294901760
  %v4225 = vsub.f32 %v3209, %v4224
  %v4226 = vand.u32 %v4225, 4294901760
  %v4227 = vsub.f32 %v4225, %v4226
  %v4228 = vand.u32 %v4227, 4294901760
  %4229 = vmatpush.msra.mxu0 %v4228
  %v4230 = vand.u32 %v3208, 4294901760
  %v4231 = vsub.f32 %v3208, %v4230
  %v4232 = vand.u32 %v4231, 4294901760
  %v4233 = vsub.f32 %v4231, %v4232
  %v4234 = vand.u32 %v4233, 4294901760
  %4235 = vmatpush.msra.mxu0 %v4234
  %v4236 = vand.u32 %v3207, 4294901760
  %v4237 = vsub.f32 %v3207, %v4236
  %v4238 = vand.u32 %v4237, 4294901760
  %v4239 = vsub.f32 %v4237, %v4238
  %v4240 = vand.u32 %v4239, 4294901760
  %4241 = vmatpush.msra.mxu0 %v4240
  %v4242 = vand.u32 %v4073, 4294901760
  %4243 = vmatmul.f32.gmra.mxu0 %v4242
  %v4244 = vpop.f32.mrf.mxu0
  %v4245 = vadd.f32 %v4120, %v4244
  %v4246 = vand.u32 %v4075, 4294901760
  %4247 = vmatmul.f32.gmra.mxu0 %v4246
  %v4248 = vpop.f32.mrf.mxu0
  %v4249 = vadd.f32 %v4128, %v4248
  %v4250 = vand.u32 %v4077, 4294901760
  %4251 = vmatmul.f32.gmra.mxu0 %v4250
  %v4252 = vpop.f32.mrf.mxu0
  %v4253 = vadd.f32 %v4136, %v4252
  %v4254 = vand.u32 %v4079, 4294901760
  %4255 = vmatmul.f32.gmra.mxu0 %v4254
  %v4256 = vpop.f32.mrf.mxu0
  %v4257 = vadd.f32 %v4144, %v4256
  %4258 = vdwg.mxu0
  %v4259 = vand.u32 %v3222, 4294901760
  %v4260 = vsub.f32 %v3222, %v4259
  %4261 = vmatpush.msra.mxu0 %v4260
  %v4262 = vand.u32 %v3221, 4294901760
  %v4263 = vsub.f32 %v3221, %v4262
  %4264 = vmatpush.msra.mxu0 %v4263
  %v4265 = vand.u32 %v3220, 4294901760
  %v4266 = vsub.f32 %v3220, %v4265
  %4267 = vmatpush.msra.mxu0 %v4266
  %v4268 = vand.u32 %v3219, 4294901760
  %v4269 = vsub.f32 %v3219, %v4268
  %4270 = vmatpush.msra.mxu0 %v4269
  %v4271 = vand.u32 %v3218, 4294901760
  %v4272 = vsub.f32 %v3218, %v4271
  %4273 = vmatpush.msra.mxu0 %v4272
  %v4274 = vand.u32 %v3217, 4294901760
  %v4275 = vsub.f32 %v3217, %v4274
  %4276 = vmatpush.msra.mxu0 %v4275
  %v4277 = vand.u32 %v3216, 4294901760
  %v4278 = vsub.f32 %v3216, %v4277
  %4279 = vmatpush.msra.mxu0 %v4278
  %v4280 = vand.u32 %v3215, 4294901760
  %v4281 = vsub.f32 %v3215, %v4280
  %4282 = vmatpush.msra.mxu0 %v4281
  %v4283 = vand.u32 %v3214, 4294901760
  %v4284 = vsub.f32 %v3214, %v4283
  %4285 = vmatpush.msra.mxu0 %v4284
  %v4286 = vand.u32 %v3213, 4294901760
  %v4287 = vsub.f32 %v3213, %v4286
  %4288 = vmatpush.msra.mxu0 %v4287
  %v4289 = vand.u32 %v3212, 4294901760
  %v4290 = vsub.f32 %v3212, %v4289
  %4291 = vmatpush.msra.mxu0 %v4290
  %v4292 = vand.u32 %v3211, 4294901760
  %v4293 = vsub.f32 %v3211, %v4292
  %4294 = vmatpush.msra.mxu0 %v4293
  %v4295 = vand.u32 %v3210, 4294901760
  %v4296 = vsub.f32 %v3210, %v4295
  %4297 = vmatpush.msra.mxu0 %v4296
  %v4298 = vand.u32 %v3209, 4294901760
  %v4299 = vsub.f32 %v3209, %v4298
  %4300 = vmatpush.msra.mxu0 %v4299
  %v4301 = vand.u32 %v3208, 4294901760
  %v4302 = vsub.f32 %v3208, %v4301
  %4303 = vmatpush.msra.mxu0 %v4302
  %v4304 = vand.u32 %v3207, 4294901760
  %v4305 = vsub.f32 %v3207, %v4304
  %4306 = vmatpush.msra.mxu0 %v4305
  %v4307 = vand.u32 %v4073, 4294901760
  %v4308 = vsub.f32 %v4073, %v4307
  %4309 = vmatmul.f32.gmra.mxu0 %v4308
  %v4310 = vpop.f32.mrf.mxu0
  %v4311 = vadd.f32 %v4245, %v4310
  %v4312 = vand.u32 %v4075, 4294901760
  %v4313 = vsub.f32 %v4075, %v4312
  %4314 = vmatmul.f32.gmra.mxu0 %v4313
  %v4315 = vpop.f32.mrf.mxu0
  %v4316 = vadd.f32 %v4249, %v4315
  %v4317 = vand.u32 %v4077, 4294901760
  %v4318 = vsub.f32 %v4077, %v4317
  %4319 = vmatmul.f32.gmra.mxu0 %v4318
  %v4320 = vpop.f32.mrf.mxu0
  %v4321 = vadd.f32 %v4253, %v4320
  %v4322 = vand.u32 %v4079, 4294901760
  %v4323 = vsub.f32 %v4079, %v4322
  %4324 = vmatmul.f32.gmra.mxu0 %v4323
  %v4325 = vpop.f32.mrf.mxu0
  %v4326 = vadd.f32 %v4257, %v4325
  %4327 = vdwg.mxu0
  %v4328 = vand.u32 %v3222, 4294901760
  %4329 = vmatpush.msra.mxu0 %v4328
  %v4330 = vand.u32 %v3221, 4294901760
  %4331 = vmatpush.msra.mxu0 %v4330
  %v4332 = vand.u32 %v3220, 4294901760
  %4333 = vmatpush.msra.mxu0 %v4332
  %v4334 = vand.u32 %v3219, 4294901760
  %4335 = vmatpush.msra.mxu0 %v4334
  %v4336 = vand.u32 %v3218, 4294901760
  %4337 = vmatpush.msra.mxu0 %v4336
  %v4338 = vand.u32 %v3217, 4294901760
  %4339 = vmatpush.msra.mxu0 %v4338
  %v4340 = vand.u32 %v3216, 4294901760
  %4341 = vmatpush.msra.mxu0 %v4340
  %v4342 = vand.u32 %v3215, 4294901760
  %4343 = vmatpush.msra.mxu0 %v4342
  %v4344 = vand.u32 %v3214, 4294901760
  %4345 = vmatpush.msra.mxu0 %v4344
  %v4346 = vand.u32 %v3213, 4294901760
  %4347 = vmatpush.msra.mxu0 %v4346
  %v4348 = vand.u32 %v3212, 4294901760
  %4349 = vmatpush.msra.mxu0 %v4348
  %v4350 = vand.u32 %v3211, 4294901760
  %4351 = vmatpush.msra.mxu0 %v4350
  %v4352 = vand.u32 %v3210, 4294901760
  %4353 = vmatpush.msra.mxu0 %v4352
  %v4354 = vand.u32 %v3209, 4294901760
  %4355 = vmatpush.msra.mxu0 %v4354
  %v4356 = vand.u32 %v3208, 4294901760
  %4357 = vmatpush.msra.mxu0 %v4356
  %v4358 = vand.u32 %v3207, 4294901760
  %4359 = vmatpush.msra.mxu0 %v4358
  %v4360 = vand.u32 %v4073, 4294901760
  %v4361 = vsub.f32 %v4073, %v4360
  %v4362 = vand.u32 %v4361, 4294901760
  %4363 = vmatmul.f32.gmra.mxu0 %v4362
  %v4364 = vpop.f32.mrf.mxu0
  %v4365 = vadd.f32 %v4311, %v4364
  %v4366 = vand.u32 %v4075, 4294901760
  %v4367 = vsub.f32 %v4075, %v4366
  %v4368 = vand.u32 %v4367, 4294901760
  %4369 = vmatmul.f32.gmra.mxu0 %v4368
  %v4370 = vpop.f32.mrf.mxu0
  %v4371 = vadd.f32 %v4316, %v4370
  %v4372 = vand.u32 %v4077, 4294901760
  %v4373 = vsub.f32 %v4077, %v4372
  %v4374 = vand.u32 %v4373, 4294901760
  %4375 = vmatmul.f32.gmra.mxu0 %v4374
  %v4376 = vpop.f32.mrf.mxu0
  %v4377 = vadd.f32 %v4321, %v4376
  %v4378 = vand.u32 %v4079, 4294901760
  %v4379 = vsub.f32 %v4079, %v4378
  %v4380 = vand.u32 %v4379, 4294901760
  %4381 = vmatmul.f32.gmra.mxu0 %v4380
  %v4382 = vpop.f32.mrf.mxu0
  %v4383 = vadd.f32 %v4326, %v4382
  %4384 = vdwg.mxu0
  %v4385 = vand.u32 %v3222, 4294901760
  %v4386 = vsub.f32 %v3222, %v4385
  %v4387 = vand.u32 %v4386, 4294901760
  %4388 = vmatpush.msra.mxu0 %v4387
  %v4389 = vand.u32 %v3221, 4294901760
  %v4390 = vsub.f32 %v3221, %v4389
  %v4391 = vand.u32 %v4390, 4294901760
  %4392 = vmatpush.msra.mxu0 %v4391
  %v4393 = vand.u32 %v3220, 4294901760
  %v4394 = vsub.f32 %v3220, %v4393
  %v4395 = vand.u32 %v4394, 4294901760
  %4396 = vmatpush.msra.mxu0 %v4395
  %v4397 = vand.u32 %v3219, 4294901760
  %v4398 = vsub.f32 %v3219, %v4397
  %v4399 = vand.u32 %v4398, 4294901760
  %4400 = vmatpush.msra.mxu0 %v4399
  %v4401 = vand.u32 %v3218, 4294901760
  %v4402 = vsub.f32 %v3218, %v4401
  %v4403 = vand.u32 %v4402, 4294901760
  %4404 = vmatpush.msra.mxu0 %v4403
  %v4405 = vand.u32 %v3217, 4294901760
  %v4406 = vsub.f32 %v3217, %v4405
  %v4407 = vand.u32 %v4406, 4294901760
  %4408 = vmatpush.msra.mxu0 %v4407
  %v4409 = vand.u32 %v3216, 4294901760
  %v4410 = vsub.f32 %v3216, %v4409
  %v4411 = vand.u32 %v4410, 4294901760
  %4412 = vmatpush.msra.mxu0 %v4411
  %v4413 = vand.u32 %v3215, 4294901760
  %v4414 = vsub.f32 %v3215, %v4413
  %v4415 = vand.u32 %v4414, 4294901760
  %4416 = vmatpush.msra.mxu0 %v4415
  %v4417 = vand.u32 %v3214, 4294901760
  %v4418 = vsub.f32 %v3214, %v4417
  %v4419 = vand.u32 %v4418, 4294901760
  %4420 = vmatpush.msra.mxu0 %v4419
  %v4421 = vand.u32 %v3213, 4294901760
  %v4422 = vsub.f32 %v3213, %v4421
  %v4423 = vand.u32 %v4422, 4294901760
  %4424 = vmatpush.msra.mxu0 %v4423
  %v4425 = vand.u32 %v3212, 4294901760
  %v4426 = vsub.f32 %v3212, %v4425
  %v4427 = vand.u32 %v4426, 4294901760
  %4428 = vmatpush.msra.mxu0 %v4427
  %v4429 = vand.u32 %v3211, 4294901760
  %v4430 = vsub.f32 %v3211, %v4429
  %v4431 = vand.u32 %v4430, 4294901760
  %4432 = vmatpush.msra.mxu0 %v4431
  %v4433 = vand.u32 %v3210, 4294901760
  %v4434 = vsub.f32 %v3210, %v4433
  %v4435 = vand.u32 %v4434, 4294901760
  %4436 = vmatpush.msra.mxu0 %v4435
  %v4437 = vand.u32 %v3209, 4294901760
  %v4438 = vsub.f32 %v3209, %v4437
  %v4439 = vand.u32 %v4438, 4294901760
  %4440 = vmatpush.msra.mxu0 %v4439
  %v4441 = vand.u32 %v3208, 4294901760
  %v4442 = vsub.f32 %v3208, %v4441
  %v4443 = vand.u32 %v4442, 4294901760
  %4444 = vmatpush.msra.mxu0 %v4443
  %v4445 = vand.u32 %v3207, 4294901760
  %v4446 = vsub.f32 %v3207, %v4445
  %v4447 = vand.u32 %v4446, 4294901760
  %4448 = vmatpush.msra.mxu0 %v4447
  %v4449 = vand.u32 %v4073, 4294901760
  %4450 = vmatmul.f32.gmra.mxu0 %v4449
  %v4451 = vpop.f32.mrf.mxu0
  %v4452 = vadd.f32 %v4365, %v4451
  %v4453 = vand.u32 %v4075, 4294901760
  %4454 = vmatmul.f32.gmra.mxu0 %v4453
  %v4455 = vpop.f32.mrf.mxu0
  %v4456 = vadd.f32 %v4371, %v4455
  %v4457 = vand.u32 %v4077, 4294901760
  %4458 = vmatmul.f32.gmra.mxu0 %v4457
  %v4459 = vpop.f32.mrf.mxu0
  %v4460 = vadd.f32 %v4377, %v4459
  %v4461 = vand.u32 %v4079, 4294901760
  %4462 = vmatmul.f32.gmra.mxu0 %v4461
  %v4463 = vpop.f32.mrf.mxu0
  %v4464 = vadd.f32 %v4383, %v4463
  %4465 = vdwg.mxu0
  %v4466 = vand.u32 %v3222, 4294901760
  %4467 = vmatpush.msra.mxu0 %v4466
  %v4468 = vand.u32 %v3221, 4294901760
  %4469 = vmatpush.msra.mxu0 %v4468
  %v4470 = vand.u32 %v3220, 4294901760
  %4471 = vmatpush.msra.mxu0 %v4470
  %v4472 = vand.u32 %v3219, 4294901760
  %4473 = vmatpush.msra.mxu0 %v4472
  %v4474 = vand.u32 %v3218, 4294901760
  %4475 = vmatpush.msra.mxu0 %v4474
  %v4476 = vand.u32 %v3217, 4294901760
  %4477 = vmatpush.msra.mxu0 %v4476
  %v4478 = vand.u32 %v3216, 4294901760
  %4479 = vmatpush.msra.mxu0 %v4478
  %v4480 = vand.u32 %v3215, 4294901760
  %4481 = vmatpush.msra.mxu0 %v4480
  %v4482 = vand.u32 %v3214, 4294901760
  %4483 = vmatpush.msra.mxu0 %v4482
  %v4484 = vand.u32 %v3213, 4294901760
  %4485 = vmatpush.msra.mxu0 %v4484
  %v4486 = vand.u32 %v3212, 4294901760
  %4487 = vmatpush.msra.mxu0 %v4486
  %v4488 = vand.u32 %v3211, 4294901760
  %4489 = vmatpush.msra.mxu0 %v4488
  %v4490 = vand.u32 %v3210, 4294901760
  %4491 = vmatpush.msra.mxu0 %v4490
  %v4492 = vand.u32 %v3209, 4294901760
  %4493 = vmatpush.msra.mxu0 %v4492
  %v4494 = vand.u32 %v3208, 4294901760
  %4495 = vmatpush.msra.mxu0 %v4494
  %v4496 = vand.u32 %v3207, 4294901760
  %4497 = vmatpush.msra.mxu0 %v4496
  %v4498 = vand.u32 %v4073, 4294901760
  %4499 = vmatmul.f32.gmra.mxu0 %v4498
  %v4500 = vpop.f32.mrf.mxu0
  %v4501 = vadd.f32 %v4452, %v4500
  %v4502 = vand.u32 %v4075, 4294901760
  %4503 = vmatmul.f32.gmra.mxu0 %v4502
  %v4504 = vpop.f32.mrf.mxu0
  %v4505 = vadd.f32 %v4456, %v4504
  %v4506 = vand.u32 %v4077, 4294901760
  %4507 = vmatmul.f32.gmra.mxu0 %v4506
  %v4508 = vpop.f32.mrf.mxu0
  %v4509 = vadd.f32 %v4460, %v4508
  %v4510 = vand.u32 %v4079, 4294901760
  %4511 = vmatmul.f32.gmra.mxu0 %v4510
  %v4512 = vpop.f32.mrf.mxu0
  %v4513 = vadd.f32 %v4464, %v4512
  %4514 = vdwg.mxu0
  %v4515 = vand.u32 %v3238, 4294901760
  %4516 = vmatpush.msra.mxu0 %v4515
  %v4517 = vand.u32 %v3237, 4294901760
  %4518 = vmatpush.msra.mxu0 %v4517
  %v4519 = vand.u32 %v3236, 4294901760
  %4520 = vmatpush.msra.mxu0 %v4519
  %v4521 = vand.u32 %v3235, 4294901760
  %4522 = vmatpush.msra.mxu0 %v4521
  %v4523 = vand.u32 %v3234, 4294901760
  %4524 = vmatpush.msra.mxu0 %v4523
  %v4525 = vand.u32 %v3233, 4294901760
  %4526 = vmatpush.msra.mxu0 %v4525
  %v4527 = vand.u32 %v3232, 4294901760
  %4528 = vmatpush.msra.mxu0 %v4527
  %v4529 = vand.u32 %v3231, 4294901760
  %4530 = vmatpush.msra.mxu0 %v4529
  %v4531 = vand.u32 %v3230, 4294901760
  %4532 = vmatpush.msra.mxu0 %v4531
  %v4533 = vand.u32 %v3229, 4294901760
  %4534 = vmatpush.msra.mxu0 %v4533
  %v4535 = vand.u32 %v3228, 4294901760
  %4536 = vmatpush.msra.mxu0 %v4535
  %v4537 = vand.u32 %v3227, 4294901760
  %4538 = vmatpush.msra.mxu0 %v4537
  %v4539 = vand.u32 %v3226, 4294901760
  %4540 = vmatpush.msra.mxu0 %v4539
  %v4541 = vand.u32 %v3225, 4294901760
  %4542 = vmatpush.msra.mxu0 %v4541
  %v4543 = vand.u32 %v3224, 4294901760
  %4544 = vmatpush.msra.mxu0 %v4543
  %v4545 = vand.u32 %v3223, 4294901760
  %4546 = vmatpush.msra.mxu0 %v4545
  %v4547 = vand.u32 %v4074, 4294901760
  %v4548 = vsub.f32 %v4074, %v4547
  %v4549 = vand.u32 %v4548, 4294901760
  %v4550 = vsub.f32 %v4548, %v4549
  %v4551 = vand.u32 %v4550, 4294901760
  %4552 = vmatmul.f32.gmra.mxu0 %v4551
  %v4553 = vpop.f32.mrf.mxu0
  %v4554 = vadd.f32 %v4501, %v4553
  %v4555 = vand.u32 %v4076, 4294901760
  %v4556 = vsub.f32 %v4076, %v4555
  %v4557 = vand.u32 %v4556, 4294901760
  %v4558 = vsub.f32 %v4556, %v4557
  %v4559 = vand.u32 %v4558, 4294901760
  %4560 = vmatmul.f32.gmra.mxu0 %v4559
  %v4561 = vpop.f32.mrf.mxu0
  %v4562 = vadd.f32 %v4505, %v4561
  %v4563 = vand.u32 %v4078, 4294901760
  %v4564 = vsub.f32 %v4078, %v4563
  %v4565 = vand.u32 %v4564, 4294901760
  %v4566 = vsub.f32 %v4564, %v4565
  %v4567 = vand.u32 %v4566, 4294901760
  %4568 = vmatmul.f32.gmra.mxu0 %v4567
  %v4569 = vpop.f32.mrf.mxu0
  %v4570 = vadd.f32 %v4509, %v4569
  %v4571 = vand.u32 %v4080, 4294901760
  %v4572 = vsub.f32 %v4080, %v4571
  %v4573 = vand.u32 %v4572, 4294901760
  %v4574 = vsub.f32 %v4572, %v4573
  %v4575 = vand.u32 %v4574, 4294901760
  %4576 = vmatmul.f32.gmra.mxu0 %v4575
  %v4577 = vpop.f32.mrf.mxu0
  %v4578 = vadd.f32 %v4513, %v4577
  %4579 = vdwg.mxu0
  %v4580 = vand.u32 %v3238, 4294901760
  %v4581 = vsub.f32 %v3238, %v4580
  %v4582 = vand.u32 %v4581, 4294901760
  %v4583 = vsub.f32 %v4581, %v4582
  %v4584 = vand.u32 %v4583, 4294901760
  %4585 = vmatpush.msra.mxu0 %v4584
  %v4586 = vand.u32 %v3237, 4294901760
  %v4587 = vsub.f32 %v3237, %v4586
  %v4588 = vand.u32 %v4587, 4294901760
  %v4589 = vsub.f32 %v4587, %v4588
  %v4590 = vand.u32 %v4589, 4294901760
  %4591 = vmatpush.msra.mxu0 %v4590
  %v4592 = vand.u32 %v3236, 4294901760
  %v4593 = vsub.f32 %v3236, %v4592
  %v4594 = vand.u32 %v4593, 4294901760
  %v4595 = vsub.f32 %v4593, %v4594
  %v4596 = vand.u32 %v4595, 4294901760
  %4597 = vmatpush.msra.mxu0 %v4596
  %v4598 = vand.u32 %v3235, 4294901760
  %v4599 = vsub.f32 %v3235, %v4598
  %v4600 = vand.u32 %v4599, 4294901760
  %v4601 = vsub.f32 %v4599, %v4600
  %v4602 = vand.u32 %v4601, 4294901760
  %4603 = vmatpush.msra.mxu0 %v4602
  %v4604 = vand.u32 %v3234, 4294901760
  %v4605 = vsub.f32 %v3234, %v4604
  %v4606 = vand.u32 %v4605, 4294901760
  %v4607 = vsub.f32 %v4605, %v4606
  %v4608 = vand.u32 %v4607, 4294901760
  %4609 = vmatpush.msra.mxu0 %v4608
  %v4610 = vand.u32 %v3233, 4294901760
  %v4611 = vsub.f32 %v3233, %v4610
  %v4612 = vand.u32 %v4611, 4294901760
  %v4613 = vsub.f32 %v4611, %v4612
  %v4614 = vand.u32 %v4613, 4294901760
  %4615 = vmatpush.msra.mxu0 %v4614
  %v4616 = vand.u32 %v3232, 4294901760
  %v4617 = vsub.f32 %v3232, %v4616
  %v4618 = vand.u32 %v4617, 4294901760
  %v4619 = vsub.f32 %v4617, %v4618
  %v4620 = vand.u32 %v4619, 4294901760
  %4621 = vmatpush.msra.mxu0 %v4620
  %v4622 = vand.u32 %v3231, 4294901760
  %v4623 = vsub.f32 %v3231, %v4622
  %v4624 = vand.u32 %v4623, 4294901760
  %v4625 = vsub.f32 %v4623, %v4624
  %v4626 = vand.u32 %v4625, 4294901760
  %4627 = vmatpush.msra.mxu0 %v4626
  %v4628 = vand.u32 %v3230, 4294901760
  %v4629 = vsub.f32 %v3230, %v4628
  %v4630 = vand.u32 %v4629, 4294901760
  %v4631 = vsub.f32 %v4629, %v4630
  %v4632 = vand.u32 %v4631, 4294901760
  %4633 = vmatpush.msra.mxu0 %v4632
  %v4634 = vand.u32 %v3229, 4294901760
  %v4635 = vsub.f32 %v3229, %v4634
  %v4636 = vand.u32 %v4635, 4294901760
  %v4637 = vsub.f32 %v4635, %v4636
  %v4638 = vand.u32 %v4637, 4294901760
  %4639 = vmatpush.msra.mxu0 %v4638
  %v4640 = vand.u32 %v3228, 4294901760
  %v4641 = vsub.f32 %v3228, %v4640
  %v4642 = vand.u32 %v4641, 4294901760
  %v4643 = vsub.f32 %v4641, %v4642
  %v4644 = vand.u32 %v4643, 4294901760
  %4645 = vmatpush.msra.mxu0 %v4644
  %v4646 = vand.u32 %v3227, 4294901760
  %v4647 = vsub.f32 %v3227, %v4646
  %v4648 = vand.u32 %v4647, 4294901760
  %v4649 = vsub.f32 %v4647, %v4648
  %v4650 = vand.u32 %v4649, 4294901760
  %4651 = vmatpush.msra.mxu0 %v4650
  %v4652 = vand.u32 %v3226, 4294901760
  %v4653 = vsub.f32 %v3226, %v4652
  %v4654 = vand.u32 %v4653, 4294901760
  %v4655 = vsub.f32 %v4653, %v4654
  %v4656 = vand.u32 %v4655, 4294901760
  %4657 = vmatpush.msra.mxu0 %v4656
  %v4658 = vand.u32 %v3225, 4294901760
  %v4659 = vsub.f32 %v3225, %v4658
  %v4660 = vand.u32 %v4659, 4294901760
  %v4661 = vsub.f32 %v4659, %v4660
  %v4662 = vand.u32 %v4661, 4294901760
  %4663 = vmatpush.msra.mxu0 %v4662
  %v4664 = vand.u32 %v3224, 4294901760
  %v4665 = vsub.f32 %v3224, %v4664
  %v4666 = vand.u32 %v4665, 4294901760
  %v4667 = vsub.f32 %v4665, %v4666
  %v4668 = vand.u32 %v4667, 4294901760
  %4669 = vmatpush.msra.mxu0 %v4668
  %v4670 = vand.u32 %v3223, 4294901760
  %v4671 = vsub.f32 %v3223, %v4670
  %v4672 = vand.u32 %v4671, 4294901760
  %v4673 = vsub.f32 %v4671, %v4672
  %v4674 = vand.u32 %v4673, 4294901760
  %4675 = vmatpush.msra.mxu0 %v4674
  %v4676 = vand.u32 %v4074, 4294901760
  %4677 = vmatmul.f32.gmra.mxu0 %v4676
  %v4678 = vpop.f32.mrf.mxu0
  %v4679 = vadd.f32 %v4554, %v4678
  %v4680 = vand.u32 %v4076, 4294901760
  %4681 = vmatmul.f32.gmra.mxu0 %v4680
  %v4682 = vpop.f32.mrf.mxu0
  %v4683 = vadd.f32 %v4562, %v4682
  %v4684 = vand.u32 %v4078, 4294901760
  %4685 = vmatmul.f32.gmra.mxu0 %v4684
  %v4686 = vpop.f32.mrf.mxu0
  %v4687 = vadd.f32 %v4570, %v4686
  %v4688 = vand.u32 %v4080, 4294901760
  %4689 = vmatmul.f32.gmra.mxu0 %v4688
  %v4690 = vpop.f32.mrf.mxu0
  %v4691 = vadd.f32 %v4578, %v4690
  %4692 = vdwg.mxu0
  %v4693 = vand.u32 %v3238, 4294901760
  %v4694 = vsub.f32 %v3238, %v4693
  %4695 = vmatpush.msra.mxu0 %v4694
  %v4696 = vand.u32 %v3237, 4294901760
  %v4697 = vsub.f32 %v3237, %v4696
  %4698 = vmatpush.msra.mxu0 %v4697
  %v4699 = vand.u32 %v3236, 4294901760
  %v4700 = vsub.f32 %v3236, %v4699
  %4701 = vmatpush.msra.mxu0 %v4700
  %v4702 = vand.u32 %v3235, 4294901760
  %v4703 = vsub.f32 %v3235, %v4702
  %4704 = vmatpush.msra.mxu0 %v4703
  %v4705 = vand.u32 %v3234, 4294901760
  %v4706 = vsub.f32 %v3234, %v4705
  %4707 = vmatpush.msra.mxu0 %v4706
  %v4708 = vand.u32 %v3233, 4294901760
  %v4709 = vsub.f32 %v3233, %v4708
  %4710 = vmatpush.msra.mxu0 %v4709
  %v4711 = vand.u32 %v3232, 4294901760
  %v4712 = vsub.f32 %v3232, %v4711
  %4713 = vmatpush.msra.mxu0 %v4712
  %v4714 = vand.u32 %v3231, 4294901760
  %v4715 = vsub.f32 %v3231, %v4714
  %4716 = vmatpush.msra.mxu0 %v4715
  %v4717 = vand.u32 %v3230, 4294901760
  %v4718 = vsub.f32 %v3230, %v4717
  %4719 = vmatpush.msra.mxu0 %v4718
  %v4720 = vand.u32 %v3229, 4294901760
  %v4721 = vsub.f32 %v3229, %v4720
  %4722 = vmatpush.msra.mxu0 %v4721
  %v4723 = vand.u32 %v3228, 4294901760
  %v4724 = vsub.f32 %v3228, %v4723
  %4725 = vmatpush.msra.mxu0 %v4724
  %v4726 = vand.u32 %v3227, 4294901760
  %v4727 = vsub.f32 %v3227, %v4726
  %4728 = vmatpush.msra.mxu0 %v4727
  %v4729 = vand.u32 %v3226, 4294901760
  %v4730 = vsub.f32 %v3226, %v4729
  %4731 = vmatpush.msra.mxu0 %v4730
  %v4732 = vand.u32 %v3225, 4294901760
  %v4733 = vsub.f32 %v3225, %v4732
  %4734 = vmatpush.msra.mxu0 %v4733
  %v4735 = vand.u32 %v3224, 4294901760
  %v4736 = vsub.f32 %v3224, %v4735
  %4737 = vmatpush.msra.mxu0 %v4736
  %v4738 = vand.u32 %v3223, 4294901760
  %v4739 = vsub.f32 %v3223, %v4738
  %4740 = vmatpush.msra.mxu0 %v4739
  %v4741 = vand.u32 %v4074, 4294901760
  %v4742 = vsub.f32 %v4074, %v4741
  %4743 = vmatmul.f32.gmra.mxu0 %v4742
  %v4744 = vpop.f32.mrf.mxu0
  %v4745 = vadd.f32 %v4679, %v4744
  %v4746 = vand.u32 %v4076, 4294901760
  %v4747 = vsub.f32 %v4076, %v4746
  %4748 = vmatmul.f32.gmra.mxu0 %v4747
  %v4749 = vpop.f32.mrf.mxu0
  %v4750 = vadd.f32 %v4683, %v4749
  %v4751 = vand.u32 %v4078, 4294901760
  %v4752 = vsub.f32 %v4078, %v4751
  %4753 = vmatmul.f32.gmra.mxu0 %v4752
  %v4754 = vpop.f32.mrf.mxu0
  %v4755 = vadd.f32 %v4687, %v4754
  %v4756 = vand.u32 %v4080, 4294901760
  %v4757 = vsub.f32 %v4080, %v4756
  %4758 = vmatmul.f32.gmra.mxu0 %v4757
  %v4759 = vpop.f32.mrf.mxu0
  %v4760 = vadd.f32 %v4691, %v4759
  %4761 = vdwg.mxu0
  %v4762 = vand.u32 %v3238, 4294901760
  %4763 = vmatpush.msra.mxu0 %v4762
  %v4764 = vand.u32 %v3237, 4294901760
  %4765 = vmatpush.msra.mxu0 %v4764
  %v4766 = vand.u32 %v3236, 4294901760
  %4767 = vmatpush.msra.mxu0 %v4766
  %v4768 = vand.u32 %v3235, 4294901760
  %4769 = vmatpush.msra.mxu0 %v4768
  %v4770 = vand.u32 %v3234, 4294901760
  %4771 = vmatpush.msra.mxu0 %v4770
  %v4772 = vand.u32 %v3233, 4294901760
  %4773 = vmatpush.msra.mxu0 %v4772
  %v4774 = vand.u32 %v3232, 4294901760
  %4775 = vmatpush.msra.mxu0 %v4774
  %v4776 = vand.u32 %v3231, 4294901760
  %4777 = vmatpush.msra.mxu0 %v4776
  %v4778 = vand.u32 %v3230, 4294901760
  %4779 = vmatpush.msra.mxu0 %v4778
  %v4780 = vand.u32 %v3229, 4294901760
  %4781 = vmatpush.msra.mxu0 %v4780
  %v4782 = vand.u32 %v3228, 4294901760
  %4783 = vmatpush.msra.mxu0 %v4782
  %v4784 = vand.u32 %v3227, 4294901760
  %4785 = vmatpush.msra.mxu0 %v4784
  %v4786 = vand.u32 %v3226, 4294901760
  %4787 = vmatpush.msra.mxu0 %v4786
  %v4788 = vand.u32 %v3225, 4294901760
  %4789 = vmatpush.msra.mxu0 %v4788
  %v4790 = vand.u32 %v3224, 4294901760
  %4791 = vmatpush.msra.mxu0 %v4790
  %v4792 = vand.u32 %v3223, 4294901760
  %4793 = vmatpush.msra.mxu0 %v4792
  %v4794 = vand.u32 %v4074, 4294901760
  %v4795 = vsub.f32 %v4074, %v4794
  %v4796 = vand.u32 %v4795, 4294901760
  %4797 = vmatmul.f32.gmra.mxu0 %v4796
  %v4798 = vpop.f32.mrf.mxu0
  %v4799 = vadd.f32 %v4745, %v4798
  %v4800 = vand.u32 %v4076, 4294901760
  %v4801 = vsub.f32 %v4076, %v4800
  %v4802 = vand.u32 %v4801, 4294901760
  %4803 = vmatmul.f32.gmra.mxu0 %v4802
  %v4804 = vpop.f32.mrf.mxu0
  %v4805 = vadd.f32 %v4750, %v4804
  %v4806 = vand.u32 %v4078, 4294901760
  %v4807 = vsub.f32 %v4078, %v4806
  %v4808 = vand.u32 %v4807, 4294901760
  %4809 = vmatmul.f32.gmra.mxu0 %v4808
  %v4810 = vpop.f32.mrf.mxu0
  %v4811 = vadd.f32 %v4755, %v4810
  %v4812 = vand.u32 %v4080, 4294901760
  %v4813 = vsub.f32 %v4080, %v4812
  %v4814 = vand.u32 %v4813, 4294901760
  %4815 = vmatmul.f32.gmra.mxu0 %v4814
  %v4816 = vpop.f32.mrf.mxu0
  %v4817 = vadd.f32 %v4760, %v4816
  %4818 = vdwg.mxu0
  %v4819 = vand.u32 %v3238, 4294901760
  %v4820 = vsub.f32 %v3238, %v4819
  %v4821 = vand.u32 %v4820, 4294901760
  %4822 = vmatpush.msra.mxu0 %v4821
  %v4823 = vand.u32 %v3237, 4294901760
  %v4824 = vsub.f32 %v3237, %v4823
  %v4825 = vand.u32 %v4824, 4294901760
  %4826 = vmatpush.msra.mxu0 %v4825
  %v4827 = vand.u32 %v3236, 4294901760
  %v4828 = vsub.f32 %v3236, %v4827
  %v4829 = vand.u32 %v4828, 4294901760
  %4830 = vmatpush.msra.mxu0 %v4829
  %v4831 = vand.u32 %v3235, 4294901760
  %v4832 = vsub.f32 %v3235, %v4831
  %v4833 = vand.u32 %v4832, 4294901760
  %4834 = vmatpush.msra.mxu0 %v4833
  %v4835 = vand.u32 %v3234, 4294901760
  %v4836 = vsub.f32 %v3234, %v4835
  %v4837 = vand.u32 %v4836, 4294901760
  %4838 = vmatpush.msra.mxu0 %v4837
  %v4839 = vand.u32 %v3233, 4294901760
  %v4840 = vsub.f32 %v3233, %v4839
  %v4841 = vand.u32 %v4840, 4294901760
  %4842 = vmatpush.msra.mxu0 %v4841
  %v4843 = vand.u32 %v3232, 4294901760
  %v4844 = vsub.f32 %v3232, %v4843
  %v4845 = vand.u32 %v4844, 4294901760
  %4846 = vmatpush.msra.mxu0 %v4845
  %v4847 = vand.u32 %v3231, 4294901760
  %v4848 = vsub.f32 %v3231, %v4847
  %v4849 = vand.u32 %v4848, 4294901760
  %4850 = vmatpush.msra.mxu0 %v4849
  %v4851 = vand.u32 %v3230, 4294901760
  %v4852 = vsub.f32 %v3230, %v4851
  %v4853 = vand.u32 %v4852, 4294901760
  %4854 = vmatpush.msra.mxu0 %v4853
  %v4855 = vand.u32 %v3229, 4294901760
  %v4856 = vsub.f32 %v3229, %v4855
  %v4857 = vand.u32 %v4856, 4294901760
  %4858 = vmatpush.msra.mxu0 %v4857
  %v4859 = vand.u32 %v3228, 4294901760
  %v4860 = vsub.f32 %v3228, %v4859
  %v4861 = vand.u32 %v4860, 4294901760
  %4862 = vmatpush.msra.mxu0 %v4861
  %v4863 = vand.u32 %v3227, 4294901760
  %v4864 = vsub.f32 %v3227, %v4863
  %v4865 = vand.u32 %v4864, 4294901760
  %4866 = vmatpush.msra.mxu0 %v4865
  %v4867 = vand.u32 %v3226, 4294901760
  %v4868 = vsub.f32 %v3226, %v4867
  %v4869 = vand.u32 %v4868, 4294901760
  %4870 = vmatpush.msra.mxu0 %v4869
  %v4871 = vand.u32 %v3225, 4294901760
  %v4872 = vsub.f32 %v3225, %v4871
  %v4873 = vand.u32 %v4872, 4294901760
  %4874 = vmatpush.msra.mxu0 %v4873
  %v4875 = vand.u32 %v3224, 4294901760
  %v4876 = vsub.f32 %v3224, %v4875
  %v4877 = vand.u32 %v4876, 4294901760
  %4878 = vmatpush.msra.mxu0 %v4877
  %v4879 = vand.u32 %v3223, 4294901760
  %v4880 = vsub.f32 %v3223, %v4879
  %v4881 = vand.u32 %v4880, 4294901760
  %4882 = vmatpush.msra.mxu0 %v4881
  %v4883 = vand.u32 %v4074, 4294901760
  %4884 = vmatmul.f32.gmra.mxu0 %v4883
  %v4885 = vpop.f32.mrf.mxu0
  %v4886 = vadd.f32 %v4799, %v4885
  %v4887 = vand.u32 %v4076, 4294901760
  %4888 = vmatmul.f32.gmra.mxu0 %v4887
  %v4889 = vpop.f32.mrf.mxu0
  %v4890 = vadd.f32 %v4805, %v4889
  %v4891 = vand.u32 %v4078, 4294901760
  %4892 = vmatmul.f32.gmra.mxu0 %v4891
  %v4893 = vpop.f32.mrf.mxu0
  %v4894 = vadd.f32 %v4811, %v4893
  %v4895 = vand.u32 %v4080, 4294901760
  %4896 = vmatmul.f32.gmra.mxu0 %v4895
  %v4897 = vpop.f32.mrf.mxu0
  %v4898 = vadd.f32 %v4817, %v4897
  %4899 = vdwg.mxu0
  %v4900 = vand.u32 %v3238, 4294901760
  %4901 = vmatpush.msra.mxu0 %v4900
  %v4902 = vand.u32 %v3237, 4294901760
  %4903 = vmatpush.msra.mxu0 %v4902
  %v4904 = vand.u32 %v3236, 4294901760
  %4905 = vmatpush.msra.mxu0 %v4904
  %v4906 = vand.u32 %v3235, 4294901760
  %4907 = vmatpush.msra.mxu0 %v4906
  %v4908 = vand.u32 %v3234, 4294901760
  %4909 = vmatpush.msra.mxu0 %v4908
  %v4910 = vand.u32 %v3233, 4294901760
  %4911 = vmatpush.msra.mxu0 %v4910
  %v4912 = vand.u32 %v3232, 4294901760
  %4913 = vmatpush.msra.mxu0 %v4912
  %v4914 = vand.u32 %v3231, 4294901760
  %4915 = vmatpush.msra.mxu0 %v4914
  %v4916 = vand.u32 %v3230, 4294901760
  %4917 = vmatpush.msra.mxu0 %v4916
  %v4918 = vand.u32 %v3229, 4294901760
  %4919 = vmatpush.msra.mxu0 %v4918
  %v4920 = vand.u32 %v3228, 4294901760
  %4921 = vmatpush.msra.mxu0 %v4920
  %v4922 = vand.u32 %v3227, 4294901760
  %4923 = vmatpush.msra.mxu0 %v4922
  %v4924 = vand.u32 %v3226, 4294901760
  %4925 = vmatpush.msra.mxu0 %v4924
  %v4926 = vand.u32 %v3225, 4294901760
  %4927 = vmatpush.msra.mxu0 %v4926
  %v4928 = vand.u32 %v3224, 4294901760
  %4929 = vmatpush.msra.mxu0 %v4928
  %v4930 = vand.u32 %v3223, 4294901760
  %4931 = vmatpush.msra.mxu0 %v4930
  %v4932 = vand.u32 %v4074, 4294901760
  %4933 = vmatmul.f32.gmra.mxu0 %v4932
  %v4934 = vpop.f32.mrf.mxu0
  %v4935 = vadd.f32 %v4886, %v4934
  %v4936 = vand.u32 %v4076, 4294901760
  %4937 = vmatmul.f32.gmra.mxu0 %v4936
  %v4938 = vpop.f32.mrf.mxu0
  %v4939 = vadd.f32 %v4890, %v4938
  %v4940 = vand.u32 %v4078, 4294901760
  %4941 = vmatmul.f32.gmra.mxu0 %v4940
  %v4942 = vpop.f32.mrf.mxu0
  %v4943 = vadd.f32 %v4894, %v4942
  %v4944 = vand.u32 %v4080, 4294901760
  %4945 = vmatmul.f32.gmra.mxu0 %v4944
  %v4946 = vpop.f32.mrf.mxu0
  %v4947 = vadd.f32 %v4898, %v4946
  %4948 = vdwg.mxu0
  %4949 = vset.pattern.permute.xlu0 0
  %4950 = vperm.xlu0 %4949, %v24
  %v4951 = vpop.permute.xlu0 %4950
  %4953 = vset.pattern.permute.xlu0 0
  %4954 = vperm.xlu0 %4953, %v25
  %v4955 = vpop.permute.xlu0 %4954
  %4958 = vset.pattern.permute.xlu0 0
  %4959 = vperm.xlu0 %4958, %v26
  %v4960 = vpop.permute.xlu0 %4959
  %4963 = vset.pattern.permute.xlu0 0
  %4964 = vperm.xlu0 %4963, %v27
  %v4965 = vpop.permute.xlu0 %4964
  %v4968 = vsel %vm3266, %v3258, 0
  %v4971 = vsel %vm3266, %v3259, 0
  %v4974 = vsel %vm3266, %v3260, 0
  %v4977 = vsel %vm3266, %v3261, 0
  %4979 = vmatpush.msra.mxu0 0.0
  %4980 = vmatpush.msra.mxu0 0.0
  %4981 = vmatpush.msra.mxu0 0.0
  %4982 = vmatpush.msra.mxu0 0.0
  %4983 = vmatpush.msra.mxu0 0.0
  %4984 = vmatpush.msra.mxu0 0.0
  %4985 = vmatpush.msra.mxu0 0.0
  %4986 = vmatpush.msra.mxu0 0.0
  %4987 = vmatpush.msra.mxu0 0.0
  %4988 = vmatpush.msra.mxu0 0.0
  %4989 = vmatpush.msra.mxu0 0.0
  %4990 = vmatpush.msra.mxu0 0.0
  %v4991 = vand.u32 %v4947, 4294901760
  %4992 = vmatpush.msra.mxu0 %v4991
  %v4993 = vand.u32 %v4943, 4294901760
  %4994 = vmatpush.msra.mxu0 %v4993
  %v4995 = vand.u32 %v4939, 4294901760
  %4996 = vmatpush.msra.mxu0 %v4995
  %v4997 = vand.u32 %v4935, 4294901760
  %4998 = vmatpush.msra.mxu0 %v4997
  %v4999 = vand.u32 %v4968, 4294901760
  %v5000 = vsub.f32 %v4968, %v4999
  %v5001 = vand.u32 %v5000, 4294901760
  %v5002 = vsub.f32 %v5000, %v5001
  %v5003 = vand.u32 %v5002, 4294901760
  %5004 = vmatmul.f32.gmra.mxu0 %v5003
  %v5005 = vpop.f32.mrf.mxu0
  %v5006 = vadd.f32 %v4951, %v5005
  %v5007 = vand.u32 %v4971, 4294901760
  %v5008 = vsub.f32 %v4971, %v5007
  %v5009 = vand.u32 %v5008, 4294901760
  %v5010 = vsub.f32 %v5008, %v5009
  %v5011 = vand.u32 %v5010, 4294901760
  %5012 = vmatmul.f32.gmra.mxu0 %v5011
  %v5013 = vpop.f32.mrf.mxu0
  %v5014 = vadd.f32 %v4955, %v5013
  %v5015 = vand.u32 %v4974, 4294901760
  %v5016 = vsub.f32 %v4974, %v5015
  %v5017 = vand.u32 %v5016, 4294901760
  %v5018 = vsub.f32 %v5016, %v5017
  %v5019 = vand.u32 %v5018, 4294901760
  %5020 = vmatmul.f32.gmra.mxu0 %v5019
  %v5021 = vpop.f32.mrf.mxu0
  %v5022 = vadd.f32 %v4960, %v5021
  %v5023 = vand.u32 %v4977, 4294901760
  %v5024 = vsub.f32 %v4977, %v5023
  %v5025 = vand.u32 %v5024, 4294901760
  %v5026 = vsub.f32 %v5024, %v5025
  %v5027 = vand.u32 %v5026, 4294901760
  %5028 = vmatmul.f32.gmra.mxu0 %v5027
  %v5029 = vpop.f32.mrf.mxu0
  %v5030 = vadd.f32 %v4965, %v5029
  %5031 = vdwg.mxu0
  %5032 = vmatpush.msra.mxu0 0.0
  %5033 = vmatpush.msra.mxu0 0.0
  %5034 = vmatpush.msra.mxu0 0.0
  %5035 = vmatpush.msra.mxu0 0.0
  %5036 = vmatpush.msra.mxu0 0.0
  %5037 = vmatpush.msra.mxu0 0.0
  %5038 = vmatpush.msra.mxu0 0.0
  %5039 = vmatpush.msra.mxu0 0.0
  %5040 = vmatpush.msra.mxu0 0.0
  %5041 = vmatpush.msra.mxu0 0.0
  %5042 = vmatpush.msra.mxu0 0.0
  %5043 = vmatpush.msra.mxu0 0.0
  %v5044 = vand.u32 %v4947, 4294901760
  %v5045 = vsub.f32 %v4947, %v5044
  %v5046 = vand.u32 %v5045, 4294901760
  %v5047 = vsub.f32 %v5045, %v5046
  %v5048 = vand.u32 %v5047, 4294901760
  %5049 = vmatpush.msra.mxu0 %v5048
  %v5050 = vand.u32 %v4943, 4294901760
  %v5051 = vsub.f32 %v4943, %v5050
  %v5052 = vand.u32 %v5051, 4294901760
  %v5053 = vsub.f32 %v5051, %v5052
  %v5054 = vand.u32 %v5053, 4294901760
  %5055 = vmatpush.msra.mxu0 %v5054
  %v5056 = vand.u32 %v4939, 4294901760
  %v5057 = vsub.f32 %v4939, %v5056
  %v5058 = vand.u32 %v5057, 4294901760
  %v5059 = vsub.f32 %v5057, %v5058
  %v5060 = vand.u32 %v5059, 4294901760
  %5061 = vmatpush.msra.mxu0 %v5060
  %v5062 = vand.u32 %v4935, 4294901760
  %v5063 = vsub.f32 %v4935, %v5062
  %v5064 = vand.u32 %v5063, 4294901760
  %v5065 = vsub.f32 %v5063, %v5064
  %v5066 = vand.u32 %v5065, 4294901760
  %5067 = vmatpush.msra.mxu0 %v5066
  %v5068 = vand.u32 %v4968, 4294901760
  %5069 = vmatmul.f32.gmra.mxu0 %v5068
  %v5070 = vpop.f32.mrf.mxu0
  %v5071 = vadd.f32 %v5006, %v5070
  %v5072 = vand.u32 %v4971, 4294901760
  %5073 = vmatmul.f32.gmra.mxu0 %v5072
  %v5074 = vpop.f32.mrf.mxu0
  %v5075 = vadd.f32 %v5014, %v5074
  %v5076 = vand.u32 %v4974, 4294901760
  %5077 = vmatmul.f32.gmra.mxu0 %v5076
  %v5078 = vpop.f32.mrf.mxu0
  %v5079 = vadd.f32 %v5022, %v5078
  %v5080 = vand.u32 %v4977, 4294901760
  %5081 = vmatmul.f32.gmra.mxu0 %v5080
  %v5082 = vpop.f32.mrf.mxu0
  %v5083 = vadd.f32 %v5030, %v5082
  %5084 = vdwg.mxu0
  %5085 = vmatpush.msra.mxu0 0.0
  %5086 = vmatpush.msra.mxu0 0.0
  %5087 = vmatpush.msra.mxu0 0.0
  %5088 = vmatpush.msra.mxu0 0.0
  %5089 = vmatpush.msra.mxu0 0.0
  %5090 = vmatpush.msra.mxu0 0.0
  %5091 = vmatpush.msra.mxu0 0.0
  %5092 = vmatpush.msra.mxu0 0.0
  %5093 = vmatpush.msra.mxu0 0.0
  %5094 = vmatpush.msra.mxu0 0.0
  %5095 = vmatpush.msra.mxu0 0.0
  %5096 = vmatpush.msra.mxu0 0.0
  %v5097 = vand.u32 %v4947, 4294901760
  %v5098 = vsub.f32 %v4947, %v5097
  %5099 = vmatpush.msra.mxu0 %v5098
  %v5100 = vand.u32 %v4943, 4294901760
  %v5101 = vsub.f32 %v4943, %v5100
  %5102 = vmatpush.msra.mxu0 %v5101
  %v5103 = vand.u32 %v4939, 4294901760
  %v5104 = vsub.f32 %v4939, %v5103
  %5105 = vmatpush.msra.mxu0 %v5104
  %v5106 = vand.u32 %v4935, 4294901760
  %v5107 = vsub.f32 %v4935, %v5106
  %5108 = vmatpush.msra.mxu0 %v5107
  %v5109 = vand.u32 %v4968, 4294901760
  %v5110 = vsub.f32 %v4968, %v5109
  %5111 = vmatmul.f32.gmra.mxu0 %v5110
  %v5112 = vpop.f32.mrf.mxu0
  %v5113 = vadd.f32 %v5071, %v5112
  %v5114 = vand.u32 %v4971, 4294901760
  %v5115 = vsub.f32 %v4971, %v5114
  %5116 = vmatmul.f32.gmra.mxu0 %v5115
  %v5117 = vpop.f32.mrf.mxu0
  %v5118 = vadd.f32 %v5075, %v5117
  %v5119 = vand.u32 %v4974, 4294901760
  %v5120 = vsub.f32 %v4974, %v5119
  %5121 = vmatmul.f32.gmra.mxu0 %v5120
  %v5122 = vpop.f32.mrf.mxu0
  %v5123 = vadd.f32 %v5079, %v5122
  %v5124 = vand.u32 %v4977, 4294901760
  %v5125 = vsub.f32 %v4977, %v5124
  %5126 = vmatmul.f32.gmra.mxu0 %v5125
  %v5127 = vpop.f32.mrf.mxu0
  %v5128 = vadd.f32 %v5083, %v5127
  %5129 = vdwg.mxu0
  %5130 = vmatpush.msra.mxu0 0.0
  %5131 = vmatpush.msra.mxu0 0.0
  %5132 = vmatpush.msra.mxu0 0.0
  %5133 = vmatpush.msra.mxu0 0.0
  %5134 = vmatpush.msra.mxu0 0.0
  %5135 = vmatpush.msra.mxu0 0.0
  %5136 = vmatpush.msra.mxu0 0.0
  %5137 = vmatpush.msra.mxu0 0.0
  %5138 = vmatpush.msra.mxu0 0.0
  %5139 = vmatpush.msra.mxu0 0.0
  %5140 = vmatpush.msra.mxu0 0.0
  %5141 = vmatpush.msra.mxu0 0.0
  %v5142 = vand.u32 %v4947, 4294901760
  %5143 = vmatpush.msra.mxu0 %v5142
  %v5144 = vand.u32 %v4943, 4294901760
  %5145 = vmatpush.msra.mxu0 %v5144
  %v5146 = vand.u32 %v4939, 4294901760
  %5147 = vmatpush.msra.mxu0 %v5146
  %v5148 = vand.u32 %v4935, 4294901760
  %5149 = vmatpush.msra.mxu0 %v5148
  %v5150 = vand.u32 %v4968, 4294901760
  %v5151 = vsub.f32 %v4968, %v5150
  %v5152 = vand.u32 %v5151, 4294901760
  %5153 = vmatmul.f32.gmra.mxu0 %v5152
  %v5154 = vpop.f32.mrf.mxu0
  %v5155 = vadd.f32 %v5113, %v5154
  %v5156 = vand.u32 %v4971, 4294901760
  %v5157 = vsub.f32 %v4971, %v5156
  %v5158 = vand.u32 %v5157, 4294901760
  %5159 = vmatmul.f32.gmra.mxu0 %v5158
  %v5160 = vpop.f32.mrf.mxu0
  %v5161 = vadd.f32 %v5118, %v5160
  %v5162 = vand.u32 %v4974, 4294901760
  %v5163 = vsub.f32 %v4974, %v5162
  %v5164 = vand.u32 %v5163, 4294901760
  %5165 = vmatmul.f32.gmra.mxu0 %v5164
  %v5166 = vpop.f32.mrf.mxu0
  %v5167 = vadd.f32 %v5123, %v5166
  %v5168 = vand.u32 %v4977, 4294901760
  %v5169 = vsub.f32 %v4977, %v5168
  %v5170 = vand.u32 %v5169, 4294901760
  %5171 = vmatmul.f32.gmra.mxu0 %v5170
  %v5172 = vpop.f32.mrf.mxu0
  %v5173 = vadd.f32 %v5128, %v5172
  %5174 = vdwg.mxu0
  %5175 = vmatpush.msra.mxu0 0.0
  %5176 = vmatpush.msra.mxu0 0.0
  %5177 = vmatpush.msra.mxu0 0.0
  %5178 = vmatpush.msra.mxu0 0.0
  %5179 = vmatpush.msra.mxu0 0.0
  %5180 = vmatpush.msra.mxu0 0.0
  %5181 = vmatpush.msra.mxu0 0.0
  %5182 = vmatpush.msra.mxu0 0.0
  %5183 = vmatpush.msra.mxu0 0.0
  %5184 = vmatpush.msra.mxu0 0.0
  %5185 = vmatpush.msra.mxu0 0.0
  %5186 = vmatpush.msra.mxu0 0.0
  %v5187 = vand.u32 %v4947, 4294901760
  %v5188 = vsub.f32 %v4947, %v5187
  %v5189 = vand.u32 %v5188, 4294901760
  %5190 = vmatpush.msra.mxu0 %v5189
  %v5191 = vand.u32 %v4943, 4294901760
  %v5192 = vsub.f32 %v4943, %v5191
  %v5193 = vand.u32 %v5192, 4294901760
  %5194 = vmatpush.msra.mxu0 %v5193
  %v5195 = vand.u32 %v4939, 4294901760
  %v5196 = vsub.f32 %v4939, %v5195
  %v5197 = vand.u32 %v5196, 4294901760
  %5198 = vmatpush.msra.mxu0 %v5197
  %v5199 = vand.u32 %v4935, 4294901760
  %v5200 = vsub.f32 %v4935, %v5199
  %v5201 = vand.u32 %v5200, 4294901760
  %5202 = vmatpush.msra.mxu0 %v5201
  %v5203 = vand.u32 %v4968, 4294901760
  %5204 = vmatmul.f32.gmra.mxu0 %v5203
  %v5205 = vpop.f32.mrf.mxu0
  %v5206 = vadd.f32 %v5155, %v5205
  %v5207 = vand.u32 %v4971, 4294901760
  %5208 = vmatmul.f32.gmra.mxu0 %v5207
  %v5209 = vpop.f32.mrf.mxu0
  %v5210 = vadd.f32 %v5161, %v5209
  %v5211 = vand.u32 %v4974, 4294901760
  %5212 = vmatmul.f32.gmra.mxu0 %v5211
  %v5213 = vpop.f32.mrf.mxu0
  %v5214 = vadd.f32 %v5167, %v5213
  %v5215 = vand.u32 %v4977, 4294901760
  %5216 = vmatmul.f32.gmra.mxu0 %v5215
  %v5217 = vpop.f32.mrf.mxu0
  %v5218 = vadd.f32 %v5173, %v5217
  %5219 = vdwg.mxu0
  %5220 = vmatpush.msra.mxu0 0.0
  %5221 = vmatpush.msra.mxu0 0.0
  %5222 = vmatpush.msra.mxu0 0.0
  %5223 = vmatpush.msra.mxu0 0.0
  %5224 = vmatpush.msra.mxu0 0.0
  %5225 = vmatpush.msra.mxu0 0.0
  %5226 = vmatpush.msra.mxu0 0.0
  %5227 = vmatpush.msra.mxu0 0.0
  %5228 = vmatpush.msra.mxu0 0.0
  %5229 = vmatpush.msra.mxu0 0.0
  %5230 = vmatpush.msra.mxu0 0.0
  %5231 = vmatpush.msra.mxu0 0.0
  %v5232 = vand.u32 %v4947, 4294901760
  %5233 = vmatpush.msra.mxu0 %v5232
  %v5234 = vand.u32 %v4943, 4294901760
  %5235 = vmatpush.msra.mxu0 %v5234
  %v5236 = vand.u32 %v4939, 4294901760
  %5237 = vmatpush.msra.mxu0 %v5236
  %v5238 = vand.u32 %v4935, 4294901760
  %5239 = vmatpush.msra.mxu0 %v5238
  %v5240 = vand.u32 %v4968, 4294901760
  %5241 = vmatmul.f32.gmra.mxu0 %v5240
  %v5242 = vpop.f32.mrf.mxu0
  %v5243 = vadd.f32 %v5206, %v5242
  %v5244 = vand.u32 %v4971, 4294901760
  %5245 = vmatmul.f32.gmra.mxu0 %v5244
  %v5246 = vpop.f32.mrf.mxu0
  %v5247 = vadd.f32 %v5210, %v5246
  %v5248 = vand.u32 %v4974, 4294901760
  %5249 = vmatmul.f32.gmra.mxu0 %v5248
  %v5250 = vpop.f32.mrf.mxu0
  %v5251 = vadd.f32 %v5214, %v5250
  %v5252 = vand.u32 %v4977, 4294901760
  %5253 = vmatmul.f32.gmra.mxu0 %v5252
  %v5254 = vpop.f32.mrf.mxu0
  %v5255 = vadd.f32 %v5218, %v5254
  %5256 = vdwg.mxu0
  %v5257 = vmax.f32 %v5243, 0.0
  %v5258 = vmax.f32 %v5247, 0.0
  %v5259 = vmax.f32 %v5251, 0.0
  %v5260 = vmax.f32 %v5255, 0.0
  %v5261 = vand.u32 2147483647, %v5243
  %v5262 = vand.u32 2147483647, %v5247
  %v5263 = vand.u32 2147483647, %v5251
  %v5264 = vand.u32 2147483647, %v5255
  %v5265 = vsub.f32 0.0, %v5261
  %v5266 = vsub.f32 0.0, %v5262
  %v5267 = vsub.f32 0.0, %v5263
  %v5268 = vsub.f32 0.0, %v5264
  %v5269 = vmul.f32 %v5265, 1.442695
  %v5270 = vpow.pop %v5269
  %v5271 = vmul.f32 %v5266, 1.442695
  %v5272 = vpow.pop %v5271
  %v5273 = vmul.f32 %v5267, 1.442695
  %v5274 = vpow.pop %v5273
  %v5275 = vmul.f32 %v5268, 1.442695
  %v5276 = vpow.pop %v5275
  %v5277 = vadd.f32 %v5270, 1.0
  %v5278 = vlog2.pop %v5277
  %v5279 = vmul.f32 %v5278, 0.6931472
  %v5280 = vmul.f32 -0.5, %v5270
  %v5281 = vadd.f32 %v5280, 1.0
  %v5282 = vmul.f32 %v5281, %v5270
  %v5283 = vand.u32 2147483647, %v5270
  %vm5284 = vcmp.lt.f32.partialorder %v5283, 0.0004427343
  %v5285 = vsel %vm5284, %v5282, %v5279
  %v5286 = vadd.f32 %v5272, 1.0
  %v5287 = vlog2.pop %v5286
  %v5288 = vmul.f32 %v5287, 0.6931472
  %v5289 = vmul.f32 -0.5, %v5272
  %v5290 = vadd.f32 %v5289, 1.0
  %v5291 = vmul.f32 %v5290, %v5272
  %v5292 = vand.u32 2147483647, %v5272
  %vm5293 = vcmp.lt.f32.partialorder %v5292, 0.0004427343
  %v5294 = vsel %vm5293, %v5291, %v5288
  %v5295 = vadd.f32 %v5274, 1.0
  %v5296 = vlog2.pop %v5295
  %v5297 = vmul.f32 %v5296, 0.6931472
  %v5298 = vmul.f32 -0.5, %v5274
  %v5299 = vadd.f32 %v5298, 1.0
  %v5300 = vmul.f32 %v5299, %v5274
  %v5301 = vand.u32 2147483647, %v5274
  %vm5302 = vcmp.lt.f32.partialorder %v5301, 0.0004427343
  %v5303 = vsel %vm5302, %v5300, %v5297
  %v5304 = vadd.f32 %v5276, 1.0
  %v5305 = vlog2.pop %v5304
  %v5306 = vmul.f32 %v5305, 0.6931472
  %v5307 = vmul.f32 -0.5, %v5276
  %v5308 = vadd.f32 %v5307, 1.0
  %v5309 = vmul.f32 %v5308, %v5276
  %v5310 = vand.u32 2147483647, %v5276
  %vm5311 = vcmp.lt.f32.partialorder %v5310, 0.0004427343
  %v5312 = vsel %vm5311, %v5309, %v5306
  %v5313 = vadd.f32 %v5257, %v5285
  %v5314 = vadd.f32 %v5258, %v5294
  %v5315 = vadd.f32 %v5259, %v5303
  %v5316 = vadd.f32 %v5260, %v5312
  %5317 = vset.pattern.permute.xlu0 3
  %5318 = vperm.xlu0 %5317, %v24
  %v5319 = vpop.permute.xlu0 %5318
  %5321 = vset.pattern.permute.xlu0 3
  %5322 = vperm.xlu0 %5321, %v25
  %v5323 = vpop.permute.xlu0 %5322
  %5325 = vset.pattern.permute.xlu0 3
  %5326 = vperm.xlu0 %5325, %v26
  %v5327 = vpop.permute.xlu0 %5326
  %5329 = vset.pattern.permute.xlu0 3
  %5330 = vperm.xlu0 %5329, %v27
  %v5331 = vpop.permute.xlu0 %5330
  %v5334 = vsel %vm3266, %v3262, 0
  %v5337 = vsel %vm3266, %v3263, 0
  %v5340 = vsel %vm3266, %v3264, 0
  %v5343 = vsel %vm3266, %v3265, 0
  %5345 = vmatpush.msra.mxu0 0.0
  %5346 = vmatpush.msra.mxu0 0.0
  %5347 = vmatpush.msra.mxu0 0.0
  %5348 = vmatpush.msra.mxu0 0.0
  %5349 = vmatpush.msra.mxu0 0.0
  %5350 = vmatpush.msra.mxu0 0.0
  %5351 = vmatpush.msra.mxu0 0.0
  %5352 = vmatpush.msra.mxu0 0.0
  %5353 = vmatpush.msra.mxu0 0.0
  %5354 = vmatpush.msra.mxu0 0.0
  %5355 = vmatpush.msra.mxu0 0.0
  %5356 = vmatpush.msra.mxu0 0.0
  %v5357 = vand.u32 %v5316, 4294901760
  %5358 = vmatpush.msra.mxu0 %v5357
  %v5359 = vand.u32 %v5315, 4294901760
  %5360 = vmatpush.msra.mxu0 %v5359
  %v5361 = vand.u32 %v5314, 4294901760
  %5362 = vmatpush.msra.mxu0 %v5361
  %v5363 = vand.u32 %v5313, 4294901760
  %5364 = vmatpush.msra.mxu0 %v5363
  %v5365 = vand.u32 %v5334, 4294901760
  %v5366 = vsub.f32 %v5334, %v5365
  %v5367 = vand.u32 %v5366, 4294901760
  %v5368 = vsub.f32 %v5366, %v5367
  %v5369 = vand.u32 %v5368, 4294901760
  %5370 = vmatmul.f32.gmra.mxu0 %v5369
  %v5371 = vpop.f32.mrf.mxu0
  %v5372 = vadd.f32 %v5319, %v5371
  %v5373 = vand.u32 %v5337, 4294901760
  %v5374 = vsub.f32 %v5337, %v5373
  %v5375 = vand.u32 %v5374, 4294901760
  %v5376 = vsub.f32 %v5374, %v5375
  %v5377 = vand.u32 %v5376, 4294901760
  %5378 = vmatmul.f32.gmra.mxu0 %v5377
  %v5379 = vpop.f32.mrf.mxu0
  %v5380 = vadd.f32 %v5323, %v5379
  %v5381 = vand.u32 %v5340, 4294901760
  %v5382 = vsub.f32 %v5340, %v5381
  %v5383 = vand.u32 %v5382, 4294901760
  %v5384 = vsub.f32 %v5382, %v5383
  %v5385 = vand.u32 %v5384, 4294901760
  %5386 = vmatmul.f32.gmra.mxu0 %v5385
  %v5387 = vpop.f32.mrf.mxu0
  %v5388 = vadd.f32 %v5327, %v5387
  %v5389 = vand.u32 %v5343, 4294901760
  %v5390 = vsub.f32 %v5343, %v5389
  %v5391 = vand.u32 %v5390, 4294901760
  %v5392 = vsub.f32 %v5390, %v5391
  %v5393 = vand.u32 %v5392, 4294901760
  %5394 = vmatmul.f32.gmra.mxu0 %v5393
  %v5395 = vpop.f32.mrf.mxu0
  %v5396 = vadd.f32 %v5331, %v5395
  %5397 = vdwg.mxu0
  %5398 = vmatpush.msra.mxu0 0.0
  %5399 = vmatpush.msra.mxu0 0.0
  %5400 = vmatpush.msra.mxu0 0.0
  %5401 = vmatpush.msra.mxu0 0.0
  %5402 = vmatpush.msra.mxu0 0.0
  %5403 = vmatpush.msra.mxu0 0.0
  %5404 = vmatpush.msra.mxu0 0.0
  %5405 = vmatpush.msra.mxu0 0.0
  %5406 = vmatpush.msra.mxu0 0.0
  %5407 = vmatpush.msra.mxu0 0.0
  %5408 = vmatpush.msra.mxu0 0.0
  %5409 = vmatpush.msra.mxu0 0.0
  %v5410 = vand.u32 %v5316, 4294901760
  %v5411 = vsub.f32 %v5316, %v5410
  %v5412 = vand.u32 %v5411, 4294901760
  %v5413 = vsub.f32 %v5411, %v5412
  %v5414 = vand.u32 %v5413, 4294901760
  %5415 = vmatpush.msra.mxu0 %v5414
  %v5416 = vand.u32 %v5315, 4294901760
  %v5417 = vsub.f32 %v5315, %v5416
  %v5418 = vand.u32 %v5417, 4294901760
  %v5419 = vsub.f32 %v5417, %v5418
  %v5420 = vand.u32 %v5419, 4294901760
  %5421 = vmatpush.msra.mxu0 %v5420
  %v5422 = vand.u32 %v5314, 4294901760
  %v5423 = vsub.f32 %v5314, %v5422
  %v5424 = vand.u32 %v5423, 4294901760
  %v5425 = vsub.f32 %v5423, %v5424
  %v5426 = vand.u32 %v5425, 4294901760
  %5427 = vmatpush.msra.mxu0 %v5426
  %v5428 = vand.u32 %v5313, 4294901760
  %v5429 = vsub.f32 %v5313, %v5428
  %v5430 = vand.u32 %v5429, 4294901760
  %v5431 = vsub.f32 %v5429, %v5430
  %v5432 = vand.u32 %v5431, 4294901760
  %5433 = vmatpush.msra.mxu0 %v5432
  %v5434 = vand.u32 %v5334, 4294901760
  %5435 = vmatmul.f32.gmra.mxu0 %v5434
  %v5436 = vpop.f32.mrf.mxu0
  %v5437 = vadd.f32 %v5372, %v5436
  %v5438 = vand.u32 %v5337, 4294901760
  %5439 = vmatmul.f32.gmra.mxu0 %v5438
  %v5440 = vpop.f32.mrf.mxu0
  %v5441 = vadd.f32 %v5380, %v5440
  %v5442 = vand.u32 %v5340, 4294901760
  %5443 = vmatmul.f32.gmra.mxu0 %v5442
  %v5444 = vpop.f32.mrf.mxu0
  %v5445 = vadd.f32 %v5388, %v5444
  %v5446 = vand.u32 %v5343, 4294901760
  %5447 = vmatmul.f32.gmra.mxu0 %v5446
  %v5448 = vpop.f32.mrf.mxu0
  %v5449 = vadd.f32 %v5396, %v5448
  %5450 = vdwg.mxu0
  %5451 = vmatpush.msra.mxu0 0.0
  %5452 = vmatpush.msra.mxu0 0.0
  %5453 = vmatpush.msra.mxu0 0.0
  %5454 = vmatpush.msra.mxu0 0.0
  %5455 = vmatpush.msra.mxu0 0.0
  %5456 = vmatpush.msra.mxu0 0.0
  %5457 = vmatpush.msra.mxu0 0.0
  %5458 = vmatpush.msra.mxu0 0.0
  %5459 = vmatpush.msra.mxu0 0.0
  %5460 = vmatpush.msra.mxu0 0.0
  %5461 = vmatpush.msra.mxu0 0.0
  %5462 = vmatpush.msra.mxu0 0.0
  %v5463 = vand.u32 %v5316, 4294901760
  %v5464 = vsub.f32 %v5316, %v5463
  %5465 = vmatpush.msra.mxu0 %v5464
  %v5466 = vand.u32 %v5315, 4294901760
  %v5467 = vsub.f32 %v5315, %v5466
  %5468 = vmatpush.msra.mxu0 %v5467
  %v5469 = vand.u32 %v5314, 4294901760
  %v5470 = vsub.f32 %v5314, %v5469
  %5471 = vmatpush.msra.mxu0 %v5470
  %v5472 = vand.u32 %v5313, 4294901760
  %v5473 = vsub.f32 %v5313, %v5472
  %5474 = vmatpush.msra.mxu0 %v5473
  %v5475 = vand.u32 %v5334, 4294901760
  %v5476 = vsub.f32 %v5334, %v5475
  %5477 = vmatmul.f32.gmra.mxu0 %v5476
  %v5478 = vpop.f32.mrf.mxu0
  %v5479 = vadd.f32 %v5437, %v5478
  %v5480 = vand.u32 %v5337, 4294901760
  %v5481 = vsub.f32 %v5337, %v5480
  %5482 = vmatmul.f32.gmra.mxu0 %v5481
  %v5483 = vpop.f32.mrf.mxu0
  %v5484 = vadd.f32 %v5441, %v5483
  %v5485 = vand.u32 %v5340, 4294901760
  %v5486 = vsub.f32 %v5340, %v5485
  %5487 = vmatmul.f32.gmra.mxu0 %v5486
  %v5488 = vpop.f32.mrf.mxu0
  %v5489 = vadd.f32 %v5445, %v5488
  %v5490 = vand.u32 %v5343, 4294901760
  %v5491 = vsub.f32 %v5343, %v5490
  %5492 = vmatmul.f32.gmra.mxu0 %v5491
  %v5493 = vpop.f32.mrf.mxu0
  %v5494 = vadd.f32 %v5449, %v5493
  %5495 = vdwg.mxu0
  %5496 = vmatpush.msra.mxu0 0.0
  %5497 = vmatpush.msra.mxu0 0.0
  %5498 = vmatpush.msra.mxu0 0.0
  %5499 = vmatpush.msra.mxu0 0.0
  %5500 = vmatpush.msra.mxu0 0.0
  %5501 = vmatpush.msra.mxu0 0.0
  %5502 = vmatpush.msra.mxu0 0.0
  %5503 = vmatpush.msra.mxu0 0.0
  %5504 = vmatpush.msra.mxu0 0.0
  %5505 = vmatpush.msra.mxu0 0.0
  %5506 = vmatpush.msra.mxu0 0.0
  %5507 = vmatpush.msra.mxu0 0.0
  %v5508 = vand.u32 %v5316, 4294901760
  %5509 = vmatpush.msra.mxu0 %v5508
  %v5510 = vand.u32 %v5315, 4294901760
  %5511 = vmatpush.msra.mxu0 %v5510
  %v5512 = vand.u32 %v5314, 4294901760
  %5513 = vmatpush.msra.mxu0 %v5512
  %v5514 = vand.u32 %v5313, 4294901760
  %5515 = vmatpush.msra.mxu0 %v5514
  %v5516 = vand.u32 %v5334, 4294901760
  %v5517 = vsub.f32 %v5334, %v5516
  %v5518 = vand.u32 %v5517, 4294901760
  %5519 = vmatmul.f32.gmra.mxu0 %v5518
  %v5520 = vpop.f32.mrf.mxu0
  %v5521 = vadd.f32 %v5479, %v5520
  %v5522 = vand.u32 %v5337, 4294901760
  %v5523 = vsub.f32 %v5337, %v5522
  %v5524 = vand.u32 %v5523, 4294901760
  %5525 = vmatmul.f32.gmra.mxu0 %v5524
  %v5526 = vpop.f32.mrf.mxu0
  %v5527 = vadd.f32 %v5484, %v5526
  %v5528 = vand.u32 %v5340, 4294901760
  %v5529 = vsub.f32 %v5340, %v5528
  %v5530 = vand.u32 %v5529, 4294901760
  %5531 = vmatmul.f32.gmra.mxu0 %v5530
  %v5532 = vpop.f32.mrf.mxu0
  %v5533 = vadd.f32 %v5489, %v5532
  %v5534 = vand.u32 %v5343, 4294901760
  %v5535 = vsub.f32 %v5343, %v5534
  %v5536 = vand.u32 %v5535, 4294901760
  %5537 = vmatmul.f32.gmra.mxu0 %v5536
  %v5538 = vpop.f32.mrf.mxu0
  %v5539 = vadd.f32 %v5494, %v5538
  %5540 = vdwg.mxu0
  %5541 = vmatpush.msra.mxu0 0.0
  %5542 = vmatpush.msra.mxu0 0.0
  %5543 = vmatpush.msra.mxu0 0.0
  %5544 = vmatpush.msra.mxu0 0.0
  %5545 = vmatpush.msra.mxu0 0.0
  %5546 = vmatpush.msra.mxu0 0.0
  %5547 = vmatpush.msra.mxu0 0.0
  %5548 = vmatpush.msra.mxu0 0.0
  %5549 = vmatpush.msra.mxu0 0.0
  %5550 = vmatpush.msra.mxu0 0.0
  %5551 = vmatpush.msra.mxu0 0.0
  %5552 = vmatpush.msra.mxu0 0.0
  %v5553 = vand.u32 %v5316, 4294901760
  %v5554 = vsub.f32 %v5316, %v5553
  %v5555 = vand.u32 %v5554, 4294901760
  %5556 = vmatpush.msra.mxu0 %v5555
  %v5557 = vand.u32 %v5315, 4294901760
  %v5558 = vsub.f32 %v5315, %v5557
  %v5559 = vand.u32 %v5558, 4294901760
  %5560 = vmatpush.msra.mxu0 %v5559
  %v5561 = vand.u32 %v5314, 4294901760
  %v5562 = vsub.f32 %v5314, %v5561
  %v5563 = vand.u32 %v5562, 4294901760
  %5564 = vmatpush.msra.mxu0 %v5563
  %v5565 = vand.u32 %v5313, 4294901760
  %v5566 = vsub.f32 %v5313, %v5565
  %v5567 = vand.u32 %v5566, 4294901760
  %5568 = vmatpush.msra.mxu0 %v5567
  %v5569 = vand.u32 %v5334, 4294901760
  %5570 = vmatmul.f32.gmra.mxu0 %v5569
  %v5571 = vpop.f32.mrf.mxu0
  %v5572 = vadd.f32 %v5521, %v5571
  %v5573 = vand.u32 %v5337, 4294901760
  %5574 = vmatmul.f32.gmra.mxu0 %v5573
  %v5575 = vpop.f32.mrf.mxu0
  %v5576 = vadd.f32 %v5527, %v5575
  %v5577 = vand.u32 %v5340, 4294901760
  %5578 = vmatmul.f32.gmra.mxu0 %v5577
  %v5579 = vpop.f32.mrf.mxu0
  %v5580 = vadd.f32 %v5533, %v5579
  %v5581 = vand.u32 %v5343, 4294901760
  %5582 = vmatmul.f32.gmra.mxu0 %v5581
  %v5583 = vpop.f32.mrf.mxu0
  %v5584 = vadd.f32 %v5539, %v5583
  %5585 = vdwg.mxu0
  %5586 = vmatpush.msra.mxu0 0.0
  %5587 = vmatpush.msra.mxu0 0.0
  %5588 = vmatpush.msra.mxu0 0.0
  %5589 = vmatpush.msra.mxu0 0.0
  %5590 = vmatpush.msra.mxu0 0.0
  %5591 = vmatpush.msra.mxu0 0.0
  %5592 = vmatpush.msra.mxu0 0.0
  %5593 = vmatpush.msra.mxu0 0.0
  %5594 = vmatpush.msra.mxu0 0.0
  %5595 = vmatpush.msra.mxu0 0.0
  %5596 = vmatpush.msra.mxu0 0.0
  %5597 = vmatpush.msra.mxu0 0.0
  %v5598 = vand.u32 %v5316, 4294901760
  %5599 = vmatpush.msra.mxu0 %v5598
  %v5600 = vand.u32 %v5315, 4294901760
  %5601 = vmatpush.msra.mxu0 %v5600
  %v5602 = vand.u32 %v5314, 4294901760
  %5603 = vmatpush.msra.mxu0 %v5602
  %v5604 = vand.u32 %v5313, 4294901760
  %5605 = vmatpush.msra.mxu0 %v5604
  %v5606 = vand.u32 %v5334, 4294901760
  %5607 = vmatmul.f32.gmra.mxu0 %v5606
  %v5608 = vpop.f32.mrf.mxu0
  %v5609 = vadd.f32 %v5572, %v5608
  %v5610 = vand.u32 %v5337, 4294901760
  %5611 = vmatmul.f32.gmra.mxu0 %v5610
  %v5612 = vpop.f32.mrf.mxu0
  %v5613 = vadd.f32 %v5576, %v5612
  %v5614 = vand.u32 %v5340, 4294901760
  %5615 = vmatmul.f32.gmra.mxu0 %v5614
  %v5616 = vpop.f32.mrf.mxu0
  %v5617 = vadd.f32 %v5580, %v5616
  %v5618 = vand.u32 %v5343, 4294901760
  %5619 = vmatmul.f32.gmra.mxu0 %v5618
  %v5620 = vpop.f32.mrf.mxu0
  %v5621 = vadd.f32 %v5584, %v5620
  %5622 = vdwg.mxu0
  %v5623 = vadd.f32 %v28, %v5609
  %v5624 = vadd.f32 %v29, %v5613
  %v5625 = vadd.f32 %v30, %v5617
  %v5626 = vadd.f32 %v31, %v5621
  %v5627 = vld [vmem:[%s5 + $0x60] sm:$0xff]
  %v5628 = vld [vmem:[%s5 + $0x68] sm:$0xff]
  %v5629 = vld [vmem:[%s5 + $0x70] sm:$0xff]
  %v5630 = vld [vmem:[%s5 + $0x78] sm:$0xff]
  %v5631 = vld [vmem:[%s5 + $0x80] sm:$0xff]
  %v5632 = vld [vmem:[%s5 + $0x88] sm:$0xff]
  %v5633 = vld [vmem:[%s5 + $0x90] sm:$0xff]
  %v5634 = vld [vmem:[%s5 + $0x98] sm:$0xff]
  %v5635 = vld [vmem:[%s5 + $0xa0] sm:$0xff]
  %v5636 = vld [vmem:[%s5 + $0xa8] sm:$0xff]
  %v5637 = vld [vmem:[%s5 + $0xb0] sm:$0xff]
  %v5638 = vld [vmem:[%s5 + $0xb8] sm:$0xff]
  %v5640 = vsel %vm3266, %v5627, 0
  %v5643 = vsel %vm3266, %v5628, 0
  %v5646 = vsel %vm3266, %v5629, 0
  %v5649 = vsel %vm3266, %v5630, 0
  %5651 = vmatpush.msra.mxu0 0.0
  %5652 = vmatpush.msra.mxu0 0.0
  %5653 = vmatpush.msra.mxu0 0.0
  %5654 = vmatpush.msra.mxu0 0.0
  %5655 = vmatpush.msra.mxu0 0.0
  %5656 = vmatpush.msra.mxu0 0.0
  %5657 = vmatpush.msra.mxu0 0.0
  %5658 = vmatpush.msra.mxu0 0.0
  %5659 = vmatpush.msra.mxu0 0.0
  %5660 = vmatpush.msra.mxu0 0.0
  %5661 = vmatpush.msra.mxu0 0.0
  %5662 = vmatpush.msra.mxu0 0.0
  %v5663 = vand.u32 %v5626, 4294901760
  %5664 = vmatpush.msra.mxu0 %v5663
  %v5665 = vand.u32 %v5625, 4294901760
  %5666 = vmatpush.msra.mxu0 %v5665
  %v5667 = vand.u32 %v5624, 4294901760
  %5668 = vmatpush.msra.mxu0 %v5667
  %v5669 = vand.u32 %v5623, 4294901760
  %5670 = vmatpush.msra.mxu0 %v5669
  %v5671 = vand.u32 %v5640, 4294901760
  %v5672 = vsub.f32 %v5640, %v5671
  %v5673 = vand.u32 %v5672, 4294901760
  %v5674 = vsub.f32 %v5672, %v5673
  %v5675 = vand.u32 %v5674, 4294901760
  %5676 = vmatmul.f32.gmra.mxu0 %v5675
  %v5677 = vpop.f32.mrf.mxu0
  %v5678 = vadd.f32 0.0, %v5677
  %v5679 = vand.u32 %v5643, 4294901760
  %v5680 = vsub.f32 %v5643, %v5679
  %v5681 = vand.u32 %v5680, 4294901760
  %v5682 = vsub.f32 %v5680, %v5681
  %v5683 = vand.u32 %v5682, 4294901760
  %5684 = vmatmul.f32.gmra.mxu0 %v5683
  %v5685 = vpop.f32.mrf.mxu0
  %v5686 = vadd.f32 0.0, %v5685
  %v5687 = vand.u32 %v5646, 4294901760
  %v5688 = vsub.f32 %v5646, %v5687
  %v5689 = vand.u32 %v5688, 4294901760
  %v5690 = vsub.f32 %v5688, %v5689
  %v5691 = vand.u32 %v5690, 4294901760
  %5692 = vmatmul.f32.gmra.mxu0 %v5691
  %v5693 = vpop.f32.mrf.mxu0
  %v5694 = vadd.f32 0.0, %v5693
  %v5695 = vand.u32 %v5649, 4294901760
  %v5696 = vsub.f32 %v5649, %v5695
  %v5697 = vand.u32 %v5696, 4294901760
  %v5698 = vsub.f32 %v5696, %v5697
  %v5699 = vand.u32 %v5698, 4294901760
  %5700 = vmatmul.f32.gmra.mxu0 %v5699
  %v5701 = vpop.f32.mrf.mxu0
  %v5702 = vadd.f32 0.0, %v5701
  %5703 = vdwg.mxu0
  %5704 = vmatpush.msra.mxu0 0.0
  %5705 = vmatpush.msra.mxu0 0.0
  %5706 = vmatpush.msra.mxu0 0.0
  %5707 = vmatpush.msra.mxu0 0.0
  %5708 = vmatpush.msra.mxu0 0.0
  %5709 = vmatpush.msra.mxu0 0.0
  %5710 = vmatpush.msra.mxu0 0.0
  %5711 = vmatpush.msra.mxu0 0.0
  %5712 = vmatpush.msra.mxu0 0.0
  %5713 = vmatpush.msra.mxu0 0.0
  %5714 = vmatpush.msra.mxu0 0.0
  %5715 = vmatpush.msra.mxu0 0.0
  %v5716 = vand.u32 %v5626, 4294901760
  %v5717 = vsub.f32 %v5626, %v5716
  %v5718 = vand.u32 %v5717, 4294901760
  %v5719 = vsub.f32 %v5717, %v5718
  %v5720 = vand.u32 %v5719, 4294901760
  %5721 = vmatpush.msra.mxu0 %v5720
  %v5722 = vand.u32 %v5625, 4294901760
  %v5723 = vsub.f32 %v5625, %v5722
  %v5724 = vand.u32 %v5723, 4294901760
  %v5725 = vsub.f32 %v5723, %v5724
  %v5726 = vand.u32 %v5725, 4294901760
  %5727 = vmatpush.msra.mxu0 %v5726
  %v5728 = vand.u32 %v5624, 4294901760
  %v5729 = vsub.f32 %v5624, %v5728
  %v5730 = vand.u32 %v5729, 4294901760
  %v5731 = vsub.f32 %v5729, %v5730
  %v5732 = vand.u32 %v5731, 4294901760
  %5733 = vmatpush.msra.mxu0 %v5732
  %v5734 = vand.u32 %v5623, 4294901760
  %v5735 = vsub.f32 %v5623, %v5734
  %v5736 = vand.u32 %v5735, 4294901760
  %v5737 = vsub.f32 %v5735, %v5736
  %v5738 = vand.u32 %v5737, 4294901760
  %5739 = vmatpush.msra.mxu0 %v5738
  %v5740 = vand.u32 %v5640, 4294901760
  %5741 = vmatmul.f32.gmra.mxu0 %v5740
  %v5742 = vpop.f32.mrf.mxu0
  %v5743 = vadd.f32 %v5678, %v5742
  %v5744 = vand.u32 %v5643, 4294901760
  %5745 = vmatmul.f32.gmra.mxu0 %v5744
  %v5746 = vpop.f32.mrf.mxu0
  %v5747 = vadd.f32 %v5686, %v5746
  %v5748 = vand.u32 %v5646, 4294901760
  %5749 = vmatmul.f32.gmra.mxu0 %v5748
  %v5750 = vpop.f32.mrf.mxu0
  %v5751 = vadd.f32 %v5694, %v5750
  %v5752 = vand.u32 %v5649, 4294901760
  %5753 = vmatmul.f32.gmra.mxu0 %v5752
  %v5754 = vpop.f32.mrf.mxu0
  %v5755 = vadd.f32 %v5702, %v5754
  %5756 = vdwg.mxu0
  %5757 = vmatpush.msra.mxu0 0.0
  %5758 = vmatpush.msra.mxu0 0.0
  %5759 = vmatpush.msra.mxu0 0.0
  %5760 = vmatpush.msra.mxu0 0.0
  %5761 = vmatpush.msra.mxu0 0.0
  %5762 = vmatpush.msra.mxu0 0.0
  %5763 = vmatpush.msra.mxu0 0.0
  %5764 = vmatpush.msra.mxu0 0.0
  %5765 = vmatpush.msra.mxu0 0.0
  %5766 = vmatpush.msra.mxu0 0.0
  %5767 = vmatpush.msra.mxu0 0.0
  %5768 = vmatpush.msra.mxu0 0.0
  %v5769 = vand.u32 %v5626, 4294901760
  %v5770 = vsub.f32 %v5626, %v5769
  %5771 = vmatpush.msra.mxu0 %v5770
  %v5772 = vand.u32 %v5625, 4294901760
  %v5773 = vsub.f32 %v5625, %v5772
  %5774 = vmatpush.msra.mxu0 %v5773
  %v5775 = vand.u32 %v5624, 4294901760
  %v5776 = vsub.f32 %v5624, %v5775
  %5777 = vmatpush.msra.mxu0 %v5776
  %v5778 = vand.u32 %v5623, 4294901760
  %v5779 = vsub.f32 %v5623, %v5778
  %5780 = vmatpush.msra.mxu0 %v5779
  %v5781 = vand.u32 %v5640, 4294901760
  %v5782 = vsub.f32 %v5640, %v5781
  %5783 = vmatmul.f32.gmra.mxu0 %v5782
  %v5784 = vpop.f32.mrf.mxu0
  %v5785 = vadd.f32 %v5743, %v5784
  %v5786 = vand.u32 %v5643, 4294901760
  %v5787 = vsub.f32 %v5643, %v5786
  %5788 = vmatmul.f32.gmra.mxu0 %v5787
  %v5789 = vpop.f32.mrf.mxu0
  %v5790 = vadd.f32 %v5747, %v5789
  %v5791 = vand.u32 %v5646, 4294901760
  %v5792 = vsub.f32 %v5646, %v5791
  %5793 = vmatmul.f32.gmra.mxu0 %v5792
  %v5794 = vpop.f32.mrf.mxu0
  %v5795 = vadd.f32 %v5751, %v5794
  %v5796 = vand.u32 %v5649, 4294901760
  %v5797 = vsub.f32 %v5649, %v5796
  %5798 = vmatmul.f32.gmra.mxu0 %v5797
  %v5799 = vpop.f32.mrf.mxu0
  %v5800 = vadd.f32 %v5755, %v5799
  %5801 = vdwg.mxu0
  %5802 = vmatpush.msra.mxu0 0.0
  %5803 = vmatpush.msra.mxu0 0.0
  %5804 = vmatpush.msra.mxu0 0.0
  %5805 = vmatpush.msra.mxu0 0.0
  %5806 = vmatpush.msra.mxu0 0.0
  %5807 = vmatpush.msra.mxu0 0.0
  %5808 = vmatpush.msra.mxu0 0.0
  %5809 = vmatpush.msra.mxu0 0.0
  %5810 = vmatpush.msra.mxu0 0.0
  %5811 = vmatpush.msra.mxu0 0.0
  %5812 = vmatpush.msra.mxu0 0.0
  %5813 = vmatpush.msra.mxu0 0.0
  %v5814 = vand.u32 %v5626, 4294901760
  %5815 = vmatpush.msra.mxu0 %v5814
  %v5816 = vand.u32 %v5625, 4294901760
  %5817 = vmatpush.msra.mxu0 %v5816
  %v5818 = vand.u32 %v5624, 4294901760
  %5819 = vmatpush.msra.mxu0 %v5818
  %v5820 = vand.u32 %v5623, 4294901760
  %5821 = vmatpush.msra.mxu0 %v5820
  %v5822 = vand.u32 %v5640, 4294901760
  %v5823 = vsub.f32 %v5640, %v5822
  %v5824 = vand.u32 %v5823, 4294901760
  %5825 = vmatmul.f32.gmra.mxu0 %v5824
  %v5826 = vpop.f32.mrf.mxu0
  %v5827 = vadd.f32 %v5785, %v5826
  %v5828 = vand.u32 %v5643, 4294901760
  %v5829 = vsub.f32 %v5643, %v5828
  %v5830 = vand.u32 %v5829, 4294901760
  %5831 = vmatmul.f32.gmra.mxu0 %v5830
  %v5832 = vpop.f32.mrf.mxu0
  %v5833 = vadd.f32 %v5790, %v5832
  %v5834 = vand.u32 %v5646, 4294901760
  %v5835 = vsub.f32 %v5646, %v5834
  %v5836 = vand.u32 %v5835, 4294901760
  %5837 = vmatmul.f32.gmra.mxu0 %v5836
  %v5838 = vpop.f32.mrf.mxu0
  %v5839 = vadd.f32 %v5795, %v5838
  %v5840 = vand.u32 %v5649, 4294901760
  %v5841 = vsub.f32 %v5649, %v5840
  %v5842 = vand.u32 %v5841, 4294901760
  %5843 = vmatmul.f32.gmra.mxu0 %v5842
  %v5844 = vpop.f32.mrf.mxu0
  %v5845 = vadd.f32 %v5800, %v5844
  %5846 = vdwg.mxu0
  %5847 = vmatpush.msra.mxu0 0.0
  %5848 = vmatpush.msra.mxu0 0.0
  %5849 = vmatpush.msra.mxu0 0.0
  %5850 = vmatpush.msra.mxu0 0.0
  %5851 = vmatpush.msra.mxu0 0.0
  %5852 = vmatpush.msra.mxu0 0.0
  %5853 = vmatpush.msra.mxu0 0.0
  %5854 = vmatpush.msra.mxu0 0.0
  %5855 = vmatpush.msra.mxu0 0.0
  %5856 = vmatpush.msra.mxu0 0.0
  %5857 = vmatpush.msra.mxu0 0.0
  %5858 = vmatpush.msra.mxu0 0.0
  %v5859 = vand.u32 %v5626, 4294901760
  %v5860 = vsub.f32 %v5626, %v5859
  %v5861 = vand.u32 %v5860, 4294901760
  %5862 = vmatpush.msra.mxu0 %v5861
  %v5863 = vand.u32 %v5625, 4294901760
  %v5864 = vsub.f32 %v5625, %v5863
  %v5865 = vand.u32 %v5864, 4294901760
  %5866 = vmatpush.msra.mxu0 %v5865
  %v5867 = vand.u32 %v5624, 4294901760
  %v5868 = vsub.f32 %v5624, %v5867
  %v5869 = vand.u32 %v5868, 4294901760
  %5870 = vmatpush.msra.mxu0 %v5869
  %v5871 = vand.u32 %v5623, 4294901760
  %v5872 = vsub.f32 %v5623, %v5871
  %v5873 = vand.u32 %v5872, 4294901760
  %5874 = vmatpush.msra.mxu0 %v5873
  %v5875 = vand.u32 %v5640, 4294901760
  %5876 = vmatmul.f32.gmra.mxu0 %v5875
  %v5877 = vpop.f32.mrf.mxu0
  %v5878 = vadd.f32 %v5827, %v5877
  %v5879 = vand.u32 %v5643, 4294901760
  %5880 = vmatmul.f32.gmra.mxu0 %v5879
  %v5881 = vpop.f32.mrf.mxu0
  %v5882 = vadd.f32 %v5833, %v5881
  %v5883 = vand.u32 %v5646, 4294901760
  %5884 = vmatmul.f32.gmra.mxu0 %v5883
  %v5885 = vpop.f32.mrf.mxu0
  %v5886 = vadd.f32 %v5839, %v5885
  %v5887 = vand.u32 %v5649, 4294901760
  %5888 = vmatmul.f32.gmra.mxu0 %v5887
  %v5889 = vpop.f32.mrf.mxu0
  %v5890 = vadd.f32 %v5845, %v5889
  %5891 = vdwg.mxu0
  %5892 = vmatpush.msra.mxu0 0.0
  %5893 = vmatpush.msra.mxu0 0.0
  %5894 = vmatpush.msra.mxu0 0.0
  %5895 = vmatpush.msra.mxu0 0.0
  %5896 = vmatpush.msra.mxu0 0.0
  %5897 = vmatpush.msra.mxu0 0.0
  %5898 = vmatpush.msra.mxu0 0.0
  %5899 = vmatpush.msra.mxu0 0.0
  %5900 = vmatpush.msra.mxu0 0.0
  %5901 = vmatpush.msra.mxu0 0.0
  %5902 = vmatpush.msra.mxu0 0.0
  %5903 = vmatpush.msra.mxu0 0.0
  %v5904 = vand.u32 %v5626, 4294901760
  %5905 = vmatpush.msra.mxu0 %v5904
  %v5906 = vand.u32 %v5625, 4294901760
  %5907 = vmatpush.msra.mxu0 %v5906
  %v5908 = vand.u32 %v5624, 4294901760
  %5909 = vmatpush.msra.mxu0 %v5908
  %v5910 = vand.u32 %v5623, 4294901760
  %5911 = vmatpush.msra.mxu0 %v5910
  %v5912 = vand.u32 %v5640, 4294901760
  %5913 = vmatmul.f32.gmra.mxu0 %v5912
  %v5914 = vpop.f32.mrf.mxu0
  %v5915 = vadd.f32 %v5878, %v5914
  %v5916 = vand.u32 %v5643, 4294901760
  %5917 = vmatmul.f32.gmra.mxu0 %v5916
  %v5918 = vpop.f32.mrf.mxu0
  %v5919 = vadd.f32 %v5882, %v5918
  %v5920 = vand.u32 %v5646, 4294901760
  %5921 = vmatmul.f32.gmra.mxu0 %v5920
  %v5922 = vpop.f32.mrf.mxu0
  %v5923 = vadd.f32 %v5886, %v5922
  %v5924 = vand.u32 %v5649, 4294901760
  %5925 = vmatmul.f32.gmra.mxu0 %v5924
  %v5926 = vpop.f32.mrf.mxu0
  %v5927 = vadd.f32 %v5890, %v5926
  %5928 = vdwg.mxu0
  %v5930 = vsel %vm142, %v5915, 0
  %v5933 = vsel %vm142, %v5919, 0
  %v5936 = vsel %vm142, %v5923, 0
  %v5939 = vsel %vm142, %v5927, 0
  %5941 = vmatpush.msra.mxu0 0.0
  %5942 = vmatpush.msra.mxu0 0.0
  %5943 = vmatpush.msra.mxu0 0.0
  %5944 = vmatpush.msra.mxu0 0.0
  %5945 = vmatpush.msra.mxu0 0.0
  %5946 = vmatpush.msra.mxu0 0.0
  %5947 = vmatpush.msra.mxu0 0.0
  %5948 = vmatpush.msra.mxu0 0.0
  %5949 = vmatpush.msra.mxu0 0.0
  %5950 = vmatpush.msra.mxu0 0.0
  %5951 = vmatpush.msra.mxu0 0.0
  %5952 = vmatpush.msra.mxu0 0.0
  %5953 = vmatpush.msra.mxu0 0.0
  %5954 = vmatpush.msra.mxu0 0.0
  %v5955 = vand.u32 %v3252, 4294901760
  %5956 = vmatpush.msra.mxu0 %v5955
  %v5957 = vand.u32 %v3250, 4294901760
  %5958 = vmatpush.msra.mxu0 %v5957
  %v5959 = vand.u32 %v5930, 4294901760
  %v5960 = vsub.f32 %v5930, %v5959
  %v5961 = vand.u32 %v5960, 4294901760
  %v5962 = vsub.f32 %v5960, %v5961
  %v5963 = vand.u32 %v5962, 4294901760
  %5964 = vmatmul.f32.gmra.mxu0 %v5963
  %v5965 = vpop.f32.mrf.mxu0
  %v5966 = vadd.f32 0.0, %v5965
  %v5967 = vand.u32 %v5933, 4294901760
  %v5968 = vsub.f32 %v5933, %v5967
  %v5969 = vand.u32 %v5968, 4294901760
  %v5970 = vsub.f32 %v5968, %v5969
  %v5971 = vand.u32 %v5970, 4294901760
  %5972 = vmatmul.f32.gmra.mxu0 %v5971
  %v5973 = vpop.f32.mrf.mxu0
  %v5974 = vadd.f32 0.0, %v5973
  %v5975 = vand.u32 %v5936, 4294901760
  %v5976 = vsub.f32 %v5936, %v5975
  %v5977 = vand.u32 %v5976, 4294901760
  %v5978 = vsub.f32 %v5976, %v5977
  %v5979 = vand.u32 %v5978, 4294901760
  %5980 = vmatmul.f32.gmra.mxu0 %v5979
  %v5981 = vpop.f32.mrf.mxu0
  %v5982 = vadd.f32 0.0, %v5981
  %v5983 = vand.u32 %v5939, 4294901760
  %v5984 = vsub.f32 %v5939, %v5983
  %v5985 = vand.u32 %v5984, 4294901760
  %v5986 = vsub.f32 %v5984, %v5985
  %v5987 = vand.u32 %v5986, 4294901760
  %5988 = vmatmul.f32.gmra.mxu0 %v5987
  %v5989 = vpop.f32.mrf.mxu0
  %v5990 = vadd.f32 0.0, %v5989
  %5991 = vdwg.mxu0
  %5992 = vmatpush.msra.mxu0 0.0
  %5993 = vmatpush.msra.mxu0 0.0
  %5994 = vmatpush.msra.mxu0 0.0
  %5995 = vmatpush.msra.mxu0 0.0
  %5996 = vmatpush.msra.mxu0 0.0
  %5997 = vmatpush.msra.mxu0 0.0
  %5998 = vmatpush.msra.mxu0 0.0
  %5999 = vmatpush.msra.mxu0 0.0
  %6000 = vmatpush.msra.mxu0 0.0
  %6001 = vmatpush.msra.mxu0 0.0
  %6002 = vmatpush.msra.mxu0 0.0
  %6003 = vmatpush.msra.mxu0 0.0
  %6004 = vmatpush.msra.mxu0 0.0
  %6005 = vmatpush.msra.mxu0 0.0
  %v6006 = vand.u32 %v3252, 4294901760
  %v6007 = vsub.f32 %v3252, %v6006
  %v6008 = vand.u32 %v6007, 4294901760
  %v6009 = vsub.f32 %v6007, %v6008
  %v6010 = vand.u32 %v6009, 4294901760
  %6011 = vmatpush.msra.mxu0 %v6010
  %v6012 = vand.u32 %v3250, 4294901760
  %v6013 = vsub.f32 %v3250, %v6012
  %v6014 = vand.u32 %v6013, 4294901760
  %v6015 = vsub.f32 %v6013, %v6014
  %v6016 = vand.u32 %v6015, 4294901760
  %6017 = vmatpush.msra.mxu0 %v6016
  %v6018 = vand.u32 %v5930, 4294901760
  %6019 = vmatmul.f32.gmra.mxu0 %v6018
  %v6020 = vpop.f32.mrf.mxu0
  %v6021 = vadd.f32 %v5966, %v6020
  %v6022 = vand.u32 %v5933, 4294901760
  %6023 = vmatmul.f32.gmra.mxu0 %v6022
  %v6024 = vpop.f32.mrf.mxu0
  %v6025 = vadd.f32 %v5974, %v6024
  %v6026 = vand.u32 %v5936, 4294901760
  %6027 = vmatmul.f32.gmra.mxu0 %v6026
  %v6028 = vpop.f32.mrf.mxu0
  %v6029 = vadd.f32 %v5982, %v6028
  %v6030 = vand.u32 %v5939, 4294901760
  %6031 = vmatmul.f32.gmra.mxu0 %v6030
  %v6032 = vpop.f32.mrf.mxu0
  %v6033 = vadd.f32 %v5990, %v6032
  %6034 = vdwg.mxu0
  %6035 = vmatpush.msra.mxu0 0.0
  %6036 = vmatpush.msra.mxu0 0.0
  %6037 = vmatpush.msra.mxu0 0.0
  %6038 = vmatpush.msra.mxu0 0.0
  %6039 = vmatpush.msra.mxu0 0.0
  %6040 = vmatpush.msra.mxu0 0.0
  %6041 = vmatpush.msra.mxu0 0.0
  %6042 = vmatpush.msra.mxu0 0.0
  %6043 = vmatpush.msra.mxu0 0.0
  %6044 = vmatpush.msra.mxu0 0.0
  %6045 = vmatpush.msra.mxu0 0.0
  %6046 = vmatpush.msra.mxu0 0.0
  %6047 = vmatpush.msra.mxu0 0.0
  %6048 = vmatpush.msra.mxu0 0.0
  %v6049 = vand.u32 %v3252, 4294901760
  %v6050 = vsub.f32 %v3252, %v6049
  %6051 = vmatpush.msra.mxu0 %v6050
  %v6052 = vand.u32 %v3250, 4294901760
  %v6053 = vsub.f32 %v3250, %v6052
  %6054 = vmatpush.msra.mxu0 %v6053
  %v6055 = vand.u32 %v5930, 4294901760
  %v6056 = vsub.f32 %v5930, %v6055
  %6057 = vmatmul.f32.gmra.mxu0 %v6056
  %v6058 = vpop.f32.mrf.mxu0
  %v6059 = vadd.f32 %v6021, %v6058
  %v6060 = vand.u32 %v5933, 4294901760
  %v6061 = vsub.f32 %v5933, %v6060
  %6062 = vmatmul.f32.gmra.mxu0 %v6061
  %v6063 = vpop.f32.mrf.mxu0
  %v6064 = vadd.f32 %v6025, %v6063
  %v6065 = vand.u32 %v5936, 4294901760
  %v6066 = vsub.f32 %v5936, %v6065
  %6067 = vmatmul.f32.gmra.mxu0 %v6066
  %v6068 = vpop.f32.mrf.mxu0
  %v6069 = vadd.f32 %v6029, %v6068
  %v6070 = vand.u32 %v5939, 4294901760
  %v6071 = vsub.f32 %v5939, %v6070
  %6072 = vmatmul.f32.gmra.mxu0 %v6071
  %v6073 = vpop.f32.mrf.mxu0
  %v6074 = vadd.f32 %v6033, %v6073
  %6075 = vdwg.mxu0
  %6076 = vmatpush.msra.mxu0 0.0
  %6077 = vmatpush.msra.mxu0 0.0
  %6078 = vmatpush.msra.mxu0 0.0
  %6079 = vmatpush.msra.mxu0 0.0
  %6080 = vmatpush.msra.mxu0 0.0
  %6081 = vmatpush.msra.mxu0 0.0
  %6082 = vmatpush.msra.mxu0 0.0
  %6083 = vmatpush.msra.mxu0 0.0
  %6084 = vmatpush.msra.mxu0 0.0
  %6085 = vmatpush.msra.mxu0 0.0
  %6086 = vmatpush.msra.mxu0 0.0
  %6087 = vmatpush.msra.mxu0 0.0
  %6088 = vmatpush.msra.mxu0 0.0
  %6089 = vmatpush.msra.mxu0 0.0
  %v6090 = vand.u32 %v3252, 4294901760
  %6091 = vmatpush.msra.mxu0 %v6090
  %v6092 = vand.u32 %v3250, 4294901760
  %6093 = vmatpush.msra.mxu0 %v6092
  %v6094 = vand.u32 %v5930, 4294901760
  %v6095 = vsub.f32 %v5930, %v6094
  %v6096 = vand.u32 %v6095, 4294901760
  %6097 = vmatmul.f32.gmra.mxu0 %v6096
  %v6098 = vpop.f32.mrf.mxu0
  %v6099 = vadd.f32 %v6059, %v6098
  %v6100 = vand.u32 %v5933, 4294901760
  %v6101 = vsub.f32 %v5933, %v6100
  %v6102 = vand.u32 %v6101, 4294901760
  %6103 = vmatmul.f32.gmra.mxu0 %v6102
  %v6104 = vpop.f32.mrf.mxu0
  %v6105 = vadd.f32 %v6064, %v6104
  %v6106 = vand.u32 %v5936, 4294901760
  %v6107 = vsub.f32 %v5936, %v6106
  %v6108 = vand.u32 %v6107, 4294901760
  %6109 = vmatmul.f32.gmra.mxu0 %v6108
  %v6110 = vpop.f32.mrf.mxu0
  %v6111 = vadd.f32 %v6069, %v6110
  %v6112 = vand.u32 %v5939, 4294901760
  %v6113 = vsub.f32 %v5939, %v6112
  %v6114 = vand.u32 %v6113, 4294901760
  %6115 = vmatmul.f32.gmra.mxu0 %v6114
  %v6116 = vpop.f32.mrf.mxu0
  %v6117 = vadd.f32 %v6074, %v6116
  %6118 = vdwg.mxu0
  %6119 = vmatpush.msra.mxu0 0.0
  %6120 = vmatpush.msra.mxu0 0.0
  %6121 = vmatpush.msra.mxu0 0.0
  %6122 = vmatpush.msra.mxu0 0.0
  %6123 = vmatpush.msra.mxu0 0.0
  %6124 = vmatpush.msra.mxu0 0.0
  %6125 = vmatpush.msra.mxu0 0.0
  %6126 = vmatpush.msra.mxu0 0.0
  %6127 = vmatpush.msra.mxu0 0.0
  %6128 = vmatpush.msra.mxu0 0.0
  %6129 = vmatpush.msra.mxu0 0.0
  %6130 = vmatpush.msra.mxu0 0.0
  %6131 = vmatpush.msra.mxu0 0.0
  %6132 = vmatpush.msra.mxu0 0.0
  %v6133 = vand.u32 %v3252, 4294901760
  %v6134 = vsub.f32 %v3252, %v6133
  %v6135 = vand.u32 %v6134, 4294901760
  %6136 = vmatpush.msra.mxu0 %v6135
  %v6137 = vand.u32 %v3250, 4294901760
  %v6138 = vsub.f32 %v3250, %v6137
  %v6139 = vand.u32 %v6138, 4294901760
  %6140 = vmatpush.msra.mxu0 %v6139
  %v6141 = vand.u32 %v5930, 4294901760
  %6142 = vmatmul.f32.gmra.mxu0 %v6141
  %v6143 = vpop.f32.mrf.mxu0
  %v6144 = vadd.f32 %v6099, %v6143
  %v6145 = vand.u32 %v5933, 4294901760
  %6146 = vmatmul.f32.gmra.mxu0 %v6145
  %v6147 = vpop.f32.mrf.mxu0
  %v6148 = vadd.f32 %v6105, %v6147
  %v6149 = vand.u32 %v5936, 4294901760
  %6150 = vmatmul.f32.gmra.mxu0 %v6149
  %v6151 = vpop.f32.mrf.mxu0
  %v6152 = vadd.f32 %v6111, %v6151
  %v6153 = vand.u32 %v5939, 4294901760
  %6154 = vmatmul.f32.gmra.mxu0 %v6153
  %v6155 = vpop.f32.mrf.mxu0
  %v6156 = vadd.f32 %v6117, %v6155
  %6157 = vdwg.mxu0
  %6158 = vmatpush.msra.mxu0 0.0
  %6159 = vmatpush.msra.mxu0 0.0
  %6160 = vmatpush.msra.mxu0 0.0
  %6161 = vmatpush.msra.mxu0 0.0
  %6162 = vmatpush.msra.mxu0 0.0
  %6163 = vmatpush.msra.mxu0 0.0
  %6164 = vmatpush.msra.mxu0 0.0
  %6165 = vmatpush.msra.mxu0 0.0
  %6166 = vmatpush.msra.mxu0 0.0
  %6167 = vmatpush.msra.mxu0 0.0
  %6168 = vmatpush.msra.mxu0 0.0
  %6169 = vmatpush.msra.mxu0 0.0
  %6170 = vmatpush.msra.mxu0 0.0
  %6171 = vmatpush.msra.mxu0 0.0
  %v6172 = vand.u32 %v3252, 4294901760
  %6173 = vmatpush.msra.mxu0 %v6172
  %v6174 = vand.u32 %v3250, 4294901760
  %6175 = vmatpush.msra.mxu0 %v6174
  %v6176 = vand.u32 %v5930, 4294901760
  %6177 = vmatmul.f32.gmra.mxu0 %v6176
  %v6178 = vpop.f32.mrf.mxu0
  %v6179 = vadd.f32 %v6144, %v6178
  %v6180 = vand.u32 %v5933, 4294901760
  %6181 = vmatmul.f32.gmra.mxu0 %v6180
  %v6182 = vpop.f32.mrf.mxu0
  %v6183 = vadd.f32 %v6148, %v6182
  %v6184 = vand.u32 %v5936, 4294901760
  %6185 = vmatmul.f32.gmra.mxu0 %v6184
  %v6186 = vpop.f32.mrf.mxu0
  %v6187 = vadd.f32 %v6152, %v6186
  %v6188 = vand.u32 %v5939, 4294901760
  %6189 = vmatmul.f32.gmra.mxu0 %v6188
  %v6190 = vpop.f32.mrf.mxu0
  %v6191 = vadd.f32 %v6156, %v6190
  %6192 = vdwg.mxu0
  %6193 = vmatpush.msra.mxu0 0.0
  %6194 = vmatpush.msra.mxu0 0.0
  %6195 = vmatpush.msra.mxu0 0.0
  %6196 = vmatpush.msra.mxu0 0.0
  %6197 = vmatpush.msra.mxu0 0.0
  %6198 = vmatpush.msra.mxu0 0.0
  %6199 = vmatpush.msra.mxu0 0.0
  %6200 = vmatpush.msra.mxu0 0.0
  %6201 = vmatpush.msra.mxu0 0.0
  %6202 = vmatpush.msra.mxu0 0.0
  %6203 = vmatpush.msra.mxu0 0.0
  %6204 = vmatpush.msra.mxu0 0.0
  %6205 = vmatpush.msra.mxu0 0.0
  %6206 = vmatpush.msra.mxu0 0.0
  %v6207 = vand.u32 %v3253, 4294901760
  %6208 = vmatpush.msra.mxu0 %v6207
  %v6209 = vand.u32 %v3251, 4294901760
  %6210 = vmatpush.msra.mxu0 %v6209
  %v6211 = vand.u32 %v5930, 4294901760
  %v6212 = vsub.f32 %v5930, %v6211
  %v6213 = vand.u32 %v6212, 4294901760
  %v6214 = vsub.f32 %v6212, %v6213
  %v6215 = vand.u32 %v6214, 4294901760
  %6216 = vmatmul.f32.gmra.mxu0 %v6215
  %v6217 = vpop.f32.mrf.mxu0
  %v6218 = vadd.f32 0.0, %v6217
  %v6219 = vand.u32 %v5933, 4294901760
  %v6220 = vsub.f32 %v5933, %v6219
  %v6221 = vand.u32 %v6220, 4294901760
  %v6222 = vsub.f32 %v6220, %v6221
  %v6223 = vand.u32 %v6222, 4294901760
  %6224 = vmatmul.f32.gmra.mxu0 %v6223
  %v6225 = vpop.f32.mrf.mxu0
  %v6226 = vadd.f32 0.0, %v6225
  %v6227 = vand.u32 %v5936, 4294901760
  %v6228 = vsub.f32 %v5936, %v6227
  %v6229 = vand.u32 %v6228, 4294901760
  %v6230 = vsub.f32 %v6228, %v6229
  %v6231 = vand.u32 %v6230, 4294901760
  %6232 = vmatmul.f32.gmra.mxu0 %v6231
  %v6233 = vpop.f32.mrf.mxu0
  %v6234 = vadd.f32 0.0, %v6233
  %v6235 = vand.u32 %v5939, 4294901760
  %v6236 = vsub.f32 %v5939, %v6235
  %v6237 = vand.u32 %v6236, 4294901760
  %v6238 = vsub.f32 %v6236, %v6237
  %v6239 = vand.u32 %v6238, 4294901760
  %6240 = vmatmul.f32.gmra.mxu0 %v6239
  %v6241 = vpop.f32.mrf.mxu0
  %v6242 = vadd.f32 0.0, %v6241
  %6243 = vdwg.mxu0
  %6244 = vmatpush.msra.mxu0 0.0
  %6245 = vmatpush.msra.mxu0 0.0
  %6246 = vmatpush.msra.mxu0 0.0
  %6247 = vmatpush.msra.mxu0 0.0
  %6248 = vmatpush.msra.mxu0 0.0
  %6249 = vmatpush.msra.mxu0 0.0
  %6250 = vmatpush.msra.mxu0 0.0
  %6251 = vmatpush.msra.mxu0 0.0
  %6252 = vmatpush.msra.mxu0 0.0
  %6253 = vmatpush.msra.mxu0 0.0
  %6254 = vmatpush.msra.mxu0 0.0
  %6255 = vmatpush.msra.mxu0 0.0
  %6256 = vmatpush.msra.mxu0 0.0
  %6257 = vmatpush.msra.mxu0 0.0
  %v6258 = vand.u32 %v3253, 4294901760
  %v6259 = vsub.f32 %v3253, %v6258
  %v6260 = vand.u32 %v6259, 4294901760
  %v6261 = vsub.f32 %v6259, %v6260
  %v6262 = vand.u32 %v6261, 4294901760
  %6263 = vmatpush.msra.mxu0 %v6262
  %v6264 = vand.u32 %v3251, 4294901760
  %v6265 = vsub.f32 %v3251, %v6264
  %v6266 = vand.u32 %v6265, 4294901760
  %v6267 = vsub.f32 %v6265, %v6266
  %v6268 = vand.u32 %v6267, 4294901760
  %6269 = vmatpush.msra.mxu0 %v6268
  %v6270 = vand.u32 %v5930, 4294901760
  %6271 = vmatmul.f32.gmra.mxu0 %v6270
  %v6272 = vpop.f32.mrf.mxu0
  %v6273 = vadd.f32 %v6218, %v6272
  %v6274 = vand.u32 %v5933, 4294901760
  %6275 = vmatmul.f32.gmra.mxu0 %v6274
  %v6276 = vpop.f32.mrf.mxu0
  %v6277 = vadd.f32 %v6226, %v6276
  %v6278 = vand.u32 %v5936, 4294901760
  %6279 = vmatmul.f32.gmra.mxu0 %v6278
  %v6280 = vpop.f32.mrf.mxu0
  %v6281 = vadd.f32 %v6234, %v6280
  %v6282 = vand.u32 %v5939, 4294901760
  %6283 = vmatmul.f32.gmra.mxu0 %v6282
  %v6284 = vpop.f32.mrf.mxu0
  %v6285 = vadd.f32 %v6242, %v6284
  %6286 = vdwg.mxu0
  %6287 = vmatpush.msra.mxu0 0.0
  %6288 = vmatpush.msra.mxu0 0.0
  %6289 = vmatpush.msra.mxu0 0.0
  %6290 = vmatpush.msra.mxu0 0.0
  %6291 = vmatpush.msra.mxu0 0.0
  %6292 = vmatpush.msra.mxu0 0.0
  %6293 = vmatpush.msra.mxu0 0.0
  %6294 = vmatpush.msra.mxu0 0.0
  %6295 = vmatpush.msra.mxu0 0.0
  %6296 = vmatpush.msra.mxu0 0.0
  %6297 = vmatpush.msra.mxu0 0.0
  %6298 = vmatpush.msra.mxu0 0.0
  %6299 = vmatpush.msra.mxu0 0.0
  %6300 = vmatpush.msra.mxu0 0.0
  %v6301 = vand.u32 %v3253, 4294901760
  %v6302 = vsub.f32 %v3253, %v6301
  %6303 = vmatpush.msra.mxu0 %v6302
  %v6304 = vand.u32 %v3251, 4294901760
  %v6305 = vsub.f32 %v3251, %v6304
  %6306 = vmatpush.msra.mxu0 %v6305
  %v6307 = vand.u32 %v5930, 4294901760
  %v6308 = vsub.f32 %v5930, %v6307
  %6309 = vmatmul.f32.gmra.mxu0 %v6308
  %v6310 = vpop.f32.mrf.mxu0
  %v6311 = vadd.f32 %v6273, %v6310
  %v6312 = vand.u32 %v5933, 4294901760
  %v6313 = vsub.f32 %v5933, %v6312
  %6314 = vmatmul.f32.gmra.mxu0 %v6313
  %v6315 = vpop.f32.mrf.mxu0
  %v6316 = vadd.f32 %v6277, %v6315
  %v6317 = vand.u32 %v5936, 4294901760
  %v6318 = vsub.f32 %v5936, %v6317
  %6319 = vmatmul.f32.gmra.mxu0 %v6318
  %v6320 = vpop.f32.mrf.mxu0
  %v6321 = vadd.f32 %v6281, %v6320
  %v6322 = vand.u32 %v5939, 4294901760
  %v6323 = vsub.f32 %v5939, %v6322
  %6324 = vmatmul.f32.gmra.mxu0 %v6323
  %v6325 = vpop.f32.mrf.mxu0
  %v6326 = vadd.f32 %v6285, %v6325
  %6327 = vdwg.mxu0
  %6328 = vmatpush.msra.mxu0 0.0
  %6329 = vmatpush.msra.mxu0 0.0
  %6330 = vmatpush.msra.mxu0 0.0
  %6331 = vmatpush.msra.mxu0 0.0
  %6332 = vmatpush.msra.mxu0 0.0
  %6333 = vmatpush.msra.mxu0 0.0
  %6334 = vmatpush.msra.mxu0 0.0
  %6335 = vmatpush.msra.mxu0 0.0
  %6336 = vmatpush.msra.mxu0 0.0
  %6337 = vmatpush.msra.mxu0 0.0
  %6338 = vmatpush.msra.mxu0 0.0
  %6339 = vmatpush.msra.mxu0 0.0
  %6340 = vmatpush.msra.mxu0 0.0
  %6341 = vmatpush.msra.mxu0 0.0
  %v6342 = vand.u32 %v3253, 4294901760
  %6343 = vmatpush.msra.mxu0 %v6342
  %v6344 = vand.u32 %v3251, 4294901760
  %6345 = vmatpush.msra.mxu0 %v6344
  %v6346 = vand.u32 %v5930, 4294901760
  %v6347 = vsub.f32 %v5930, %v6346
  %v6348 = vand.u32 %v6347, 4294901760
  %6349 = vmatmul.f32.gmra.mxu0 %v6348
  %v6350 = vpop.f32.mrf.mxu0
  %v6351 = vadd.f32 %v6311, %v6350
  %v6352 = vand.u32 %v5933, 4294901760
  %v6353 = vsub.f32 %v5933, %v6352
  %v6354 = vand.u32 %v6353, 4294901760
  %6355 = vmatmul.f32.gmra.mxu0 %v6354
  %v6356 = vpop.f32.mrf.mxu0
  %v6357 = vadd.f32 %v6316, %v6356
  %v6358 = vand.u32 %v5936, 4294901760
  %v6359 = vsub.f32 %v5936, %v6358
  %v6360 = vand.u32 %v6359, 4294901760
  %6361 = vmatmul.f32.gmra.mxu0 %v6360
  %v6362 = vpop.f32.mrf.mxu0
  %v6363 = vadd.f32 %v6321, %v6362
  %v6364 = vand.u32 %v5939, 4294901760
  %v6365 = vsub.f32 %v5939, %v6364
  %v6366 = vand.u32 %v6365, 4294901760
  %6367 = vmatmul.f32.gmra.mxu0 %v6366
  %v6368 = vpop.f32.mrf.mxu0
  %v6369 = vadd.f32 %v6326, %v6368
  %6370 = vdwg.mxu0
  %6371 = vmatpush.msra.mxu0 0.0
  %6372 = vmatpush.msra.mxu0 0.0
  %6373 = vmatpush.msra.mxu0 0.0
  %6374 = vmatpush.msra.mxu0 0.0
  %6375 = vmatpush.msra.mxu0 0.0
  %6376 = vmatpush.msra.mxu0 0.0
  %6377 = vmatpush.msra.mxu0 0.0
  %6378 = vmatpush.msra.mxu0 0.0
  %6379 = vmatpush.msra.mxu0 0.0
  %6380 = vmatpush.msra.mxu0 0.0
  %6381 = vmatpush.msra.mxu0 0.0
  %6382 = vmatpush.msra.mxu0 0.0
  %6383 = vmatpush.msra.mxu0 0.0
  %6384 = vmatpush.msra.mxu0 0.0
  %v6385 = vand.u32 %v3253, 4294901760
  %v6386 = vsub.f32 %v3253, %v6385
  %v6387 = vand.u32 %v6386, 4294901760
  %6388 = vmatpush.msra.mxu0 %v6387
  %v6389 = vand.u32 %v3251, 4294901760
  %v6390 = vsub.f32 %v3251, %v6389
  %v6391 = vand.u32 %v6390, 4294901760
  %6392 = vmatpush.msra.mxu0 %v6391
  %v6393 = vand.u32 %v5930, 4294901760
  %6394 = vmatmul.f32.gmra.mxu0 %v6393
  %v6395 = vpop.f32.mrf.mxu0
  %v6396 = vadd.f32 %v6351, %v6395
  %v6397 = vand.u32 %v5933, 4294901760
  %6398 = vmatmul.f32.gmra.mxu0 %v6397
  %v6399 = vpop.f32.mrf.mxu0
  %v6400 = vadd.f32 %v6357, %v6399
  %v6401 = vand.u32 %v5936, 4294901760
  %6402 = vmatmul.f32.gmra.mxu0 %v6401
  %v6403 = vpop.f32.mrf.mxu0
  %v6404 = vadd.f32 %v6363, %v6403
  %v6405 = vand.u32 %v5939, 4294901760
  %6406 = vmatmul.f32.gmra.mxu0 %v6405
  %v6407 = vpop.f32.mrf.mxu0
  %v6408 = vadd.f32 %v6369, %v6407
  %6409 = vdwg.mxu0
  %6410 = vmatpush.msra.mxu0 0.0
  %6411 = vmatpush.msra.mxu0 0.0
  %6412 = vmatpush.msra.mxu0 0.0
  %6413 = vmatpush.msra.mxu0 0.0
  %6414 = vmatpush.msra.mxu0 0.0
  %6415 = vmatpush.msra.mxu0 0.0
  %6416 = vmatpush.msra.mxu0 0.0
  %6417 = vmatpush.msra.mxu0 0.0
  %6418 = vmatpush.msra.mxu0 0.0
  %6419 = vmatpush.msra.mxu0 0.0
  %6420 = vmatpush.msra.mxu0 0.0
  %6421 = vmatpush.msra.mxu0 0.0
  %6422 = vmatpush.msra.mxu0 0.0
  %6423 = vmatpush.msra.mxu0 0.0
  %v6424 = vand.u32 %v3253, 4294901760
  %6425 = vmatpush.msra.mxu0 %v6424
  %v6426 = vand.u32 %v3251, 4294901760
  %6427 = vmatpush.msra.mxu0 %v6426
  %v6428 = vand.u32 %v5930, 4294901760
  %6429 = vmatmul.f32.gmra.mxu0 %v6428
  %v6430 = vpop.f32.mrf.mxu0
  %v6431 = vadd.f32 %v6396, %v6430
  %v6432 = vand.u32 %v5933, 4294901760
  %6433 = vmatmul.f32.gmra.mxu0 %v6432
  %v6434 = vpop.f32.mrf.mxu0
  %v6435 = vadd.f32 %v6400, %v6434
  %v6436 = vand.u32 %v5936, 4294901760
  %6437 = vmatmul.f32.gmra.mxu0 %v6436
  %v6438 = vpop.f32.mrf.mxu0
  %v6439 = vadd.f32 %v6404, %v6438
  %v6440 = vand.u32 %v5939, 4294901760
  %6441 = vmatmul.f32.gmra.mxu0 %v6440
  %v6442 = vpop.f32.mrf.mxu0
  %v6443 = vadd.f32 %v6408, %v6442
  %6444 = vdwg.mxu0
  %v6445 = vmul.f32 %v3060, %v6179
  %v6446 = vmul.f32 %v3061, %v6431
  %v6447 = vmul.f32 %v3062, %v6183
  %v6448 = vmul.f32 %v3063, %v6435
  %v6449 = vmul.f32 %v3064, %v6187
  %v6450 = vmul.f32 %v3065, %v6439
  %v6451 = vmul.f32 %v3066, %v6191
  %v6452 = vmul.f32 %v3067, %v6443
  %v6453 = vand.u32 %v3222, 4294901760
  %6454 = vmatpush.msra.mxu0 %v6453
  %v6455 = vand.u32 %v3221, 4294901760
  %6456 = vmatpush.msra.mxu0 %v6455
  %v6457 = vand.u32 %v3220, 4294901760
  %6458 = vmatpush.msra.mxu0 %v6457
  %v6459 = vand.u32 %v3219, 4294901760
  %6460 = vmatpush.msra.mxu0 %v6459
  %v6461 = vand.u32 %v3218, 4294901760
  %6462 = vmatpush.msra.mxu0 %v6461
  %v6463 = vand.u32 %v3217, 4294901760
  %6464 = vmatpush.msra.mxu0 %v6463
  %v6465 = vand.u32 %v3216, 4294901760
  %6466 = vmatpush.msra.mxu0 %v6465
  %v6467 = vand.u32 %v3215, 4294901760
  %6468 = vmatpush.msra.mxu0 %v6467
  %v6469 = vand.u32 %v3214, 4294901760
  %6470 = vmatpush.msra.mxu0 %v6469
  %v6471 = vand.u32 %v3213, 4294901760
  %6472 = vmatpush.msra.mxu0 %v6471
  %v6473 = vand.u32 %v3212, 4294901760
  %6474 = vmatpush.msra.mxu0 %v6473
  %v6475 = vand.u32 %v3211, 4294901760
  %6476 = vmatpush.msra.mxu0 %v6475
  %v6477 = vand.u32 %v3210, 4294901760
  %6478 = vmatpush.msra.mxu0 %v6477
  %v6479 = vand.u32 %v3209, 4294901760
  %6480 = vmatpush.msra.mxu0 %v6479
  %v6481 = vand.u32 %v3208, 4294901760
  %6482 = vmatpush.msra.mxu0 %v6481
  %v6483 = vand.u32 %v3207, 4294901760
  %6484 = vmatpush.msra.mxu0 %v6483
  %v6485 = vand.u32 %v6445, 4294901760
  %v6486 = vsub.f32 %v6445, %v6485
  %v6487 = vand.u32 %v6486, 4294901760
  %v6488 = vsub.f32 %v6486, %v6487
  %v6489 = vand.u32 %v6488, 4294901760
  %6490 = vmatmul.f32.gmra.mxu0 %v6489
  %v6491 = vpop.f32.mrf.mxu0
  %v6492 = vadd.f32 0.0, %v6491
  %v6493 = vand.u32 %v6447, 4294901760
  %v6494 = vsub.f32 %v6447, %v6493
  %v6495 = vand.u32 %v6494, 4294901760
  %v6496 = vsub.f32 %v6494, %v6495
  %v6497 = vand.u32 %v6496, 4294901760
  %6498 = vmatmul.f32.gmra.mxu0 %v6497
  %v6499 = vpop.f32.mrf.mxu0
  %v6500 = vadd.f32 0.0, %v6499
  %v6501 = vand.u32 %v6449, 4294901760
  %v6502 = vsub.f32 %v6449, %v6501
  %v6503 = vand.u32 %v6502, 4294901760
  %v6504 = vsub.f32 %v6502, %v6503
  %v6505 = vand.u32 %v6504, 4294901760
  %6506 = vmatmul.f32.gmra.mxu0 %v6505
  %v6507 = vpop.f32.mrf.mxu0
  %v6508 = vadd.f32 0.0, %v6507
  %v6509 = vand.u32 %v6451, 4294901760
  %v6510 = vsub.f32 %v6451, %v6509
  %v6511 = vand.u32 %v6510, 4294901760
  %v6512 = vsub.f32 %v6510, %v6511
  %v6513 = vand.u32 %v6512, 4294901760
  %6514 = vmatmul.f32.gmra.mxu0 %v6513
  %v6515 = vpop.f32.mrf.mxu0
  %v6516 = vadd.f32 0.0, %v6515
  %6517 = vdwg.mxu0
  %v6518 = vand.u32 %v3222, 4294901760
  %v6519 = vsub.f32 %v3222, %v6518
  %v6520 = vand.u32 %v6519, 4294901760
  %v6521 = vsub.f32 %v6519, %v6520
  %v6522 = vand.u32 %v6521, 4294901760
  %6523 = vmatpush.msra.mxu0 %v6522
  %v6524 = vand.u32 %v3221, 4294901760
  %v6525 = vsub.f32 %v3221, %v6524
  %v6526 = vand.u32 %v6525, 4294901760
  %v6527 = vsub.f32 %v6525, %v6526
  %v6528 = vand.u32 %v6527, 4294901760
  %6529 = vmatpush.msra.mxu0 %v6528
  %v6530 = vand.u32 %v3220, 4294901760
  %v6531 = vsub.f32 %v3220, %v6530
  %v6532 = vand.u32 %v6531, 4294901760
  %v6533 = vsub.f32 %v6531, %v6532
  %v6534 = vand.u32 %v6533, 4294901760
  %6535 = vmatpush.msra.mxu0 %v6534
  %v6536 = vand.u32 %v3219, 4294901760
  %v6537 = vsub.f32 %v3219, %v6536
  %v6538 = vand.u32 %v6537, 4294901760
  %v6539 = vsub.f32 %v6537, %v6538
  %v6540 = vand.u32 %v6539, 4294901760
  %6541 = vmatpush.msra.mxu0 %v6540
  %v6542 = vand.u32 %v3218, 4294901760
  %v6543 = vsub.f32 %v3218, %v6542
  %v6544 = vand.u32 %v6543, 4294901760
  %v6545 = vsub.f32 %v6543, %v6544
  %v6546 = vand.u32 %v6545, 4294901760
  %6547 = vmatpush.msra.mxu0 %v6546
  %v6548 = vand.u32 %v3217, 4294901760
  %v6549 = vsub.f32 %v3217, %v6548
  %v6550 = vand.u32 %v6549, 4294901760
  %v6551 = vsub.f32 %v6549, %v6550
  %v6552 = vand.u32 %v6551, 4294901760
  %6553 = vmatpush.msra.mxu0 %v6552
  %v6554 = vand.u32 %v3216, 4294901760
  %v6555 = vsub.f32 %v3216, %v6554
  %v6556 = vand.u32 %v6555, 4294901760
  %v6557 = vsub.f32 %v6555, %v6556
  %v6558 = vand.u32 %v6557, 4294901760
  %6559 = vmatpush.msra.mxu0 %v6558
  %v6560 = vand.u32 %v3215, 4294901760
  %v6561 = vsub.f32 %v3215, %v6560
  %v6562 = vand.u32 %v6561, 4294901760
  %v6563 = vsub.f32 %v6561, %v6562
  %v6564 = vand.u32 %v6563, 4294901760
  %6565 = vmatpush.msra.mxu0 %v6564
  %v6566 = vand.u32 %v3214, 4294901760
  %v6567 = vsub.f32 %v3214, %v6566
  %v6568 = vand.u32 %v6567, 4294901760
  %v6569 = vsub.f32 %v6567, %v6568
  %v6570 = vand.u32 %v6569, 4294901760
  %6571 = vmatpush.msra.mxu0 %v6570
  %v6572 = vand.u32 %v3213, 4294901760
  %v6573 = vsub.f32 %v3213, %v6572
  %v6574 = vand.u32 %v6573, 4294901760
  %v6575 = vsub.f32 %v6573, %v6574
  %v6576 = vand.u32 %v6575, 4294901760
  %6577 = vmatpush.msra.mxu0 %v6576
  %v6578 = vand.u32 %v3212, 4294901760
  %v6579 = vsub.f32 %v3212, %v6578
  %v6580 = vand.u32 %v6579, 4294901760
  %v6581 = vsub.f32 %v6579, %v6580
  %v6582 = vand.u32 %v6581, 4294901760
  %6583 = vmatpush.msra.mxu0 %v6582
  %v6584 = vand.u32 %v3211, 4294901760
  %v6585 = vsub.f32 %v3211, %v6584
  %v6586 = vand.u32 %v6585, 4294901760
  %v6587 = vsub.f32 %v6585, %v6586
  %v6588 = vand.u32 %v6587, 4294901760
  %6589 = vmatpush.msra.mxu0 %v6588
  %v6590 = vand.u32 %v3210, 4294901760
  %v6591 = vsub.f32 %v3210, %v6590
  %v6592 = vand.u32 %v6591, 4294901760
  %v6593 = vsub.f32 %v6591, %v6592
  %v6594 = vand.u32 %v6593, 4294901760
  %6595 = vmatpush.msra.mxu0 %v6594
  %v6596 = vand.u32 %v3209, 4294901760
  %v6597 = vsub.f32 %v3209, %v6596
  %v6598 = vand.u32 %v6597, 4294901760
  %v6599 = vsub.f32 %v6597, %v6598
  %v6600 = vand.u32 %v6599, 4294901760
  %6601 = vmatpush.msra.mxu0 %v6600
  %v6602 = vand.u32 %v3208, 4294901760
  %v6603 = vsub.f32 %v3208, %v6602
  %v6604 = vand.u32 %v6603, 4294901760
  %v6605 = vsub.f32 %v6603, %v6604
  %v6606 = vand.u32 %v6605, 4294901760
  %6607 = vmatpush.msra.mxu0 %v6606
  %v6608 = vand.u32 %v3207, 4294901760
  %v6609 = vsub.f32 %v3207, %v6608
  %v6610 = vand.u32 %v6609, 4294901760
  %v6611 = vsub.f32 %v6609, %v6610
  %v6612 = vand.u32 %v6611, 4294901760
  %6613 = vmatpush.msra.mxu0 %v6612
  %v6614 = vand.u32 %v6445, 4294901760
  %6615 = vmatmul.f32.gmra.mxu0 %v6614
  %v6616 = vpop.f32.mrf.mxu0
  %v6617 = vadd.f32 %v6492, %v6616
  %v6618 = vand.u32 %v6447, 4294901760
  %6619 = vmatmul.f32.gmra.mxu0 %v6618
  %v6620 = vpop.f32.mrf.mxu0
  %v6621 = vadd.f32 %v6500, %v6620
  %v6622 = vand.u32 %v6449, 4294901760
  %6623 = vmatmul.f32.gmra.mxu0 %v6622
  %v6624 = vpop.f32.mrf.mxu0
  %v6625 = vadd.f32 %v6508, %v6624
  %v6626 = vand.u32 %v6451, 4294901760
  %6627 = vmatmul.f32.gmra.mxu0 %v6626
  %v6628 = vpop.f32.mrf.mxu0
  %v6629 = vadd.f32 %v6516, %v6628
  %6630 = vdwg.mxu0
  %v6631 = vand.u32 %v3222, 4294901760
  %v6632 = vsub.f32 %v3222, %v6631
  %6633 = vmatpush.msra.mxu0 %v6632
  %v6634 = vand.u32 %v3221, 4294901760
  %v6635 = vsub.f32 %v3221, %v6634
  %6636 = vmatpush.msra.mxu0 %v6635
  %v6637 = vand.u32 %v3220, 4294901760
  %v6638 = vsub.f32 %v3220, %v6637
  %6639 = vmatpush.msra.mxu0 %v6638
  %v6640 = vand.u32 %v3219, 4294901760
  %v6641 = vsub.f32 %v3219, %v6640
  %6642 = vmatpush.msra.mxu0 %v6641
  %v6643 = vand.u32 %v3218, 4294901760
  %v6644 = vsub.f32 %v3218, %v6643
  %6645 = vmatpush.msra.mxu0 %v6644
  %v6646 = vand.u32 %v3217, 4294901760
  %v6647 = vsub.f32 %v3217, %v6646
  %6648 = vmatpush.msra.mxu0 %v6647
  %v6649 = vand.u32 %v3216, 4294901760
  %v6650 = vsub.f32 %v3216, %v6649
  %6651 = vmatpush.msra.mxu0 %v6650
  %v6652 = vand.u32 %v3215, 4294901760
  %v6653 = vsub.f32 %v3215, %v6652
  %6654 = vmatpush.msra.mxu0 %v6653
  %v6655 = vand.u32 %v3214, 4294901760
  %v6656 = vsub.f32 %v3214, %v6655
  %6657 = vmatpush.msra.mxu0 %v6656
  %v6658 = vand.u32 %v3213, 4294901760
  %v6659 = vsub.f32 %v3213, %v6658
  %6660 = vmatpush.msra.mxu0 %v6659
  %v6661 = vand.u32 %v3212, 4294901760
  %v6662 = vsub.f32 %v3212, %v6661
  %6663 = vmatpush.msra.mxu0 %v6662
  %v6664 = vand.u32 %v3211, 4294901760
  %v6665 = vsub.f32 %v3211, %v6664
  %6666 = vmatpush.msra.mxu0 %v6665
  %v6667 = vand.u32 %v3210, 4294901760
  %v6668 = vsub.f32 %v3210, %v6667
  %6669 = vmatpush.msra.mxu0 %v6668
  %v6670 = vand.u32 %v3209, 4294901760
  %v6671 = vsub.f32 %v3209, %v6670
  %6672 = vmatpush.msra.mxu0 %v6671
  %v6673 = vand.u32 %v3208, 4294901760
  %v6674 = vsub.f32 %v3208, %v6673
  %6675 = vmatpush.msra.mxu0 %v6674
  %v6676 = vand.u32 %v3207, 4294901760
  %v6677 = vsub.f32 %v3207, %v6676
  %6678 = vmatpush.msra.mxu0 %v6677
  %v6679 = vand.u32 %v6445, 4294901760
  %v6680 = vsub.f32 %v6445, %v6679
  %6681 = vmatmul.f32.gmra.mxu0 %v6680
  %v6682 = vpop.f32.mrf.mxu0
  %v6683 = vadd.f32 %v6617, %v6682
  %v6684 = vand.u32 %v6447, 4294901760
  %v6685 = vsub.f32 %v6447, %v6684
  %6686 = vmatmul.f32.gmra.mxu0 %v6685
  %v6687 = vpop.f32.mrf.mxu0
  %v6688 = vadd.f32 %v6621, %v6687
  %v6689 = vand.u32 %v6449, 4294901760
  %v6690 = vsub.f32 %v6449, %v6689
  %6691 = vmatmul.f32.gmra.mxu0 %v6690
  %v6692 = vpop.f32.mrf.mxu0
  %v6693 = vadd.f32 %v6625, %v6692
  %v6694 = vand.u32 %v6451, 4294901760
  %v6695 = vsub.f32 %v6451, %v6694
  %6696 = vmatmul.f32.gmra.mxu0 %v6695
  %v6697 = vpop.f32.mrf.mxu0
  %v6698 = vadd.f32 %v6629, %v6697
  %6699 = vdwg.mxu0
  %v6700 = vand.u32 %v3222, 4294901760
  %6701 = vmatpush.msra.mxu0 %v6700
  %v6702 = vand.u32 %v3221, 4294901760
  %6703 = vmatpush.msra.mxu0 %v6702
  %v6704 = vand.u32 %v3220, 4294901760
  %6705 = vmatpush.msra.mxu0 %v6704
  %v6706 = vand.u32 %v3219, 4294901760
  %6707 = vmatpush.msra.mxu0 %v6706
  %v6708 = vand.u32 %v3218, 4294901760
  %6709 = vmatpush.msra.mxu0 %v6708
  %v6710 = vand.u32 %v3217, 4294901760
  %6711 = vmatpush.msra.mxu0 %v6710
  %v6712 = vand.u32 %v3216, 4294901760
  %6713 = vmatpush.msra.mxu0 %v6712
  %v6714 = vand.u32 %v3215, 4294901760
  %6715 = vmatpush.msra.mxu0 %v6714
  %v6716 = vand.u32 %v3214, 4294901760
  %6717 = vmatpush.msra.mxu0 %v6716
  %v6718 = vand.u32 %v3213, 4294901760
  %6719 = vmatpush.msra.mxu0 %v6718
  %v6720 = vand.u32 %v3212, 4294901760
  %6721 = vmatpush.msra.mxu0 %v6720
  %v6722 = vand.u32 %v3211, 4294901760
  %6723 = vmatpush.msra.mxu0 %v6722
  %v6724 = vand.u32 %v3210, 4294901760
  %6725 = vmatpush.msra.mxu0 %v6724
  %v6726 = vand.u32 %v3209, 4294901760
  %6727 = vmatpush.msra.mxu0 %v6726
  %v6728 = vand.u32 %v3208, 4294901760
  %6729 = vmatpush.msra.mxu0 %v6728
  %v6730 = vand.u32 %v3207, 4294901760
  %6731 = vmatpush.msra.mxu0 %v6730
  %v6732 = vand.u32 %v6445, 4294901760
  %v6733 = vsub.f32 %v6445, %v6732
  %v6734 = vand.u32 %v6733, 4294901760
  %6735 = vmatmul.f32.gmra.mxu0 %v6734
  %v6736 = vpop.f32.mrf.mxu0
  %v6737 = vadd.f32 %v6683, %v6736
  %v6738 = vand.u32 %v6447, 4294901760
  %v6739 = vsub.f32 %v6447, %v6738
  %v6740 = vand.u32 %v6739, 4294901760
  %6741 = vmatmul.f32.gmra.mxu0 %v6740
  %v6742 = vpop.f32.mrf.mxu0
  %v6743 = vadd.f32 %v6688, %v6742
  %v6744 = vand.u32 %v6449, 4294901760
  %v6745 = vsub.f32 %v6449, %v6744
  %v6746 = vand.u32 %v6745, 4294901760
  %6747 = vmatmul.f32.gmra.mxu0 %v6746
  %v6748 = vpop.f32.mrf.mxu0
  %v6749 = vadd.f32 %v6693, %v6748
  %v6750 = vand.u32 %v6451, 4294901760
  %v6751 = vsub.f32 %v6451, %v6750
  %v6752 = vand.u32 %v6751, 4294901760
  %6753 = vmatmul.f32.gmra.mxu0 %v6752
  %v6754 = vpop.f32.mrf.mxu0
  %v6755 = vadd.f32 %v6698, %v6754
  %6756 = vdwg.mxu0
  %v6757 = vand.u32 %v3222, 4294901760
  %v6758 = vsub.f32 %v3222, %v6757
  %v6759 = vand.u32 %v6758, 4294901760
  %6760 = vmatpush.msra.mxu0 %v6759
  %v6761 = vand.u32 %v3221, 4294901760
  %v6762 = vsub.f32 %v3221, %v6761
  %v6763 = vand.u32 %v6762, 4294901760
  %6764 = vmatpush.msra.mxu0 %v6763
  %v6765 = vand.u32 %v3220, 4294901760
  %v6766 = vsub.f32 %v3220, %v6765
  %v6767 = vand.u32 %v6766, 4294901760
  %6768 = vmatpush.msra.mxu0 %v6767
  %v6769 = vand.u32 %v3219, 4294901760
  %v6770 = vsub.f32 %v3219, %v6769
  %v6771 = vand.u32 %v6770, 4294901760
  %6772 = vmatpush.msra.mxu0 %v6771
  %v6773 = vand.u32 %v3218, 4294901760
  %v6774 = vsub.f32 %v3218, %v6773
  %v6775 = vand.u32 %v6774, 4294901760
  %6776 = vmatpush.msra.mxu0 %v6775
  %v6777 = vand.u32 %v3217, 4294901760
  %v6778 = vsub.f32 %v3217, %v6777
  %v6779 = vand.u32 %v6778, 4294901760
  %6780 = vmatpush.msra.mxu0 %v6779
  %v6781 = vand.u32 %v3216, 4294901760
  %v6782 = vsub.f32 %v3216, %v6781
  %v6783 = vand.u32 %v6782, 4294901760
  %6784 = vmatpush.msra.mxu0 %v6783
  %v6785 = vand.u32 %v3215, 4294901760
  %v6786 = vsub.f32 %v3215, %v6785
  %v6787 = vand.u32 %v6786, 4294901760
  %6788 = vmatpush.msra.mxu0 %v6787
  %v6789 = vand.u32 %v3214, 4294901760
  %v6790 = vsub.f32 %v3214, %v6789
  %v6791 = vand.u32 %v6790, 4294901760
  %6792 = vmatpush.msra.mxu0 %v6791
  %v6793 = vand.u32 %v3213, 4294901760
  %v6794 = vsub.f32 %v3213, %v6793
  %v6795 = vand.u32 %v6794, 4294901760
  %6796 = vmatpush.msra.mxu0 %v6795
  %v6797 = vand.u32 %v3212, 4294901760
  %v6798 = vsub.f32 %v3212, %v6797
  %v6799 = vand.u32 %v6798, 4294901760
  %6800 = vmatpush.msra.mxu0 %v6799
  %v6801 = vand.u32 %v3211, 4294901760
  %v6802 = vsub.f32 %v3211, %v6801
  %v6803 = vand.u32 %v6802, 4294901760
  %6804 = vmatpush.msra.mxu0 %v6803
  %v6805 = vand.u32 %v3210, 4294901760
  %v6806 = vsub.f32 %v3210, %v6805
  %v6807 = vand.u32 %v6806, 4294901760
  %6808 = vmatpush.msra.mxu0 %v6807
  %v6809 = vand.u32 %v3209, 4294901760
  %v6810 = vsub.f32 %v3209, %v6809
  %v6811 = vand.u32 %v6810, 4294901760
  %6812 = vmatpush.msra.mxu0 %v6811
  %v6813 = vand.u32 %v3208, 4294901760
  %v6814 = vsub.f32 %v3208, %v6813
  %v6815 = vand.u32 %v6814, 4294901760
  %6816 = vmatpush.msra.mxu0 %v6815
  %v6817 = vand.u32 %v3207, 4294901760
  %v6818 = vsub.f32 %v3207, %v6817
  %v6819 = vand.u32 %v6818, 4294901760
  %6820 = vmatpush.msra.mxu0 %v6819
  %v6821 = vand.u32 %v6445, 4294901760
  %6822 = vmatmul.f32.gmra.mxu0 %v6821
  %v6823 = vpop.f32.mrf.mxu0
  %v6824 = vadd.f32 %v6737, %v6823
  %v6825 = vand.u32 %v6447, 4294901760
  %6826 = vmatmul.f32.gmra.mxu0 %v6825
  %v6827 = vpop.f32.mrf.mxu0
  %v6828 = vadd.f32 %v6743, %v6827
  %v6829 = vand.u32 %v6449, 4294901760
  %6830 = vmatmul.f32.gmra.mxu0 %v6829
  %v6831 = vpop.f32.mrf.mxu0
  %v6832 = vadd.f32 %v6749, %v6831
  %v6833 = vand.u32 %v6451, 4294901760
  %6834 = vmatmul.f32.gmra.mxu0 %v6833
  %v6835 = vpop.f32.mrf.mxu0
  %v6836 = vadd.f32 %v6755, %v6835
  %6837 = vdwg.mxu0
  %v6838 = vand.u32 %v3222, 4294901760
  %6839 = vmatpush.msra.mxu0 %v6838
  %v6840 = vand.u32 %v3221, 4294901760
  %6841 = vmatpush.msra.mxu0 %v6840
  %v6842 = vand.u32 %v3220, 4294901760
  %6843 = vmatpush.msra.mxu0 %v6842
  %v6844 = vand.u32 %v3219, 4294901760
  %6845 = vmatpush.msra.mxu0 %v6844
  %v6846 = vand.u32 %v3218, 4294901760
  %6847 = vmatpush.msra.mxu0 %v6846
  %v6848 = vand.u32 %v3217, 4294901760
  %6849 = vmatpush.msra.mxu0 %v6848
  %v6850 = vand.u32 %v3216, 4294901760
  %6851 = vmatpush.msra.mxu0 %v6850
  %v6852 = vand.u32 %v3215, 4294901760
  %6853 = vmatpush.msra.mxu0 %v6852
  %v6854 = vand.u32 %v3214, 4294901760
  %6855 = vmatpush.msra.mxu0 %v6854
  %v6856 = vand.u32 %v3213, 4294901760
  %6857 = vmatpush.msra.mxu0 %v6856
  %v6858 = vand.u32 %v3212, 4294901760
  %6859 = vmatpush.msra.mxu0 %v6858
  %v6860 = vand.u32 %v3211, 4294901760
  %6861 = vmatpush.msra.mxu0 %v6860
  %v6862 = vand.u32 %v3210, 4294901760
  %6863 = vmatpush.msra.mxu0 %v6862
  %v6864 = vand.u32 %v3209, 4294901760
  %6865 = vmatpush.msra.mxu0 %v6864
  %v6866 = vand.u32 %v3208, 4294901760
  %6867 = vmatpush.msra.mxu0 %v6866
  %v6868 = vand.u32 %v3207, 4294901760
  %6869 = vmatpush.msra.mxu0 %v6868
  %v6870 = vand.u32 %v6445, 4294901760
  %6871 = vmatmul.f32.gmra.mxu0 %v6870
  %v6872 = vpop.f32.mrf.mxu0
  %v6873 = vadd.f32 %v6824, %v6872
  %v6874 = vand.u32 %v6447, 4294901760
  %6875 = vmatmul.f32.gmra.mxu0 %v6874
  %v6876 = vpop.f32.mrf.mxu0
  %v6877 = vadd.f32 %v6828, %v6876
  %v6878 = vand.u32 %v6449, 4294901760
  %6879 = vmatmul.f32.gmra.mxu0 %v6878
  %v6880 = vpop.f32.mrf.mxu0
  %v6881 = vadd.f32 %v6832, %v6880
  %v6882 = vand.u32 %v6451, 4294901760
  %6883 = vmatmul.f32.gmra.mxu0 %v6882
  %v6884 = vpop.f32.mrf.mxu0
  %v6885 = vadd.f32 %v6836, %v6884
  %6886 = vdwg.mxu0
  %v6887 = vand.u32 %v3238, 4294901760
  %6888 = vmatpush.msra.mxu0 %v6887
  %v6889 = vand.u32 %v3237, 4294901760
  %6890 = vmatpush.msra.mxu0 %v6889
  %v6891 = vand.u32 %v3236, 4294901760
  %6892 = vmatpush.msra.mxu0 %v6891
  %v6893 = vand.u32 %v3235, 4294901760
  %6894 = vmatpush.msra.mxu0 %v6893
  %v6895 = vand.u32 %v3234, 4294901760
  %6896 = vmatpush.msra.mxu0 %v6895
  %v6897 = vand.u32 %v3233, 4294901760
  %6898 = vmatpush.msra.mxu0 %v6897
  %v6899 = vand.u32 %v3232, 4294901760
  %6900 = vmatpush.msra.mxu0 %v6899
  %v6901 = vand.u32 %v3231, 4294901760
  %6902 = vmatpush.msra.mxu0 %v6901
  %v6903 = vand.u32 %v3230, 4294901760
  %6904 = vmatpush.msra.mxu0 %v6903
  %v6905 = vand.u32 %v3229, 4294901760
  %6906 = vmatpush.msra.mxu0 %v6905
  %v6907 = vand.u32 %v3228, 4294901760
  %6908 = vmatpush.msra.mxu0 %v6907
  %v6909 = vand.u32 %v3227, 4294901760
  %6910 = vmatpush.msra.mxu0 %v6909
  %v6911 = vand.u32 %v3226, 4294901760
  %6912 = vmatpush.msra.mxu0 %v6911
  %v6913 = vand.u32 %v3225, 4294901760
  %6914 = vmatpush.msra.mxu0 %v6913
  %v6915 = vand.u32 %v3224, 4294901760
  %6916 = vmatpush.msra.mxu0 %v6915
  %v6917 = vand.u32 %v3223, 4294901760
  %6918 = vmatpush.msra.mxu0 %v6917
  %v6919 = vand.u32 %v6446, 4294901760
  %v6920 = vsub.f32 %v6446, %v6919
  %v6921 = vand.u32 %v6920, 4294901760
  %v6922 = vsub.f32 %v6920, %v6921
  %v6923 = vand.u32 %v6922, 4294901760
  %6924 = vmatmul.f32.gmra.mxu0 %v6923
  %v6925 = vpop.f32.mrf.mxu0
  %v6926 = vadd.f32 %v6873, %v6925
  %v6927 = vand.u32 %v6448, 4294901760
  %v6928 = vsub.f32 %v6448, %v6927
  %v6929 = vand.u32 %v6928, 4294901760
  %v6930 = vsub.f32 %v6928, %v6929
  %v6931 = vand.u32 %v6930, 4294901760
  %6932 = vmatmul.f32.gmra.mxu0 %v6931
  %v6933 = vpop.f32.mrf.mxu0
  %v6934 = vadd.f32 %v6877, %v6933
  %v6935 = vand.u32 %v6450, 4294901760
  %v6936 = vsub.f32 %v6450, %v6935
  %v6937 = vand.u32 %v6936, 4294901760
  %v6938 = vsub.f32 %v6936, %v6937
  %v6939 = vand.u32 %v6938, 4294901760
  %6940 = vmatmul.f32.gmra.mxu0 %v6939
  %v6941 = vpop.f32.mrf.mxu0
  %v6942 = vadd.f32 %v6881, %v6941
  %v6943 = vand.u32 %v6452, 4294901760
  %v6944 = vsub.f32 %v6452, %v6943
  %v6945 = vand.u32 %v6944, 4294901760
  %v6946 = vsub.f32 %v6944, %v6945
  %v6947 = vand.u32 %v6946, 4294901760
  %6948 = vmatmul.f32.gmra.mxu0 %v6947
  %v6949 = vpop.f32.mrf.mxu0
  %v6950 = vadd.f32 %v6885, %v6949
  %6951 = vdwg.mxu0
  %v6952 = vand.u32 %v3238, 4294901760
  %v6953 = vsub.f32 %v3238, %v6952
  %v6954 = vand.u32 %v6953, 4294901760
  %v6955 = vsub.f32 %v6953, %v6954
  %v6956 = vand.u32 %v6955, 4294901760
  %6957 = vmatpush.msra.mxu0 %v6956
  %v6958 = vand.u32 %v3237, 4294901760
  %v6959 = vsub.f32 %v3237, %v6958
  %v6960 = vand.u32 %v6959, 4294901760
  %v6961 = vsub.f32 %v6959, %v6960
  %v6962 = vand.u32 %v6961, 4294901760
  %6963 = vmatpush.msra.mxu0 %v6962
  %v6964 = vand.u32 %v3236, 4294901760
  %v6965 = vsub.f32 %v3236, %v6964
  %v6966 = vand.u32 %v6965, 4294901760
  %v6967 = vsub.f32 %v6965, %v6966
  %v6968 = vand.u32 %v6967, 4294901760
  %6969 = vmatpush.msra.mxu0 %v6968
  %v6970 = vand.u32 %v3235, 4294901760
  %v6971 = vsub.f32 %v3235, %v6970
  %v6972 = vand.u32 %v6971, 4294901760
  %v6973 = vsub.f32 %v6971, %v6972
  %v6974 = vand.u32 %v6973, 4294901760
  %6975 = vmatpush.msra.mxu0 %v6974
  %v6976 = vand.u32 %v3234, 4294901760
  %v6977 = vsub.f32 %v3234, %v6976
  %v6978 = vand.u32 %v6977, 4294901760
  %v6979 = vsub.f32 %v6977, %v6978
  %v6980 = vand.u32 %v6979, 4294901760
  %6981 = vmatpush.msra.mxu0 %v6980
  %v6982 = vand.u32 %v3233, 4294901760
  %v6983 = vsub.f32 %v3233, %v6982
  %v6984 = vand.u32 %v6983, 4294901760
  %v6985 = vsub.f32 %v6983, %v6984
  %v6986 = vand.u32 %v6985, 4294901760
  %6987 = vmatpush.msra.mxu0 %v6986
  %v6988 = vand.u32 %v3232, 4294901760
  %v6989 = vsub.f32 %v3232, %v6988
  %v6990 = vand.u32 %v6989, 4294901760
  %v6991 = vsub.f32 %v6989, %v6990
  %v6992 = vand.u32 %v6991, 4294901760
  %6993 = vmatpush.msra.mxu0 %v6992
  %v6994 = vand.u32 %v3231, 4294901760
  %v6995 = vsub.f32 %v3231, %v6994
  %v6996 = vand.u32 %v6995, 4294901760
  %v6997 = vsub.f32 %v6995, %v6996
  %v6998 = vand.u32 %v6997, 4294901760
  %6999 = vmatpush.msra.mxu0 %v6998
  %v7000 = vand.u32 %v3230, 4294901760
  %v7001 = vsub.f32 %v3230, %v7000
  %v7002 = vand.u32 %v7001, 4294901760
  %v7003 = vsub.f32 %v7001, %v7002
  %v7004 = vand.u32 %v7003, 4294901760
  %7005 = vmatpush.msra.mxu0 %v7004
  %v7006 = vand.u32 %v3229, 4294901760
  %v7007 = vsub.f32 %v3229, %v7006
  %v7008 = vand.u32 %v7007, 4294901760
  %v7009 = vsub.f32 %v7007, %v7008
  %v7010 = vand.u32 %v7009, 4294901760
  %7011 = vmatpush.msra.mxu0 %v7010
  %v7012 = vand.u32 %v3228, 4294901760
  %v7013 = vsub.f32 %v3228, %v7012
  %v7014 = vand.u32 %v7013, 4294901760
  %v7015 = vsub.f32 %v7013, %v7014
  %v7016 = vand.u32 %v7015, 4294901760
  %7017 = vmatpush.msra.mxu0 %v7016
  %v7018 = vand.u32 %v3227, 4294901760
  %v7019 = vsub.f32 %v3227, %v7018
  %v7020 = vand.u32 %v7019, 4294901760
  %v7021 = vsub.f32 %v7019, %v7020
  %v7022 = vand.u32 %v7021, 4294901760
  %7023 = vmatpush.msra.mxu0 %v7022
  %v7024 = vand.u32 %v3226, 4294901760
  %v7025 = vsub.f32 %v3226, %v7024
  %v7026 = vand.u32 %v7025, 4294901760
  %v7027 = vsub.f32 %v7025, %v7026
  %v7028 = vand.u32 %v7027, 4294901760
  %7029 = vmatpush.msra.mxu0 %v7028
  %v7030 = vand.u32 %v3225, 4294901760
  %v7031 = vsub.f32 %v3225, %v7030
  %v7032 = vand.u32 %v7031, 4294901760
  %v7033 = vsub.f32 %v7031, %v7032
  %v7034 = vand.u32 %v7033, 4294901760
  %7035 = vmatpush.msra.mxu0 %v7034
  %v7036 = vand.u32 %v3224, 4294901760
  %v7037 = vsub.f32 %v3224, %v7036
  %v7038 = vand.u32 %v7037, 4294901760
  %v7039 = vsub.f32 %v7037, %v7038
  %v7040 = vand.u32 %v7039, 4294901760
  %7041 = vmatpush.msra.mxu0 %v7040
  %v7042 = vand.u32 %v3223, 4294901760
  %v7043 = vsub.f32 %v3223, %v7042
  %v7044 = vand.u32 %v7043, 4294901760
  %v7045 = vsub.f32 %v7043, %v7044
  %v7046 = vand.u32 %v7045, 4294901760
  %7047 = vmatpush.msra.mxu0 %v7046
  %v7048 = vand.u32 %v6446, 4294901760
  %7049 = vmatmul.f32.gmra.mxu0 %v7048
  %v7050 = vpop.f32.mrf.mxu0
  %v7051 = vadd.f32 %v6926, %v7050
  %v7052 = vand.u32 %v6448, 4294901760
  %7053 = vmatmul.f32.gmra.mxu0 %v7052
  %v7054 = vpop.f32.mrf.mxu0
  %v7055 = vadd.f32 %v6934, %v7054
  %v7056 = vand.u32 %v6450, 4294901760
  %7057 = vmatmul.f32.gmra.mxu0 %v7056
  %v7058 = vpop.f32.mrf.mxu0
  %v7059 = vadd.f32 %v6942, %v7058
  %v7060 = vand.u32 %v6452, 4294901760
  %7061 = vmatmul.f32.gmra.mxu0 %v7060
  %v7062 = vpop.f32.mrf.mxu0
  %v7063 = vadd.f32 %v6950, %v7062
  %7064 = vdwg.mxu0
  %v7065 = vand.u32 %v3238, 4294901760
  %v7066 = vsub.f32 %v3238, %v7065
  %7067 = vmatpush.msra.mxu0 %v7066
  %v7068 = vand.u32 %v3237, 4294901760
  %v7069 = vsub.f32 %v3237, %v7068
  %7070 = vmatpush.msra.mxu0 %v7069
  %v7071 = vand.u32 %v3236, 4294901760
  %v7072 = vsub.f32 %v3236, %v7071
  %7073 = vmatpush.msra.mxu0 %v7072
  %v7074 = vand.u32 %v3235, 4294901760
  %v7075 = vsub.f32 %v3235, %v7074
  %7076 = vmatpush.msra.mxu0 %v7075
  %v7077 = vand.u32 %v3234, 4294901760
  %v7078 = vsub.f32 %v3234, %v7077
  %7079 = vmatpush.msra.mxu0 %v7078
  %v7080 = vand.u32 %v3233, 4294901760
  %v7081 = vsub.f32 %v3233, %v7080
  %7082 = vmatpush.msra.mxu0 %v7081
  %v7083 = vand.u32 %v3232, 4294901760
  %v7084 = vsub.f32 %v3232, %v7083
  %7085 = vmatpush.msra.mxu0 %v7084
  %v7086 = vand.u32 %v3231, 4294901760
  %v7087 = vsub.f32 %v3231, %v7086
  %7088 = vmatpush.msra.mxu0 %v7087
  %v7089 = vand.u32 %v3230, 4294901760
  %v7090 = vsub.f32 %v3230, %v7089
  %7091 = vmatpush.msra.mxu0 %v7090
  %v7092 = vand.u32 %v3229, 4294901760
  %v7093 = vsub.f32 %v3229, %v7092
  %7094 = vmatpush.msra.mxu0 %v7093
  %v7095 = vand.u32 %v3228, 4294901760
  %v7096 = vsub.f32 %v3228, %v7095
  %7097 = vmatpush.msra.mxu0 %v7096
  %v7098 = vand.u32 %v3227, 4294901760
  %v7099 = vsub.f32 %v3227, %v7098
  %7100 = vmatpush.msra.mxu0 %v7099
  %v7101 = vand.u32 %v3226, 4294901760
  %v7102 = vsub.f32 %v3226, %v7101
  %7103 = vmatpush.msra.mxu0 %v7102
  %v7104 = vand.u32 %v3225, 4294901760
  %v7105 = vsub.f32 %v3225, %v7104
  %7106 = vmatpush.msra.mxu0 %v7105
  %v7107 = vand.u32 %v3224, 4294901760
  %v7108 = vsub.f32 %v3224, %v7107
  %7109 = vmatpush.msra.mxu0 %v7108
  %v7110 = vand.u32 %v3223, 4294901760
  %v7111 = vsub.f32 %v3223, %v7110
  %7112 = vmatpush.msra.mxu0 %v7111
  %v7113 = vand.u32 %v6446, 4294901760
  %v7114 = vsub.f32 %v6446, %v7113
  %7115 = vmatmul.f32.gmra.mxu0 %v7114
  %v7116 = vpop.f32.mrf.mxu0
  %v7117 = vadd.f32 %v7051, %v7116
  %v7118 = vand.u32 %v6448, 4294901760
  %v7119 = vsub.f32 %v6448, %v7118
  %7120 = vmatmul.f32.gmra.mxu0 %v7119
  %v7121 = vpop.f32.mrf.mxu0
  %v7122 = vadd.f32 %v7055, %v7121
  %v7123 = vand.u32 %v6450, 4294901760
  %v7124 = vsub.f32 %v6450, %v7123
  %7125 = vmatmul.f32.gmra.mxu0 %v7124
  %v7126 = vpop.f32.mrf.mxu0
  %v7127 = vadd.f32 %v7059, %v7126
  %v7128 = vand.u32 %v6452, 4294901760
  %v7129 = vsub.f32 %v6452, %v7128
  %7130 = vmatmul.f32.gmra.mxu0 %v7129
  %v7131 = vpop.f32.mrf.mxu0
  %v7132 = vadd.f32 %v7063, %v7131
  %7133 = vdwg.mxu0
  %v7134 = vand.u32 %v3238, 4294901760
  %7135 = vmatpush.msra.mxu0 %v7134
  %v7136 = vand.u32 %v3237, 4294901760
  %7137 = vmatpush.msra.mxu0 %v7136
  %v7138 = vand.u32 %v3236, 4294901760
  %7139 = vmatpush.msra.mxu0 %v7138
  %v7140 = vand.u32 %v3235, 4294901760
  %7141 = vmatpush.msra.mxu0 %v7140
  %v7142 = vand.u32 %v3234, 4294901760
  %7143 = vmatpush.msra.mxu0 %v7142
  %v7144 = vand.u32 %v3233, 4294901760
  %7145 = vmatpush.msra.mxu0 %v7144
  %v7146 = vand.u32 %v3232, 4294901760
  %7147 = vmatpush.msra.mxu0 %v7146
  %v7148 = vand.u32 %v3231, 4294901760
  %7149 = vmatpush.msra.mxu0 %v7148
  %v7150 = vand.u32 %v3230, 4294901760
  %7151 = vmatpush.msra.mxu0 %v7150
  %v7152 = vand.u32 %v3229, 4294901760
  %7153 = vmatpush.msra.mxu0 %v7152
  %v7154 = vand.u32 %v3228, 4294901760
  %7155 = vmatpush.msra.mxu0 %v7154
  %v7156 = vand.u32 %v3227, 4294901760
  %7157 = vmatpush.msra.mxu0 %v7156
  %v7158 = vand.u32 %v3226, 4294901760
  %7159 = vmatpush.msra.mxu0 %v7158
  %v7160 = vand.u32 %v3225, 4294901760
  %7161 = vmatpush.msra.mxu0 %v7160
  %v7162 = vand.u32 %v3224, 4294901760
  %7163 = vmatpush.msra.mxu0 %v7162
  %v7164 = vand.u32 %v3223, 4294901760
  %7165 = vmatpush.msra.mxu0 %v7164
  %v7166 = vand.u32 %v6446, 4294901760
  %v7167 = vsub.f32 %v6446, %v7166
  %v7168 = vand.u32 %v7167, 4294901760
  %7169 = vmatmul.f32.gmra.mxu0 %v7168
  %v7170 = vpop.f32.mrf.mxu0
  %v7171 = vadd.f32 %v7117, %v7170
  %v7172 = vand.u32 %v6448, 4294901760
  %v7173 = vsub.f32 %v6448, %v7172
  %v7174 = vand.u32 %v7173, 4294901760
  %7175 = vmatmul.f32.gmra.mxu0 %v7174
  %v7176 = vpop.f32.mrf.mxu0
  %v7177 = vadd.f32 %v7122, %v7176
  %v7178 = vand.u32 %v6450, 4294901760
  %v7179 = vsub.f32 %v6450, %v7178
  %v7180 = vand.u32 %v7179, 4294901760
  %7181 = vmatmul.f32.gmra.mxu0 %v7180
  %v7182 = vpop.f32.mrf.mxu0
  %v7183 = vadd.f32 %v7127, %v7182
  %v7184 = vand.u32 %v6452, 4294901760
  %v7185 = vsub.f32 %v6452, %v7184
  %v7186 = vand.u32 %v7185, 4294901760
  %7187 = vmatmul.f32.gmra.mxu0 %v7186
  %v7188 = vpop.f32.mrf.mxu0
  %v7189 = vadd.f32 %v7132, %v7188
  %7190 = vdwg.mxu0
  %v7191 = vand.u32 %v3238, 4294901760
  %v7192 = vsub.f32 %v3238, %v7191
  %v7193 = vand.u32 %v7192, 4294901760
  %7194 = vmatpush.msra.mxu0 %v7193
  %v7195 = vand.u32 %v3237, 4294901760
  %v7196 = vsub.f32 %v3237, %v7195
  %v7197 = vand.u32 %v7196, 4294901760
  %7198 = vmatpush.msra.mxu0 %v7197
  %v7199 = vand.u32 %v3236, 4294901760
  %v7200 = vsub.f32 %v3236, %v7199
  %v7201 = vand.u32 %v7200, 4294901760
  %7202 = vmatpush.msra.mxu0 %v7201
  %v7203 = vand.u32 %v3235, 4294901760
  %v7204 = vsub.f32 %v3235, %v7203
  %v7205 = vand.u32 %v7204, 4294901760
  %7206 = vmatpush.msra.mxu0 %v7205
  %v7207 = vand.u32 %v3234, 4294901760
  %v7208 = vsub.f32 %v3234, %v7207
  %v7209 = vand.u32 %v7208, 4294901760
  %7210 = vmatpush.msra.mxu0 %v7209
  %v7211 = vand.u32 %v3233, 4294901760
  %v7212 = vsub.f32 %v3233, %v7211
  %v7213 = vand.u32 %v7212, 4294901760
  %7214 = vmatpush.msra.mxu0 %v7213
  %v7215 = vand.u32 %v3232, 4294901760
  %v7216 = vsub.f32 %v3232, %v7215
  %v7217 = vand.u32 %v7216, 4294901760
  %7218 = vmatpush.msra.mxu0 %v7217
  %v7219 = vand.u32 %v3231, 4294901760
  %v7220 = vsub.f32 %v3231, %v7219
  %v7221 = vand.u32 %v7220, 4294901760
  %7222 = vmatpush.msra.mxu0 %v7221
  %v7223 = vand.u32 %v3230, 4294901760
  %v7224 = vsub.f32 %v3230, %v7223
  %v7225 = vand.u32 %v7224, 4294901760
  %7226 = vmatpush.msra.mxu0 %v7225
  %v7227 = vand.u32 %v3229, 4294901760
  %v7228 = vsub.f32 %v3229, %v7227
  %v7229 = vand.u32 %v7228, 4294901760
  %7230 = vmatpush.msra.mxu0 %v7229
  %v7231 = vand.u32 %v3228, 4294901760
  %v7232 = vsub.f32 %v3228, %v7231
  %v7233 = vand.u32 %v7232, 4294901760
  %7234 = vmatpush.msra.mxu0 %v7233
  %v7235 = vand.u32 %v3227, 4294901760
  %v7236 = vsub.f32 %v3227, %v7235
  %v7237 = vand.u32 %v7236, 4294901760
  %7238 = vmatpush.msra.mxu0 %v7237
  %v7239 = vand.u32 %v3226, 4294901760
  %v7240 = vsub.f32 %v3226, %v7239
  %v7241 = vand.u32 %v7240, 4294901760
  %7242 = vmatpush.msra.mxu0 %v7241
  %v7243 = vand.u32 %v3225, 4294901760
  %v7244 = vsub.f32 %v3225, %v7243
  %v7245 = vand.u32 %v7244, 4294901760
  %7246 = vmatpush.msra.mxu0 %v7245
  %v7247 = vand.u32 %v3224, 4294901760
  %v7248 = vsub.f32 %v3224, %v7247
  %v7249 = vand.u32 %v7248, 4294901760
  %7250 = vmatpush.msra.mxu0 %v7249
  %v7251 = vand.u32 %v3223, 4294901760
  %v7252 = vsub.f32 %v3223, %v7251
  %v7253 = vand.u32 %v7252, 4294901760
  %7254 = vmatpush.msra.mxu0 %v7253
  %v7255 = vand.u32 %v6446, 4294901760
  %7256 = vmatmul.f32.gmra.mxu0 %v7255
  %v7257 = vpop.f32.mrf.mxu0
  %v7258 = vadd.f32 %v7171, %v7257
  %v7259 = vand.u32 %v6448, 4294901760
  %7260 = vmatmul.f32.gmra.mxu0 %v7259
  %v7261 = vpop.f32.mrf.mxu0
  %v7262 = vadd.f32 %v7177, %v7261
  %v7263 = vand.u32 %v6450, 4294901760
  %7264 = vmatmul.f32.gmra.mxu0 %v7263
  %v7265 = vpop.f32.mrf.mxu0
  %v7266 = vadd.f32 %v7183, %v7265
  %v7267 = vand.u32 %v6452, 4294901760
  %7268 = vmatmul.f32.gmra.mxu0 %v7267
  %v7269 = vpop.f32.mrf.mxu0
  %v7270 = vadd.f32 %v7189, %v7269
  %7271 = vdwg.mxu0
  %v7272 = vand.u32 %v3238, 4294901760
  %7273 = vmatpush.msra.mxu0 %v7272
  %v7274 = vand.u32 %v3237, 4294901760
  %7275 = vmatpush.msra.mxu0 %v7274
  %v7276 = vand.u32 %v3236, 4294901760
  %7277 = vmatpush.msra.mxu0 %v7276
  %v7278 = vand.u32 %v3235, 4294901760
  %7279 = vmatpush.msra.mxu0 %v7278
  %v7280 = vand.u32 %v3234, 4294901760
  %7281 = vmatpush.msra.mxu0 %v7280
  %v7282 = vand.u32 %v3233, 4294901760
  %7283 = vmatpush.msra.mxu0 %v7282
  %v7284 = vand.u32 %v3232, 4294901760
  %7285 = vmatpush.msra.mxu0 %v7284
  %v7286 = vand.u32 %v3231, 4294901760
  %7287 = vmatpush.msra.mxu0 %v7286
  %v7288 = vand.u32 %v3230, 4294901760
  %7289 = vmatpush.msra.mxu0 %v7288
  %v7290 = vand.u32 %v3229, 4294901760
  %7291 = vmatpush.msra.mxu0 %v7290
  %v7292 = vand.u32 %v3228, 4294901760
  %7293 = vmatpush.msra.mxu0 %v7292
  %v7294 = vand.u32 %v3227, 4294901760
  %7295 = vmatpush.msra.mxu0 %v7294
  %v7296 = vand.u32 %v3226, 4294901760
  %7297 = vmatpush.msra.mxu0 %v7296
  %v7298 = vand.u32 %v3225, 4294901760
  %7299 = vmatpush.msra.mxu0 %v7298
  %v7300 = vand.u32 %v3224, 4294901760
  %7301 = vmatpush.msra.mxu0 %v7300
  %v7302 = vand.u32 %v3223, 4294901760
  %7303 = vmatpush.msra.mxu0 %v7302
  %v7304 = vand.u32 %v6446, 4294901760
  %7305 = vmatmul.f32.gmra.mxu0 %v7304
  %v7306 = vpop.f32.mrf.mxu0
  %v7307 = vadd.f32 %v7258, %v7306
  %v7308 = vand.u32 %v6448, 4294901760
  %7309 = vmatmul.f32.gmra.mxu0 %v7308
  %v7310 = vpop.f32.mrf.mxu0
  %v7311 = vadd.f32 %v7262, %v7310
  %v7312 = vand.u32 %v6450, 4294901760
  %7313 = vmatmul.f32.gmra.mxu0 %v7312
  %v7314 = vpop.f32.mrf.mxu0
  %v7315 = vadd.f32 %v7266, %v7314
  %v7316 = vand.u32 %v6452, 4294901760
  %7317 = vmatmul.f32.gmra.mxu0 %v7316
  %v7318 = vpop.f32.mrf.mxu0
  %v7319 = vadd.f32 %v7270, %v7318
  %7320 = vdwg.mxu0
  %7321 = vset.pattern.permute.xlu0 1
  %7322 = vperm.xlu0 %7321, %v24
  %v7323 = vpop.permute.xlu0 %7322
  %7325 = vset.pattern.permute.xlu0 1
  %7326 = vperm.xlu0 %7325, %v25
  %v7327 = vpop.permute.xlu0 %7326
  %7329 = vset.pattern.permute.xlu0 1
  %7330 = vperm.xlu0 %7329, %v26
  %v7331 = vpop.permute.xlu0 %7330
  %7333 = vset.pattern.permute.xlu0 1
  %7334 = vperm.xlu0 %7333, %v27
  %v7335 = vpop.permute.xlu0 %7334
  %v7338 = vsel %vm3266, %v5631, 0
  %v7341 = vsel %vm3266, %v5632, 0
  %v7344 = vsel %vm3266, %v5633, 0
  %v7347 = vsel %vm3266, %v5634, 0
  %7349 = vmatpush.msra.mxu0 0.0
  %7350 = vmatpush.msra.mxu0 0.0
  %7351 = vmatpush.msra.mxu0 0.0
  %7352 = vmatpush.msra.mxu0 0.0
  %7353 = vmatpush.msra.mxu0 0.0
  %7354 = vmatpush.msra.mxu0 0.0
  %7355 = vmatpush.msra.mxu0 0.0
  %7356 = vmatpush.msra.mxu0 0.0
  %7357 = vmatpush.msra.mxu0 0.0
  %7358 = vmatpush.msra.mxu0 0.0
  %7359 = vmatpush.msra.mxu0 0.0
  %7360 = vmatpush.msra.mxu0 0.0
  %v7361 = vand.u32 %v7319, 4294901760
  %7362 = vmatpush.msra.mxu0 %v7361
  %v7363 = vand.u32 %v7315, 4294901760
  %7364 = vmatpush.msra.mxu0 %v7363
  %v7365 = vand.u32 %v7311, 4294901760
  %7366 = vmatpush.msra.mxu0 %v7365
  %v7367 = vand.u32 %v7307, 4294901760
  %7368 = vmatpush.msra.mxu0 %v7367
  %v7369 = vand.u32 %v7338, 4294901760
  %v7370 = vsub.f32 %v7338, %v7369
  %v7371 = vand.u32 %v7370, 4294901760
  %v7372 = vsub.f32 %v7370, %v7371
  %v7373 = vand.u32 %v7372, 4294901760
  %7374 = vmatmul.f32.gmra.mxu0 %v7373
  %v7375 = vpop.f32.mrf.mxu0
  %v7376 = vadd.f32 %v7323, %v7375
  %v7377 = vand.u32 %v7341, 4294901760
  %v7378 = vsub.f32 %v7341, %v7377
  %v7379 = vand.u32 %v7378, 4294901760
  %v7380 = vsub.f32 %v7378, %v7379
  %v7381 = vand.u32 %v7380, 4294901760
  %7382 = vmatmul.f32.gmra.mxu0 %v7381
  %v7383 = vpop.f32.mrf.mxu0
  %v7384 = vadd.f32 %v7327, %v7383
  %v7385 = vand.u32 %v7344, 4294901760
  %v7386 = vsub.f32 %v7344, %v7385
  %v7387 = vand.u32 %v7386, 4294901760
  %v7388 = vsub.f32 %v7386, %v7387
  %v7389 = vand.u32 %v7388, 4294901760
  %7390 = vmatmul.f32.gmra.mxu0 %v7389
  %v7391 = vpop.f32.mrf.mxu0
  %v7392 = vadd.f32 %v7331, %v7391
  %v7393 = vand.u32 %v7347, 4294901760
  %v7394 = vsub.f32 %v7347, %v7393
  %v7395 = vand.u32 %v7394, 4294901760
  %v7396 = vsub.f32 %v7394, %v7395
  %v7397 = vand.u32 %v7396, 4294901760
  %7398 = vmatmul.f32.gmra.mxu0 %v7397
  %v7399 = vpop.f32.mrf.mxu0
  %v7400 = vadd.f32 %v7335, %v7399
  %7401 = vdwg.mxu0
  %7402 = vmatpush.msra.mxu0 0.0
  %7403 = vmatpush.msra.mxu0 0.0
  %7404 = vmatpush.msra.mxu0 0.0
  %7405 = vmatpush.msra.mxu0 0.0
  %7406 = vmatpush.msra.mxu0 0.0
  %7407 = vmatpush.msra.mxu0 0.0
  %7408 = vmatpush.msra.mxu0 0.0
  %7409 = vmatpush.msra.mxu0 0.0
  %7410 = vmatpush.msra.mxu0 0.0
  %7411 = vmatpush.msra.mxu0 0.0
  %7412 = vmatpush.msra.mxu0 0.0
  %7413 = vmatpush.msra.mxu0 0.0
  %v7414 = vand.u32 %v7319, 4294901760
  %v7415 = vsub.f32 %v7319, %v7414
  %v7416 = vand.u32 %v7415, 4294901760
  %v7417 = vsub.f32 %v7415, %v7416
  %v7418 = vand.u32 %v7417, 4294901760
  %7419 = vmatpush.msra.mxu0 %v7418
  %v7420 = vand.u32 %v7315, 4294901760
  %v7421 = vsub.f32 %v7315, %v7420
  %v7422 = vand.u32 %v7421, 4294901760
  %v7423 = vsub.f32 %v7421, %v7422
  %v7424 = vand.u32 %v7423, 4294901760
  %7425 = vmatpush.msra.mxu0 %v7424
  %v7426 = vand.u32 %v7311, 4294901760
  %v7427 = vsub.f32 %v7311, %v7426
  %v7428 = vand.u32 %v7427, 4294901760
  %v7429 = vsub.f32 %v7427, %v7428
  %v7430 = vand.u32 %v7429, 4294901760
  %7431 = vmatpush.msra.mxu0 %v7430
  %v7432 = vand.u32 %v7307, 4294901760
  %v7433 = vsub.f32 %v7307, %v7432
  %v7434 = vand.u32 %v7433, 4294901760
  %v7435 = vsub.f32 %v7433, %v7434
  %v7436 = vand.u32 %v7435, 4294901760
  %7437 = vmatpush.msra.mxu0 %v7436
  %v7438 = vand.u32 %v7338, 4294901760
  %7439 = vmatmul.f32.gmra.mxu0 %v7438
  %v7440 = vpop.f32.mrf.mxu0
  %v7441 = vadd.f32 %v7376, %v7440
  %v7442 = vand.u32 %v7341, 4294901760
  %7443 = vmatmul.f32.gmra.mxu0 %v7442
  %v7444 = vpop.f32.mrf.mxu0
  %v7445 = vadd.f32 %v7384, %v7444
  %v7446 = vand.u32 %v7344, 4294901760
  %7447 = vmatmul.f32.gmra.mxu0 %v7446
  %v7448 = vpop.f32.mrf.mxu0
  %v7449 = vadd.f32 %v7392, %v7448
  %v7450 = vand.u32 %v7347, 4294901760
  %7451 = vmatmul.f32.gmra.mxu0 %v7450
  %v7452 = vpop.f32.mrf.mxu0
  %v7453 = vadd.f32 %v7400, %v7452
  %7454 = vdwg.mxu0
  %7455 = vmatpush.msra.mxu0 0.0
  %7456 = vmatpush.msra.mxu0 0.0
  %7457 = vmatpush.msra.mxu0 0.0
  %7458 = vmatpush.msra.mxu0 0.0
  %7459 = vmatpush.msra.mxu0 0.0
  %7460 = vmatpush.msra.mxu0 0.0
  %7461 = vmatpush.msra.mxu0 0.0
  %7462 = vmatpush.msra.mxu0 0.0
  %7463 = vmatpush.msra.mxu0 0.0
  %7464 = vmatpush.msra.mxu0 0.0
  %7465 = vmatpush.msra.mxu0 0.0
  %7466 = vmatpush.msra.mxu0 0.0
  %v7467 = vand.u32 %v7319, 4294901760
  %v7468 = vsub.f32 %v7319, %v7467
  %7469 = vmatpush.msra.mxu0 %v7468
  %v7470 = vand.u32 %v7315, 4294901760
  %v7471 = vsub.f32 %v7315, %v7470
  %7472 = vmatpush.msra.mxu0 %v7471
  %v7473 = vand.u32 %v7311, 4294901760
  %v7474 = vsub.f32 %v7311, %v7473
  %7475 = vmatpush.msra.mxu0 %v7474
  %v7476 = vand.u32 %v7307, 4294901760
  %v7477 = vsub.f32 %v7307, %v7476
  %7478 = vmatpush.msra.mxu0 %v7477
  %v7479 = vand.u32 %v7338, 4294901760
  %v7480 = vsub.f32 %v7338, %v7479
  %7481 = vmatmul.f32.gmra.mxu0 %v7480
  %v7482 = vpop.f32.mrf.mxu0
  %v7483 = vadd.f32 %v7441, %v7482
  %v7484 = vand.u32 %v7341, 4294901760
  %v7485 = vsub.f32 %v7341, %v7484
  %7486 = vmatmul.f32.gmra.mxu0 %v7485
  %v7487 = vpop.f32.mrf.mxu0
  %v7488 = vadd.f32 %v7445, %v7487
  %v7489 = vand.u32 %v7344, 4294901760
  %v7490 = vsub.f32 %v7344, %v7489
  %7491 = vmatmul.f32.gmra.mxu0 %v7490
  %v7492 = vpop.f32.mrf.mxu0
  %v7493 = vadd.f32 %v7449, %v7492
  %v7494 = vand.u32 %v7347, 4294901760
  %v7495 = vsub.f32 %v7347, %v7494
  %7496 = vmatmul.f32.gmra.mxu0 %v7495
  %v7497 = vpop.f32.mrf.mxu0
  %v7498 = vadd.f32 %v7453, %v7497
  %7499 = vdwg.mxu0
  %7500 = vmatpush.msra.mxu0 0.0
  %7501 = vmatpush.msra.mxu0 0.0
  %7502 = vmatpush.msra.mxu0 0.0
  %7503 = vmatpush.msra.mxu0 0.0
  %7504 = vmatpush.msra.mxu0 0.0
  %7505 = vmatpush.msra.mxu0 0.0
  %7506 = vmatpush.msra.mxu0 0.0
  %7507 = vmatpush.msra.mxu0 0.0
  %7508 = vmatpush.msra.mxu0 0.0
  %7509 = vmatpush.msra.mxu0 0.0
  %7510 = vmatpush.msra.mxu0 0.0
  %7511 = vmatpush.msra.mxu0 0.0
  %v7512 = vand.u32 %v7319, 4294901760
  %7513 = vmatpush.msra.mxu0 %v7512
  %v7514 = vand.u32 %v7315, 4294901760
  %7515 = vmatpush.msra.mxu0 %v7514
  %v7516 = vand.u32 %v7311, 4294901760
  %7517 = vmatpush.msra.mxu0 %v7516
  %v7518 = vand.u32 %v7307, 4294901760
  %7519 = vmatpush.msra.mxu0 %v7518
  %v7520 = vand.u32 %v7338, 4294901760
  %v7521 = vsub.f32 %v7338, %v7520
  %v7522 = vand.u32 %v7521, 4294901760
  %7523 = vmatmul.f32.gmra.mxu0 %v7522
  %v7524 = vpop.f32.mrf.mxu0
  %v7525 = vadd.f32 %v7483, %v7524
  %v7526 = vand.u32 %v7341, 4294901760
  %v7527 = vsub.f32 %v7341, %v7526
  %v7528 = vand.u32 %v7527, 4294901760
  %7529 = vmatmul.f32.gmra.mxu0 %v7528
  %v7530 = vpop.f32.mrf.mxu0
  %v7531 = vadd.f32 %v7488, %v7530
  %v7532 = vand.u32 %v7344, 4294901760
  %v7533 = vsub.f32 %v7344, %v7532
  %v7534 = vand.u32 %v7533, 4294901760
  %7535 = vmatmul.f32.gmra.mxu0 %v7534
  %v7536 = vpop.f32.mrf.mxu0
  %v7537 = vadd.f32 %v7493, %v7536
  %v7538 = vand.u32 %v7347, 4294901760
  %v7539 = vsub.f32 %v7347, %v7538
  %v7540 = vand.u32 %v7539, 4294901760
  %7541 = vmatmul.f32.gmra.mxu0 %v7540
  %v7542 = vpop.f32.mrf.mxu0
  %v7543 = vadd.f32 %v7498, %v7542
  %7544 = vdwg.mxu0
  %7545 = vmatpush.msra.mxu0 0.0
  %7546 = vmatpush.msra.mxu0 0.0
  %7547 = vmatpush.msra.mxu0 0.0
  %7548 = vmatpush.msra.mxu0 0.0
  %7549 = vmatpush.msra.mxu0 0.0
  %7550 = vmatpush.msra.mxu0 0.0
  %7551 = vmatpush.msra.mxu0 0.0
  %7552 = vmatpush.msra.mxu0 0.0
  %7553 = vmatpush.msra.mxu0 0.0
  %7554 = vmatpush.msra.mxu0 0.0
  %7555 = vmatpush.msra.mxu0 0.0
  %7556 = vmatpush.msra.mxu0 0.0
  %v7557 = vand.u32 %v7319, 4294901760
  %v7558 = vsub.f32 %v7319, %v7557
  %v7559 = vand.u32 %v7558, 4294901760
  %7560 = vmatpush.msra.mxu0 %v7559
  %v7561 = vand.u32 %v7315, 4294901760
  %v7562 = vsub.f32 %v7315, %v7561
  %v7563 = vand.u32 %v7562, 4294901760
  %7564 = vmatpush.msra.mxu0 %v7563
  %v7565 = vand.u32 %v7311, 4294901760
  %v7566 = vsub.f32 %v7311, %v7565
  %v7567 = vand.u32 %v7566, 4294901760
  %7568 = vmatpush.msra.mxu0 %v7567
  %v7569 = vand.u32 %v7307, 4294901760
  %v7570 = vsub.f32 %v7307, %v7569
  %v7571 = vand.u32 %v7570, 4294901760
  %7572 = vmatpush.msra.mxu0 %v7571
  %v7573 = vand.u32 %v7338, 4294901760
  %7574 = vmatmul.f32.gmra.mxu0 %v7573
  %v7575 = vpop.f32.mrf.mxu0
  %v7576 = vadd.f32 %v7525, %v7575
  %v7577 = vand.u32 %v7341, 4294901760
  %7578 = vmatmul.f32.gmra.mxu0 %v7577
  %v7579 = vpop.f32.mrf.mxu0
  %v7580 = vadd.f32 %v7531, %v7579
  %v7581 = vand.u32 %v7344, 4294901760
  %7582 = vmatmul.f32.gmra.mxu0 %v7581
  %v7583 = vpop.f32.mrf.mxu0
  %v7584 = vadd.f32 %v7537, %v7583
  %v7585 = vand.u32 %v7347, 4294901760
  %7586 = vmatmul.f32.gmra.mxu0 %v7585
  %v7587 = vpop.f32.mrf.mxu0
  %v7588 = vadd.f32 %v7543, %v7587
  %7589 = vdwg.mxu0
  %7590 = vmatpush.msra.mxu0 0.0
  %7591 = vmatpush.msra.mxu0 0.0
  %7592 = vmatpush.msra.mxu0 0.0
  %7593 = vmatpush.msra.mxu0 0.0
  %7594 = vmatpush.msra.mxu0 0.0
  %7595 = vmatpush.msra.mxu0 0.0
  %7596 = vmatpush.msra.mxu0 0.0
  %7597 = vmatpush.msra.mxu0 0.0
  %7598 = vmatpush.msra.mxu0 0.0
  %7599 = vmatpush.msra.mxu0 0.0
  %7600 = vmatpush.msra.mxu0 0.0
  %7601 = vmatpush.msra.mxu0 0.0
  %v7602 = vand.u32 %v7319, 4294901760
  %7603 = vmatpush.msra.mxu0 %v7602
  %v7604 = vand.u32 %v7315, 4294901760
  %7605 = vmatpush.msra.mxu0 %v7604
  %v7606 = vand.u32 %v7311, 4294901760
  %7607 = vmatpush.msra.mxu0 %v7606
  %v7608 = vand.u32 %v7307, 4294901760
  %7609 = vmatpush.msra.mxu0 %v7608
  %v7610 = vand.u32 %v7338, 4294901760
  %7611 = vmatmul.f32.gmra.mxu0 %v7610
  %v7612 = vpop.f32.mrf.mxu0
  %v7613 = vadd.f32 %v7576, %v7612
  %v7614 = vand.u32 %v7341, 4294901760
  %7615 = vmatmul.f32.gmra.mxu0 %v7614
  %v7616 = vpop.f32.mrf.mxu0
  %v7617 = vadd.f32 %v7580, %v7616
  %v7618 = vand.u32 %v7344, 4294901760
  %7619 = vmatmul.f32.gmra.mxu0 %v7618
  %v7620 = vpop.f32.mrf.mxu0
  %v7621 = vadd.f32 %v7584, %v7620
  %v7622 = vand.u32 %v7347, 4294901760
  %7623 = vmatmul.f32.gmra.mxu0 %v7622
  %v7624 = vpop.f32.mrf.mxu0
  %v7625 = vadd.f32 %v7588, %v7624
  %7626 = vdwg.mxu0
  %v7627 = vmax.f32 %v7613, 0.0
  %v7628 = vmax.f32 %v7617, 0.0
  %v7629 = vmax.f32 %v7621, 0.0
  %v7630 = vmax.f32 %v7625, 0.0
  %v7631 = vand.u32 2147483647, %v7613
  %v7632 = vand.u32 2147483647, %v7617
  %v7633 = vand.u32 2147483647, %v7621
  %v7634 = vand.u32 2147483647, %v7625
  %v7635 = vsub.f32 0.0, %v7631
  %v7636 = vsub.f32 0.0, %v7632
  %v7637 = vsub.f32 0.0, %v7633
  %v7638 = vsub.f32 0.0, %v7634
  %v7639 = vmul.f32 %v7635, 1.442695
  %v7640 = vpow.pop %v7639
  %v7641 = vmul.f32 %v7636, 1.442695
  %v7642 = vpow.pop %v7641
  %v7643 = vmul.f32 %v7637, 1.442695
  %v7644 = vpow.pop %v7643
  %v7645 = vmul.f32 %v7638, 1.442695
  %v7646 = vpow.pop %v7645
  %v7647 = vadd.f32 %v7640, 1.0
  %v7648 = vlog2.pop %v7647
  %v7649 = vmul.f32 %v7648, 0.6931472
  %v7650 = vmul.f32 -0.5, %v7640
  %v7651 = vadd.f32 %v7650, 1.0
  %v7652 = vmul.f32 %v7651, %v7640
  %v7653 = vand.u32 2147483647, %v7640
  %vm7654 = vcmp.lt.f32.partialorder %v7653, 0.0004427343
  %v7655 = vsel %vm7654, %v7652, %v7649
  %v7656 = vadd.f32 %v7642, 1.0
  %v7657 = vlog2.pop %v7656
  %v7658 = vmul.f32 %v7657, 0.6931472
  %v7659 = vmul.f32 -0.5, %v7642
  %v7660 = vadd.f32 %v7659, 1.0
  %v7661 = vmul.f32 %v7660, %v7642
  %v7662 = vand.u32 2147483647, %v7642
  %vm7663 = vcmp.lt.f32.partialorder %v7662, 0.0004427343
  %v7664 = vsel %vm7663, %v7661, %v7658
  %v7665 = vadd.f32 %v7644, 1.0
  %v7666 = vlog2.pop %v7665
  %v7667 = vmul.f32 %v7666, 0.6931472
  %v7668 = vmul.f32 -0.5, %v7644
  %v7669 = vadd.f32 %v7668, 1.0
  %v7670 = vmul.f32 %v7669, %v7644
  %v7671 = vand.u32 2147483647, %v7644
  %vm7672 = vcmp.lt.f32.partialorder %v7671, 0.0004427343
  %v7673 = vsel %vm7672, %v7670, %v7667
  %v7674 = vadd.f32 %v7646, 1.0
  %v7675 = vlog2.pop %v7674
  %v7676 = vmul.f32 %v7675, 0.6931472
  %v7677 = vmul.f32 -0.5, %v7646
  %v7678 = vadd.f32 %v7677, 1.0
  %v7679 = vmul.f32 %v7678, %v7646
  %v7680 = vand.u32 2147483647, %v7646
  %vm7681 = vcmp.lt.f32.partialorder %v7680, 0.0004427343
  %v7682 = vsel %vm7681, %v7679, %v7676
  %v7683 = vadd.f32 %v7627, %v7655
  %v7684 = vadd.f32 %v7628, %v7664
  %v7685 = vadd.f32 %v7629, %v7673
  %v7686 = vadd.f32 %v7630, %v7682
  %7687 = vset.pattern.permute.xlu0 4
  %7688 = vperm.xlu0 %7687, %v24
  %v7689 = vpop.permute.xlu0 %7688
  %7691 = vset.pattern.permute.xlu0 4
  %7692 = vperm.xlu0 %7691, %v25
  %v7693 = vpop.permute.xlu0 %7692
  %7695 = vset.pattern.permute.xlu0 4
  %7696 = vperm.xlu0 %7695, %v26
  %v7697 = vpop.permute.xlu0 %7696
  %7699 = vset.pattern.permute.xlu0 4
  %7700 = vperm.xlu0 %7699, %v27
  %v7701 = vpop.permute.xlu0 %7700
  %v7704 = vsel %vm3266, %v5635, 0
  %v7707 = vsel %vm3266, %v5636, 0
  %v7710 = vsel %vm3266, %v5637, 0
  %v7713 = vsel %vm3266, %v5638, 0
  %7715 = vmatpush.msra.mxu0 0.0
  %7716 = vmatpush.msra.mxu0 0.0
  %7717 = vmatpush.msra.mxu0 0.0
  %7718 = vmatpush.msra.mxu0 0.0
  %7719 = vmatpush.msra.mxu0 0.0
  %7720 = vmatpush.msra.mxu0 0.0
  %7721 = vmatpush.msra.mxu0 0.0
  %7722 = vmatpush.msra.mxu0 0.0
  %7723 = vmatpush.msra.mxu0 0.0
  %7724 = vmatpush.msra.mxu0 0.0
  %7725 = vmatpush.msra.mxu0 0.0
  %7726 = vmatpush.msra.mxu0 0.0
  %v7727 = vand.u32 %v7686, 4294901760
  %7728 = vmatpush.msra.mxu0 %v7727
  %v7729 = vand.u32 %v7685, 4294901760
  %7730 = vmatpush.msra.mxu0 %v7729
  %v7731 = vand.u32 %v7684, 4294901760
  %7732 = vmatpush.msra.mxu0 %v7731
  %v7733 = vand.u32 %v7683, 4294901760
  %7734 = vmatpush.msra.mxu0 %v7733
  %v7735 = vand.u32 %v7704, 4294901760
  %v7736 = vsub.f32 %v7704, %v7735
  %v7737 = vand.u32 %v7736, 4294901760
  %v7738 = vsub.f32 %v7736, %v7737
  %v7739 = vand.u32 %v7738, 4294901760
  %7740 = vmatmul.f32.gmra.mxu0 %v7739
  %v7741 = vpop.f32.mrf.mxu0
  %v7742 = vadd.f32 %v7689, %v7741
  %v7743 = vand.u32 %v7707, 4294901760
  %v7744 = vsub.f32 %v7707, %v7743
  %v7745 = vand.u32 %v7744, 4294901760
  %v7746 = vsub.f32 %v7744, %v7745
  %v7747 = vand.u32 %v7746, 4294901760
  %7748 = vmatmul.f32.gmra.mxu0 %v7747
  %v7749 = vpop.f32.mrf.mxu0
  %v7750 = vadd.f32 %v7693, %v7749
  %v7751 = vand.u32 %v7710, 4294901760
  %v7752 = vsub.f32 %v7710, %v7751
  %v7753 = vand.u32 %v7752, 4294901760
  %v7754 = vsub.f32 %v7752, %v7753
  %v7755 = vand.u32 %v7754, 4294901760
  %7756 = vmatmul.f32.gmra.mxu0 %v7755
  %v7757 = vpop.f32.mrf.mxu0
  %v7758 = vadd.f32 %v7697, %v7757
  %v7759 = vand.u32 %v7713, 4294901760
  %v7760 = vsub.f32 %v7713, %v7759
  %v7761 = vand.u32 %v7760, 4294901760
  %v7762 = vsub.f32 %v7760, %v7761
  %v7763 = vand.u32 %v7762, 4294901760
  %7764 = vmatmul.f32.gmra.mxu0 %v7763
  %v7765 = vpop.f32.mrf.mxu0
  %v7766 = vadd.f32 %v7701, %v7765
  %7767 = vdwg.mxu0
  %7768 = vmatpush.msra.mxu0 0.0
  %7769 = vmatpush.msra.mxu0 0.0
  %7770 = vmatpush.msra.mxu0 0.0
  %7771 = vmatpush.msra.mxu0 0.0
  %7772 = vmatpush.msra.mxu0 0.0
  %7773 = vmatpush.msra.mxu0 0.0
  %7774 = vmatpush.msra.mxu0 0.0
  %7775 = vmatpush.msra.mxu0 0.0
  %7776 = vmatpush.msra.mxu0 0.0
  %7777 = vmatpush.msra.mxu0 0.0
  %7778 = vmatpush.msra.mxu0 0.0
  %7779 = vmatpush.msra.mxu0 0.0
  %v7780 = vand.u32 %v7686, 4294901760
  %v7781 = vsub.f32 %v7686, %v7780
  %v7782 = vand.u32 %v7781, 4294901760
  %v7783 = vsub.f32 %v7781, %v7782
  %v7784 = vand.u32 %v7783, 4294901760
  %7785 = vmatpush.msra.mxu0 %v7784
  %v7786 = vand.u32 %v7685, 4294901760
  %v7787 = vsub.f32 %v7685, %v7786
  %v7788 = vand.u32 %v7787, 4294901760
  %v7789 = vsub.f32 %v7787, %v7788
  %v7790 = vand.u32 %v7789, 4294901760
  %7791 = vmatpush.msra.mxu0 %v7790
  %v7792 = vand.u32 %v7684, 4294901760
  %v7793 = vsub.f32 %v7684, %v7792
  %v7794 = vand.u32 %v7793, 4294901760
  %v7795 = vsub.f32 %v7793, %v7794
  %v7796 = vand.u32 %v7795, 4294901760
  %7797 = vmatpush.msra.mxu0 %v7796
  %v7798 = vand.u32 %v7683, 4294901760
  %v7799 = vsub.f32 %v7683, %v7798
  %v7800 = vand.u32 %v7799, 4294901760
  %v7801 = vsub.f32 %v7799, %v7800
  %v7802 = vand.u32 %v7801, 4294901760
  %7803 = vmatpush.msra.mxu0 %v7802
  %v7804 = vand.u32 %v7704, 4294901760
  %7805 = vmatmul.f32.gmra.mxu0 %v7804
  %v7806 = vpop.f32.mrf.mxu0
  %v7807 = vadd.f32 %v7742, %v7806
  %v7808 = vand.u32 %v7707, 4294901760
  %7809 = vmatmul.f32.gmra.mxu0 %v7808
  %v7810 = vpop.f32.mrf.mxu0
  %v7811 = vadd.f32 %v7750, %v7810
  %v7812 = vand.u32 %v7710, 4294901760
  %7813 = vmatmul.f32.gmra.mxu0 %v7812
  %v7814 = vpop.f32.mrf.mxu0
  %v7815 = vadd.f32 %v7758, %v7814
  %v7816 = vand.u32 %v7713, 4294901760
  %7817 = vmatmul.f32.gmra.mxu0 %v7816
  %v7818 = vpop.f32.mrf.mxu0
  %v7819 = vadd.f32 %v7766, %v7818
  %7820 = vdwg.mxu0
  %7821 = vmatpush.msra.mxu0 0.0
  %7822 = vmatpush.msra.mxu0 0.0
  %7823 = vmatpush.msra.mxu0 0.0
  %7824 = vmatpush.msra.mxu0 0.0
  %7825 = vmatpush.msra.mxu0 0.0
  %7826 = vmatpush.msra.mxu0 0.0
  %7827 = vmatpush.msra.mxu0 0.0
  %7828 = vmatpush.msra.mxu0 0.0
  %7829 = vmatpush.msra.mxu0 0.0
  %7830 = vmatpush.msra.mxu0 0.0
  %7831 = vmatpush.msra.mxu0 0.0
  %7832 = vmatpush.msra.mxu0 0.0
  %v7833 = vand.u32 %v7686, 4294901760
  %v7834 = vsub.f32 %v7686, %v7833
  %7835 = vmatpush.msra.mxu0 %v7834
  %v7836 = vand.u32 %v7685, 4294901760
  %v7837 = vsub.f32 %v7685, %v7836
  %7838 = vmatpush.msra.mxu0 %v7837
  %v7839 = vand.u32 %v7684, 4294901760
  %v7840 = vsub.f32 %v7684, %v7839
  %7841 = vmatpush.msra.mxu0 %v7840
  %v7842 = vand.u32 %v7683, 4294901760
  %v7843 = vsub.f32 %v7683, %v7842
  %7844 = vmatpush.msra.mxu0 %v7843
  %v7845 = vand.u32 %v7704, 4294901760
  %v7846 = vsub.f32 %v7704, %v7845
  %7847 = vmatmul.f32.gmra.mxu0 %v7846
  %v7848 = vpop.f32.mrf.mxu0
  %v7849 = vadd.f32 %v7807, %v7848
  %v7850 = vand.u32 %v7707, 4294901760
  %v7851 = vsub.f32 %v7707, %v7850
  %7852 = vmatmul.f32.gmra.mxu0 %v7851
  %v7853 = vpop.f32.mrf.mxu0
  %v7854 = vadd.f32 %v7811, %v7853
  %v7855 = vand.u32 %v7710, 4294901760
  %v7856 = vsub.f32 %v7710, %v7855
  %7857 = vmatmul.f32.gmra.mxu0 %v7856
  %v7858 = vpop.f32.mrf.mxu0
  %v7859 = vadd.f32 %v7815, %v7858
  %v7860 = vand.u32 %v7713, 4294901760
  %v7861 = vsub.f32 %v7713, %v7860
  %7862 = vmatmul.f32.gmra.mxu0 %v7861
  %v7863 = vpop.f32.mrf.mxu0
  %v7864 = vadd.f32 %v7819, %v7863
  %7865 = vdwg.mxu0
  %7866 = vmatpush.msra.mxu0 0.0
  %7867 = vmatpush.msra.mxu0 0.0
  %7868 = vmatpush.msra.mxu0 0.0
  %7869 = vmatpush.msra.mxu0 0.0
  %7870 = vmatpush.msra.mxu0 0.0
  %7871 = vmatpush.msra.mxu0 0.0
  %7872 = vmatpush.msra.mxu0 0.0
  %7873 = vmatpush.msra.mxu0 0.0
  %7874 = vmatpush.msra.mxu0 0.0
  %7875 = vmatpush.msra.mxu0 0.0
  %7876 = vmatpush.msra.mxu0 0.0
  %7877 = vmatpush.msra.mxu0 0.0
  %v7878 = vand.u32 %v7686, 4294901760
  %7879 = vmatpush.msra.mxu0 %v7878
  %v7880 = vand.u32 %v7685, 4294901760
  %7881 = vmatpush.msra.mxu0 %v7880
  %v7882 = vand.u32 %v7684, 4294901760
  %7883 = vmatpush.msra.mxu0 %v7882
  %v7884 = vand.u32 %v7683, 4294901760
  %7885 = vmatpush.msra.mxu0 %v7884
  %v7886 = vand.u32 %v7704, 4294901760
  %v7887 = vsub.f32 %v7704, %v7886
  %v7888 = vand.u32 %v7887, 4294901760
  %7889 = vmatmul.f32.gmra.mxu0 %v7888
  %v7890 = vpop.f32.mrf.mxu0
  %v7891 = vadd.f32 %v7849, %v7890
  %v7892 = vand.u32 %v7707, 4294901760
  %v7893 = vsub.f32 %v7707, %v7892
  %v7894 = vand.u32 %v7893, 4294901760
  %7895 = vmatmul.f32.gmra.mxu0 %v7894
  %v7896 = vpop.f32.mrf.mxu0
  %v7897 = vadd.f32 %v7854, %v7896
  %v7898 = vand.u32 %v7710, 4294901760
  %v7899 = vsub.f32 %v7710, %v7898
  %v7900 = vand.u32 %v7899, 4294901760
  %7901 = vmatmul.f32.gmra.mxu0 %v7900
  %v7902 = vpop.f32.mrf.mxu0
  %v7903 = vadd.f32 %v7859, %v7902
  %v7904 = vand.u32 %v7713, 4294901760
  %v7905 = vsub.f32 %v7713, %v7904
  %v7906 = vand.u32 %v7905, 4294901760
  %7907 = vmatmul.f32.gmra.mxu0 %v7906
  %v7908 = vpop.f32.mrf.mxu0
  %v7909 = vadd.f32 %v7864, %v7908
  %7910 = vdwg.mxu0
  %7911 = vmatpush.msra.mxu0 0.0
  %7912 = vmatpush.msra.mxu0 0.0
  %7913 = vmatpush.msra.mxu0 0.0
  %7914 = vmatpush.msra.mxu0 0.0
  %7915 = vmatpush.msra.mxu0 0.0
  %7916 = vmatpush.msra.mxu0 0.0
  %7917 = vmatpush.msra.mxu0 0.0
  %7918 = vmatpush.msra.mxu0 0.0
  %7919 = vmatpush.msra.mxu0 0.0
  %7920 = vmatpush.msra.mxu0 0.0
  %7921 = vmatpush.msra.mxu0 0.0
  %7922 = vmatpush.msra.mxu0 0.0
  %v7923 = vand.u32 %v7686, 4294901760
  %v7924 = vsub.f32 %v7686, %v7923
  %v7925 = vand.u32 %v7924, 4294901760
  %7926 = vmatpush.msra.mxu0 %v7925
  %v7927 = vand.u32 %v7685, 4294901760
  %v7928 = vsub.f32 %v7685, %v7927
  %v7929 = vand.u32 %v7928, 4294901760
  %7930 = vmatpush.msra.mxu0 %v7929
  %v7931 = vand.u32 %v7684, 4294901760
  %v7932 = vsub.f32 %v7684, %v7931
  %v7933 = vand.u32 %v7932, 4294901760
  %7934 = vmatpush.msra.mxu0 %v7933
  %v7935 = vand.u32 %v7683, 4294901760
  %v7936 = vsub.f32 %v7683, %v7935
  %v7937 = vand.u32 %v7936, 4294901760
  %7938 = vmatpush.msra.mxu0 %v7937
  %v7939 = vand.u32 %v7704, 4294901760
  %7940 = vmatmul.f32.gmra.mxu0 %v7939
  %v7941 = vpop.f32.mrf.mxu0
  %v7942 = vadd.f32 %v7891, %v7941
  %v7943 = vand.u32 %v7707, 4294901760
  %7944 = vmatmul.f32.gmra.mxu0 %v7943
  %v7945 = vpop.f32.mrf.mxu0
  %v7946 = vadd.f32 %v7897, %v7945
  %v7947 = vand.u32 %v7710, 4294901760
  %7948 = vmatmul.f32.gmra.mxu0 %v7947
  %v7949 = vpop.f32.mrf.mxu0
  %v7950 = vadd.f32 %v7903, %v7949
  %v7951 = vand.u32 %v7713, 4294901760
  %7952 = vmatmul.f32.gmra.mxu0 %v7951
  %v7953 = vpop.f32.mrf.mxu0
  %v7954 = vadd.f32 %v7909, %v7953
  %7955 = vdwg.mxu0
  %7956 = vmatpush.msra.mxu0 0.0
  %7957 = vmatpush.msra.mxu0 0.0
  %7958 = vmatpush.msra.mxu0 0.0
  %7959 = vmatpush.msra.mxu0 0.0
  %7960 = vmatpush.msra.mxu0 0.0
  %7961 = vmatpush.msra.mxu0 0.0
  %7962 = vmatpush.msra.mxu0 0.0
  %7963 = vmatpush.msra.mxu0 0.0
  %7964 = vmatpush.msra.mxu0 0.0
  %7965 = vmatpush.msra.mxu0 0.0
  %7966 = vmatpush.msra.mxu0 0.0
  %7967 = vmatpush.msra.mxu0 0.0
  %v7968 = vand.u32 %v7686, 4294901760
  %7969 = vmatpush.msra.mxu0 %v7968
  %v7970 = vand.u32 %v7685, 4294901760
  %7971 = vmatpush.msra.mxu0 %v7970
  %v7972 = vand.u32 %v7684, 4294901760
  %7973 = vmatpush.msra.mxu0 %v7972
  %v7974 = vand.u32 %v7683, 4294901760
  %7975 = vmatpush.msra.mxu0 %v7974
  %v7976 = vand.u32 %v7704, 4294901760
  %7977 = vmatmul.f32.gmra.mxu0 %v7976
  %v7978 = vpop.f32.mrf.mxu0
  %v7979 = vadd.f32 %v7942, %v7978
  %v7980 = vand.u32 %v7707, 4294901760
  %7981 = vmatmul.f32.gmra.mxu0 %v7980
  %v7982 = vpop.f32.mrf.mxu0
  %v7983 = vadd.f32 %v7946, %v7982
  %v7984 = vand.u32 %v7710, 4294901760
  %7985 = vmatmul.f32.gmra.mxu0 %v7984
  %v7986 = vpop.f32.mrf.mxu0
  %v7987 = vadd.f32 %v7950, %v7986
  %v7988 = vand.u32 %v7713, 4294901760
  %7989 = vmatmul.f32.gmra.mxu0 %v7988
  %v7990 = vpop.f32.mrf.mxu0
  %v7991 = vadd.f32 %v7954, %v7990
  %7992 = vdwg.mxu0
  %v7993 = vadd.f32 %v5623, %v7979
  %v7994 = vadd.f32 %v5624, %v7983
  %v7995 = vadd.f32 %v5625, %v7987
  %v7996 = vadd.f32 %v5626, %v7991
  %v7997 = vld [vmem:[%s5 + $0xc0] sm:$0xff]
  %v7998 = vld [vmem:[%s5 + $0xc8] sm:$0xff]
  %v7999 = vld [vmem:[%s5 + $0xd0] sm:$0xff]
  %v8000 = vld [vmem:[%s5 + $0xd8] sm:$0xff]
  %v8001 = vld [vmem:[%s5 + $0xe0] sm:$0xff]
  %v8002 = vld [vmem:[%s5 + $0xe8] sm:$0xff]
  %v8003 = vld [vmem:[%s5 + $0xf0] sm:$0xff]
  %v8004 = vld [vmem:[%s5 + $0xf8] sm:$0xff]
  %v8005 = vld [vmem:[%s5 + $0x100] sm:$0xff]
  %v8006 = vld [vmem:[%s5 + $0x108] sm:$0xff]
  %v8007 = vld [vmem:[%s5 + $0x110] sm:$0xff]
  %v8008 = vld [vmem:[%s5 + $0x118] sm:$0xff]
  %v8010 = vsel %vm3266, %v7997, 0
  %v8013 = vsel %vm3266, %v7998, 0
  %v8016 = vsel %vm3266, %v7999, 0
  %v8019 = vsel %vm3266, %v8000, 0
  %8021 = vmatpush.msra.mxu0 0.0
  %8022 = vmatpush.msra.mxu0 0.0
  %8023 = vmatpush.msra.mxu0 0.0
  %8024 = vmatpush.msra.mxu0 0.0
  %8025 = vmatpush.msra.mxu0 0.0
  %8026 = vmatpush.msra.mxu0 0.0
  %8027 = vmatpush.msra.mxu0 0.0
  %8028 = vmatpush.msra.mxu0 0.0
  %8029 = vmatpush.msra.mxu0 0.0
  %8030 = vmatpush.msra.mxu0 0.0
  %8031 = vmatpush.msra.mxu0 0.0
  %8032 = vmatpush.msra.mxu0 0.0
  %v8033 = vand.u32 %v7996, 4294901760
  %8034 = vmatpush.msra.mxu0 %v8033
  %v8035 = vand.u32 %v7995, 4294901760
  %8036 = vmatpush.msra.mxu0 %v8035
  %v8037 = vand.u32 %v7994, 4294901760
  %8038 = vmatpush.msra.mxu0 %v8037
  %v8039 = vand.u32 %v7993, 4294901760
  %8040 = vmatpush.msra.mxu0 %v8039
  %v8041 = vand.u32 %v8010, 4294901760
  %v8042 = vsub.f32 %v8010, %v8041
  %v8043 = vand.u32 %v8042, 4294901760
  %v8044 = vsub.f32 %v8042, %v8043
  %v8045 = vand.u32 %v8044, 4294901760
  %8046 = vmatmul.f32.gmra.mxu0 %v8045
  %v8047 = vpop.f32.mrf.mxu0
  %v8048 = vadd.f32 0.0, %v8047
  %v8049 = vand.u32 %v8013, 4294901760
  %v8050 = vsub.f32 %v8013, %v8049
  %v8051 = vand.u32 %v8050, 4294901760
  %v8052 = vsub.f32 %v8050, %v8051
  %v8053 = vand.u32 %v8052, 4294901760
  %8054 = vmatmul.f32.gmra.mxu0 %v8053
  %v8055 = vpop.f32.mrf.mxu0
  %v8056 = vadd.f32 0.0, %v8055
  %v8057 = vand.u32 %v8016, 4294901760
  %v8058 = vsub.f32 %v8016, %v8057
  %v8059 = vand.u32 %v8058, 4294901760
  %v8060 = vsub.f32 %v8058, %v8059
  %v8061 = vand.u32 %v8060, 4294901760
  %8062 = vmatmul.f32.gmra.mxu0 %v8061
  %v8063 = vpop.f32.mrf.mxu0
  %v8064 = vadd.f32 0.0, %v8063
  %v8065 = vand.u32 %v8019, 4294901760
  %v8066 = vsub.f32 %v8019, %v8065
  %v8067 = vand.u32 %v8066, 4294901760
  %v8068 = vsub.f32 %v8066, %v8067
  %v8069 = vand.u32 %v8068, 4294901760
  %8070 = vmatmul.f32.gmra.mxu0 %v8069
  %v8071 = vpop.f32.mrf.mxu0
  %v8072 = vadd.f32 0.0, %v8071
  %8073 = vdwg.mxu0
  %8074 = vmatpush.msra.mxu0 0.0
  %8075 = vmatpush.msra.mxu0 0.0
  %8076 = vmatpush.msra.mxu0 0.0
  %8077 = vmatpush.msra.mxu0 0.0
  %8078 = vmatpush.msra.mxu0 0.0
  %8079 = vmatpush.msra.mxu0 0.0
  %8080 = vmatpush.msra.mxu0 0.0
  %8081 = vmatpush.msra.mxu0 0.0
  %8082 = vmatpush.msra.mxu0 0.0
  %8083 = vmatpush.msra.mxu0 0.0
  %8084 = vmatpush.msra.mxu0 0.0
  %8085 = vmatpush.msra.mxu0 0.0
  %v8086 = vand.u32 %v7996, 4294901760
  %v8087 = vsub.f32 %v7996, %v8086
  %v8088 = vand.u32 %v8087, 4294901760
  %v8089 = vsub.f32 %v8087, %v8088
  %v8090 = vand.u32 %v8089, 4294901760
  %8091 = vmatpush.msra.mxu0 %v8090
  %v8092 = vand.u32 %v7995, 4294901760
  %v8093 = vsub.f32 %v7995, %v8092
  %v8094 = vand.u32 %v8093, 4294901760
  %v8095 = vsub.f32 %v8093, %v8094
  %v8096 = vand.u32 %v8095, 4294901760
  %8097 = vmatpush.msra.mxu0 %v8096
  %v8098 = vand.u32 %v7994, 4294901760
  %v8099 = vsub.f32 %v7994, %v8098
  %v8100 = vand.u32 %v8099, 4294901760
  %v8101 = vsub.f32 %v8099, %v8100
  %v8102 = vand.u32 %v8101, 4294901760
  %8103 = vmatpush.msra.mxu0 %v8102
  %v8104 = vand.u32 %v7993, 4294901760
  %v8105 = vsub.f32 %v7993, %v8104
  %v8106 = vand.u32 %v8105, 4294901760
  %v8107 = vsub.f32 %v8105, %v8106
  %v8108 = vand.u32 %v8107, 4294901760
  %8109 = vmatpush.msra.mxu0 %v8108
  %v8110 = vand.u32 %v8010, 4294901760
  %8111 = vmatmul.f32.gmra.mxu0 %v8110
  %v8112 = vpop.f32.mrf.mxu0
  %v8113 = vadd.f32 %v8048, %v8112
  %v8114 = vand.u32 %v8013, 4294901760
  %8115 = vmatmul.f32.gmra.mxu0 %v8114
  %v8116 = vpop.f32.mrf.mxu0
  %v8117 = vadd.f32 %v8056, %v8116
  %v8118 = vand.u32 %v8016, 4294901760
  %8119 = vmatmul.f32.gmra.mxu0 %v8118
  %v8120 = vpop.f32.mrf.mxu0
  %v8121 = vadd.f32 %v8064, %v8120
  %v8122 = vand.u32 %v8019, 4294901760
  %8123 = vmatmul.f32.gmra.mxu0 %v8122
  %v8124 = vpop.f32.mrf.mxu0
  %v8125 = vadd.f32 %v8072, %v8124
  %8126 = vdwg.mxu0
  %8127 = vmatpush.msra.mxu0 0.0
  %8128 = vmatpush.msra.mxu0 0.0
  %8129 = vmatpush.msra.mxu0 0.0
  %8130 = vmatpush.msra.mxu0 0.0
  %8131 = vmatpush.msra.mxu0 0.0
  %8132 = vmatpush.msra.mxu0 0.0
  %8133 = vmatpush.msra.mxu0 0.0
  %8134 = vmatpush.msra.mxu0 0.0
  %8135 = vmatpush.msra.mxu0 0.0
  %8136 = vmatpush.msra.mxu0 0.0
  %8137 = vmatpush.msra.mxu0 0.0
  %8138 = vmatpush.msra.mxu0 0.0
  %v8139 = vand.u32 %v7996, 4294901760
  %v8140 = vsub.f32 %v7996, %v8139
  %8141 = vmatpush.msra.mxu0 %v8140
  %v8142 = vand.u32 %v7995, 4294901760
  %v8143 = vsub.f32 %v7995, %v8142
  %8144 = vmatpush.msra.mxu0 %v8143
  %v8145 = vand.u32 %v7994, 4294901760
  %v8146 = vsub.f32 %v7994, %v8145
  %8147 = vmatpush.msra.mxu0 %v8146
  %v8148 = vand.u32 %v7993, 4294901760
  %v8149 = vsub.f32 %v7993, %v8148
  %8150 = vmatpush.msra.mxu0 %v8149
  %v8151 = vand.u32 %v8010, 4294901760
  %v8152 = vsub.f32 %v8010, %v8151
  %8153 = vmatmul.f32.gmra.mxu0 %v8152
  %v8154 = vpop.f32.mrf.mxu0
  %v8155 = vadd.f32 %v8113, %v8154
  %v8156 = vand.u32 %v8013, 4294901760
  %v8157 = vsub.f32 %v8013, %v8156
  %8158 = vmatmul.f32.gmra.mxu0 %v8157
  %v8159 = vpop.f32.mrf.mxu0
  %v8160 = vadd.f32 %v8117, %v8159
  %v8161 = vand.u32 %v8016, 4294901760
  %v8162 = vsub.f32 %v8016, %v8161
  %8163 = vmatmul.f32.gmra.mxu0 %v8162
  %v8164 = vpop.f32.mrf.mxu0
  %v8165 = vadd.f32 %v8121, %v8164
  %v8166 = vand.u32 %v8019, 4294901760
  %v8167 = vsub.f32 %v8019, %v8166
  %8168 = vmatmul.f32.gmra.mxu0 %v8167
  %v8169 = vpop.f32.mrf.mxu0
  %v8170 = vadd.f32 %v8125, %v8169
  %8171 = vdwg.mxu0
  %8172 = vmatpush.msra.mxu0 0.0
  %8173 = vmatpush.msra.mxu0 0.0
  %8174 = vmatpush.msra.mxu0 0.0
  %8175 = vmatpush.msra.mxu0 0.0
  %8176 = vmatpush.msra.mxu0 0.0
  %8177 = vmatpush.msra.mxu0 0.0
  %8178 = vmatpush.msra.mxu0 0.0
  %8179 = vmatpush.msra.mxu0 0.0
  %8180 = vmatpush.msra.mxu0 0.0
  %8181 = vmatpush.msra.mxu0 0.0
  %8182 = vmatpush.msra.mxu0 0.0
  %8183 = vmatpush.msra.mxu0 0.0
  %v8184 = vand.u32 %v7996, 4294901760
  %8185 = vmatpush.msra.mxu0 %v8184
  %v8186 = vand.u32 %v7995, 4294901760
  %8187 = vmatpush.msra.mxu0 %v8186
  %v8188 = vand.u32 %v7994, 4294901760
  %8189 = vmatpush.msra.mxu0 %v8188
  %v8190 = vand.u32 %v7993, 4294901760
  %8191 = vmatpush.msra.mxu0 %v8190
  %v8192 = vand.u32 %v8010, 4294901760
  %v8193 = vsub.f32 %v8010, %v8192
  %v8194 = vand.u32 %v8193, 4294901760
  %8195 = vmatmul.f32.gmra.mxu0 %v8194
  %v8196 = vpop.f32.mrf.mxu0
  %v8197 = vadd.f32 %v8155, %v8196
  %v8198 = vand.u32 %v8013, 4294901760
  %v8199 = vsub.f32 %v8013, %v8198
  %v8200 = vand.u32 %v8199, 4294901760
  %8201 = vmatmul.f32.gmra.mxu0 %v8200
  %v8202 = vpop.f32.mrf.mxu0
  %v8203 = vadd.f32 %v8160, %v8202
  %v8204 = vand.u32 %v8016, 4294901760
  %v8205 = vsub.f32 %v8016, %v8204
  %v8206 = vand.u32 %v8205, 4294901760
  %8207 = vmatmul.f32.gmra.mxu0 %v8206
  %v8208 = vpop.f32.mrf.mxu0
  %v8209 = vadd.f32 %v8165, %v8208
  %v8210 = vand.u32 %v8019, 4294901760
  %v8211 = vsub.f32 %v8019, %v8210
  %v8212 = vand.u32 %v8211, 4294901760
  %8213 = vmatmul.f32.gmra.mxu0 %v8212
  %v8214 = vpop.f32.mrf.mxu0
  %v8215 = vadd.f32 %v8170, %v8214
  %8216 = vdwg.mxu0
  %8217 = vmatpush.msra.mxu0 0.0
  %8218 = vmatpush.msra.mxu0 0.0
  %8219 = vmatpush.msra.mxu0 0.0
  %8220 = vmatpush.msra.mxu0 0.0
  %8221 = vmatpush.msra.mxu0 0.0
  %8222 = vmatpush.msra.mxu0 0.0
  %8223 = vmatpush.msra.mxu0 0.0
  %8224 = vmatpush.msra.mxu0 0.0
  %8225 = vmatpush.msra.mxu0 0.0
  %8226 = vmatpush.msra.mxu0 0.0
  %8227 = vmatpush.msra.mxu0 0.0
  %8228 = vmatpush.msra.mxu0 0.0
  %v8229 = vand.u32 %v7996, 4294901760
  %v8230 = vsub.f32 %v7996, %v8229
  %v8231 = vand.u32 %v8230, 4294901760
  %8232 = vmatpush.msra.mxu0 %v8231
  %v8233 = vand.u32 %v7995, 4294901760
  %v8234 = vsub.f32 %v7995, %v8233
  %v8235 = vand.u32 %v8234, 4294901760
  %8236 = vmatpush.msra.mxu0 %v8235
  %v8237 = vand.u32 %v7994, 4294901760
  %v8238 = vsub.f32 %v7994, %v8237
  %v8239 = vand.u32 %v8238, 4294901760
  %8240 = vmatpush.msra.mxu0 %v8239
  %v8241 = vand.u32 %v7993, 4294901760
  %v8242 = vsub.f32 %v7993, %v8241
  %v8243 = vand.u32 %v8242, 4294901760
  %8244 = vmatpush.msra.mxu0 %v8243
  %v8245 = vand.u32 %v8010, 4294901760
  %8246 = vmatmul.f32.gmra.mxu0 %v8245
  %v8247 = vpop.f32.mrf.mxu0
  %v8248 = vadd.f32 %v8197, %v8247
  %v8249 = vand.u32 %v8013, 4294901760
  %8250 = vmatmul.f32.gmra.mxu0 %v8249
  %v8251 = vpop.f32.mrf.mxu0
  %v8252 = vadd.f32 %v8203, %v8251
  %v8253 = vand.u32 %v8016, 4294901760
  %8254 = vmatmul.f32.gmra.mxu0 %v8253
  %v8255 = vpop.f32.mrf.mxu0
  %v8256 = vadd.f32 %v8209, %v8255
  %v8257 = vand.u32 %v8019, 4294901760
  %8258 = vmatmul.f32.gmra.mxu0 %v8257
  %v8259 = vpop.f32.mrf.mxu0
  %v8260 = vadd.f32 %v8215, %v8259
  %8261 = vdwg.mxu0
  %8262 = vmatpush.msra.mxu0 0.0
  %8263 = vmatpush.msra.mxu0 0.0
  %8264 = vmatpush.msra.mxu0 0.0
  %8265 = vmatpush.msra.mxu0 0.0
  %8266 = vmatpush.msra.mxu0 0.0
  %8267 = vmatpush.msra.mxu0 0.0
  %8268 = vmatpush.msra.mxu0 0.0
  %8269 = vmatpush.msra.mxu0 0.0
  %8270 = vmatpush.msra.mxu0 0.0
  %8271 = vmatpush.msra.mxu0 0.0
  %8272 = vmatpush.msra.mxu0 0.0
  %8273 = vmatpush.msra.mxu0 0.0
  %v8274 = vand.u32 %v7996, 4294901760
  %8275 = vmatpush.msra.mxu0 %v8274
  %v8276 = vand.u32 %v7995, 4294901760
  %8277 = vmatpush.msra.mxu0 %v8276
  %v8278 = vand.u32 %v7994, 4294901760
  %8279 = vmatpush.msra.mxu0 %v8278
  %v8280 = vand.u32 %v7993, 4294901760
  %8281 = vmatpush.msra.mxu0 %v8280
  %v8282 = vand.u32 %v8010, 4294901760
  %8283 = vmatmul.f32.gmra.mxu0 %v8282
  %v8284 = vpop.f32.mrf.mxu0
  %v8285 = vadd.f32 %v8248, %v8284
  %v8286 = vand.u32 %v8013, 4294901760
  %8287 = vmatmul.f32.gmra.mxu0 %v8286
  %v8288 = vpop.f32.mrf.mxu0
  %v8289 = vadd.f32 %v8252, %v8288
  %v8290 = vand.u32 %v8016, 4294901760
  %8291 = vmatmul.f32.gmra.mxu0 %v8290
  %v8292 = vpop.f32.mrf.mxu0
  %v8293 = vadd.f32 %v8256, %v8292
  %v8294 = vand.u32 %v8019, 4294901760
  %8295 = vmatmul.f32.gmra.mxu0 %v8294
  %v8296 = vpop.f32.mrf.mxu0
  %v8297 = vadd.f32 %v8260, %v8296
  %8298 = vdwg.mxu0
  %v8300 = vsel %vm142, %v8285, 0
  %v8303 = vsel %vm142, %v8289, 0
  %v8306 = vsel %vm142, %v8293, 0
  %v8309 = vsel %vm142, %v8297, 0
  %8311 = vmatpush.msra.mxu0 0.0
  %8312 = vmatpush.msra.mxu0 0.0
  %8313 = vmatpush.msra.mxu0 0.0
  %8314 = vmatpush.msra.mxu0 0.0
  %8315 = vmatpush.msra.mxu0 0.0
  %8316 = vmatpush.msra.mxu0 0.0
  %8317 = vmatpush.msra.mxu0 0.0
  %8318 = vmatpush.msra.mxu0 0.0
  %8319 = vmatpush.msra.mxu0 0.0
  %8320 = vmatpush.msra.mxu0 0.0
  %8321 = vmatpush.msra.mxu0 0.0
  %8322 = vmatpush.msra.mxu0 0.0
  %8323 = vmatpush.msra.mxu0 0.0
  %8324 = vmatpush.msra.mxu0 0.0
  %v8325 = vand.u32 %v3252, 4294901760
  %8326 = vmatpush.msra.mxu0 %v8325
  %v8327 = vand.u32 %v3250, 4294901760
  %8328 = vmatpush.msra.mxu0 %v8327
  %v8329 = vand.u32 %v8300, 4294901760
  %v8330 = vsub.f32 %v8300, %v8329
  %v8331 = vand.u32 %v8330, 4294901760
  %v8332 = vsub.f32 %v8330, %v8331
  %v8333 = vand.u32 %v8332, 4294901760
  %8334 = vmatmul.f32.gmra.mxu0 %v8333
  %v8335 = vpop.f32.mrf.mxu0
  %v8336 = vadd.f32 0.0, %v8335
  %v8337 = vand.u32 %v8303, 4294901760
  %v8338 = vsub.f32 %v8303, %v8337
  %v8339 = vand.u32 %v8338, 4294901760
  %v8340 = vsub.f32 %v8338, %v8339
  %v8341 = vand.u32 %v8340, 4294901760
  %8342 = vmatmul.f32.gmra.mxu0 %v8341
  %v8343 = vpop.f32.mrf.mxu0
  %v8344 = vadd.f32 0.0, %v8343
  %v8345 = vand.u32 %v8306, 4294901760
  %v8346 = vsub.f32 %v8306, %v8345
  %v8347 = vand.u32 %v8346, 4294901760
  %v8348 = vsub.f32 %v8346, %v8347
  %v8349 = vand.u32 %v8348, 4294901760
  %8350 = vmatmul.f32.gmra.mxu0 %v8349
  %v8351 = vpop.f32.mrf.mxu0
  %v8352 = vadd.f32 0.0, %v8351
  %v8353 = vand.u32 %v8309, 4294901760
  %v8354 = vsub.f32 %v8309, %v8353
  %v8355 = vand.u32 %v8354, 4294901760
  %v8356 = vsub.f32 %v8354, %v8355
  %v8357 = vand.u32 %v8356, 4294901760
  %8358 = vmatmul.f32.gmra.mxu0 %v8357
  %v8359 = vpop.f32.mrf.mxu0
  %v8360 = vadd.f32 0.0, %v8359
  %8361 = vdwg.mxu0
  %8362 = vmatpush.msra.mxu0 0.0
  %8363 = vmatpush.msra.mxu0 0.0
  %8364 = vmatpush.msra.mxu0 0.0
  %8365 = vmatpush.msra.mxu0 0.0
  %8366 = vmatpush.msra.mxu0 0.0
  %8367 = vmatpush.msra.mxu0 0.0
  %8368 = vmatpush.msra.mxu0 0.0
  %8369 = vmatpush.msra.mxu0 0.0
  %8370 = vmatpush.msra.mxu0 0.0
  %8371 = vmatpush.msra.mxu0 0.0
  %8372 = vmatpush.msra.mxu0 0.0
  %8373 = vmatpush.msra.mxu0 0.0
  %8374 = vmatpush.msra.mxu0 0.0
  %8375 = vmatpush.msra.mxu0 0.0
  %v8376 = vand.u32 %v3252, 4294901760
  %v8377 = vsub.f32 %v3252, %v8376
  %v8378 = vand.u32 %v8377, 4294901760
  %v8379 = vsub.f32 %v8377, %v8378
  %v8380 = vand.u32 %v8379, 4294901760
  %8381 = vmatpush.msra.mxu0 %v8380
  %v8382 = vand.u32 %v3250, 4294901760
  %v8383 = vsub.f32 %v3250, %v8382
  %v8384 = vand.u32 %v8383, 4294901760
  %v8385 = vsub.f32 %v8383, %v8384
  %v8386 = vand.u32 %v8385, 4294901760
  %8387 = vmatpush.msra.mxu0 %v8386
  %v8388 = vand.u32 %v8300, 4294901760
  %8389 = vmatmul.f32.gmra.mxu0 %v8388
  %v8390 = vpop.f32.mrf.mxu0
  %v8391 = vadd.f32 %v8336, %v8390
  %v8392 = vand.u32 %v8303, 4294901760
  %8393 = vmatmul.f32.gmra.mxu0 %v8392
  %v8394 = vpop.f32.mrf.mxu0
  %v8395 = vadd.f32 %v8344, %v8394
  %v8396 = vand.u32 %v8306, 4294901760
  %8397 = vmatmul.f32.gmra.mxu0 %v8396
  %v8398 = vpop.f32.mrf.mxu0
  %v8399 = vadd.f32 %v8352, %v8398
  %v8400 = vand.u32 %v8309, 4294901760
  %8401 = vmatmul.f32.gmra.mxu0 %v8400
  %v8402 = vpop.f32.mrf.mxu0
  %v8403 = vadd.f32 %v8360, %v8402
  %8404 = vdwg.mxu0
  %8405 = vmatpush.msra.mxu0 0.0
  %8406 = vmatpush.msra.mxu0 0.0
  %8407 = vmatpush.msra.mxu0 0.0
  %8408 = vmatpush.msra.mxu0 0.0
  %8409 = vmatpush.msra.mxu0 0.0
  %8410 = vmatpush.msra.mxu0 0.0
  %8411 = vmatpush.msra.mxu0 0.0
  %8412 = vmatpush.msra.mxu0 0.0
  %8413 = vmatpush.msra.mxu0 0.0
  %8414 = vmatpush.msra.mxu0 0.0
  %8415 = vmatpush.msra.mxu0 0.0
  %8416 = vmatpush.msra.mxu0 0.0
  %8417 = vmatpush.msra.mxu0 0.0
  %8418 = vmatpush.msra.mxu0 0.0
  %v8419 = vand.u32 %v3252, 4294901760
  %v8420 = vsub.f32 %v3252, %v8419
  %8421 = vmatpush.msra.mxu0 %v8420
  %v8422 = vand.u32 %v3250, 4294901760
  %v8423 = vsub.f32 %v3250, %v8422
  %8424 = vmatpush.msra.mxu0 %v8423
  %v8425 = vand.u32 %v8300, 4294901760
  %v8426 = vsub.f32 %v8300, %v8425
  %8427 = vmatmul.f32.gmra.mxu0 %v8426
  %v8428 = vpop.f32.mrf.mxu0
  %v8429 = vadd.f32 %v8391, %v8428
  %v8430 = vand.u32 %v8303, 4294901760
  %v8431 = vsub.f32 %v8303, %v8430
  %8432 = vmatmul.f32.gmra.mxu0 %v8431
  %v8433 = vpop.f32.mrf.mxu0
  %v8434 = vadd.f32 %v8395, %v8433
  %v8435 = vand.u32 %v8306, 4294901760
  %v8436 = vsub.f32 %v8306, %v8435
  %8437 = vmatmul.f32.gmra.mxu0 %v8436
  %v8438 = vpop.f32.mrf.mxu0
  %v8439 = vadd.f32 %v8399, %v8438
  %v8440 = vand.u32 %v8309, 4294901760
  %v8441 = vsub.f32 %v8309, %v8440
  %8442 = vmatmul.f32.gmra.mxu0 %v8441
  %v8443 = vpop.f32.mrf.mxu0
  %v8444 = vadd.f32 %v8403, %v8443
  %8445 = vdwg.mxu0
  %8446 = vmatpush.msra.mxu0 0.0
  %8447 = vmatpush.msra.mxu0 0.0
  %8448 = vmatpush.msra.mxu0 0.0
  %8449 = vmatpush.msra.mxu0 0.0
  %8450 = vmatpush.msra.mxu0 0.0
  %8451 = vmatpush.msra.mxu0 0.0
  %8452 = vmatpush.msra.mxu0 0.0
  %8453 = vmatpush.msra.mxu0 0.0
  %8454 = vmatpush.msra.mxu0 0.0
  %8455 = vmatpush.msra.mxu0 0.0
  %8456 = vmatpush.msra.mxu0 0.0
  %8457 = vmatpush.msra.mxu0 0.0
  %8458 = vmatpush.msra.mxu0 0.0
  %8459 = vmatpush.msra.mxu0 0.0
  %v8460 = vand.u32 %v3252, 4294901760
  %8461 = vmatpush.msra.mxu0 %v8460
  %v8462 = vand.u32 %v3250, 4294901760
  %8463 = vmatpush.msra.mxu0 %v8462
  %v8464 = vand.u32 %v8300, 4294901760
  %v8465 = vsub.f32 %v8300, %v8464
  %v8466 = vand.u32 %v8465, 4294901760
  %8467 = vmatmul.f32.gmra.mxu0 %v8466
  %v8468 = vpop.f32.mrf.mxu0
  %v8469 = vadd.f32 %v8429, %v8468
  %v8470 = vand.u32 %v8303, 4294901760
  %v8471 = vsub.f32 %v8303, %v8470
  %v8472 = vand.u32 %v8471, 4294901760
  %8473 = vmatmul.f32.gmra.mxu0 %v8472
  %v8474 = vpop.f32.mrf.mxu0
  %v8475 = vadd.f32 %v8434, %v8474
  %v8476 = vand.u32 %v8306, 4294901760
  %v8477 = vsub.f32 %v8306, %v8476
  %v8478 = vand.u32 %v8477, 4294901760
  %8479 = vmatmul.f32.gmra.mxu0 %v8478
  %v8480 = vpop.f32.mrf.mxu0
  %v8481 = vadd.f32 %v8439, %v8480
  %v8482 = vand.u32 %v8309, 4294901760
  %v8483 = vsub.f32 %v8309, %v8482
  %v8484 = vand.u32 %v8483, 4294901760
  %8485 = vmatmul.f32.gmra.mxu0 %v8484
  %v8486 = vpop.f32.mrf.mxu0
  %v8487 = vadd.f32 %v8444, %v8486
  %8488 = vdwg.mxu0
  %8489 = vmatpush.msra.mxu0 0.0
  %8490 = vmatpush.msra.mxu0 0.0
  %8491 = vmatpush.msra.mxu0 0.0
  %8492 = vmatpush.msra.mxu0 0.0
  %8493 = vmatpush.msra.mxu0 0.0
  %8494 = vmatpush.msra.mxu0 0.0
  %8495 = vmatpush.msra.mxu0 0.0
  %8496 = vmatpush.msra.mxu0 0.0
  %8497 = vmatpush.msra.mxu0 0.0
  %8498 = vmatpush.msra.mxu0 0.0
  %8499 = vmatpush.msra.mxu0 0.0
  %8500 = vmatpush.msra.mxu0 0.0
  %8501 = vmatpush.msra.mxu0 0.0
  %8502 = vmatpush.msra.mxu0 0.0
  %v8503 = vand.u32 %v3252, 4294901760
  %v8504 = vsub.f32 %v3252, %v8503
  %v8505 = vand.u32 %v8504, 4294901760
  %8506 = vmatpush.msra.mxu0 %v8505
  %v8507 = vand.u32 %v3250, 4294901760
  %v8508 = vsub.f32 %v3250, %v8507
  %v8509 = vand.u32 %v8508, 4294901760
  %8510 = vmatpush.msra.mxu0 %v8509
  %v8511 = vand.u32 %v8300, 4294901760
  %8512 = vmatmul.f32.gmra.mxu0 %v8511
  %v8513 = vpop.f32.mrf.mxu0
  %v8514 = vadd.f32 %v8469, %v8513
  %v8515 = vand.u32 %v8303, 4294901760
  %8516 = vmatmul.f32.gmra.mxu0 %v8515
  %v8517 = vpop.f32.mrf.mxu0
  %v8518 = vadd.f32 %v8475, %v8517
  %v8519 = vand.u32 %v8306, 4294901760
  %8520 = vmatmul.f32.gmra.mxu0 %v8519
  %v8521 = vpop.f32.mrf.mxu0
  %v8522 = vadd.f32 %v8481, %v8521
  %v8523 = vand.u32 %v8309, 4294901760
  %8524 = vmatmul.f32.gmra.mxu0 %v8523
  %v8525 = vpop.f32.mrf.mxu0
  %v8526 = vadd.f32 %v8487, %v8525
  %8527 = vdwg.mxu0
  %8528 = vmatpush.msra.mxu0 0.0
  %8529 = vmatpush.msra.mxu0 0.0
  %8530 = vmatpush.msra.mxu0 0.0
  %8531 = vmatpush.msra.mxu0 0.0
  %8532 = vmatpush.msra.mxu0 0.0
  %8533 = vmatpush.msra.mxu0 0.0
  %8534 = vmatpush.msra.mxu0 0.0
  %8535 = vmatpush.msra.mxu0 0.0
  %8536 = vmatpush.msra.mxu0 0.0
  %8537 = vmatpush.msra.mxu0 0.0
  %8538 = vmatpush.msra.mxu0 0.0
  %8539 = vmatpush.msra.mxu0 0.0
  %8540 = vmatpush.msra.mxu0 0.0
  %8541 = vmatpush.msra.mxu0 0.0
  %v8542 = vand.u32 %v3252, 4294901760
  %8543 = vmatpush.msra.mxu0 %v8542
  %v8544 = vand.u32 %v3250, 4294901760
  %8545 = vmatpush.msra.mxu0 %v8544
  %v8546 = vand.u32 %v8300, 4294901760
  %8547 = vmatmul.f32.gmra.mxu0 %v8546
  %v8548 = vpop.f32.mrf.mxu0
  %v8549 = vadd.f32 %v8514, %v8548
  %v8550 = vand.u32 %v8303, 4294901760
  %8551 = vmatmul.f32.gmra.mxu0 %v8550
  %v8552 = vpop.f32.mrf.mxu0
  %v8553 = vadd.f32 %v8518, %v8552
  %v8554 = vand.u32 %v8306, 4294901760
  %8555 = vmatmul.f32.gmra.mxu0 %v8554
  %v8556 = vpop.f32.mrf.mxu0
  %v8557 = vadd.f32 %v8522, %v8556
  %v8558 = vand.u32 %v8309, 4294901760
  %8559 = vmatmul.f32.gmra.mxu0 %v8558
  %v8560 = vpop.f32.mrf.mxu0
  %v8561 = vadd.f32 %v8526, %v8560
  %8562 = vdwg.mxu0
  %8563 = vmatpush.msra.mxu0 0.0
  %8564 = vmatpush.msra.mxu0 0.0
  %8565 = vmatpush.msra.mxu0 0.0
  %8566 = vmatpush.msra.mxu0 0.0
  %8567 = vmatpush.msra.mxu0 0.0
  %8568 = vmatpush.msra.mxu0 0.0
  %8569 = vmatpush.msra.mxu0 0.0
  %8570 = vmatpush.msra.mxu0 0.0
  %8571 = vmatpush.msra.mxu0 0.0
  %8572 = vmatpush.msra.mxu0 0.0
  %8573 = vmatpush.msra.mxu0 0.0
  %8574 = vmatpush.msra.mxu0 0.0
  %8575 = vmatpush.msra.mxu0 0.0
  %8576 = vmatpush.msra.mxu0 0.0
  %v8577 = vand.u32 %v3253, 4294901760
  %8578 = vmatpush.msra.mxu0 %v8577
  %v8579 = vand.u32 %v3251, 4294901760
  %8580 = vmatpush.msra.mxu0 %v8579
  %v8581 = vand.u32 %v8300, 4294901760
  %v8582 = vsub.f32 %v8300, %v8581
  %v8583 = vand.u32 %v8582, 4294901760
  %v8584 = vsub.f32 %v8582, %v8583
  %v8585 = vand.u32 %v8584, 4294901760
  %8586 = vmatmul.f32.gmra.mxu0 %v8585
  %v8587 = vpop.f32.mrf.mxu0
  %v8588 = vadd.f32 0.0, %v8587
  %v8589 = vand.u32 %v8303, 4294901760
  %v8590 = vsub.f32 %v8303, %v8589
  %v8591 = vand.u32 %v8590, 4294901760
  %v8592 = vsub.f32 %v8590, %v8591
  %v8593 = vand.u32 %v8592, 4294901760
  %8594 = vmatmul.f32.gmra.mxu0 %v8593
  %v8595 = vpop.f32.mrf.mxu0
  %v8596 = vadd.f32 0.0, %v8595
  %v8597 = vand.u32 %v8306, 4294901760
  %v8598 = vsub.f32 %v8306, %v8597
  %v8599 = vand.u32 %v8598, 4294901760
  %v8600 = vsub.f32 %v8598, %v8599
  %v8601 = vand.u32 %v8600, 4294901760
  %8602 = vmatmul.f32.gmra.mxu0 %v8601
  %v8603 = vpop.f32.mrf.mxu0
  %v8604 = vadd.f32 0.0, %v8603
  %v8605 = vand.u32 %v8309, 4294901760
  %v8606 = vsub.f32 %v8309, %v8605
  %v8607 = vand.u32 %v8606, 4294901760
  %v8608 = vsub.f32 %v8606, %v8607
  %v8609 = vand.u32 %v8608, 4294901760
  %8610 = vmatmul.f32.gmra.mxu0 %v8609
  %v8611 = vpop.f32.mrf.mxu0
  %v8612 = vadd.f32 0.0, %v8611
  %8613 = vdwg.mxu0
  %8614 = vmatpush.msra.mxu0 0.0
  %8615 = vmatpush.msra.mxu0 0.0
  %8616 = vmatpush.msra.mxu0 0.0
  %8617 = vmatpush.msra.mxu0 0.0
  %8618 = vmatpush.msra.mxu0 0.0
  %8619 = vmatpush.msra.mxu0 0.0
  %8620 = vmatpush.msra.mxu0 0.0
  %8621 = vmatpush.msra.mxu0 0.0
  %8622 = vmatpush.msra.mxu0 0.0
  %8623 = vmatpush.msra.mxu0 0.0
  %8624 = vmatpush.msra.mxu0 0.0
  %8625 = vmatpush.msra.mxu0 0.0
  %8626 = vmatpush.msra.mxu0 0.0
  %8627 = vmatpush.msra.mxu0 0.0
  %v8628 = vand.u32 %v3253, 4294901760
  %v8629 = vsub.f32 %v3253, %v8628
  %v8630 = vand.u32 %v8629, 4294901760
  %v8631 = vsub.f32 %v8629, %v8630
  %v8632 = vand.u32 %v8631, 4294901760
  %8633 = vmatpush.msra.mxu0 %v8632
  %v8634 = vand.u32 %v3251, 4294901760
  %v8635 = vsub.f32 %v3251, %v8634
  %v8636 = vand.u32 %v8635, 4294901760
  %v8637 = vsub.f32 %v8635, %v8636
  %v8638 = vand.u32 %v8637, 4294901760
  %8639 = vmatpush.msra.mxu0 %v8638
  %v8640 = vand.u32 %v8300, 4294901760
  %8641 = vmatmul.f32.gmra.mxu0 %v8640
  %v8642 = vpop.f32.mrf.mxu0
  %v8643 = vadd.f32 %v8588, %v8642
  %v8644 = vand.u32 %v8303, 4294901760
  %8645 = vmatmul.f32.gmra.mxu0 %v8644
  %v8646 = vpop.f32.mrf.mxu0
  %v8647 = vadd.f32 %v8596, %v8646
  %v8648 = vand.u32 %v8306, 4294901760
  %8649 = vmatmul.f32.gmra.mxu0 %v8648
  %v8650 = vpop.f32.mrf.mxu0
  %v8651 = vadd.f32 %v8604, %v8650
  %v8652 = vand.u32 %v8309, 4294901760
  %8653 = vmatmul.f32.gmra.mxu0 %v8652
  %v8654 = vpop.f32.mrf.mxu0
  %v8655 = vadd.f32 %v8612, %v8654
  %8656 = vdwg.mxu0
  %8657 = vmatpush.msra.mxu0 0.0
  %8658 = vmatpush.msra.mxu0 0.0
  %8659 = vmatpush.msra.mxu0 0.0
  %8660 = vmatpush.msra.mxu0 0.0
  %8661 = vmatpush.msra.mxu0 0.0
  %8662 = vmatpush.msra.mxu0 0.0
  %8663 = vmatpush.msra.mxu0 0.0
  %8664 = vmatpush.msra.mxu0 0.0
  %8665 = vmatpush.msra.mxu0 0.0
  %8666 = vmatpush.msra.mxu0 0.0
  %8667 = vmatpush.msra.mxu0 0.0
  %8668 = vmatpush.msra.mxu0 0.0
  %8669 = vmatpush.msra.mxu0 0.0
  %8670 = vmatpush.msra.mxu0 0.0
  %v8671 = vand.u32 %v3253, 4294901760
  %v8672 = vsub.f32 %v3253, %v8671
  %8673 = vmatpush.msra.mxu0 %v8672
  %v8674 = vand.u32 %v3251, 4294901760
  %v8675 = vsub.f32 %v3251, %v8674
  %8676 = vmatpush.msra.mxu0 %v8675
  %v8677 = vand.u32 %v8300, 4294901760
  %v8678 = vsub.f32 %v8300, %v8677
  %8679 = vmatmul.f32.gmra.mxu0 %v8678
  %v8680 = vpop.f32.mrf.mxu0
  %v8681 = vadd.f32 %v8643, %v8680
  %v8682 = vand.u32 %v8303, 4294901760
  %v8683 = vsub.f32 %v8303, %v8682
  %8684 = vmatmul.f32.gmra.mxu0 %v8683
  %v8685 = vpop.f32.mrf.mxu0
  %v8686 = vadd.f32 %v8647, %v8685
  %v8687 = vand.u32 %v8306, 4294901760
  %v8688 = vsub.f32 %v8306, %v8687
  %8689 = vmatmul.f32.gmra.mxu0 %v8688
  %v8690 = vpop.f32.mrf.mxu0
  %v8691 = vadd.f32 %v8651, %v8690
  %v8692 = vand.u32 %v8309, 4294901760
  %v8693 = vsub.f32 %v8309, %v8692
  %8694 = vmatmul.f32.gmra.mxu0 %v8693
  %v8695 = vpop.f32.mrf.mxu0
  %v8696 = vadd.f32 %v8655, %v8695
  %8697 = vdwg.mxu0
  %8698 = vmatpush.msra.mxu0 0.0
  %8699 = vmatpush.msra.mxu0 0.0
  %8700 = vmatpush.msra.mxu0 0.0
  %8701 = vmatpush.msra.mxu0 0.0
  %8702 = vmatpush.msra.mxu0 0.0
  %8703 = vmatpush.msra.mxu0 0.0
  %8704 = vmatpush.msra.mxu0 0.0
  %8705 = vmatpush.msra.mxu0 0.0
  %8706 = vmatpush.msra.mxu0 0.0
  %8707 = vmatpush.msra.mxu0 0.0
  %8708 = vmatpush.msra.mxu0 0.0
  %8709 = vmatpush.msra.mxu0 0.0
  %8710 = vmatpush.msra.mxu0 0.0
  %8711 = vmatpush.msra.mxu0 0.0
  %v8712 = vand.u32 %v3253, 4294901760
  %8713 = vmatpush.msra.mxu0 %v8712
  %v8714 = vand.u32 %v3251, 4294901760
  %8715 = vmatpush.msra.mxu0 %v8714
  %v8716 = vand.u32 %v8300, 4294901760
  %v8717 = vsub.f32 %v8300, %v8716
  %v8718 = vand.u32 %v8717, 4294901760
  %8719 = vmatmul.f32.gmra.mxu0 %v8718
  %v8720 = vpop.f32.mrf.mxu0
  %v8721 = vadd.f32 %v8681, %v8720
  %v8722 = vand.u32 %v8303, 4294901760
  %v8723 = vsub.f32 %v8303, %v8722
  %v8724 = vand.u32 %v8723, 4294901760
  %8725 = vmatmul.f32.gmra.mxu0 %v8724
  %v8726 = vpop.f32.mrf.mxu0
  %v8727 = vadd.f32 %v8686, %v8726
  %v8728 = vand.u32 %v8306, 4294901760
  %v8729 = vsub.f32 %v8306, %v8728
  %v8730 = vand.u32 %v8729, 4294901760
  %8731 = vmatmul.f32.gmra.mxu0 %v8730
  %v8732 = vpop.f32.mrf.mxu0
  %v8733 = vadd.f32 %v8691, %v8732
  %v8734 = vand.u32 %v8309, 4294901760
  %v8735 = vsub.f32 %v8309, %v8734
  %v8736 = vand.u32 %v8735, 4294901760
  %8737 = vmatmul.f32.gmra.mxu0 %v8736
  %v8738 = vpop.f32.mrf.mxu0
  %v8739 = vadd.f32 %v8696, %v8738
  %8740 = vdwg.mxu0
  %8741 = vmatpush.msra.mxu0 0.0
  %8742 = vmatpush.msra.mxu0 0.0
  %8743 = vmatpush.msra.mxu0 0.0
  %8744 = vmatpush.msra.mxu0 0.0
  %8745 = vmatpush.msra.mxu0 0.0
  %8746 = vmatpush.msra.mxu0 0.0
  %8747 = vmatpush.msra.mxu0 0.0
  %8748 = vmatpush.msra.mxu0 0.0
  %8749 = vmatpush.msra.mxu0 0.0
  %8750 = vmatpush.msra.mxu0 0.0
  %8751 = vmatpush.msra.mxu0 0.0
  %8752 = vmatpush.msra.mxu0 0.0
  %8753 = vmatpush.msra.mxu0 0.0
  %8754 = vmatpush.msra.mxu0 0.0
  %v8755 = vand.u32 %v3253, 4294901760
  %v8756 = vsub.f32 %v3253, %v8755
  %v8757 = vand.u32 %v8756, 4294901760
  %8758 = vmatpush.msra.mxu0 %v8757
  %v8759 = vand.u32 %v3251, 4294901760
  %v8760 = vsub.f32 %v3251, %v8759
  %v8761 = vand.u32 %v8760, 4294901760
  %8762 = vmatpush.msra.mxu0 %v8761
  %v8763 = vand.u32 %v8300, 4294901760
  %8764 = vmatmul.f32.gmra.mxu0 %v8763
  %v8765 = vpop.f32.mrf.mxu0
  %v8766 = vadd.f32 %v8721, %v8765
  %v8767 = vand.u32 %v8303, 4294901760
  %8768 = vmatmul.f32.gmra.mxu0 %v8767
  %v8769 = vpop.f32.mrf.mxu0
  %v8770 = vadd.f32 %v8727, %v8769
  %v8771 = vand.u32 %v8306, 4294901760
  %8772 = vmatmul.f32.gmra.mxu0 %v8771
  %v8773 = vpop.f32.mrf.mxu0
  %v8774 = vadd.f32 %v8733, %v8773
  %v8775 = vand.u32 %v8309, 4294901760
  %8776 = vmatmul.f32.gmra.mxu0 %v8775
  %v8777 = vpop.f32.mrf.mxu0
  %v8778 = vadd.f32 %v8739, %v8777
  %8779 = vdwg.mxu0
  %8780 = vmatpush.msra.mxu0 0.0
  %8781 = vmatpush.msra.mxu0 0.0
  %8782 = vmatpush.msra.mxu0 0.0
  %8783 = vmatpush.msra.mxu0 0.0
  %8784 = vmatpush.msra.mxu0 0.0
  %8785 = vmatpush.msra.mxu0 0.0
  %8786 = vmatpush.msra.mxu0 0.0
  %8787 = vmatpush.msra.mxu0 0.0
  %8788 = vmatpush.msra.mxu0 0.0
  %8789 = vmatpush.msra.mxu0 0.0
  %8790 = vmatpush.msra.mxu0 0.0
  %8791 = vmatpush.msra.mxu0 0.0
  %8792 = vmatpush.msra.mxu0 0.0
  %8793 = vmatpush.msra.mxu0 0.0
  %v8794 = vand.u32 %v3253, 4294901760
  %8795 = vmatpush.msra.mxu0 %v8794
  %v8796 = vand.u32 %v3251, 4294901760
  %8797 = vmatpush.msra.mxu0 %v8796
  %v8798 = vand.u32 %v8300, 4294901760
  %8799 = vmatmul.f32.gmra.mxu0 %v8798
  %v8800 = vpop.f32.mrf.mxu0
  %v8801 = vadd.f32 %v8766, %v8800
  %v8802 = vand.u32 %v8303, 4294901760
  %8803 = vmatmul.f32.gmra.mxu0 %v8802
  %v8804 = vpop.f32.mrf.mxu0
  %v8805 = vadd.f32 %v8770, %v8804
  %v8806 = vand.u32 %v8306, 4294901760
  %8807 = vmatmul.f32.gmra.mxu0 %v8806
  %v8808 = vpop.f32.mrf.mxu0
  %v8809 = vadd.f32 %v8774, %v8808
  %v8810 = vand.u32 %v8309, 4294901760
  %8811 = vmatmul.f32.gmra.mxu0 %v8810
  %v8812 = vpop.f32.mrf.mxu0
  %v8813 = vadd.f32 %v8778, %v8812
  %8814 = vdwg.mxu0
  %v8815 = vmul.f32 %v3068, %v8549
  %v8816 = vmul.f32 %v3069, %v8801
  %v8817 = vmul.f32 %v3070, %v8553
  %v8818 = vmul.f32 %v3071, %v8805
  %v8819 = vmul.f32 %v3072, %v8557
  %v8820 = vmul.f32 %v3073, %v8809
  %v8821 = vmul.f32 %v3074, %v8561
  %v8822 = vmul.f32 %v3075, %v8813
  %v8823 = vand.u32 %v3222, 4294901760
  %8824 = vmatpush.msra.mxu0 %v8823
  %v8825 = vand.u32 %v3221, 4294901760
  %8826 = vmatpush.msra.mxu0 %v8825
  %v8827 = vand.u32 %v3220, 4294901760
  %8828 = vmatpush.msra.mxu0 %v8827
  %v8829 = vand.u32 %v3219, 4294901760
  %8830 = vmatpush.msra.mxu0 %v8829
  %v8831 = vand.u32 %v3218, 4294901760
  %8832 = vmatpush.msra.mxu0 %v8831
  %v8833 = vand.u32 %v3217, 4294901760
  %8834 = vmatpush.msra.mxu0 %v8833
  %v8835 = vand.u32 %v3216, 4294901760
  %8836 = vmatpush.msra.mxu0 %v8835
  %v8837 = vand.u32 %v3215, 4294901760
  %8838 = vmatpush.msra.mxu0 %v8837
  %v8839 = vand.u32 %v3214, 4294901760
  %8840 = vmatpush.msra.mxu0 %v8839
  %v8841 = vand.u32 %v3213, 4294901760
  %8842 = vmatpush.msra.mxu0 %v8841
  %v8843 = vand.u32 %v3212, 4294901760
  %8844 = vmatpush.msra.mxu0 %v8843
  %v8845 = vand.u32 %v3211, 4294901760
  %8846 = vmatpush.msra.mxu0 %v8845
  %v8847 = vand.u32 %v3210, 4294901760
  %8848 = vmatpush.msra.mxu0 %v8847
  %v8849 = vand.u32 %v3209, 4294901760
  %8850 = vmatpush.msra.mxu0 %v8849
  %v8851 = vand.u32 %v3208, 4294901760
  %8852 = vmatpush.msra.mxu0 %v8851
  %v8853 = vand.u32 %v3207, 4294901760
  %8854 = vmatpush.msra.mxu0 %v8853
  %v8855 = vand.u32 %v8815, 4294901760
  %v8856 = vsub.f32 %v8815, %v8855
  %v8857 = vand.u32 %v8856, 4294901760
  %v8858 = vsub.f32 %v8856, %v8857
  %v8859 = vand.u32 %v8858, 4294901760
  %8860 = vmatmul.f32.gmra.mxu0 %v8859
  %v8861 = vpop.f32.mrf.mxu0
  %v8862 = vadd.f32 0.0, %v8861
  %v8863 = vand.u32 %v8817, 4294901760
  %v8864 = vsub.f32 %v8817, %v8863
  %v8865 = vand.u32 %v8864, 4294901760
  %v8866 = vsub.f32 %v8864, %v8865
  %v8867 = vand.u32 %v8866, 4294901760
  %8868 = vmatmul.f32.gmra.mxu0 %v8867
  %v8869 = vpop.f32.mrf.mxu0
  %v8870 = vadd.f32 0.0, %v8869
  %v8871 = vand.u32 %v8819, 4294901760
  %v8872 = vsub.f32 %v8819, %v8871
  %v8873 = vand.u32 %v8872, 4294901760
  %v8874 = vsub.f32 %v8872, %v8873
  %v8875 = vand.u32 %v8874, 4294901760
  %8876 = vmatmul.f32.gmra.mxu0 %v8875
  %v8877 = vpop.f32.mrf.mxu0
  %v8878 = vadd.f32 0.0, %v8877
  %v8879 = vand.u32 %v8821, 4294901760
  %v8880 = vsub.f32 %v8821, %v8879
  %v8881 = vand.u32 %v8880, 4294901760
  %v8882 = vsub.f32 %v8880, %v8881
  %v8883 = vand.u32 %v8882, 4294901760
  %8884 = vmatmul.f32.gmra.mxu0 %v8883
  %v8885 = vpop.f32.mrf.mxu0
  %v8886 = vadd.f32 0.0, %v8885
  %8887 = vdwg.mxu0
  %v8888 = vand.u32 %v3222, 4294901760
  %v8889 = vsub.f32 %v3222, %v8888
  %v8890 = vand.u32 %v8889, 4294901760
  %v8891 = vsub.f32 %v8889, %v8890
  %v8892 = vand.u32 %v8891, 4294901760
  %8893 = vmatpush.msra.mxu0 %v8892
  %v8894 = vand.u32 %v3221, 4294901760
  %v8895 = vsub.f32 %v3221, %v8894
  %v8896 = vand.u32 %v8895, 4294901760
  %v8897 = vsub.f32 %v8895, %v8896
  %v8898 = vand.u32 %v8897, 4294901760
  %8899 = vmatpush.msra.mxu0 %v8898
  %v8900 = vand.u32 %v3220, 4294901760
  %v8901 = vsub.f32 %v3220, %v8900
  %v8902 = vand.u32 %v8901, 4294901760
  %v8903 = vsub.f32 %v8901, %v8902
  %v8904 = vand.u32 %v8903, 4294901760
  %8905 = vmatpush.msra.mxu0 %v8904
  %v8906 = vand.u32 %v3219, 4294901760
  %v8907 = vsub.f32 %v3219, %v8906
  %v8908 = vand.u32 %v8907, 4294901760
  %v8909 = vsub.f32 %v8907, %v8908
  %v8910 = vand.u32 %v8909, 4294901760
  %8911 = vmatpush.msra.mxu0 %v8910
  %v8912 = vand.u32 %v3218, 4294901760
  %v8913 = vsub.f32 %v3218, %v8912
  %v8914 = vand.u32 %v8913, 4294901760
  %v8915 = vsub.f32 %v8913, %v8914
  %v8916 = vand.u32 %v8915, 4294901760
  %8917 = vmatpush.msra.mxu0 %v8916
  %v8918 = vand.u32 %v3217, 4294901760
  %v8919 = vsub.f32 %v3217, %v8918
  %v8920 = vand.u32 %v8919, 4294901760
  %v8921 = vsub.f32 %v8919, %v8920
  %v8922 = vand.u32 %v8921, 4294901760
  %8923 = vmatpush.msra.mxu0 %v8922
  %v8924 = vand.u32 %v3216, 4294901760
  %v8925 = vsub.f32 %v3216, %v8924
  %v8926 = vand.u32 %v8925, 4294901760
  %v8927 = vsub.f32 %v8925, %v8926
  %v8928 = vand.u32 %v8927, 4294901760
  %8929 = vmatpush.msra.mxu0 %v8928
  %v8930 = vand.u32 %v3215, 4294901760
  %v8931 = vsub.f32 %v3215, %v8930
  %v8932 = vand.u32 %v8931, 4294901760
  %v8933 = vsub.f32 %v8931, %v8932
  %v8934 = vand.u32 %v8933, 4294901760
  %8935 = vmatpush.msra.mxu0 %v8934
  %v8936 = vand.u32 %v3214, 4294901760
  %v8937 = vsub.f32 %v3214, %v8936
  %v8938 = vand.u32 %v8937, 4294901760
  %v8939 = vsub.f32 %v8937, %v8938
  %v8940 = vand.u32 %v8939, 4294901760
  %8941 = vmatpush.msra.mxu0 %v8940
  %v8942 = vand.u32 %v3213, 4294901760
  %v8943 = vsub.f32 %v3213, %v8942
  %v8944 = vand.u32 %v8943, 4294901760
  %v8945 = vsub.f32 %v8943, %v8944
  %v8946 = vand.u32 %v8945, 4294901760
  %8947 = vmatpush.msra.mxu0 %v8946
  %v8948 = vand.u32 %v3212, 4294901760
  %v8949 = vsub.f32 %v3212, %v8948
  %v8950 = vand.u32 %v8949, 4294901760
  %v8951 = vsub.f32 %v8949, %v8950
  %v8952 = vand.u32 %v8951, 4294901760
  %8953 = vmatpush.msra.mxu0 %v8952
  %v8954 = vand.u32 %v3211, 4294901760
  %v8955 = vsub.f32 %v3211, %v8954
  %v8956 = vand.u32 %v8955, 4294901760
  %v8957 = vsub.f32 %v8955, %v8956
  %v8958 = vand.u32 %v8957, 4294901760
  %8959 = vmatpush.msra.mxu0 %v8958
  %v8960 = vand.u32 %v3210, 4294901760
  %v8961 = vsub.f32 %v3210, %v8960
  %v8962 = vand.u32 %v8961, 4294901760
  %v8963 = vsub.f32 %v8961, %v8962
  %v8964 = vand.u32 %v8963, 4294901760
  %8965 = vmatpush.msra.mxu0 %v8964
  %v8966 = vand.u32 %v3209, 4294901760
  %v8967 = vsub.f32 %v3209, %v8966
  %v8968 = vand.u32 %v8967, 4294901760
  %v8969 = vsub.f32 %v8967, %v8968
  %v8970 = vand.u32 %v8969, 4294901760
  %8971 = vmatpush.msra.mxu0 %v8970
  %v8972 = vand.u32 %v3208, 4294901760
  %v8973 = vsub.f32 %v3208, %v8972
  %v8974 = vand.u32 %v8973, 4294901760
  %v8975 = vsub.f32 %v8973, %v8974
  %v8976 = vand.u32 %v8975, 4294901760
  %8977 = vmatpush.msra.mxu0 %v8976
  %v8978 = vand.u32 %v3207, 4294901760
  %v8979 = vsub.f32 %v3207, %v8978
  %v8980 = vand.u32 %v8979, 4294901760
  %v8981 = vsub.f32 %v8979, %v8980
  %v8982 = vand.u32 %v8981, 4294901760
  %8983 = vmatpush.msra.mxu0 %v8982
  %v8984 = vand.u32 %v8815, 4294901760
  %8985 = vmatmul.f32.gmra.mxu0 %v8984
  %v8986 = vpop.f32.mrf.mxu0
  %v8987 = vadd.f32 %v8862, %v8986
  %v8988 = vand.u32 %v8817, 4294901760
  %8989 = vmatmul.f32.gmra.mxu0 %v8988
  %v8990 = vpop.f32.mrf.mxu0
  %v8991 = vadd.f32 %v8870, %v8990
  %v8992 = vand.u32 %v8819, 4294901760
  %8993 = vmatmul.f32.gmra.mxu0 %v8992
  %v8994 = vpop.f32.mrf.mxu0
  %v8995 = vadd.f32 %v8878, %v8994
  %v8996 = vand.u32 %v8821, 4294901760
  %8997 = vmatmul.f32.gmra.mxu0 %v8996
  %v8998 = vpop.f32.mrf.mxu0
  %v8999 = vadd.f32 %v8886, %v8998
  %9000 = vdwg.mxu0
  %v9001 = vand.u32 %v3222, 4294901760
  %v9002 = vsub.f32 %v3222, %v9001
  %9003 = vmatpush.msra.mxu0 %v9002
  %v9004 = vand.u32 %v3221, 4294901760
  %v9005 = vsub.f32 %v3221, %v9004
  %9006 = vmatpush.msra.mxu0 %v9005
  %v9007 = vand.u32 %v3220, 4294901760
  %v9008 = vsub.f32 %v3220, %v9007
  %9009 = vmatpush.msra.mxu0 %v9008
  %v9010 = vand.u32 %v3219, 4294901760
  %v9011 = vsub.f32 %v3219, %v9010
  %9012 = vmatpush.msra.mxu0 %v9011
  %v9013 = vand.u32 %v3218, 4294901760
  %v9014 = vsub.f32 %v3218, %v9013
  %9015 = vmatpush.msra.mxu0 %v9014
  %v9016 = vand.u32 %v3217, 4294901760
  %v9017 = vsub.f32 %v3217, %v9016
  %9018 = vmatpush.msra.mxu0 %v9017
  %v9019 = vand.u32 %v3216, 4294901760
  %v9020 = vsub.f32 %v3216, %v9019
  %9021 = vmatpush.msra.mxu0 %v9020
  %v9022 = vand.u32 %v3215, 4294901760
  %v9023 = vsub.f32 %v3215, %v9022
  %9024 = vmatpush.msra.mxu0 %v9023
  %v9025 = vand.u32 %v3214, 4294901760
  %v9026 = vsub.f32 %v3214, %v9025
  %9027 = vmatpush.msra.mxu0 %v9026
  %v9028 = vand.u32 %v3213, 4294901760
  %v9029 = vsub.f32 %v3213, %v9028
  %9030 = vmatpush.msra.mxu0 %v9029
  %v9031 = vand.u32 %v3212, 4294901760
  %v9032 = vsub.f32 %v3212, %v9031
  %9033 = vmatpush.msra.mxu0 %v9032
  %v9034 = vand.u32 %v3211, 4294901760
  %v9035 = vsub.f32 %v3211, %v9034
  %9036 = vmatpush.msra.mxu0 %v9035
  %v9037 = vand.u32 %v3210, 4294901760
  %v9038 = vsub.f32 %v3210, %v9037
  %9039 = vmatpush.msra.mxu0 %v9038
  %v9040 = vand.u32 %v3209, 4294901760
  %v9041 = vsub.f32 %v3209, %v9040
  %9042 = vmatpush.msra.mxu0 %v9041
  %v9043 = vand.u32 %v3208, 4294901760
  %v9044 = vsub.f32 %v3208, %v9043
  %9045 = vmatpush.msra.mxu0 %v9044
  %v9046 = vand.u32 %v3207, 4294901760
  %v9047 = vsub.f32 %v3207, %v9046
  %9048 = vmatpush.msra.mxu0 %v9047
  %v9049 = vand.u32 %v8815, 4294901760
  %v9050 = vsub.f32 %v8815, %v9049
  %9051 = vmatmul.f32.gmra.mxu0 %v9050
  %v9052 = vpop.f32.mrf.mxu0
  %v9053 = vadd.f32 %v8987, %v9052
  %v9054 = vand.u32 %v8817, 4294901760
  %v9055 = vsub.f32 %v8817, %v9054
  %9056 = vmatmul.f32.gmra.mxu0 %v9055
  %v9057 = vpop.f32.mrf.mxu0
  %v9058 = vadd.f32 %v8991, %v9057
  %v9059 = vand.u32 %v8819, 4294901760
  %v9060 = vsub.f32 %v8819, %v9059
  %9061 = vmatmul.f32.gmra.mxu0 %v9060
  %v9062 = vpop.f32.mrf.mxu0
  %v9063 = vadd.f32 %v8995, %v9062
  %v9064 = vand.u32 %v8821, 4294901760
  %v9065 = vsub.f32 %v8821, %v9064
  %9066 = vmatmul.f32.gmra.mxu0 %v9065
  %v9067 = vpop.f32.mrf.mxu0
  %v9068 = vadd.f32 %v8999, %v9067
  %9069 = vdwg.mxu0
  %v9070 = vand.u32 %v3222, 4294901760
  %9071 = vmatpush.msra.mxu0 %v9070
  %v9072 = vand.u32 %v3221, 4294901760
  %9073 = vmatpush.msra.mxu0 %v9072
  %v9074 = vand.u32 %v3220, 4294901760
  %9075 = vmatpush.msra.mxu0 %v9074
  %v9076 = vand.u32 %v3219, 4294901760
  %9077 = vmatpush.msra.mxu0 %v9076
  %v9078 = vand.u32 %v3218, 4294901760
  %9079 = vmatpush.msra.mxu0 %v9078
  %v9080 = vand.u32 %v3217, 4294901760
  %9081 = vmatpush.msra.mxu0 %v9080
  %v9082 = vand.u32 %v3216, 4294901760
  %9083 = vmatpush.msra.mxu0 %v9082
  %v9084 = vand.u32 %v3215, 4294901760
  %9085 = vmatpush.msra.mxu0 %v9084
  %v9086 = vand.u32 %v3214, 4294901760
  %9087 = vmatpush.msra.mxu0 %v9086
  %v9088 = vand.u32 %v3213, 4294901760
  %9089 = vmatpush.msra.mxu0 %v9088
  %v9090 = vand.u32 %v3212, 4294901760
  %9091 = vmatpush.msra.mxu0 %v9090
  %v9092 = vand.u32 %v3211, 4294901760
  %9093 = vmatpush.msra.mxu0 %v9092
  %v9094 = vand.u32 %v3210, 4294901760
  %9095 = vmatpush.msra.mxu0 %v9094
  %v9096 = vand.u32 %v3209, 4294901760
  %9097 = vmatpush.msra.mxu0 %v9096
  %v9098 = vand.u32 %v3208, 4294901760
  %9099 = vmatpush.msra.mxu0 %v9098
  %v9100 = vand.u32 %v3207, 4294901760
  %9101 = vmatpush.msra.mxu0 %v9100
  %v9102 = vand.u32 %v8815, 4294901760
  %v9103 = vsub.f32 %v8815, %v9102
  %v9104 = vand.u32 %v9103, 4294901760
  %9105 = vmatmul.f32.gmra.mxu0 %v9104
  %v9106 = vpop.f32.mrf.mxu0
  %v9107 = vadd.f32 %v9053, %v9106
  %v9108 = vand.u32 %v8817, 4294901760
  %v9109 = vsub.f32 %v8817, %v9108
  %v9110 = vand.u32 %v9109, 4294901760
  %9111 = vmatmul.f32.gmra.mxu0 %v9110
  %v9112 = vpop.f32.mrf.mxu0
  %v9113 = vadd.f32 %v9058, %v9112
  %v9114 = vand.u32 %v8819, 4294901760
  %v9115 = vsub.f32 %v8819, %v9114
  %v9116 = vand.u32 %v9115, 4294901760
  %9117 = vmatmul.f32.gmra.mxu0 %v9116
  %v9118 = vpop.f32.mrf.mxu0
  %v9119 = vadd.f32 %v9063, %v9118
  %v9120 = vand.u32 %v8821, 4294901760
  %v9121 = vsub.f32 %v8821, %v9120
  %v9122 = vand.u32 %v9121, 4294901760
  %9123 = vmatmul.f32.gmra.mxu0 %v9122
  %v9124 = vpop.f32.mrf.mxu0
  %v9125 = vadd.f32 %v9068, %v9124
  %9126 = vdwg.mxu0
  %v9127 = vand.u32 %v3222, 4294901760
  %v9128 = vsub.f32 %v3222, %v9127
  %v9129 = vand.u32 %v9128, 4294901760
  %9130 = vmatpush.msra.mxu0 %v9129
  %v9131 = vand.u32 %v3221, 4294901760
  %v9132 = vsub.f32 %v3221, %v9131
  %v9133 = vand.u32 %v9132, 4294901760
  %9134 = vmatpush.msra.mxu0 %v9133
  %v9135 = vand.u32 %v3220, 4294901760
  %v9136 = vsub.f32 %v3220, %v9135
  %v9137 = vand.u32 %v9136, 4294901760
  %9138 = vmatpush.msra.mxu0 %v9137
  %v9139 = vand.u32 %v3219, 4294901760
  %v9140 = vsub.f32 %v3219, %v9139
  %v9141 = vand.u32 %v9140, 4294901760
  %9142 = vmatpush.msra.mxu0 %v9141
  %v9143 = vand.u32 %v3218, 4294901760
  %v9144 = vsub.f32 %v3218, %v9143
  %v9145 = vand.u32 %v9144, 4294901760
  %9146 = vmatpush.msra.mxu0 %v9145
  %v9147 = vand.u32 %v3217, 4294901760
  %v9148 = vsub.f32 %v3217, %v9147
  %v9149 = vand.u32 %v9148, 4294901760
  %9150 = vmatpush.msra.mxu0 %v9149
  %v9151 = vand.u32 %v3216, 4294901760
  %v9152 = vsub.f32 %v3216, %v9151
  %v9153 = vand.u32 %v9152, 4294901760
  %9154 = vmatpush.msra.mxu0 %v9153
  %v9155 = vand.u32 %v3215, 4294901760
  %v9156 = vsub.f32 %v3215, %v9155
  %v9157 = vand.u32 %v9156, 4294901760
  %9158 = vmatpush.msra.mxu0 %v9157
  %v9159 = vand.u32 %v3214, 4294901760
  %v9160 = vsub.f32 %v3214, %v9159
  %v9161 = vand.u32 %v9160, 4294901760
  %9162 = vmatpush.msra.mxu0 %v9161
  %v9163 = vand.u32 %v3213, 4294901760
  %v9164 = vsub.f32 %v3213, %v9163
  %v9165 = vand.u32 %v9164, 4294901760
  %9166 = vmatpush.msra.mxu0 %v9165
  %v9167 = vand.u32 %v3212, 4294901760
  %v9168 = vsub.f32 %v3212, %v9167
  %v9169 = vand.u32 %v9168, 4294901760
  %9170 = vmatpush.msra.mxu0 %v9169
  %v9171 = vand.u32 %v3211, 4294901760
  %v9172 = vsub.f32 %v3211, %v9171
  %v9173 = vand.u32 %v9172, 4294901760
  %9174 = vmatpush.msra.mxu0 %v9173
  %v9175 = vand.u32 %v3210, 4294901760
  %v9176 = vsub.f32 %v3210, %v9175
  %v9177 = vand.u32 %v9176, 4294901760
  %9178 = vmatpush.msra.mxu0 %v9177
  %v9179 = vand.u32 %v3209, 4294901760
  %v9180 = vsub.f32 %v3209, %v9179
  %v9181 = vand.u32 %v9180, 4294901760
  %9182 = vmatpush.msra.mxu0 %v9181
  %v9183 = vand.u32 %v3208, 4294901760
  %v9184 = vsub.f32 %v3208, %v9183
  %v9185 = vand.u32 %v9184, 4294901760
  %9186 = vmatpush.msra.mxu0 %v9185
  %v9187 = vand.u32 %v3207, 4294901760
  %v9188 = vsub.f32 %v3207, %v9187
  %v9189 = vand.u32 %v9188, 4294901760
  %9190 = vmatpush.msra.mxu0 %v9189
  %v9191 = vand.u32 %v8815, 4294901760
  %9192 = vmatmul.f32.gmra.mxu0 %v9191
  %v9193 = vpop.f32.mrf.mxu0
  %v9194 = vadd.f32 %v9107, %v9193
  %v9195 = vand.u32 %v8817, 4294901760
  %9196 = vmatmul.f32.gmra.mxu0 %v9195
  %v9197 = vpop.f32.mrf.mxu0
  %v9198 = vadd.f32 %v9113, %v9197
  %v9199 = vand.u32 %v8819, 4294901760
  %9200 = vmatmul.f32.gmra.mxu0 %v9199
  %v9201 = vpop.f32.mrf.mxu0
  %v9202 = vadd.f32 %v9119, %v9201
  %v9203 = vand.u32 %v8821, 4294901760
  %9204 = vmatmul.f32.gmra.mxu0 %v9203
  %v9205 = vpop.f32.mrf.mxu0
  %v9206 = vadd.f32 %v9125, %v9205
  %9207 = vdwg.mxu0
  %v9208 = vand.u32 %v3222, 4294901760
  %9209 = vmatpush.msra.mxu0 %v9208
  %v9210 = vand.u32 %v3221, 4294901760
  %9211 = vmatpush.msra.mxu0 %v9210
  %v9212 = vand.u32 %v3220, 4294901760
  %9213 = vmatpush.msra.mxu0 %v9212
  %v9214 = vand.u32 %v3219, 4294901760
  %9215 = vmatpush.msra.mxu0 %v9214
  %v9216 = vand.u32 %v3218, 4294901760
  %9217 = vmatpush.msra.mxu0 %v9216
  %v9218 = vand.u32 %v3217, 4294901760
  %9219 = vmatpush.msra.mxu0 %v9218
  %v9220 = vand.u32 %v3216, 4294901760
  %9221 = vmatpush.msra.mxu0 %v9220
  %v9222 = vand.u32 %v3215, 4294901760
  %9223 = vmatpush.msra.mxu0 %v9222
  %v9224 = vand.u32 %v3214, 4294901760
  %9225 = vmatpush.msra.mxu0 %v9224
  %v9226 = vand.u32 %v3213, 4294901760
  %9227 = vmatpush.msra.mxu0 %v9226
  %v9228 = vand.u32 %v3212, 4294901760
  %9229 = vmatpush.msra.mxu0 %v9228
  %v9230 = vand.u32 %v3211, 4294901760
  %9231 = vmatpush.msra.mxu0 %v9230
  %v9232 = vand.u32 %v3210, 4294901760
  %9233 = vmatpush.msra.mxu0 %v9232
  %v9234 = vand.u32 %v3209, 4294901760
  %9235 = vmatpush.msra.mxu0 %v9234
  %v9236 = vand.u32 %v3208, 4294901760
  %9237 = vmatpush.msra.mxu0 %v9236
  %v9238 = vand.u32 %v3207, 4294901760
  %9239 = vmatpush.msra.mxu0 %v9238
  %v9240 = vand.u32 %v8815, 4294901760
  %9241 = vmatmul.f32.gmra.mxu0 %v9240
  %v9242 = vpop.f32.mrf.mxu0
  %v9243 = vadd.f32 %v9194, %v9242
  %v9244 = vand.u32 %v8817, 4294901760
  %9245 = vmatmul.f32.gmra.mxu0 %v9244
  %v9246 = vpop.f32.mrf.mxu0
  %v9247 = vadd.f32 %v9198, %v9246
  %v9248 = vand.u32 %v8819, 4294901760
  %9249 = vmatmul.f32.gmra.mxu0 %v9248
  %v9250 = vpop.f32.mrf.mxu0
  %v9251 = vadd.f32 %v9202, %v9250
  %v9252 = vand.u32 %v8821, 4294901760
  %9253 = vmatmul.f32.gmra.mxu0 %v9252
  %v9254 = vpop.f32.mrf.mxu0
  %v9255 = vadd.f32 %v9206, %v9254
  %9256 = vdwg.mxu0
  %v9257 = vand.u32 %v3238, 4294901760
  %9258 = vmatpush.msra.mxu0 %v9257
  %v9259 = vand.u32 %v3237, 4294901760
  %9260 = vmatpush.msra.mxu0 %v9259
  %v9261 = vand.u32 %v3236, 4294901760
  %9262 = vmatpush.msra.mxu0 %v9261
  %v9263 = vand.u32 %v3235, 4294901760
  %9264 = vmatpush.msra.mxu0 %v9263
  %v9265 = vand.u32 %v3234, 4294901760
  %9266 = vmatpush.msra.mxu0 %v9265
  %v9267 = vand.u32 %v3233, 4294901760
  %9268 = vmatpush.msra.mxu0 %v9267
  %v9269 = vand.u32 %v3232, 4294901760
  %9270 = vmatpush.msra.mxu0 %v9269
  %v9271 = vand.u32 %v3231, 4294901760
  %9272 = vmatpush.msra.mxu0 %v9271
  %v9273 = vand.u32 %v3230, 4294901760
  %9274 = vmatpush.msra.mxu0 %v9273
  %v9275 = vand.u32 %v3229, 4294901760
  %9276 = vmatpush.msra.mxu0 %v9275
  %v9277 = vand.u32 %v3228, 4294901760
  %9278 = vmatpush.msra.mxu0 %v9277
  %v9279 = vand.u32 %v3227, 4294901760
  %9280 = vmatpush.msra.mxu0 %v9279
  %v9281 = vand.u32 %v3226, 4294901760
  %9282 = vmatpush.msra.mxu0 %v9281
  %v9283 = vand.u32 %v3225, 4294901760
  %9284 = vmatpush.msra.mxu0 %v9283
  %v9285 = vand.u32 %v3224, 4294901760
  %9286 = vmatpush.msra.mxu0 %v9285
  %v9287 = vand.u32 %v3223, 4294901760
  %9288 = vmatpush.msra.mxu0 %v9287
  %v9289 = vand.u32 %v8816, 4294901760
  %v9290 = vsub.f32 %v8816, %v9289
  %v9291 = vand.u32 %v9290, 4294901760
  %v9292 = vsub.f32 %v9290, %v9291
  %v9293 = vand.u32 %v9292, 4294901760
  %9294 = vmatmul.f32.gmra.mxu0 %v9293
  %v9295 = vpop.f32.mrf.mxu0
  %v9296 = vadd.f32 %v9243, %v9295
  %v9297 = vand.u32 %v8818, 4294901760
  %v9298 = vsub.f32 %v8818, %v9297
  %v9299 = vand.u32 %v9298, 4294901760
  %v9300 = vsub.f32 %v9298, %v9299
  %v9301 = vand.u32 %v9300, 4294901760
  %9302 = vmatmul.f32.gmra.mxu0 %v9301
  %v9303 = vpop.f32.mrf.mxu0
  %v9304 = vadd.f32 %v9247, %v9303
  %v9305 = vand.u32 %v8820, 4294901760
  %v9306 = vsub.f32 %v8820, %v9305
  %v9307 = vand.u32 %v9306, 4294901760
  %v9308 = vsub.f32 %v9306, %v9307
  %v9309 = vand.u32 %v9308, 4294901760
  %9310 = vmatmul.f32.gmra.mxu0 %v9309
  %v9311 = vpop.f32.mrf.mxu0
  %v9312 = vadd.f32 %v9251, %v9311
  %v9313 = vand.u32 %v8822, 4294901760
  %v9314 = vsub.f32 %v8822, %v9313
  %v9315 = vand.u32 %v9314, 4294901760
  %v9316 = vsub.f32 %v9314, %v9315
  %v9317 = vand.u32 %v9316, 4294901760
  %9318 = vmatmul.f32.gmra.mxu0 %v9317
  %v9319 = vpop.f32.mrf.mxu0
  %v9320 = vadd.f32 %v9255, %v9319
  %9321 = vdwg.mxu0
  %v9322 = vand.u32 %v3238, 4294901760
  %v9323 = vsub.f32 %v3238, %v9322
  %v9324 = vand.u32 %v9323, 4294901760
  %v9325 = vsub.f32 %v9323, %v9324
  %v9326 = vand.u32 %v9325, 4294901760
  %9327 = vmatpush.msra.mxu0 %v9326
  %v9328 = vand.u32 %v3237, 4294901760
  %v9329 = vsub.f32 %v3237, %v9328
  %v9330 = vand.u32 %v9329, 4294901760
  %v9331 = vsub.f32 %v9329, %v9330
  %v9332 = vand.u32 %v9331, 4294901760
  %9333 = vmatpush.msra.mxu0 %v9332
  %v9334 = vand.u32 %v3236, 4294901760
  %v9335 = vsub.f32 %v3236, %v9334
  %v9336 = vand.u32 %v9335, 4294901760
  %v9337 = vsub.f32 %v9335, %v9336
  %v9338 = vand.u32 %v9337, 4294901760
  %9339 = vmatpush.msra.mxu0 %v9338
  %v9340 = vand.u32 %v3235, 4294901760
  %v9341 = vsub.f32 %v3235, %v9340
  %v9342 = vand.u32 %v9341, 4294901760
  %v9343 = vsub.f32 %v9341, %v9342
  %v9344 = vand.u32 %v9343, 4294901760
  %9345 = vmatpush.msra.mxu0 %v9344
  %v9346 = vand.u32 %v3234, 4294901760
  %v9347 = vsub.f32 %v3234, %v9346
  %v9348 = vand.u32 %v9347, 4294901760
  %v9349 = vsub.f32 %v9347, %v9348
  %v9350 = vand.u32 %v9349, 4294901760
  %9351 = vmatpush.msra.mxu0 %v9350
  %v9352 = vand.u32 %v3233, 4294901760
  %v9353 = vsub.f32 %v3233, %v9352
  %v9354 = vand.u32 %v9353, 4294901760
  %v9355 = vsub.f32 %v9353, %v9354
  %v9356 = vand.u32 %v9355, 4294901760
  %9357 = vmatpush.msra.mxu0 %v9356
  %v9358 = vand.u32 %v3232, 4294901760
  %v9359 = vsub.f32 %v3232, %v9358
  %v9360 = vand.u32 %v9359, 4294901760
  %v9361 = vsub.f32 %v9359, %v9360
  %v9362 = vand.u32 %v9361, 4294901760
  %9363 = vmatpush.msra.mxu0 %v9362
  %v9364 = vand.u32 %v3231, 4294901760
  %v9365 = vsub.f32 %v3231, %v9364
  %v9366 = vand.u32 %v9365, 4294901760
  %v9367 = vsub.f32 %v9365, %v9366
  %v9368 = vand.u32 %v9367, 4294901760
  %9369 = vmatpush.msra.mxu0 %v9368
  %v9370 = vand.u32 %v3230, 4294901760
  %v9371 = vsub.f32 %v3230, %v9370
  %v9372 = vand.u32 %v9371, 4294901760
  %v9373 = vsub.f32 %v9371, %v9372
  %v9374 = vand.u32 %v9373, 4294901760
  %9375 = vmatpush.msra.mxu0 %v9374
  %v9376 = vand.u32 %v3229, 4294901760
  %v9377 = vsub.f32 %v3229, %v9376
  %v9378 = vand.u32 %v9377, 4294901760
  %v9379 = vsub.f32 %v9377, %v9378
  %v9380 = vand.u32 %v9379, 4294901760
  %9381 = vmatpush.msra.mxu0 %v9380
  %v9382 = vand.u32 %v3228, 4294901760
  %v9383 = vsub.f32 %v3228, %v9382
  %v9384 = vand.u32 %v9383, 4294901760
  %v9385 = vsub.f32 %v9383, %v9384
  %v9386 = vand.u32 %v9385, 4294901760
  %9387 = vmatpush.msra.mxu0 %v9386
  %v9388 = vand.u32 %v3227, 4294901760
  %v9389 = vsub.f32 %v3227, %v9388
  %v9390 = vand.u32 %v9389, 4294901760
  %v9391 = vsub.f32 %v9389, %v9390
  %v9392 = vand.u32 %v9391, 4294901760
  %9393 = vmatpush.msra.mxu0 %v9392
  %v9394 = vand.u32 %v3226, 4294901760
  %v9395 = vsub.f32 %v3226, %v9394
  %v9396 = vand.u32 %v9395, 4294901760
  %v9397 = vsub.f32 %v9395, %v9396
  %v9398 = vand.u32 %v9397, 4294901760
  %9399 = vmatpush.msra.mxu0 %v9398
  %v9400 = vand.u32 %v3225, 4294901760
  %v9401 = vsub.f32 %v3225, %v9400
  %v9402 = vand.u32 %v9401, 4294901760
  %v9403 = vsub.f32 %v9401, %v9402
  %v9404 = vand.u32 %v9403, 4294901760
  %9405 = vmatpush.msra.mxu0 %v9404
  %v9406 = vand.u32 %v3224, 4294901760
  %v9407 = vsub.f32 %v3224, %v9406
  %v9408 = vand.u32 %v9407, 4294901760
  %v9409 = vsub.f32 %v9407, %v9408
  %v9410 = vand.u32 %v9409, 4294901760
  %9411 = vmatpush.msra.mxu0 %v9410
  %v9412 = vand.u32 %v3223, 4294901760
  %v9413 = vsub.f32 %v3223, %v9412
  %v9414 = vand.u32 %v9413, 4294901760
  %v9415 = vsub.f32 %v9413, %v9414
  %v9416 = vand.u32 %v9415, 4294901760
  %9417 = vmatpush.msra.mxu0 %v9416
  %v9418 = vand.u32 %v8816, 4294901760
  %9419 = vmatmul.f32.gmra.mxu0 %v9418
  %v9420 = vpop.f32.mrf.mxu0
  %v9421 = vadd.f32 %v9296, %v9420
  %v9422 = vand.u32 %v8818, 4294901760
  %9423 = vmatmul.f32.gmra.mxu0 %v9422
  %v9424 = vpop.f32.mrf.mxu0
  %v9425 = vadd.f32 %v9304, %v9424
  %v9426 = vand.u32 %v8820, 4294901760
  %9427 = vmatmul.f32.gmra.mxu0 %v9426
  %v9428 = vpop.f32.mrf.mxu0
  %v9429 = vadd.f32 %v9312, %v9428
  %v9430 = vand.u32 %v8822, 4294901760
  %9431 = vmatmul.f32.gmra.mxu0 %v9430
  %v9432 = vpop.f32.mrf.mxu0
  %v9433 = vadd.f32 %v9320, %v9432
  %9434 = vdwg.mxu0
  %v9435 = vand.u32 %v3238, 4294901760
  %v9436 = vsub.f32 %v3238, %v9435
  %9437 = vmatpush.msra.mxu0 %v9436
  %v9438 = vand.u32 %v3237, 4294901760
  %v9439 = vsub.f32 %v3237, %v9438
  %9440 = vmatpush.msra.mxu0 %v9439
  %v9441 = vand.u32 %v3236, 4294901760
  %v9442 = vsub.f32 %v3236, %v9441
  %9443 = vmatpush.msra.mxu0 %v9442
  %v9444 = vand.u32 %v3235, 4294901760
  %v9445 = vsub.f32 %v3235, %v9444
  %9446 = vmatpush.msra.mxu0 %v9445
  %v9447 = vand.u32 %v3234, 4294901760
  %v9448 = vsub.f32 %v3234, %v9447
  %9449 = vmatpush.msra.mxu0 %v9448
  %v9450 = vand.u32 %v3233, 4294901760
  %v9451 = vsub.f32 %v3233, %v9450
  %9452 = vmatpush.msra.mxu0 %v9451
  %v9453 = vand.u32 %v3232, 4294901760
  %v9454 = vsub.f32 %v3232, %v9453
  %9455 = vmatpush.msra.mxu0 %v9454
  %v9456 = vand.u32 %v3231, 4294901760
  %v9457 = vsub.f32 %v3231, %v9456
  %9458 = vmatpush.msra.mxu0 %v9457
  %v9459 = vand.u32 %v3230, 4294901760
  %v9460 = vsub.f32 %v3230, %v9459
  %9461 = vmatpush.msra.mxu0 %v9460
  %v9462 = vand.u32 %v3229, 4294901760
  %v9463 = vsub.f32 %v3229, %v9462
  %9464 = vmatpush.msra.mxu0 %v9463
  %v9465 = vand.u32 %v3228, 4294901760
  %v9466 = vsub.f32 %v3228, %v9465
  %9467 = vmatpush.msra.mxu0 %v9466
  %v9468 = vand.u32 %v3227, 4294901760
  %v9469 = vsub.f32 %v3227, %v9468
  %9470 = vmatpush.msra.mxu0 %v9469
  %v9471 = vand.u32 %v3226, 4294901760
  %v9472 = vsub.f32 %v3226, %v9471
  %9473 = vmatpush.msra.mxu0 %v9472
  %v9474 = vand.u32 %v3225, 4294901760
  %v9475 = vsub.f32 %v3225, %v9474
  %9476 = vmatpush.msra.mxu0 %v9475
  %v9477 = vand.u32 %v3224, 4294901760
  %v9478 = vsub.f32 %v3224, %v9477
  %9479 = vmatpush.msra.mxu0 %v9478
  %v9480 = vand.u32 %v3223, 4294901760
  %v9481 = vsub.f32 %v3223, %v9480
  %9482 = vmatpush.msra.mxu0 %v9481
  %v9483 = vand.u32 %v8816, 4294901760
  %v9484 = vsub.f32 %v8816, %v9483
  %9485 = vmatmul.f32.gmra.mxu0 %v9484
  %v9486 = vpop.f32.mrf.mxu0
  %v9487 = vadd.f32 %v9421, %v9486
  %v9488 = vand.u32 %v8818, 4294901760
  %v9489 = vsub.f32 %v8818, %v9488
  %9490 = vmatmul.f32.gmra.mxu0 %v9489
  %v9491 = vpop.f32.mrf.mxu0
  %v9492 = vadd.f32 %v9425, %v9491
  %v9493 = vand.u32 %v8820, 4294901760
  %v9494 = vsub.f32 %v8820, %v9493
  %9495 = vmatmul.f32.gmra.mxu0 %v9494
  %v9496 = vpop.f32.mrf.mxu0
  %v9497 = vadd.f32 %v9429, %v9496
  %v9498 = vand.u32 %v8822, 4294901760
  %v9499 = vsub.f32 %v8822, %v9498
  %9500 = vmatmul.f32.gmra.mxu0 %v9499
  %v9501 = vpop.f32.mrf.mxu0
  %v9502 = vadd.f32 %v9433, %v9501
  %9503 = vdwg.mxu0
  %v9504 = vand.u32 %v3238, 4294901760
  %9505 = vmatpush.msra.mxu0 %v9504
  %v9506 = vand.u32 %v3237, 4294901760
  %9507 = vmatpush.msra.mxu0 %v9506
  %v9508 = vand.u32 %v3236, 4294901760
  %9509 = vmatpush.msra.mxu0 %v9508
  %v9510 = vand.u32 %v3235, 4294901760
  %9511 = vmatpush.msra.mxu0 %v9510
  %v9512 = vand.u32 %v3234, 4294901760
  %9513 = vmatpush.msra.mxu0 %v9512
  %v9514 = vand.u32 %v3233, 4294901760
  %9515 = vmatpush.msra.mxu0 %v9514
  %v9516 = vand.u32 %v3232, 4294901760
  %9517 = vmatpush.msra.mxu0 %v9516
  %v9518 = vand.u32 %v3231, 4294901760
  %9519 = vmatpush.msra.mxu0 %v9518
  %v9520 = vand.u32 %v3230, 4294901760
  %9521 = vmatpush.msra.mxu0 %v9520
  %v9522 = vand.u32 %v3229, 4294901760
  %9523 = vmatpush.msra.mxu0 %v9522
  %v9524 = vand.u32 %v3228, 4294901760
  %9525 = vmatpush.msra.mxu0 %v9524
  %v9526 = vand.u32 %v3227, 4294901760
  %9527 = vmatpush.msra.mxu0 %v9526
  %v9528 = vand.u32 %v3226, 4294901760
  %9529 = vmatpush.msra.mxu0 %v9528
  %v9530 = vand.u32 %v3225, 4294901760
  %9531 = vmatpush.msra.mxu0 %v9530
  %v9532 = vand.u32 %v3224, 4294901760
  %9533 = vmatpush.msra.mxu0 %v9532
  %v9534 = vand.u32 %v3223, 4294901760
  %9535 = vmatpush.msra.mxu0 %v9534
  %v9536 = vand.u32 %v8816, 4294901760
  %v9537 = vsub.f32 %v8816, %v9536
  %v9538 = vand.u32 %v9537, 4294901760
  %9539 = vmatmul.f32.gmra.mxu0 %v9538
  %v9540 = vpop.f32.mrf.mxu0
  %v9541 = vadd.f32 %v9487, %v9540
  %v9542 = vand.u32 %v8818, 4294901760
  %v9543 = vsub.f32 %v8818, %v9542
  %v9544 = vand.u32 %v9543, 4294901760
  %9545 = vmatmul.f32.gmra.mxu0 %v9544
  %v9546 = vpop.f32.mrf.mxu0
  %v9547 = vadd.f32 %v9492, %v9546
  %v9548 = vand.u32 %v8820, 4294901760
  %v9549 = vsub.f32 %v8820, %v9548
  %v9550 = vand.u32 %v9549, 4294901760
  %9551 = vmatmul.f32.gmra.mxu0 %v9550
  %v9552 = vpop.f32.mrf.mxu0
  %v9553 = vadd.f32 %v9497, %v9552
  %v9554 = vand.u32 %v8822, 4294901760
  %v9555 = vsub.f32 %v8822, %v9554
  %v9556 = vand.u32 %v9555, 4294901760
  %9557 = vmatmul.f32.gmra.mxu0 %v9556
  %v9558 = vpop.f32.mrf.mxu0
  %v9559 = vadd.f32 %v9502, %v9558
  %9560 = vdwg.mxu0
  %v9561 = vand.u32 %v3238, 4294901760
  %v9562 = vsub.f32 %v3238, %v9561
  %v9563 = vand.u32 %v9562, 4294901760
  %9564 = vmatpush.msra.mxu0 %v9563
  %v9565 = vand.u32 %v3237, 4294901760
  %v9566 = vsub.f32 %v3237, %v9565
  %v9567 = vand.u32 %v9566, 4294901760
  %9568 = vmatpush.msra.mxu0 %v9567
  %v9569 = vand.u32 %v3236, 4294901760
  %v9570 = vsub.f32 %v3236, %v9569
  %v9571 = vand.u32 %v9570, 4294901760
  %9572 = vmatpush.msra.mxu0 %v9571
  %v9573 = vand.u32 %v3235, 4294901760
  %v9574 = vsub.f32 %v3235, %v9573
  %v9575 = vand.u32 %v9574, 4294901760
  %9576 = vmatpush.msra.mxu0 %v9575
  %v9577 = vand.u32 %v3234, 4294901760
  %v9578 = vsub.f32 %v3234, %v9577
  %v9579 = vand.u32 %v9578, 4294901760
  %9580 = vmatpush.msra.mxu0 %v9579
  %v9581 = vand.u32 %v3233, 4294901760
  %v9582 = vsub.f32 %v3233, %v9581
  %v9583 = vand.u32 %v9582, 4294901760
  %9584 = vmatpush.msra.mxu0 %v9583
  %v9585 = vand.u32 %v3232, 4294901760
  %v9586 = vsub.f32 %v3232, %v9585
  %v9587 = vand.u32 %v9586, 4294901760
  %9588 = vmatpush.msra.mxu0 %v9587
  %v9589 = vand.u32 %v3231, 4294901760
  %v9590 = vsub.f32 %v3231, %v9589
  %v9591 = vand.u32 %v9590, 4294901760
  %9592 = vmatpush.msra.mxu0 %v9591
  %v9593 = vand.u32 %v3230, 4294901760
  %v9594 = vsub.f32 %v3230, %v9593
  %v9595 = vand.u32 %v9594, 4294901760
  %9596 = vmatpush.msra.mxu0 %v9595
  %v9597 = vand.u32 %v3229, 4294901760
  %v9598 = vsub.f32 %v3229, %v9597
  %v9599 = vand.u32 %v9598, 4294901760
  %9600 = vmatpush.msra.mxu0 %v9599
  %v9601 = vand.u32 %v3228, 4294901760
  %v9602 = vsub.f32 %v3228, %v9601
  %v9603 = vand.u32 %v9602, 4294901760
  %9604 = vmatpush.msra.mxu0 %v9603
  %v9605 = vand.u32 %v3227, 4294901760
  %v9606 = vsub.f32 %v3227, %v9605
  %v9607 = vand.u32 %v9606, 4294901760
  %9608 = vmatpush.msra.mxu0 %v9607
  %v9609 = vand.u32 %v3226, 4294901760
  %v9610 = vsub.f32 %v3226, %v9609
  %v9611 = vand.u32 %v9610, 4294901760
  %9612 = vmatpush.msra.mxu0 %v9611
  %v9613 = vand.u32 %v3225, 4294901760
  %v9614 = vsub.f32 %v3225, %v9613
  %v9615 = vand.u32 %v9614, 4294901760
  %9616 = vmatpush.msra.mxu0 %v9615
  %v9617 = vand.u32 %v3224, 4294901760
  %v9618 = vsub.f32 %v3224, %v9617
  %v9619 = vand.u32 %v9618, 4294901760
  %9620 = vmatpush.msra.mxu0 %v9619
  %v9621 = vand.u32 %v3223, 4294901760
  %v9622 = vsub.f32 %v3223, %v9621
  %v9623 = vand.u32 %v9622, 4294901760
  %9624 = vmatpush.msra.mxu0 %v9623
  %v9625 = vand.u32 %v8816, 4294901760
  %9626 = vmatmul.f32.gmra.mxu0 %v9625
  %v9627 = vpop.f32.mrf.mxu0
  %v9628 = vadd.f32 %v9541, %v9627
  %v9629 = vand.u32 %v8818, 4294901760
  %9630 = vmatmul.f32.gmra.mxu0 %v9629
  %v9631 = vpop.f32.mrf.mxu0
  %v9632 = vadd.f32 %v9547, %v9631
  %v9633 = vand.u32 %v8820, 4294901760
  %9634 = vmatmul.f32.gmra.mxu0 %v9633
  %v9635 = vpop.f32.mrf.mxu0
  %v9636 = vadd.f32 %v9553, %v9635
  %v9637 = vand.u32 %v8822, 4294901760
  %9638 = vmatmul.f32.gmra.mxu0 %v9637
  %v9639 = vpop.f32.mrf.mxu0
  %v9640 = vadd.f32 %v9559, %v9639
  %9641 = vdwg.mxu0
  %v9642 = vand.u32 %v3238, 4294901760
  %9643 = vmatpush.msra.mxu0 %v9642
  %v9644 = vand.u32 %v3237, 4294901760
  %9645 = vmatpush.msra.mxu0 %v9644
  %v9646 = vand.u32 %v3236, 4294901760
  %9647 = vmatpush.msra.mxu0 %v9646
  %v9648 = vand.u32 %v3235, 4294901760
  %9649 = vmatpush.msra.mxu0 %v9648
  %v9650 = vand.u32 %v3234, 4294901760
  %9651 = vmatpush.msra.mxu0 %v9650
  %v9652 = vand.u32 %v3233, 4294901760
  %9653 = vmatpush.msra.mxu0 %v9652
  %v9654 = vand.u32 %v3232, 4294901760
  %9655 = vmatpush.msra.mxu0 %v9654
  %v9656 = vand.u32 %v3231, 4294901760
  %9657 = vmatpush.msra.mxu0 %v9656
  %v9658 = vand.u32 %v3230, 4294901760
  %9659 = vmatpush.msra.mxu0 %v9658
  %v9660 = vand.u32 %v3229, 4294901760
  %9661 = vmatpush.msra.mxu0 %v9660
  %v9662 = vand.u32 %v3228, 4294901760
  %9663 = vmatpush.msra.mxu0 %v9662
  %v9664 = vand.u32 %v3227, 4294901760
  %9665 = vmatpush.msra.mxu0 %v9664
  %v9666 = vand.u32 %v3226, 4294901760
  %9667 = vmatpush.msra.mxu0 %v9666
  %v9668 = vand.u32 %v3225, 4294901760
  %9669 = vmatpush.msra.mxu0 %v9668
  %v9670 = vand.u32 %v3224, 4294901760
  %9671 = vmatpush.msra.mxu0 %v9670
  %v9672 = vand.u32 %v3223, 4294901760
  %9673 = vmatpush.msra.mxu0 %v9672
  %v9674 = vand.u32 %v8816, 4294901760
  %9675 = vmatmul.f32.gmra.mxu0 %v9674
  %v9676 = vpop.f32.mrf.mxu0
  %v9677 = vadd.f32 %v9628, %v9676
  %v9678 = vand.u32 %v8818, 4294901760
  %9679 = vmatmul.f32.gmra.mxu0 %v9678
  %v9680 = vpop.f32.mrf.mxu0
  %v9681 = vadd.f32 %v9632, %v9680
  %v9682 = vand.u32 %v8820, 4294901760
  %9683 = vmatmul.f32.gmra.mxu0 %v9682
  %v9684 = vpop.f32.mrf.mxu0
  %v9685 = vadd.f32 %v9636, %v9684
  %v9686 = vand.u32 %v8822, 4294901760
  %9687 = vmatmul.f32.gmra.mxu0 %v9686
  %v9688 = vpop.f32.mrf.mxu0
  %v9689 = vadd.f32 %v9640, %v9688
  %9690 = vdwg.mxu0
  %9691 = vset.pattern.permute.xlu0 2
  %9692 = vperm.xlu0 %9691, %v24
  %v9693 = vpop.permute.xlu0 %9692
  %9695 = vset.pattern.permute.xlu0 2
  %9696 = vperm.xlu0 %9695, %v25
  %v9697 = vpop.permute.xlu0 %9696
  %9699 = vset.pattern.permute.xlu0 2
  %9700 = vperm.xlu0 %9699, %v26
  %v9701 = vpop.permute.xlu0 %9700
  %9703 = vset.pattern.permute.xlu0 2
  %9704 = vperm.xlu0 %9703, %v27
  %v9705 = vpop.permute.xlu0 %9704
  %v9708 = vsel %vm3266, %v8001, 0
  %v9711 = vsel %vm3266, %v8002, 0
  %v9714 = vsel %vm3266, %v8003, 0
  %v9717 = vsel %vm3266, %v8004, 0
  %9719 = vmatpush.msra.mxu0 0.0
  %9720 = vmatpush.msra.mxu0 0.0
  %9721 = vmatpush.msra.mxu0 0.0
  %9722 = vmatpush.msra.mxu0 0.0
  %9723 = vmatpush.msra.mxu0 0.0
  %9724 = vmatpush.msra.mxu0 0.0
  %9725 = vmatpush.msra.mxu0 0.0
  %9726 = vmatpush.msra.mxu0 0.0
  %9727 = vmatpush.msra.mxu0 0.0
  %9728 = vmatpush.msra.mxu0 0.0
  %9729 = vmatpush.msra.mxu0 0.0
  %9730 = vmatpush.msra.mxu0 0.0
  %v9731 = vand.u32 %v9689, 4294901760
  %9732 = vmatpush.msra.mxu0 %v9731
  %v9733 = vand.u32 %v9685, 4294901760
  %9734 = vmatpush.msra.mxu0 %v9733
  %v9735 = vand.u32 %v9681, 4294901760
  %9736 = vmatpush.msra.mxu0 %v9735
  %v9737 = vand.u32 %v9677, 4294901760
  %9738 = vmatpush.msra.mxu0 %v9737
  %v9739 = vand.u32 %v9708, 4294901760
  %v9740 = vsub.f32 %v9708, %v9739
  %v9741 = vand.u32 %v9740, 4294901760
  %v9742 = vsub.f32 %v9740, %v9741
  %v9743 = vand.u32 %v9742, 4294901760
  %9744 = vmatmul.f32.gmra.mxu0 %v9743
  %v9745 = vpop.f32.mrf.mxu0
  %v9746 = vadd.f32 %v9693, %v9745
  %v9747 = vand.u32 %v9711, 4294901760
  %v9748 = vsub.f32 %v9711, %v9747
  %v9749 = vand.u32 %v9748, 4294901760
  %v9750 = vsub.f32 %v9748, %v9749
  %v9751 = vand.u32 %v9750, 4294901760
  %9752 = vmatmul.f32.gmra.mxu0 %v9751
  %v9753 = vpop.f32.mrf.mxu0
  %v9754 = vadd.f32 %v9697, %v9753
  %v9755 = vand.u32 %v9714, 4294901760
  %v9756 = vsub.f32 %v9714, %v9755
  %v9757 = vand.u32 %v9756, 4294901760
  %v9758 = vsub.f32 %v9756, %v9757
  %v9759 = vand.u32 %v9758, 4294901760
  %9760 = vmatmul.f32.gmra.mxu0 %v9759
  %v9761 = vpop.f32.mrf.mxu0
  %v9762 = vadd.f32 %v9701, %v9761
  %v9763 = vand.u32 %v9717, 4294901760
  %v9764 = vsub.f32 %v9717, %v9763
  %v9765 = vand.u32 %v9764, 4294901760
  %v9766 = vsub.f32 %v9764, %v9765
  %v9767 = vand.u32 %v9766, 4294901760
  %9768 = vmatmul.f32.gmra.mxu0 %v9767
  %v9769 = vpop.f32.mrf.mxu0
  %v9770 = vadd.f32 %v9705, %v9769
  %9771 = vdwg.mxu0
  %9772 = vmatpush.msra.mxu0 0.0
  %9773 = vmatpush.msra.mxu0 0.0
  %9774 = vmatpush.msra.mxu0 0.0
  %9775 = vmatpush.msra.mxu0 0.0
  %9776 = vmatpush.msra.mxu0 0.0
  %9777 = vmatpush.msra.mxu0 0.0
  %9778 = vmatpush.msra.mxu0 0.0
  %9779 = vmatpush.msra.mxu0 0.0
  %9780 = vmatpush.msra.mxu0 0.0
  %9781 = vmatpush.msra.mxu0 0.0
  %9782 = vmatpush.msra.mxu0 0.0
  %9783 = vmatpush.msra.mxu0 0.0
  %v9784 = vand.u32 %v9689, 4294901760
  %v9785 = vsub.f32 %v9689, %v9784
  %v9786 = vand.u32 %v9785, 4294901760
  %v9787 = vsub.f32 %v9785, %v9786
  %v9788 = vand.u32 %v9787, 4294901760
  %9789 = vmatpush.msra.mxu0 %v9788
  %v9790 = vand.u32 %v9685, 4294901760
  %v9791 = vsub.f32 %v9685, %v9790
  %v9792 = vand.u32 %v9791, 4294901760
  %v9793 = vsub.f32 %v9791, %v9792
  %v9794 = vand.u32 %v9793, 4294901760
  %9795 = vmatpush.msra.mxu0 %v9794
  %v9796 = vand.u32 %v9681, 4294901760
  %v9797 = vsub.f32 %v9681, %v9796
  %v9798 = vand.u32 %v9797, 4294901760
  %v9799 = vsub.f32 %v9797, %v9798
  %v9800 = vand.u32 %v9799, 4294901760
  %9801 = vmatpush.msra.mxu0 %v9800
  %v9802 = vand.u32 %v9677, 4294901760
  %v9803 = vsub.f32 %v9677, %v9802
  %v9804 = vand.u32 %v9803, 4294901760
  %v9805 = vsub.f32 %v9803, %v9804
  %v9806 = vand.u32 %v9805, 4294901760
  %9807 = vmatpush.msra.mxu0 %v9806
  %v9808 = vand.u32 %v9708, 4294901760
  %9809 = vmatmul.f32.gmra.mxu0 %v9808
  %v9810 = vpop.f32.mrf.mxu0
  %v9811 = vadd.f32 %v9746, %v9810
  %v9812 = vand.u32 %v9711, 4294901760
  %9813 = vmatmul.f32.gmra.mxu0 %v9812
  %v9814 = vpop.f32.mrf.mxu0
  %v9815 = vadd.f32 %v9754, %v9814
  %v9816 = vand.u32 %v9714, 4294901760
  %9817 = vmatmul.f32.gmra.mxu0 %v9816
  %v9818 = vpop.f32.mrf.mxu0
  %v9819 = vadd.f32 %v9762, %v9818
  %v9820 = vand.u32 %v9717, 4294901760
  %9821 = vmatmul.f32.gmra.mxu0 %v9820
  %v9822 = vpop.f32.mrf.mxu0
  %v9823 = vadd.f32 %v9770, %v9822
  %9824 = vdwg.mxu0
  %9825 = vmatpush.msra.mxu0 0.0
  %9826 = vmatpush.msra.mxu0 0.0
  %9827 = vmatpush.msra.mxu0 0.0
  %9828 = vmatpush.msra.mxu0 0.0
  %9829 = vmatpush.msra.mxu0 0.0
  %9830 = vmatpush.msra.mxu0 0.0
  %9831 = vmatpush.msra.mxu0 0.0
  %9832 = vmatpush.msra.mxu0 0.0
  %9833 = vmatpush.msra.mxu0 0.0
  %9834 = vmatpush.msra.mxu0 0.0
  %9835 = vmatpush.msra.mxu0 0.0
  %9836 = vmatpush.msra.mxu0 0.0
  %v9837 = vand.u32 %v9689, 4294901760
  %v9838 = vsub.f32 %v9689, %v9837
  %9839 = vmatpush.msra.mxu0 %v9838
  %v9840 = vand.u32 %v9685, 4294901760
  %v9841 = vsub.f32 %v9685, %v9840
  %9842 = vmatpush.msra.mxu0 %v9841
  %v9843 = vand.u32 %v9681, 4294901760
  %v9844 = vsub.f32 %v9681, %v9843
  %9845 = vmatpush.msra.mxu0 %v9844
  %v9846 = vand.u32 %v9677, 4294901760
  %v9847 = vsub.f32 %v9677, %v9846
  %9848 = vmatpush.msra.mxu0 %v9847
  %v9849 = vand.u32 %v9708, 4294901760
  %v9850 = vsub.f32 %v9708, %v9849
  %9851 = vmatmul.f32.gmra.mxu0 %v9850
  %v9852 = vpop.f32.mrf.mxu0
  %v9853 = vadd.f32 %v9811, %v9852
  %v9854 = vand.u32 %v9711, 4294901760
  %v9855 = vsub.f32 %v9711, %v9854
  %9856 = vmatmul.f32.gmra.mxu0 %v9855
  %v9857 = vpop.f32.mrf.mxu0
  %v9858 = vadd.f32 %v9815, %v9857
  %v9859 = vand.u32 %v9714, 4294901760
  %v9860 = vsub.f32 %v9714, %v9859
  %9861 = vmatmul.f32.gmra.mxu0 %v9860
  %v9862 = vpop.f32.mrf.mxu0
  %v9863 = vadd.f32 %v9819, %v9862
  %v9864 = vand.u32 %v9717, 4294901760
  %v9865 = vsub.f32 %v9717, %v9864
  %9866 = vmatmul.f32.gmra.mxu0 %v9865
  %v9867 = vpop.f32.mrf.mxu0
  %v9868 = vadd.f32 %v9823, %v9867
  %9869 = vdwg.mxu0
  %9870 = vmatpush.msra.mxu0 0.0
  %9871 = vmatpush.msra.mxu0 0.0
  %9872 = vmatpush.msra.mxu0 0.0
  %9873 = vmatpush.msra.mxu0 0.0
  %9874 = vmatpush.msra.mxu0 0.0
  %9875 = vmatpush.msra.mxu0 0.0
  %9876 = vmatpush.msra.mxu0 0.0
  %9877 = vmatpush.msra.mxu0 0.0
  %9878 = vmatpush.msra.mxu0 0.0
  %9879 = vmatpush.msra.mxu0 0.0
  %9880 = vmatpush.msra.mxu0 0.0
  %9881 = vmatpush.msra.mxu0 0.0
  %v9882 = vand.u32 %v9689, 4294901760
  %9883 = vmatpush.msra.mxu0 %v9882
  %v9884 = vand.u32 %v9685, 4294901760
  %9885 = vmatpush.msra.mxu0 %v9884
  %v9886 = vand.u32 %v9681, 4294901760
  %9887 = vmatpush.msra.mxu0 %v9886
  %v9888 = vand.u32 %v9677, 4294901760
  %9889 = vmatpush.msra.mxu0 %v9888
  %v9890 = vand.u32 %v9708, 4294901760
  %v9891 = vsub.f32 %v9708, %v9890
  %v9892 = vand.u32 %v9891, 4294901760
  %9893 = vmatmul.f32.gmra.mxu0 %v9892
  %v9894 = vpop.f32.mrf.mxu0
  %v9895 = vadd.f32 %v9853, %v9894
  %v9896 = vand.u32 %v9711, 4294901760
  %v9897 = vsub.f32 %v9711, %v9896
  %v9898 = vand.u32 %v9897, 4294901760
  %9899 = vmatmul.f32.gmra.mxu0 %v9898
  %v9900 = vpop.f32.mrf.mxu0
  %v9901 = vadd.f32 %v9858, %v9900
  %v9902 = vand.u32 %v9714, 4294901760
  %v9903 = vsub.f32 %v9714, %v9902
  %v9904 = vand.u32 %v9903, 4294901760
  %9905 = vmatmul.f32.gmra.mxu0 %v9904
  %v9906 = vpop.f32.mrf.mxu0
  %v9907 = vadd.f32 %v9863, %v9906
  %v9908 = vand.u32 %v9717, 4294901760
  %v9909 = vsub.f32 %v9717, %v9908
  %v9910 = vand.u32 %v9909, 4294901760
  %9911 = vmatmul.f32.gmra.mxu0 %v9910
  %v9912 = vpop.f32.mrf.mxu0
  %v9913 = vadd.f32 %v9868, %v9912
  %9914 = vdwg.mxu0
  %9915 = vmatpush.msra.mxu0 0.0
  %9916 = vmatpush.msra.mxu0 0.0
  %9917 = vmatpush.msra.mxu0 0.0
  %9918 = vmatpush.msra.mxu0 0.0
  %9919 = vmatpush.msra.mxu0 0.0
  %9920 = vmatpush.msra.mxu0 0.0
  %9921 = vmatpush.msra.mxu0 0.0
  %9922 = vmatpush.msra.mxu0 0.0
  %9923 = vmatpush.msra.mxu0 0.0
  %9924 = vmatpush.msra.mxu0 0.0
  %9925 = vmatpush.msra.mxu0 0.0
  %9926 = vmatpush.msra.mxu0 0.0
  %v9927 = vand.u32 %v9689, 4294901760
  %v9928 = vsub.f32 %v9689, %v9927
  %v9929 = vand.u32 %v9928, 4294901760
  %9930 = vmatpush.msra.mxu0 %v9929
  %v9931 = vand.u32 %v9685, 4294901760
  %v9932 = vsub.f32 %v9685, %v9931
  %v9933 = vand.u32 %v9932, 4294901760
  %9934 = vmatpush.msra.mxu0 %v9933
  %v9935 = vand.u32 %v9681, 4294901760
  %v9936 = vsub.f32 %v9681, %v9935
  %v9937 = vand.u32 %v9936, 4294901760
  %9938 = vmatpush.msra.mxu0 %v9937
  %v9939 = vand.u32 %v9677, 4294901760
  %v9940 = vsub.f32 %v9677, %v9939
  %v9941 = vand.u32 %v9940, 4294901760
  %9942 = vmatpush.msra.mxu0 %v9941
  %v9943 = vand.u32 %v9708, 4294901760
  %9944 = vmatmul.f32.gmra.mxu0 %v9943
  %v9945 = vpop.f32.mrf.mxu0
  %v9946 = vadd.f32 %v9895, %v9945
  %v9947 = vand.u32 %v9711, 4294901760
  %9948 = vmatmul.f32.gmra.mxu0 %v9947
  %v9949 = vpop.f32.mrf.mxu0
  %v9950 = vadd.f32 %v9901, %v9949
  %v9951 = vand.u32 %v9714, 4294901760
  %9952 = vmatmul.f32.gmra.mxu0 %v9951
  %v9953 = vpop.f32.mrf.mxu0
  %v9954 = vadd.f32 %v9907, %v9953
  %v9955 = vand.u32 %v9717, 4294901760
  %9956 = vmatmul.f32.gmra.mxu0 %v9955
  %v9957 = vpop.f32.mrf.mxu0
  %v9958 = vadd.f32 %v9913, %v9957
  %9959 = vdwg.mxu0
  %9960 = vmatpush.msra.mxu0 0.0
  %9961 = vmatpush.msra.mxu0 0.0
  %9962 = vmatpush.msra.mxu0 0.0
  %9963 = vmatpush.msra.mxu0 0.0
  %9964 = vmatpush.msra.mxu0 0.0
  %9965 = vmatpush.msra.mxu0 0.0
  %9966 = vmatpush.msra.mxu0 0.0
  %9967 = vmatpush.msra.mxu0 0.0
  %9968 = vmatpush.msra.mxu0 0.0
  %9969 = vmatpush.msra.mxu0 0.0
  %9970 = vmatpush.msra.mxu0 0.0
  %9971 = vmatpush.msra.mxu0 0.0
  %v9972 = vand.u32 %v9689, 4294901760
  %9973 = vmatpush.msra.mxu0 %v9972
  %v9974 = vand.u32 %v9685, 4294901760
  %9975 = vmatpush.msra.mxu0 %v9974
  %v9976 = vand.u32 %v9681, 4294901760
  %9977 = vmatpush.msra.mxu0 %v9976
  %v9978 = vand.u32 %v9677, 4294901760
  %9979 = vmatpush.msra.mxu0 %v9978
  %v9980 = vand.u32 %v9708, 4294901760
  %9981 = vmatmul.f32.gmra.mxu0 %v9980
  %v9982 = vpop.f32.mrf.mxu0
  %v9983 = vadd.f32 %v9946, %v9982
  %v9984 = vand.u32 %v9711, 4294901760
  %9985 = vmatmul.f32.gmra.mxu0 %v9984
  %v9986 = vpop.f32.mrf.mxu0
  %v9987 = vadd.f32 %v9950, %v9986
  %v9988 = vand.u32 %v9714, 4294901760
  %9989 = vmatmul.f32.gmra.mxu0 %v9988
  %v9990 = vpop.f32.mrf.mxu0
  %v9991 = vadd.f32 %v9954, %v9990
  %v9992 = vand.u32 %v9717, 4294901760
  %9993 = vmatmul.f32.gmra.mxu0 %v9992
  %v9994 = vpop.f32.mrf.mxu0
  %v9995 = vadd.f32 %v9958, %v9994
  %9996 = vdwg.mxu0
  %v9997 = vmax.f32 %v9983, 0.0
  %v9998 = vmax.f32 %v9987, 0.0
  %v9999 = vmax.f32 %v9991, 0.0
  %v10000 = vmax.f32 %v9995, 0.0
  %v10001 = vand.u32 2147483647, %v9983
  %v10002 = vand.u32 2147483647, %v9987
  %v10003 = vand.u32 2147483647, %v9991
  %v10004 = vand.u32 2147483647, %v9995
  %v10005 = vsub.f32 0.0, %v10001
  %v10006 = vsub.f32 0.0, %v10002
  %v10007 = vsub.f32 0.0, %v10003
  %v10008 = vsub.f32 0.0, %v10004
  %v10009 = vmul.f32 %v10005, 1.442695
  %v10010 = vpow.pop %v10009
  %v10011 = vmul.f32 %v10006, 1.442695
  %v10012 = vpow.pop %v10011
  %v10013 = vmul.f32 %v10007, 1.442695
  %v10014 = vpow.pop %v10013
  %v10015 = vmul.f32 %v10008, 1.442695
  %v10016 = vpow.pop %v10015
  %v10017 = vadd.f32 %v10010, 1.0
  %v10018 = vlog2.pop %v10017
  %v10019 = vmul.f32 %v10018, 0.6931472
  %v10020 = vmul.f32 -0.5, %v10010
  %v10021 = vadd.f32 %v10020, 1.0
  %v10022 = vmul.f32 %v10021, %v10010
  %v10023 = vand.u32 2147483647, %v10010
  %vm10024 = vcmp.lt.f32.partialorder %v10023, 0.0004427343
  %v10025 = vsel %vm10024, %v10022, %v10019
  %v10026 = vadd.f32 %v10012, 1.0
  %v10027 = vlog2.pop %v10026
  %v10028 = vmul.f32 %v10027, 0.6931472
  %v10029 = vmul.f32 -0.5, %v10012
  %v10030 = vadd.f32 %v10029, 1.0
  %v10031 = vmul.f32 %v10030, %v10012
  %v10032 = vand.u32 2147483647, %v10012
  %vm10033 = vcmp.lt.f32.partialorder %v10032, 0.0004427343
  %v10034 = vsel %vm10033, %v10031, %v10028
  %v10035 = vadd.f32 %v10014, 1.0
  %v10036 = vlog2.pop %v10035
  %v10037 = vmul.f32 %v10036, 0.6931472
  %v10038 = vmul.f32 -0.5, %v10014
  %v10039 = vadd.f32 %v10038, 1.0
  %v10040 = vmul.f32 %v10039, %v10014
  %v10041 = vand.u32 2147483647, %v10014
  %vm10042 = vcmp.lt.f32.partialorder %v10041, 0.0004427343
  %v10043 = vsel %vm10042, %v10040, %v10037
  %v10044 = vadd.f32 %v10016, 1.0
  %v10045 = vlog2.pop %v10044
  %v10046 = vmul.f32 %v10045, 0.6931472
  %v10047 = vmul.f32 -0.5, %v10016
  %v10048 = vadd.f32 %v10047, 1.0
  %v10049 = vmul.f32 %v10048, %v10016
  %v10050 = vand.u32 2147483647, %v10016
  %vm10051 = vcmp.lt.f32.partialorder %v10050, 0.0004427343
  %v10052 = vsel %vm10051, %v10049, %v10046
  %v10053 = vadd.f32 %v9997, %v10025
  %v10054 = vadd.f32 %v9998, %v10034
  %v10055 = vadd.f32 %v9999, %v10043
  %v10056 = vadd.f32 %v10000, %v10052
  %10057 = vset.pattern.permute.xlu0 5
  %10058 = vperm.xlu0 %10057, %v24
  %v10059 = vpop.permute.xlu0 %10058
  %10061 = vset.pattern.permute.xlu0 5
  %10062 = vperm.xlu0 %10061, %v25
  %v10063 = vpop.permute.xlu0 %10062
  %10065 = vset.pattern.permute.xlu0 5
  %10066 = vperm.xlu0 %10065, %v26
  %v10067 = vpop.permute.xlu0 %10066
  %10069 = vset.pattern.permute.xlu0 5
  %10070 = vperm.xlu0 %10069, %v27
  %v10071 = vpop.permute.xlu0 %10070
  %v10074 = vsel %vm3266, %v8005, 0
  %v10077 = vsel %vm3266, %v8006, 0
  %v10080 = vsel %vm3266, %v8007, 0
  %v10083 = vsel %vm3266, %v8008, 0
  %10085 = vmatpush.msra.mxu0 0.0
  %10086 = vmatpush.msra.mxu0 0.0
  %10087 = vmatpush.msra.mxu0 0.0
  %10088 = vmatpush.msra.mxu0 0.0
  %10089 = vmatpush.msra.mxu0 0.0
  %10090 = vmatpush.msra.mxu0 0.0
  %10091 = vmatpush.msra.mxu0 0.0
  %10092 = vmatpush.msra.mxu0 0.0
  %10093 = vmatpush.msra.mxu0 0.0
  %10094 = vmatpush.msra.mxu0 0.0
  %10095 = vmatpush.msra.mxu0 0.0
  %10096 = vmatpush.msra.mxu0 0.0
  %v10097 = vand.u32 %v10056, 4294901760
  %10098 = vmatpush.msra.mxu0 %v10097
  %v10099 = vand.u32 %v10055, 4294901760
  %10100 = vmatpush.msra.mxu0 %v10099
  %v10101 = vand.u32 %v10054, 4294901760
  %10102 = vmatpush.msra.mxu0 %v10101
  %v10103 = vand.u32 %v10053, 4294901760
  %10104 = vmatpush.msra.mxu0 %v10103
  %v10105 = vand.u32 %v10074, 4294901760
  %v10106 = vsub.f32 %v10074, %v10105
  %v10107 = vand.u32 %v10106, 4294901760
  %v10108 = vsub.f32 %v10106, %v10107
  %v10109 = vand.u32 %v10108, 4294901760
  %10110 = vmatmul.f32.gmra.mxu0 %v10109
  %v10111 = vpop.f32.mrf.mxu0
  %v10112 = vadd.f32 %v10059, %v10111
  %v10113 = vand.u32 %v10077, 4294901760
  %v10114 = vsub.f32 %v10077, %v10113
  %v10115 = vand.u32 %v10114, 4294901760
  %v10116 = vsub.f32 %v10114, %v10115
  %v10117 = vand.u32 %v10116, 4294901760
  %10118 = vmatmul.f32.gmra.mxu0 %v10117
  %v10119 = vpop.f32.mrf.mxu0
  %v10120 = vadd.f32 %v10063, %v10119
  %v10121 = vand.u32 %v10080, 4294901760
  %v10122 = vsub.f32 %v10080, %v10121
  %v10123 = vand.u32 %v10122, 4294901760
  %v10124 = vsub.f32 %v10122, %v10123
  %v10125 = vand.u32 %v10124, 4294901760
  %10126 = vmatmul.f32.gmra.mxu0 %v10125
  %v10127 = vpop.f32.mrf.mxu0
  %v10128 = vadd.f32 %v10067, %v10127
  %v10129 = vand.u32 %v10083, 4294901760
  %v10130 = vsub.f32 %v10083, %v10129
  %v10131 = vand.u32 %v10130, 4294901760
  %v10132 = vsub.f32 %v10130, %v10131
  %v10133 = vand.u32 %v10132, 4294901760
  %10134 = vmatmul.f32.gmra.mxu0 %v10133
  %v10135 = vpop.f32.mrf.mxu0
  %v10136 = vadd.f32 %v10071, %v10135
  %10137 = vdwg.mxu0
  %10138 = vmatpush.msra.mxu0 0.0
  %10139 = vmatpush.msra.mxu0 0.0
  %10140 = vmatpush.msra.mxu0 0.0
  %10141 = vmatpush.msra.mxu0 0.0
  %10142 = vmatpush.msra.mxu0 0.0
  %10143 = vmatpush.msra.mxu0 0.0
  %10144 = vmatpush.msra.mxu0 0.0
  %10145 = vmatpush.msra.mxu0 0.0
  %10146 = vmatpush.msra.mxu0 0.0
  %10147 = vmatpush.msra.mxu0 0.0
  %10148 = vmatpush.msra.mxu0 0.0
  %10149 = vmatpush.msra.mxu0 0.0
  %v10150 = vand.u32 %v10056, 4294901760
  %v10151 = vsub.f32 %v10056, %v10150
  %v10152 = vand.u32 %v10151, 4294901760
  %v10153 = vsub.f32 %v10151, %v10152
  %v10154 = vand.u32 %v10153, 4294901760
  %10155 = vmatpush.msra.mxu0 %v10154
  %v10156 = vand.u32 %v10055, 4294901760
  %v10157 = vsub.f32 %v10055, %v10156
  %v10158 = vand.u32 %v10157, 4294901760
  %v10159 = vsub.f32 %v10157, %v10158
  %v10160 = vand.u32 %v10159, 4294901760
  %10161 = vmatpush.msra.mxu0 %v10160
  %v10162 = vand.u32 %v10054, 4294901760
  %v10163 = vsub.f32 %v10054, %v10162
  %v10164 = vand.u32 %v10163, 4294901760
  %v10165 = vsub.f32 %v10163, %v10164
  %v10166 = vand.u32 %v10165, 4294901760
  %10167 = vmatpush.msra.mxu0 %v10166
  %v10168 = vand.u32 %v10053, 4294901760
  %v10169 = vsub.f32 %v10053, %v10168
  %v10170 = vand.u32 %v10169, 4294901760
  %v10171 = vsub.f32 %v10169, %v10170
  %v10172 = vand.u32 %v10171, 4294901760
  %10173 = vmatpush.msra.mxu0 %v10172
  %v10174 = vand.u32 %v10074, 4294901760
  %10175 = vmatmul.f32.gmra.mxu0 %v10174
  %v10176 = vpop.f32.mrf.mxu0
  %v10177 = vadd.f32 %v10112, %v10176
  %v10178 = vand.u32 %v10077, 4294901760
  %10179 = vmatmul.f32.gmra.mxu0 %v10178
  %v10180 = vpop.f32.mrf.mxu0
  %v10181 = vadd.f32 %v10120, %v10180
  %v10182 = vand.u32 %v10080, 4294901760
  %10183 = vmatmul.f32.gmra.mxu0 %v10182
  %v10184 = vpop.f32.mrf.mxu0
  %v10185 = vadd.f32 %v10128, %v10184
  %v10186 = vand.u32 %v10083, 4294901760
  %10187 = vmatmul.f32.gmra.mxu0 %v10186
  %v10188 = vpop.f32.mrf.mxu0
  %v10189 = vadd.f32 %v10136, %v10188
  %10190 = vdwg.mxu0
  %10191 = vmatpush.msra.mxu0 0.0
  %10192 = vmatpush.msra.mxu0 0.0
  %10193 = vmatpush.msra.mxu0 0.0
  %10194 = vmatpush.msra.mxu0 0.0
  %10195 = vmatpush.msra.mxu0 0.0
  %10196 = vmatpush.msra.mxu0 0.0
  %10197 = vmatpush.msra.mxu0 0.0
  %10198 = vmatpush.msra.mxu0 0.0
  %10199 = vmatpush.msra.mxu0 0.0
  %10200 = vmatpush.msra.mxu0 0.0
  %10201 = vmatpush.msra.mxu0 0.0
  %10202 = vmatpush.msra.mxu0 0.0
  %v10203 = vand.u32 %v10056, 4294901760
  %v10204 = vsub.f32 %v10056, %v10203
  %10205 = vmatpush.msra.mxu0 %v10204
  %v10206 = vand.u32 %v10055, 4294901760
  %v10207 = vsub.f32 %v10055, %v10206
  %10208 = vmatpush.msra.mxu0 %v10207
  %v10209 = vand.u32 %v10054, 4294901760
  %v10210 = vsub.f32 %v10054, %v10209
  %10211 = vmatpush.msra.mxu0 %v10210
  %v10212 = vand.u32 %v10053, 4294901760
  %v10213 = vsub.f32 %v10053, %v10212
  %10214 = vmatpush.msra.mxu0 %v10213
  %v10215 = vand.u32 %v10074, 4294901760
  %v10216 = vsub.f32 %v10074, %v10215
  %10217 = vmatmul.f32.gmra.mxu0 %v10216
  %v10218 = vpop.f32.mrf.mxu0
  %v10219 = vadd.f32 %v10177, %v10218
  %v10220 = vand.u32 %v10077, 4294901760
  %v10221 = vsub.f32 %v10077, %v10220
  %10222 = vmatmul.f32.gmra.mxu0 %v10221
  %v10223 = vpop.f32.mrf.mxu0
  %v10224 = vadd.f32 %v10181, %v10223
  %v10225 = vand.u32 %v10080, 4294901760
  %v10226 = vsub.f32 %v10080, %v10225
  %10227 = vmatmul.f32.gmra.mxu0 %v10226
  %v10228 = vpop.f32.mrf.mxu0
  %v10229 = vadd.f32 %v10185, %v10228
  %v10230 = vand.u32 %v10083, 4294901760
  %v10231 = vsub.f32 %v10083, %v10230
  %10232 = vmatmul.f32.gmra.mxu0 %v10231
  %v10233 = vpop.f32.mrf.mxu0
  %v10234 = vadd.f32 %v10189, %v10233
  %10235 = vdwg.mxu0
  %10236 = vmatpush.msra.mxu0 0.0
  %10237 = vmatpush.msra.mxu0 0.0
  %10238 = vmatpush.msra.mxu0 0.0
  %10239 = vmatpush.msra.mxu0 0.0
  %10240 = vmatpush.msra.mxu0 0.0
  %10241 = vmatpush.msra.mxu0 0.0
  %10242 = vmatpush.msra.mxu0 0.0
  %10243 = vmatpush.msra.mxu0 0.0
  %10244 = vmatpush.msra.mxu0 0.0
  %10245 = vmatpush.msra.mxu0 0.0
  %10246 = vmatpush.msra.mxu0 0.0
  %10247 = vmatpush.msra.mxu0 0.0
  %v10248 = vand.u32 %v10056, 4294901760
  %10249 = vmatpush.msra.mxu0 %v10248
  %v10250 = vand.u32 %v10055, 4294901760
  %10251 = vmatpush.msra.mxu0 %v10250
  %v10252 = vand.u32 %v10054, 4294901760
  %10253 = vmatpush.msra.mxu0 %v10252
  %v10254 = vand.u32 %v10053, 4294901760
  %10255 = vmatpush.msra.mxu0 %v10254
  %v10256 = vand.u32 %v10074, 4294901760
  %v10257 = vsub.f32 %v10074, %v10256
  %v10258 = vand.u32 %v10257, 4294901760
  %10259 = vmatmul.f32.gmra.mxu0 %v10258
  %v10260 = vpop.f32.mrf.mxu0
  %v10261 = vadd.f32 %v10219, %v10260
  %v10262 = vand.u32 %v10077, 4294901760
  %v10263 = vsub.f32 %v10077, %v10262
  %v10264 = vand.u32 %v10263, 4294901760
  %10265 = vmatmul.f32.gmra.mxu0 %v10264
  %v10266 = vpop.f32.mrf.mxu0
  %v10267 = vadd.f32 %v10224, %v10266
  %v10268 = vand.u32 %v10080, 4294901760
  %v10269 = vsub.f32 %v10080, %v10268
  %v10270 = vand.u32 %v10269, 4294901760
  %10271 = vmatmul.f32.gmra.mxu0 %v10270
  %v10272 = vpop.f32.mrf.mxu0
  %v10273 = vadd.f32 %v10229, %v10272
  %v10274 = vand.u32 %v10083, 4294901760
  %v10275 = vsub.f32 %v10083, %v10274
  %v10276 = vand.u32 %v10275, 4294901760
  %10277 = vmatmul.f32.gmra.mxu0 %v10276
  %v10278 = vpop.f32.mrf.mxu0
  %v10279 = vadd.f32 %v10234, %v10278
  %10280 = vdwg.mxu0
  %10281 = vmatpush.msra.mxu0 0.0
  %10282 = vmatpush.msra.mxu0 0.0
  %10283 = vmatpush.msra.mxu0 0.0
  %10284 = vmatpush.msra.mxu0 0.0
  %10285 = vmatpush.msra.mxu0 0.0
  %10286 = vmatpush.msra.mxu0 0.0
  %10287 = vmatpush.msra.mxu0 0.0
  %10288 = vmatpush.msra.mxu0 0.0
  %10289 = vmatpush.msra.mxu0 0.0
  %10290 = vmatpush.msra.mxu0 0.0
  %10291 = vmatpush.msra.mxu0 0.0
  %10292 = vmatpush.msra.mxu0 0.0
  %v10293 = vand.u32 %v10056, 4294901760
  %v10294 = vsub.f32 %v10056, %v10293
  %v10295 = vand.u32 %v10294, 4294901760
  %10296 = vmatpush.msra.mxu0 %v10295
  %v10297 = vand.u32 %v10055, 4294901760
  %v10298 = vsub.f32 %v10055, %v10297
  %v10299 = vand.u32 %v10298, 4294901760
  %10300 = vmatpush.msra.mxu0 %v10299
  %v10301 = vand.u32 %v10054, 4294901760
  %v10302 = vsub.f32 %v10054, %v10301
  %v10303 = vand.u32 %v10302, 4294901760
  %10304 = vmatpush.msra.mxu0 %v10303
  %v10305 = vand.u32 %v10053, 4294901760
  %v10306 = vsub.f32 %v10053, %v10305
  %v10307 = vand.u32 %v10306, 4294901760
  %10308 = vmatpush.msra.mxu0 %v10307
  %v10309 = vand.u32 %v10074, 4294901760
  %10310 = vmatmul.f32.gmra.mxu0 %v10309
  %v10311 = vpop.f32.mrf.mxu0
  %v10312 = vadd.f32 %v10261, %v10311
  %v10313 = vand.u32 %v10077, 4294901760
  %10314 = vmatmul.f32.gmra.mxu0 %v10313
  %v10315 = vpop.f32.mrf.mxu0
  %v10316 = vadd.f32 %v10267, %v10315
  %v10317 = vand.u32 %v10080, 4294901760
  %10318 = vmatmul.f32.gmra.mxu0 %v10317
  %v10319 = vpop.f32.mrf.mxu0
  %v10320 = vadd.f32 %v10273, %v10319
  %v10321 = vand.u32 %v10083, 4294901760
  %10322 = vmatmul.f32.gmra.mxu0 %v10321
  %v10323 = vpop.f32.mrf.mxu0
  %v10324 = vadd.f32 %v10279, %v10323
  %10325 = vdwg.mxu0
  %10326 = vmatpush.msra.mxu0 0.0
  %10327 = vmatpush.msra.mxu0 0.0
  %10328 = vmatpush.msra.mxu0 0.0
  %10329 = vmatpush.msra.mxu0 0.0
  %10330 = vmatpush.msra.mxu0 0.0
  %10331 = vmatpush.msra.mxu0 0.0
  %10332 = vmatpush.msra.mxu0 0.0
  %10333 = vmatpush.msra.mxu0 0.0
  %10334 = vmatpush.msra.mxu0 0.0
  %10335 = vmatpush.msra.mxu0 0.0
  %10336 = vmatpush.msra.mxu0 0.0
  %10337 = vmatpush.msra.mxu0 0.0
  %v10338 = vand.u32 %v10056, 4294901760
  %10339 = vmatpush.msra.mxu0 %v10338
  %v10340 = vand.u32 %v10055, 4294901760
  %10341 = vmatpush.msra.mxu0 %v10340
  %v10342 = vand.u32 %v10054, 4294901760
  %10343 = vmatpush.msra.mxu0 %v10342
  %v10344 = vand.u32 %v10053, 4294901760
  %10345 = vmatpush.msra.mxu0 %v10344
  %v10346 = vand.u32 %v10074, 4294901760
  %10347 = vmatmul.f32.gmra.mxu0 %v10346
  %v10348 = vpop.f32.mrf.mxu0
  %v10349 = vadd.f32 %v10312, %v10348
  %v10350 = vand.u32 %v10077, 4294901760
  %10351 = vmatmul.f32.gmra.mxu0 %v10350
  %v10352 = vpop.f32.mrf.mxu0
  %v10353 = vadd.f32 %v10316, %v10352
  %v10354 = vand.u32 %v10080, 4294901760
  %10355 = vmatmul.f32.gmra.mxu0 %v10354
  %v10356 = vpop.f32.mrf.mxu0
  %v10357 = vadd.f32 %v10320, %v10356
  %v10358 = vand.u32 %v10083, 4294901760
  %10359 = vmatmul.f32.gmra.mxu0 %v10358
  %v10360 = vpop.f32.mrf.mxu0
  %v10361 = vadd.f32 %v10324, %v10360
  %10362 = vdwg.mxu0
  %v10363 = vadd.f32 %v7993, %v10349
  %v10364 = vadd.f32 %v7994, %v10353
  %v10365 = vadd.f32 %v7995, %v10357
  %v10366 = vadd.f32 %v7996, %v10361
  %v10367 = vld [vmem:[%s5 + $0x120] sm:$0xff]
  %v10368 = vld [vmem:[%s5 + $0x128] sm:$0xff]
  %10369 = vset.pattern.permute.xlu0 6
  %10370 = vperm.xlu0 %10369, %v24
  %v10371 = vpop.permute.xlu0 %10370
  %10373 = vset.pattern.permute.xlu0 6
  %10374 = vperm.xlu0 %10373, %v25
  %v10375 = vpop.permute.xlu0 %10374
  %v10378 = vsel %vm3266, %v10367, 0
  %v10381 = vsel %vm3266, %v10368, 0
  %10383 = vmatpush.msra.mxu0 0.0
  %10384 = vmatpush.msra.mxu0 0.0
  %10385 = vmatpush.msra.mxu0 0.0
  %10386 = vmatpush.msra.mxu0 0.0
  %10387 = vmatpush.msra.mxu0 0.0
  %10388 = vmatpush.msra.mxu0 0.0
  %10389 = vmatpush.msra.mxu0 0.0
  %10390 = vmatpush.msra.mxu0 0.0
  %10391 = vmatpush.msra.mxu0 0.0
  %10392 = vmatpush.msra.mxu0 0.0
  %10393 = vmatpush.msra.mxu0 0.0
  %10394 = vmatpush.msra.mxu0 0.0
  %v10395 = vand.u32 %v10366, 4294901760
  %10396 = vmatpush.msra.mxu0 %v10395
  %v10397 = vand.u32 %v10365, 4294901760
  %10398 = vmatpush.msra.mxu0 %v10397
  %v10399 = vand.u32 %v10364, 4294901760
  %10400 = vmatpush.msra.mxu0 %v10399
  %v10401 = vand.u32 %v10363, 4294901760
  %10402 = vmatpush.msra.mxu0 %v10401
  %v10403 = vand.u32 %v10378, 4294901760
  %v10404 = vsub.f32 %v10378, %v10403
  %v10405 = vand.u32 %v10404, 4294901760
  %v10406 = vsub.f32 %v10404, %v10405
  %v10407 = vand.u32 %v10406, 4294901760
  %10408 = vmatmul.f32.gmra.mxu0 %v10407
  %v10409 = vpop.f32.mrf.mxu0
  %v10410 = vadd.f32 %v10371, %v10409
  %v10411 = vand.u32 %v10381, 4294901760
  %v10412 = vsub.f32 %v10381, %v10411
  %v10413 = vand.u32 %v10412, 4294901760
  %v10414 = vsub.f32 %v10412, %v10413
  %v10415 = vand.u32 %v10414, 4294901760
  %10416 = vmatmul.f32.gmra.mxu0 %v10415
  %v10417 = vpop.f32.mrf.mxu0
  %v10418 = vadd.f32 %v10375, %v10417
  %10419 = vdwg.mxu0
  %10420 = vmatpush.msra.mxu0 0.0
  %10421 = vmatpush.msra.mxu0 0.0
  %10422 = vmatpush.msra.mxu0 0.0
  %10423 = vmatpush.msra.mxu0 0.0
  %10424 = vmatpush.msra.mxu0 0.0
  %10425 = vmatpush.msra.mxu0 0.0
  %10426 = vmatpush.msra.mxu0 0.0
  %10427 = vmatpush.msra.mxu0 0.0
  %10428 = vmatpush.msra.mxu0 0.0
  %10429 = vmatpush.msra.mxu0 0.0
  %10430 = vmatpush.msra.mxu0 0.0
  %10431 = vmatpush.msra.mxu0 0.0
  %v10432 = vand.u32 %v10366, 4294901760
  %v10433 = vsub.f32 %v10366, %v10432
  %v10434 = vand.u32 %v10433, 4294901760
  %v10435 = vsub.f32 %v10433, %v10434
  %v10436 = vand.u32 %v10435, 4294901760
  %10437 = vmatpush.msra.mxu0 %v10436
  %v10438 = vand.u32 %v10365, 4294901760
  %v10439 = vsub.f32 %v10365, %v10438
  %v10440 = vand.u32 %v10439, 4294901760
  %v10441 = vsub.f32 %v10439, %v10440
  %v10442 = vand.u32 %v10441, 4294901760
  %10443 = vmatpush.msra.mxu0 %v10442
  %v10444 = vand.u32 %v10364, 4294901760
  %v10445 = vsub.f32 %v10364, %v10444
  %v10446 = vand.u32 %v10445, 4294901760
  %v10447 = vsub.f32 %v10445, %v10446
  %v10448 = vand.u32 %v10447, 4294901760
  %10449 = vmatpush.msra.mxu0 %v10448
  %v10450 = vand.u32 %v10363, 4294901760
  %v10451 = vsub.f32 %v10363, %v10450
  %v10452 = vand.u32 %v10451, 4294901760
  %v10453 = vsub.f32 %v10451, %v10452
  %v10454 = vand.u32 %v10453, 4294901760
  %10455 = vmatpush.msra.mxu0 %v10454
  %v10456 = vand.u32 %v10378, 4294901760
  %10457 = vmatmul.f32.gmra.mxu0 %v10456
  %v10458 = vpop.f32.mrf.mxu0
  %v10459 = vadd.f32 %v10410, %v10458
  %v10460 = vand.u32 %v10381, 4294901760
  %10461 = vmatmul.f32.gmra.mxu0 %v10460
  %v10462 = vpop.f32.mrf.mxu0
  %v10463 = vadd.f32 %v10418, %v10462
  %10464 = vdwg.mxu0
  %10465 = vmatpush.msra.mxu0 0.0
  %10466 = vmatpush.msra.mxu0 0.0
  %10467 = vmatpush.msra.mxu0 0.0
  %10468 = vmatpush.msra.mxu0 0.0
  %10469 = vmatpush.msra.mxu0 0.0
  %10470 = vmatpush.msra.mxu0 0.0
  %10471 = vmatpush.msra.mxu0 0.0
  %10472 = vmatpush.msra.mxu0 0.0
  %10473 = vmatpush.msra.mxu0 0.0
  %10474 = vmatpush.msra.mxu0 0.0
  %10475 = vmatpush.msra.mxu0 0.0
  %10476 = vmatpush.msra.mxu0 0.0
  %v10477 = vand.u32 %v10366, 4294901760
  %v10478 = vsub.f32 %v10366, %v10477
  %10479 = vmatpush.msra.mxu0 %v10478
  %v10480 = vand.u32 %v10365, 4294901760
  %v10481 = vsub.f32 %v10365, %v10480
  %10482 = vmatpush.msra.mxu0 %v10481
  %v10483 = vand.u32 %v10364, 4294901760
  %v10484 = vsub.f32 %v10364, %v10483
  %10485 = vmatpush.msra.mxu0 %v10484
  %v10486 = vand.u32 %v10363, 4294901760
  %v10487 = vsub.f32 %v10363, %v10486
  %10488 = vmatpush.msra.mxu0 %v10487
  %v10489 = vand.u32 %v10378, 4294901760
  %v10490 = vsub.f32 %v10378, %v10489
  %10491 = vmatmul.f32.gmra.mxu0 %v10490
  %v10492 = vpop.f32.mrf.mxu0
  %v10493 = vadd.f32 %v10459, %v10492
  %v10494 = vand.u32 %v10381, 4294901760
  %v10495 = vsub.f32 %v10381, %v10494
  %10496 = vmatmul.f32.gmra.mxu0 %v10495
  %v10497 = vpop.f32.mrf.mxu0
  %v10498 = vadd.f32 %v10463, %v10497
  %10499 = vdwg.mxu0
  %10500 = vmatpush.msra.mxu0 0.0
  %10501 = vmatpush.msra.mxu0 0.0
  %10502 = vmatpush.msra.mxu0 0.0
  %10503 = vmatpush.msra.mxu0 0.0
  %10504 = vmatpush.msra.mxu0 0.0
  %10505 = vmatpush.msra.mxu0 0.0
  %10506 = vmatpush.msra.mxu0 0.0
  %10507 = vmatpush.msra.mxu0 0.0
  %10508 = vmatpush.msra.mxu0 0.0
  %10509 = vmatpush.msra.mxu0 0.0
  %10510 = vmatpush.msra.mxu0 0.0
  %10511 = vmatpush.msra.mxu0 0.0
  %v10512 = vand.u32 %v10366, 4294901760
  %10513 = vmatpush.msra.mxu0 %v10512
  %v10514 = vand.u32 %v10365, 4294901760
  %10515 = vmatpush.msra.mxu0 %v10514
  %v10516 = vand.u32 %v10364, 4294901760
  %10517 = vmatpush.msra.mxu0 %v10516
  %v10518 = vand.u32 %v10363, 4294901760
  %10519 = vmatpush.msra.mxu0 %v10518
  %v10520 = vand.u32 %v10378, 4294901760
  %v10521 = vsub.f32 %v10378, %v10520
  %v10522 = vand.u32 %v10521, 4294901760
  %10523 = vmatmul.f32.gmra.mxu0 %v10522
  %v10524 = vpop.f32.mrf.mxu0
  %v10525 = vadd.f32 %v10493, %v10524
  %v10526 = vand.u32 %v10381, 4294901760
  %v10527 = vsub.f32 %v10381, %v10526
  %v10528 = vand.u32 %v10527, 4294901760
  %10529 = vmatmul.f32.gmra.mxu0 %v10528
  %v10530 = vpop.f32.mrf.mxu0
  %v10531 = vadd.f32 %v10498, %v10530
  %10532 = vdwg.mxu0
  %10533 = vmatpush.msra.mxu0 0.0
  %10534 = vmatpush.msra.mxu0 0.0
  %10535 = vmatpush.msra.mxu0 0.0
  %10536 = vmatpush.msra.mxu0 0.0
  %10537 = vmatpush.msra.mxu0 0.0
  %10538 = vmatpush.msra.mxu0 0.0
  %10539 = vmatpush.msra.mxu0 0.0
  %10540 = vmatpush.msra.mxu0 0.0
  %10541 = vmatpush.msra.mxu0 0.0
  %10542 = vmatpush.msra.mxu0 0.0
  %10543 = vmatpush.msra.mxu0 0.0
  %10544 = vmatpush.msra.mxu0 0.0
  %v10545 = vand.u32 %v10366, 4294901760
  %v10546 = vsub.f32 %v10366, %v10545
  %v10547 = vand.u32 %v10546, 4294901760
  %10548 = vmatpush.msra.mxu0 %v10547
  %v10549 = vand.u32 %v10365, 4294901760
  %v10550 = vsub.f32 %v10365, %v10549
  %v10551 = vand.u32 %v10550, 4294901760
  %10552 = vmatpush.msra.mxu0 %v10551
  %v10553 = vand.u32 %v10364, 4294901760
  %v10554 = vsub.f32 %v10364, %v10553
  %v10555 = vand.u32 %v10554, 4294901760
  %10556 = vmatpush.msra.mxu0 %v10555
  %v10557 = vand.u32 %v10363, 4294901760
  %v10558 = vsub.f32 %v10363, %v10557
  %v10559 = vand.u32 %v10558, 4294901760
  %10560 = vmatpush.msra.mxu0 %v10559
  %v10561 = vand.u32 %v10378, 4294901760
  %10562 = vmatmul.f32.gmra.mxu0 %v10561
  %v10563 = vpop.f32.mrf.mxu0
  %v10564 = vadd.f32 %v10525, %v10563
  %v10565 = vand.u32 %v10381, 4294901760
  %10566 = vmatmul.f32.gmra.mxu0 %v10565
  %v10567 = vpop.f32.mrf.mxu0
  %v10568 = vadd.f32 %v10531, %v10567
  %10569 = vdwg.mxu0
  %10570 = vmatpush.msra.mxu0 0.0
  %10571 = vmatpush.msra.mxu0 0.0
  %10572 = vmatpush.msra.mxu0 0.0
  %10573 = vmatpush.msra.mxu0 0.0
  %10574 = vmatpush.msra.mxu0 0.0
  %10575 = vmatpush.msra.mxu0 0.0
  %10576 = vmatpush.msra.mxu0 0.0
  %10577 = vmatpush.msra.mxu0 0.0
  %10578 = vmatpush.msra.mxu0 0.0
  %10579 = vmatpush.msra.mxu0 0.0
  %10580 = vmatpush.msra.mxu0 0.0
  %10581 = vmatpush.msra.mxu0 0.0
  %v10582 = vand.u32 %v10366, 4294901760
  %10583 = vmatpush.msra.mxu0 %v10582
  %v10584 = vand.u32 %v10365, 4294901760
  %10585 = vmatpush.msra.mxu0 %v10584
  %v10586 = vand.u32 %v10364, 4294901760
  %10587 = vmatpush.msra.mxu0 %v10586
  %v10588 = vand.u32 %v10363, 4294901760
  %10589 = vmatpush.msra.mxu0 %v10588
  %v10590 = vand.u32 %v10378, 4294901760
  %10591 = vmatmul.f32.gmra.mxu0 %v10590
  %v10592 = vpop.f32.mrf.mxu0
  %v10593 = vadd.f32 %v10564, %v10592
  %v10594 = vand.u32 %v10381, 4294901760
  %10595 = vmatmul.f32.gmra.mxu0 %v10594
  %v10596 = vpop.f32.mrf.mxu0
  %v10597 = vadd.f32 %v10568, %v10596
  %10598 = vdwg.mxu0
  %v10599 = vmax.f32 %v10593, 0.0
  %v10600 = vmax.f32 %v10597, 0.0
  %v10601 = vand.u32 2147483647, %v10593
  %v10602 = vand.u32 2147483647, %v10597
  %v10603 = vsub.f32 0.0, %v10601
  %v10604 = vsub.f32 0.0, %v10602
  %v10605 = vmul.f32 %v10603, 1.442695
  %v10606 = vpow.pop %v10605
  %v10607 = vmul.f32 %v10604, 1.442695
  %v10608 = vpow.pop %v10607
  %v10609 = vadd.f32 %v10606, 1.0
  %v10610 = vlog2.pop %v10609
  %v10611 = vmul.f32 %v10610, 0.6931472
  %v10612 = vmul.f32 -0.5, %v10606
  %v10613 = vadd.f32 %v10612, 1.0
  %v10614 = vmul.f32 %v10613, %v10606
  %v10615 = vand.u32 2147483647, %v10606
  %vm10616 = vcmp.lt.f32.partialorder %v10615, 0.0004427343
  %v10617 = vsel %vm10616, %v10614, %v10611
  %v10618 = vadd.f32 %v10608, 1.0
  %v10619 = vlog2.pop %v10618
  %v10620 = vmul.f32 %v10619, 0.6931472
  %v10621 = vmul.f32 -0.5, %v10608
  %v10622 = vadd.f32 %v10621, 1.0
  %v10623 = vmul.f32 %v10622, %v10608
  %v10624 = vand.u32 2147483647, %v10608
  %vm10625 = vcmp.lt.f32.partialorder %v10624, 0.0004427343
  %v10626 = vsel %vm10625, %v10623, %v10620
  %v10627 = vadd.f32 %v10599, %v10617
  %v10628 = vadd.f32 %v10600, %v10626
  %10629 = vset.pattern.permute.xlu0 7
  %10630 = vperm.xlu0 %10629, %v24
  %v10631 = vpop.permute.xlu0 %10630
  %10633 = vset.pattern.permute.xlu0 7
  %10634 = vperm.xlu0 %10633, %v25
  %v10635 = vpop.permute.xlu0 %10634
  %v10637 = vmul.f32 %v10627, %v10631
  %v10638 = vmul.f32 %v10628, %v10635
  %v10639 = vsel %vm142, %v10637, 0.0
  %v10640 = vsel %vm142, %v10638, 0.0
  %v10641 = vadd.f32 %v10639, %v10640
  %v10642 = vrot.slane %v10641, 4
  %v10643 = vadd.f32 %v10641, %v10642
  %v10644 = vrot.slane %v10643, 2
  %v10645 = vadd.f32 %v10643, %v10644
  %v10646 = vrot.slane %v10645, 1
  %v10647 = vadd.f32 %v10645, %v10646
  %10648 = vset.pattern.permute.xlu0 8
  %10649 = vperm.xlu0 %10648, %v24
  %v10650 = vpop.permute.xlu0 %10649
  %v10652 = vadd.f32 %v10647, %v10650
  %v10653 = vperm.slane %v10652, 0
  %v10654 = vmul.f32 %v32, %v10653
  %vm10655 = vcmask 123904
  %v10656 = vsel %vm10655, %v10654, 0.0
  %10657 = vadd.xlane.f32.xlu0 %v10656
  %v10658 = vpop.xlane.xlu0 %10657
  %vm10659 = vcmask 1024
  %10660 = vst.msk [vmem:[%s6] sm:$0x3] %vm10659, %v10658
  // Predicated region
  $region26: #{tpu_custom_call.1} parent=0 // pred_check
    _
  $region27: #{tpu_custom_call.1} parent=0 // pred_check_branch
    %10662 = sbr.rel (0) target = $region29
  $region28: #{tpu_custom_call.1} parent=0 // pred_region
    _
  $region29: #{tpu_custom_call.1} parent=0 // pred_fallthru
    _
  // Predicated region
  $region30: #{tpu_custom_call.1} parent=0 // pred_check
    _
  $region31: #{tpu_custom_call.1} parent=0 // pred_check_branch
    %10664 = sbr.rel (0) target = $region33
  $region32: #{tpu_custom_call.1} parent=0 // pred_region
    _
  $region33: #{tpu_custom_call.1} parent=0 // pred_fallthru
    _

</llo_original>
